<compile_context>
chip_gen: v7x
topology: tpu7x:2x2x1
jax: 0.10.0
libtpu: 0.0.40
codegen_flags: <defaults>
</compile_context>

<pallas_src>
import numpy as np
import jax
import jax.numpy as jnp
from jax import lax
from jax.experimental import pallas as pl
from jax.experimental.pallas import tpu as pltpu

NV = 778        # MANO vertices
NVP = 896       # vertex axis padded to 7 * 128 lanes
NJ = 21         # joints after J_regressor augmentation (16 + 5 fingertips)
NJ16 = 16       # joints used by the kinematic chain
NB = 10         # shape (beta) params
NP = 45         # articulation (theta) params
NPOSE = 135     # pose-corrective feature size (15 joints * 3 * 3)

MANO_PARENTS = np.array([-1, 0, 1, 2, 0, 4, 5, 0, 7, 8, 0, 10, 11, 0, 13, 14],
                        dtype=np.int32)
MANO2BIGHAND_SKEIDX = [0, 13, 1, 4, 10, 7, 14, 15, 16, 2, 3, 17, 5, 6, 18, 11,
                       12, 19, 8, 9, 20]

_VMEM = pl.BlockSpec(memory_space=pltpu.MemorySpace.VMEM)
_NT = (((1,), (1,)), ((), ()))   # dot_general dims: contract last dim of both


# ----------------------------------------------------------------------------
# small helpers for the in-kernel 3x3 math on (B, 1) column vectors
# ----------------------------------------------------------------------------
def _mat3_mul(a, b):
    """Row-major 3x3 product; a, b are lists of 9 (B, 1) arrays."""
    return [a[3 * r + 0] * b[c] + a[3 * r + 1] * b[3 + c] + a[3 * r + 2] * b[6 + c]
            for r in range(3) for c in range(3)]


def _mat3_vec(a, v):
    """a: list of 9 (B, 1) arrays (row-major 3x3); v: list of 3 (B, 1) arrays."""
    return [a[3 * r + 0] * v[0] + a[3 * r + 1] * v[1] + a[3 * r + 2] * v[2]
            for r in range(3)]


# ----------------------------------------------------------------------------
# Fused Pallas kernel
# ----------------------------------------------------------------------------
def _mano_kernel(beta_ref, pf_ref, rs_ref, sd_ref, pd_ref, vt_ref,
                 jreg16_ref, jreg21_ref, wt_ref, verts_ref, joints_ref):
    """Fused MANO forward.

      beta_ref    (B, 10)       f32   shape params
      pf_ref      (B, 135)      f32   pose-corrective feature (R - I)
      rs_ref      (B, 144)      f32   rs[b, 9j+3r+c] = R_chain[b, j, r, c]
                                      (root already multiplied by base_rot_x)
      sd_ref      (10, 3*NVP)   bf16  shapedirs, coord-major, zero-padded verts
      pd_ref      (135, 3*NVP)  bf16  posedirs,  coord-major, zero-padded verts
      vt_ref      (1, 3*NVP)    f32   v_template, coord-major
      jreg16_ref  (16, NVP)     bf16  lane-dense transposed joint regressor
      jreg21_ref  (21, NVP)     bf16  lane-dense transposed joint regressor
      wt_ref      (16, NVP)     bf16  lane-dense transposed skinning weights
      verts_ref   (3, B, NVP)   f32   coord-major skinned vertices (out)
      joints_ref  (3, B, 21)    f32   coord-major regressed joints (out)
    """
    f32, bf16 = jnp.float32, jnp.bfloat16
    B = beta_ref.shape[0]

    # 1) shape blend + pose-corrective blend: bf16 operands straight into the
    #    MXU (no f32 upcast of the big static matrices), f32 accumulation.
    v_shaped = jnp.dot(beta_ref[...].astype(bf16), sd_ref[...],
                       preferred_element_type=f32) + vt_ref[...]     # (B, 3*NVP)
    v_posed = v_shaped + jnp.dot(pf_ref[...].astype(bf16), pd_ref[...],
                                 preferred_element_type=f32)

    # 2) 16-joint regression per coordinate; lane slices at 0/896/1792 are
    #    128-aligned; regressor is lane-dense so contract the NVP lanes.
    jreg16 = jreg16_ref[...]
    vp, jc = [], []
    for c in range(3):
        sl = slice(c * NVP, (c + 1) * NVP)
        vp.append(v_posed[:, sl])                                     # (B, NVP)
        jc.append(lax.dot_general(v_shaped[:, sl].astype(bf16), jreg16, _NT,
                                  preferred_element_type=f32))        # (B, 16)

    # 3) kinematic-tree rigid transform chain, fully unrolled in-kernel on
    #    (B, 1) columns (f32 VPU work).  Each joint's A = [R_w | t_w - R_w J]
    #    is scattered into twelve (B, 16) fields with a one-hot lane mask.
    rs = rs_ref[...]                                                  # (B, 144)
    lane16 = lax.broadcasted_iota(jnp.int32, (1, NJ16), 1)

    def rot_local(j):
        return [rs[:, 9 * j + e:9 * j + e + 1] for e in range(9)]

    def joint_pos(j):
        return [jc[k][:, j:j + 1] for k in range(3)]

    Rw = [None] * NJ16
    tw = [None] * NJ16
    acc = [None] * 12                       # acc[3*c + r] = A[:, :, r, c]
    for j in range(NJ16):
        Rl, Jj = rot_local(j), joint_pos(j)
        if j == 0:
            Rw[j], tw[j] = Rl, Jj
        else:
            p = int(MANO_PARENTS[j])
            Jp = joint_pos(p)
            Rw[j] = _mat3_mul(Rw[p], Rl)
            dj = [Jj[k] - Jp[k] for k in range(3)]
            rdj = _mat3_vec(Rw[p], dj)
            tw[j] = [rdj[k] + tw[p][k] for k in range(3)]
        rj = _mat3_vec(Rw[j], Jj)           # remove rest-pose joint location
        tA = [tw[j][k] - rj[k] for k in range(3)]
        onehot = (lane16 == j).astype(f32)  # (1, 16)
        for c in range(3):
            for r in range(3):
                idx = 3 * c + r
                term = Rw[j][3 * r + c] * onehot
                acc[idx] = term if acc[idx] is None else acc[idx] + term
        for r in range(3):
            idx = 9 + r
            term = tA[r] * onehot
            acc[idx] = term if acc[idx] is None else acc[idx] + term

    # 4) linear-blend skinning coefficients in one MXU matmul:
    #    (12B, 16) @ (16, NVP) -> per-vertex blended transform entries.
    a_all = jnp.concatenate(acc, axis=0).astype(bf16)                 # (12B, 16)
    coeff = jnp.dot(a_all, wt_ref[...],
                    preferred_element_type=f32).reshape(12, B, NVP)

    # 5) apply transforms + final 21-joint regression, coordinate-major output.
    jreg21 = jreg21_ref[...]
    for r in range(3):
        v_r = (coeff[r] * vp[0] + coeff[3 + r] * vp[1]
               + coeff[6 + r] * vp[2] + coeff[9 + r])                 # (B, NVP)
        verts_ref[r] = v_r
        joints_ref[r] = lax.dot_general(v_r.astype(bf16), jreg21, _NT,
                                        preferred_element_type=f32)   # (B, 21)


# ----------------------------------------------------------------------------
# Small glue math (matches the PyTorch helpers exactly)
# ----------------------------------------------------------------------------
def quat2mat(quat):
    nq = quat / jnp.linalg.norm(quat, axis=1, keepdims=True)
    w, x, y, z = nq[:, 0], nq[:, 1], nq[:, 2], nq[:, 3]
    w2, x2, y2, z2 = w * w, x * x, y * y, z * z
    wx, wy, wz = w * x, w * y, w * z
    xy, xz, yz = x * y, x * z, y * z
    rot = jnp.stack([w2 + x2 - y2 - z2, 2 * xy - 2 * wz, 2 * wy + 2 * xz,
                     2 * wz + 2 * xy, w2 - x2 + y2 - z2, 2 * yz - 2 * wx,
                     2 * xz - 2 * wy, 2 * wx + 2 * yz, w2 - x2 - y2 + z2],
                    axis=1)
    return rot.reshape(-1, 3, 3)


def batch_rodrigues(theta):
    l1norm = jnp.linalg.norm(theta + 1e-8, axis=1)
    angle = l1norm[:, None]
    normalized = theta / angle
    angle = angle * 0.5
    quat = jnp.concatenate([jnp.cos(angle), jnp.sin(angle) * normalized],
                           axis=1)
    return quat2mat(quat)


def batch_global_rigid_transformation(Rs, Js, parent, base_rot_x,
                                      rotate_base=True):
    # Only used by the pure-JAX reference; the Pallas path does this in-kernel.
    N = Rs.shape[0]
    root_rotation = jnp.matmul(Rs[:, 0], base_rot_x) if rotate_base else Rs[:, 0]
    Js = Js[..., None]                                   # (N, 16, 3, 1)

    def make_A(R, t):
        R_homo = jnp.pad(R, ((0, 0), (0, 1), (0, 0)))    # (N, 4, 3)
        ones_homo = jnp.ones((N, 1, 1), dtype=R.dtype)
        t_homo = jnp.concatenate([t, ones_homo], axis=1)  # (N, 4, 1)
        return jnp.concatenate([R_homo, t_homo], axis=2)  # (N, 4, 4)

    results = [make_A(root_rotation, Js[:, 0])]
    for i in range(1, parent.shape[0]):
        j_here = Js[:, i] - Js[:, parent[i]]
        A_here = make_A(Rs[:, i], j_here)
        results.append(jnp.matmul(results[parent[i]], A_here))
    results = jnp.stack(results, axis=1)                 # (N, 16, 4, 4)
    new_J = results[:, :, :3, 3]
    zeros_homo = jnp.zeros((N, 16, 1, 1), dtype=Rs.dtype)
    Js_w0 = jnp.concatenate([Js, zeros_homo], axis=2)    # (N, 16, 4, 1)
    init_bone = jnp.matmul(results, Js_w0)               # (N, 16, 4, 1)
    init_bone = jnp.pad(init_bone, ((0, 0), (0, 0), (0, 0), (3, 0)))
    return new_J, results - init_bone


# ----------------------------------------------------------------------------
# Forward pass built on the fused Pallas kernel
# ----------------------------------------------------------------------------
def mano_forward_pallas(params, beta, theta, quat, rotate_base=True):
    """Forward (get_skin=True): returns (verts (B,778,3), joints (B,21,3), Rs)."""
    B0 = beta.shape[0]
    B = ((B0 + 7) // 8) * 8          # sublane-align the batch (MXU M rows)
    if B != B0:
        pad = B - B0
        beta = jnp.concatenate([beta, jnp.zeros((pad, NB), beta.dtype)], axis=0)
        theta = jnp.concatenate([theta, jnp.zeros((pad, NP), theta.dtype)], axis=0)
        unit_q = jnp.tile(jnp.asarray([[1.0, 0.0, 0.0, 0.0]], quat.dtype),
                          (pad, 1))
        quat = jnp.concatenate([quat, unit_q], axis=0)

    # pose parameters -> per-joint rotations (tiny serial glue).
    theta_full = theta @ params['hands_comp'] + params['hands_mean']
    Rs = batch_rodrigues(theta_full.reshape(-1, 3)).reshape(B, 15, 3, 3)
    global_rot = quat2mat(quat).reshape(B, 3, 3)
    pose_feature = (Rs - jnp.eye(3, dtype=jnp.float32)).reshape(B, NPOSE)
    root = (jnp.matmul(global_rot, params['base_rot_x'])
            if rotate_base else global_rot)
    rs_chain = jnp.concatenate([root[:, None], Rs], axis=1).reshape(B, NJ16 * 9)

    verts_cm, joints_cm = pl.pallas_call(
        _mano_kernel,
        out_shape=(jax.ShapeDtypeStruct((3, B, NVP), jnp.float32),
                   jax.ShapeDtypeStruct((3, B, NJ), jnp.float32)),
        in_specs=[_VMEM] * 9,
        out_specs=(_VMEM, _VMEM),
    )(beta, pose_feature, rs_chain,
      params['shapedirs_cm'], params['posedirs_cm'], params['v_template_cm'],
      params['jreg16_T'], params['jreg21_T'], params['weights_T'])

    # NOTE: callers that can consume coord-major (3, B, NV) output should skip
    # this lane-width-3 relayout entirely.
    verts = verts_cm.transpose(1, 2, 0)[:B0, :NV, :]     # (B0, 778, 3)
    joints = joints_cm.transpose(1, 2, 0)[:B0]           # (B0, 21, 3)
    return verts, joints, Rs[:B0]


# ----------------------------------------------------------------------------
# Pure-JAX reference that mirrors the PyTorch code literally (for checking)
# ----------------------------------------------------------------------------
def mano_forward_reference(params, beta, theta, quat):
    B = beta.shape[0]
    v_shaped = (beta @ params['shapedirs']).reshape(B, NV, 3) + params['v_template']
    Jx = v_shaped[:, :, 0] @ params['j_regressor']
    Jy = v_shaped[:, :, 1] @ params['j_regressor']
    Jz = v_shaped[:, :, 2] @ params['j_regressor']
    J = jnp.stack([Jx, Jy, Jz], axis=2)
    Rs = batch_rodrigues(
        (theta @ params['hands_comp'] + params['hands_mean']).reshape(-1, 3)
    ).reshape(B, 15, 3, 3)
    global_rot = quat2mat(quat).reshape(B, 1, 3, 3)
    pose_feature = (Rs - jnp.eye(3, dtype=jnp.float32)).reshape(B, NPOSE)
    v_posed = v_shaped + (pose_feature @ params['posedirs']).reshape(B, NV, 3)
    _, A = batch_global_rigid_transformation(
        jnp.concatenate([global_rot, Rs], axis=1), J[:, :16],
        MANO_PARENTS, params['base_rot_x'], rotate_base=True)
    W = params['weights'].reshape(1, NV, 16)
    T = jnp.matmul(W, A.reshape(B, 16, 16)).reshape(B, NV, 4, 4)
    ones_homo = jnp.ones((B, NV, 1), jnp.float32)
    v_posed_homo = jnp.concatenate([v_posed, ones_homo], axis=2)
    v_homo = jnp.matmul(T, v_posed_homo[..., None])
    verts = v_homo[:, :, :3, 0]
    jx = verts[:, :, 0] @ params['j_regressor']
    jy = verts[:, :, 1] @ params['j_regressor']
    jz = verts[:, :, 2] @ params['j_regressor']
    joints = jnp.stack([jx, jy, jz], axis=2)
    return verts, joints, Rs


# ----------------------------------------------------------------------------
# Deterministic synthetic MANO parameters (no .pkl load)
# ----------------------------------------------------------------------------
def make_params(key):
    ks = jax.random.split(key, 7)
    v_template = 0.1 * jax.random.normal(ks[0], (NV, 3), jnp.float32)
    shapedirs_v = 0.01 * jax.random.normal(ks[1], (NB, NV, 3), jnp.float32)
    posedirs_v = 0.01 * jax.random.normal(ks[2], (NPOSE, NV, 3), jnp.float32)
    jreg_base = jax.nn.softmax(
        jax.random.normal(ks[3], (NV, 16), jnp.float32), axis=0)
    j_add = np.zeros((NV, 5), np.float32)
    for col, idx in enumerate([745, 333, 444, 555, 672]):
        j_add[idx, col] = 1.0
    j_regressor = jnp.concatenate([jreg_base, jnp.asarray(j_add)], axis=1)
    hands_comp = 0.1 * jax.random.normal(ks[4], (NP, NP), jnp.float32)
    hands_mean = 0.1 * jax.random.normal(ks[5], (NP,), jnp.float32)
    weights = jax.nn.softmax(
        2.0 * jax.random.normal(ks[6], (NV, 16), jnp.float32), axis=1)
    base_rot_x = jnp.array([[1, 0, 0], [0, -1, 0], [0, 0, -1]], jnp.float32)

    # torch-layout f32 buffers (vertex-major flatten) used by the reference.
    shapedirs = shapedirs_v.reshape(NB, NV * 3)
    posedirs = posedirs_v.reshape(NPOSE, NV * 3)

    # kernel-layout buffers: coord-major, vertex axis zero-padded to NVP,
    # bf16 for the big static matrices (fed straight to the MXU).
    pad_v = NVP - NV
    sd_cm = jnp.pad(shapedirs_v.transpose(0, 2, 1),
                    ((0, 0), (0, 0), (0, pad_v))).reshape(NB, 3 * NVP)
    pd_cm = jnp.pad(posedirs_v.transpose(0, 2, 1),
                    ((0, 0), (0, 0), (0, pad_v))).reshape(NPOSE, 3 * NVP)
    vt_cm = jnp.pad(v_template.T, ((0, 0), (0, pad_v))).reshape(1, 3 * NVP)
    # lane-dense transposed regressors / skin weights; pad vertices stay 0.
    jreg16_T = jnp.pad(j_regressor[:, :NJ16], ((0, pad_v), (0, 0))).T
    jreg21_T = jnp.pad(j_regressor, ((0, pad_v), (0, 0))).T
    weights_T = jnp.pad(weights.T, ((0, 0), (0, pad_v)))

    return dict(
        v_template=v_template, shapedirs=shapedirs, posedirs=posedirs,
        j_regressor=j_regressor, hands_comp=hands_comp, hands_mean=hands_mean,
        weights=weights, base_rot_x=base_rot_x,
        shapedirs_cm=sd_cm.astype(jnp.bfloat16),
        posedirs_cm=pd_cm.astype(jnp.bfloat16),
        v_template_cm=vt_cm,
        jreg16_T=jreg16_T.astype(jnp.bfloat16),
        jreg21_T=jreg21_T.astype(jnp.bfloat16),
        weights_T=weights_T.astype(jnp.bfloat16))


if __name__ == "__main__":
    key = jax.random.PRNGKey(0)
    pkey, ikey = jax.random.split(key)
    params = make_params(pkey)

    B = 8   # multiple of 8 fills the MXU M-rows / sublanes (perf feedback)
    k1, k2, k3 = jax.random.split(ikey, 3)
    beta = 0.5 * jax.random.normal(k1, (B, NB), jnp.float32)    # shape params
    theta = 0.1 * jax.random.normal(k2, (B, NP), jnp.float32)   # pose params
    quat = jax.random.normal(k3, (B, 4), jnp.float32)           # global rot (wxyz)

    fwd = jax.jit(mano_forward_pallas)
    verts, joints, Rs = jax.block_until_ready(fwd(params, beta, theta, quat))

    verts_ref, joints_ref, Rs_ref = mano_forward_reference(params, beta, theta, quat)

    assert verts.shape == (B, NV, 3)
    assert joints.shape == (B, NJ, 3)
    assert Rs.shape == (B, 15, 3, 3)
    assert np.allclose(np.asarray(verts), np.asarray(verts_ref),
                       rtol=5e-2, atol=5e-3), "verts mismatch"
    assert np.allclose(np.asarray(joints), np.asarray(joints_ref),
                       rtol=5e-2, atol=5e-3), "joints mismatch"

    print("KERNEL_OK")
</pallas_src>

<mosaic_0001>
module attributes {stable_mosaic.version = 11 : i64} {
  func.func @_mano_kernel(%arg0: memref<8x10xf32, #tpu.memory_space<vmem>>, %arg1: memref<8x135xf32, #tpu.memory_space<vmem>>, %arg2: memref<8x144xf32, #tpu.memory_space<vmem>>, %arg3: memref<10x2688xbf16, #tpu.memory_space<vmem>>, %arg4: memref<135x2688xbf16, #tpu.memory_space<vmem>>, %arg5: memref<1x2688xf32, #tpu.memory_space<vmem>>, %arg6: memref<16x896xbf16, #tpu.memory_space<vmem>>, %arg7: memref<21x896xbf16, #tpu.memory_space<vmem>>, %arg8: memref<16x896xbf16, #tpu.memory_space<vmem>>, %arg9: memref<3x8x896xf32, #tpu.memory_space<vmem>>, %arg10: memref<3x8x21xf32, #tpu.memory_space<vmem>>) attributes {dimension_semantics = [], scalar_prefetch = 0 : i64, scratch_operands = 0 : i64, tpu.core_type = #tpu.core_type<tc>} {
    %c0 = arith.constant 0 : index
    %c0_0 = arith.constant 0 : index
    %0 = vector.load %arg0[%c0, %c0_0] : memref<8x10xf32, #tpu.memory_space<vmem>>, vector<8x10xf32>
    %1 = arith.truncf %0 : vector<8x10xf32> to vector<8x10xbf16>
    %c0_1 = arith.constant 0 : index
    %c0_2 = arith.constant 0 : index
    %2 = vector.load %arg3[%c0_1, %c0_2] : memref<10x2688xbf16, #tpu.memory_space<vmem>>, vector<10x2688xbf16>
    %cst = arith.constant dense<0.000000e+00> : vector<8x2688xf32>
    %3 = tpu.matmul %1, %2, %cst {dimension_numbers = #tpu.dot_dimension_numbers<[1], [0], [0], [1], [0, 0, 1, 1], [], []>} : vector<8x10xbf16>, vector<10x2688xbf16>, vector<8x2688xf32> -> vector<8x2688xf32>
    %c0_3 = arith.constant 0 : index
    %c0_4 = arith.constant 0 : index
    %4 = vector.load %arg5[%c0_3, %c0_4] : memref<1x2688xf32, #tpu.memory_space<vmem>>, vector<1x2688xf32>
    %5 = vector.broadcast %4 : vector<1x2688xf32> to vector<8x2688xf32>
    %6 = arith.addf %3, %5 : vector<8x2688xf32>
    %c0_5 = arith.constant 0 : index
    %c0_6 = arith.constant 0 : index
    %7 = vector.load %arg1[%c0_5, %c0_6] : memref<8x135xf32, #tpu.memory_space<vmem>>, vector<8x135xf32>
    %8 = arith.truncf %7 : vector<8x135xf32> to vector<8x135xbf16>
    %c0_7 = arith.constant 0 : index
    %c0_8 = arith.constant 0 : index
    %9 = vector.load %arg4[%c0_7, %c0_8] : memref<135x2688xbf16, #tpu.memory_space<vmem>>, vector<135x2688xbf16>
    %cst_9 = arith.constant dense<0.000000e+00> : vector<8x2688xf32>
    %10 = tpu.matmul %8, %9, %cst_9 {dimension_numbers = #tpu.dot_dimension_numbers<[1], [0], [0], [1], [0, 0, 1, 1], [], []>} : vector<8x135xbf16>, vector<135x2688xbf16>, vector<8x2688xf32> -> vector<8x2688xf32>
    %11 = arith.addf %6, %10 : vector<8x2688xf32>
    %c0_10 = arith.constant 0 : index
    %c0_11 = arith.constant 0 : index
    %12 = vector.load %arg6[%c0_10, %c0_11] : memref<16x896xbf16, #tpu.memory_space<vmem>>, vector<16x896xbf16>
    %13 = vector.extract_strided_slice %11 {offsets = [0, 0], sizes = [8, 896], strides = [1, 1]} : vector<8x2688xf32> to vector<8x896xf32>
    %14 = vector.extract_strided_slice %6 {offsets = [0, 0], sizes = [8, 896], strides = [1, 1]} : vector<8x2688xf32> to vector<8x896xf32>
    %15 = arith.truncf %14 : vector<8x896xf32> to vector<8x896xbf16>
    %cst_12 = arith.constant dense<0.000000e+00> : vector<8x16xf32>
    %16 = tpu.matmul %15, %12, %cst_12 {dimension_numbers = #tpu.dot_dimension_numbers<[1], [1], [0], [0], [0, 0, 1, 0], [], []>} : vector<8x896xbf16>, vector<16x896xbf16>, vector<8x16xf32> -> vector<8x16xf32>
    %17 = vector.extract_strided_slice %11 {offsets = [0, 896], sizes = [8, 896], strides = [1, 1]} : vector<8x2688xf32> to vector<8x896xf32>
    %18 = vector.extract_strided_slice %6 {offsets = [0, 896], sizes = [8, 896], strides = [1, 1]} : vector<8x2688xf32> to vector<8x896xf32>
    %19 = arith.truncf %18 : vector<8x896xf32> to vector<8x896xbf16>
    %cst_13 = arith.constant dense<0.000000e+00> : vector<8x16xf32>
    %20 = tpu.matmul %19, %12, %cst_13 {dimension_numbers = #tpu.dot_dimension_numbers<[1], [1], [0], [0], [0, 0, 1, 0], [], []>} : vector<8x896xbf16>, vector<16x896xbf16>, vector<8x16xf32> -> vector<8x16xf32>
    %21 = vector.extract_strided_slice %11 {offsets = [0, 1792], sizes = [8, 896], strides = [1, 1]} : vector<8x2688xf32> to vector<8x896xf32>
    %22 = vector.extract_strided_slice %6 {offsets = [0, 1792], sizes = [8, 896], strides = [1, 1]} : vector<8x2688xf32> to vector<8x896xf32>
    %23 = arith.truncf %22 : vector<8x896xf32> to vector<8x896xbf16>
    %cst_14 = arith.constant dense<0.000000e+00> : vector<8x16xf32>
    %24 = tpu.matmul %23, %12, %cst_14 {dimension_numbers = #tpu.dot_dimension_numbers<[1], [1], [0], [0], [0, 0, 1, 0], [], []>} : vector<8x896xbf16>, vector<16x896xbf16>, vector<8x16xf32> -> vector<8x16xf32>
    %c0_15 = arith.constant 0 : index
    %c0_16 = arith.constant 0 : index
    %25 = vector.load %arg2[%c0_15, %c0_16] : memref<8x144xf32, #tpu.memory_space<vmem>>, vector<8x144xf32>
    %26 = tpu.iota {dimensions = array<i32: 1>} : vector<1x16xi32>
    %27 = vector.extract_strided_slice %25 {offsets = [0, 0], sizes = [8, 1], strides = [1, 1]} : vector<8x144xf32> to vector<8x1xf32>
    %28 = vector.extract_strided_slice %25 {offsets = [0, 1], sizes = [8, 1], strides = [1, 1]} : vector<8x144xf32> to vector<8x1xf32>
    %29 = vector.extract_strided_slice %25 {offsets = [0, 2], sizes = [8, 1], strides = [1, 1]} : vector<8x144xf32> to vector<8x1xf32>
    %30 = vector.extract_strided_slice %25 {offsets = [0, 3], sizes = [8, 1], strides = [1, 1]} : vector<8x144xf32> to vector<8x1xf32>
    %31 = vector.extract_strided_slice %25 {offsets = [0, 4], sizes = [8, 1], strides = [1, 1]} : vector<8x144xf32> to vector<8x1xf32>
    %32 = vector.extract_strided_slice %25 {offsets = [0, 5], sizes = [8, 1], strides = [1, 1]} : vector<8x144xf32> to vector<8x1xf32>
    %33 = vector.extract_strided_slice %25 {offsets = [0, 6], sizes = [8, 1], strides = [1, 1]} : vector<8x144xf32> to vector<8x1xf32>
    %34 = vector.extract_strided_slice %25 {offsets = [0, 7], sizes = [8, 1], strides = [1, 1]} : vector<8x144xf32> to vector<8x1xf32>
    %35 = vector.extract_strided_slice %25 {offsets = [0, 8], sizes = [8, 1], strides = [1, 1]} : vector<8x144xf32> to vector<8x1xf32>
    %36 = vector.extract_strided_slice %16 {offsets = [0, 0], sizes = [8, 1], strides = [1, 1]} : vector<8x16xf32> to vector<8x1xf32>
    %37 = vector.extract_strided_slice %20 {offsets = [0, 0], sizes = [8, 1], strides = [1, 1]} : vector<8x16xf32> to vector<8x1xf32>
    %38 = vector.extract_strided_slice %24 {offsets = [0, 0], sizes = [8, 1], strides = [1, 1]} : vector<8x16xf32> to vector<8x1xf32>
    %39 = arith.mulf %27, %36 : vector<8x1xf32>
    %40 = arith.mulf %28, %37 : vector<8x1xf32>
    %41 = arith.addf %39, %40 : vector<8x1xf32>
    %42 = arith.mulf %29, %38 : vector<8x1xf32>
    %43 = arith.addf %41, %42 : vector<8x1xf32>
    %44 = arith.mulf %30, %36 : vector<8x1xf32>
    %45 = arith.mulf %31, %37 : vector<8x1xf32>
    %46 = arith.addf %44, %45 : vector<8x1xf32>
    %47 = arith.mulf %32, %38 : vector<8x1xf32>
    %48 = arith.addf %46, %47 : vector<8x1xf32>
    %49 = arith.mulf %33, %36 : vector<8x1xf32>
    %50 = arith.mulf %34, %37 : vector<8x1xf32>
    %51 = arith.addf %49, %50 : vector<8x1xf32>
    %52 = arith.mulf %35, %38 : vector<8x1xf32>
    %53 = arith.addf %51, %52 : vector<8x1xf32>
    %54 = arith.subf %36, %43 : vector<8x1xf32>
    %55 = arith.subf %37, %48 : vector<8x1xf32>
    %56 = arith.subf %38, %53 : vector<8x1xf32>
    %c0_i32 = arith.constant 0 : i32
    %57 = vector.broadcast %c0_i32 : i32 to vector<1x16xi32>
    %58 = arith.cmpi eq, %26, %57 : vector<1x16xi32>
    %59 = arith.extui %58 : vector<1x16xi1> to vector<1x16xi32>
    %60 = arith.sitofp %59 : vector<1x16xi32> to vector<1x16xf32>
    %61 = vector.broadcast %27 : vector<8x1xf32> to vector<8x16xf32>
    %62 = vector.broadcast %60 : vector<1x16xf32> to vector<8x16xf32>
    %63 = arith.mulf %61, %62 : vector<8x16xf32>
    %64 = vector.broadcast %30 : vector<8x1xf32> to vector<8x16xf32>
    %65 = vector.broadcast %60 : vector<1x16xf32> to vector<8x16xf32>
    %66 = arith.mulf %64, %65 : vector<8x16xf32>
    %67 = vector.broadcast %33 : vector<8x1xf32> to vector<8x16xf32>
    %68 = vector.broadcast %60 : vector<1x16xf32> to vector<8x16xf32>
    %69 = arith.mulf %67, %68 : vector<8x16xf32>
    %70 = vector.broadcast %28 : vector<8x1xf32> to vector<8x16xf32>
    %71 = vector.broadcast %60 : vector<1x16xf32> to vector<8x16xf32>
    %72 = arith.mulf %70, %71 : vector<8x16xf32>
    %73 = vector.broadcast %31 : vector<8x1xf32> to vector<8x16xf32>
    %74 = vector.broadcast %60 : vector<1x16xf32> to vector<8x16xf32>
    %75 = arith.mulf %73, %74 : vector<8x16xf32>
    %76 = vector.broadcast %34 : vector<8x1xf32> to vector<8x16xf32>
    %77 = vector.broadcast %60 : vector<1x16xf32> to vector<8x16xf32>
    %78 = arith.mulf %76, %77 : vector<8x16xf32>
    %79 = vector.broadcast %29 : vector<8x1xf32> to vector<8x16xf32>
    %80 = vector.broadcast %60 : vector<1x16xf32> to vector<8x16xf32>
    %81 = arith.mulf %79, %80 : vector<8x16xf32>
    %82 = vector.broadcast %32 : vector<8x1xf32> to vector<8x16xf32>
    %83 = vector.broadcast %60 : vector<1x16xf32> to vector<8x16xf32>
    %84 = arith.mulf %82, %83 : vector<8x16xf32>
    %85 = vector.broadcast %35 : vector<8x1xf32> to vector<8x16xf32>
    %86 = vector.broadcast %60 : vector<1x16xf32> to vector<8x16xf32>
    %87 = arith.mulf %85, %86 : vector<8x16xf32>
    %88 = vector.broadcast %54 : vector<8x1xf32> to vector<8x16xf32>
    %89 = vector.broadcast %60 : vector<1x16xf32> to vector<8x16xf32>
    %90 = arith.mulf %88, %89 : vector<8x16xf32>
    %91 = vector.broadcast %55 : vector<8x1xf32> to vector<8x16xf32>
    %92 = vector.broadcast %60 : vector<1x16xf32> to vector<8x16xf32>
    %93 = arith.mulf %91, %92 : vector<8x16xf32>
    %94 = vector.broadcast %56 : vector<8x1xf32> to vector<8x16xf32>
    %95 = vector.broadcast %60 : vector<1x16xf32> to vector<8x16xf32>
    %96 = arith.mulf %94, %95 : vector<8x16xf32>
    %97 = vector.extract_strided_slice %25 {offsets = [0, 9], sizes = [8, 1], strides = [1, 1]} : vector<8x144xf32> to vector<8x1xf32>
    %98 = vector.extract_strided_slice %25 {offsets = [0, 10], sizes = [8, 1], strides = [1, 1]} : vector<8x144xf32> to vector<8x1xf32>
    %99 = vector.extract_strided_slice %25 {offsets = [0, 11], sizes = [8, 1], strides = [1, 1]} : vector<8x144xf32> to vector<8x1xf32>
    %100 = vector.extract_strided_slice %25 {offsets = [0, 12], sizes = [8, 1], strides = [1, 1]} : vector<8x144xf32> to vector<8x1xf32>
    %101 = vector.extract_strided_slice %25 {offsets = [0, 13], sizes = [8, 1], strides = [1, 1]} : vector<8x144xf32> to vector<8x1xf32>
    %102 = vector.extract_strided_slice %25 {offsets = [0, 14], sizes = [8, 1], strides = [1, 1]} : vector<8x144xf32> to vector<8x1xf32>
    %103 = vector.extract_strided_slice %25 {offsets = [0, 15], sizes = [8, 1], strides = [1, 1]} : vector<8x144xf32> to vector<8x1xf32>
    %104 = vector.extract_strided_slice %25 {offsets = [0, 16], sizes = [8, 1], strides = [1, 1]} : vector<8x144xf32> to vector<8x1xf32>
    %105 = vector.extract_strided_slice %25 {offsets = [0, 17], sizes = [8, 1], strides = [1, 1]} : vector<8x144xf32> to vector<8x1xf32>
    %106 = vector.extract_strided_slice %16 {offsets = [0, 1], sizes = [8, 1], strides = [1, 1]} : vector<8x16xf32> to vector<8x1xf32>
    %107 = vector.extract_strided_slice %20 {offsets = [0, 1], sizes = [8, 1], strides = [1, 1]} : vector<8x16xf32> to vector<8x1xf32>
    %108 = vector.extract_strided_slice %24 {offsets = [0, 1], sizes = [8, 1], strides = [1, 1]} : vector<8x16xf32> to vector<8x1xf32>
    %109 = vector.extract_strided_slice %16 {offsets = [0, 0], sizes = [8, 1], strides = [1, 1]} : vector<8x16xf32> to vector<8x1xf32>
    %110 = vector.extract_strided_slice %20 {offsets = [0, 0], sizes = [8, 1], strides = [1, 1]} : vector<8x16xf32> to vector<8x1xf32>
    %111 = vector.extract_strided_slice %24 {offsets = [0, 0], sizes = [8, 1], strides = [1, 1]} : vector<8x16xf32> to vector<8x1xf32>
    %112 = arith.mulf %27, %97 : vector<8x1xf32>
    %113 = arith.mulf %28, %100 : vector<8x1xf32>
    %114 = arith.addf %112, %113 : vector<8x1xf32>
    %115 = arith.mulf %29, %103 : vector<8x1xf32>
    %116 = arith.addf %114, %115 : vector<8x1xf32>
    %117 = arith.mulf %27, %98 : vector<8x1xf32>
    %118 = arith.mulf %28, %101 : vector<8x1xf32>
    %119 = arith.addf %117, %118 : vector<8x1xf32>
    %120 = arith.mulf %29, %104 : vector<8x1xf32>
    %121 = arith.addf %119, %120 : vector<8x1xf32>
    %122 = arith.mulf %27, %99 : vector<8x1xf32>
    %123 = arith.mulf %28, %102 : vector<8x1xf32>
    %124 = arith.addf %122, %123 : vector<8x1xf32>
    %125 = arith.mulf %29, %105 : vector<8x1xf32>
    %126 = arith.addf %124, %125 : vector<8x1xf32>
    %127 = arith.mulf %30, %97 : vector<8x1xf32>
    %128 = arith.mulf %31, %100 : vector<8x1xf32>
    %129 = arith.addf %127, %128 : vector<8x1xf32>
    %130 = arith.mulf %32, %103 : vector<8x1xf32>
    %131 = arith.addf %129, %130 : vector<8x1xf32>
    %132 = arith.mulf %30, %98 : vector<8x1xf32>
    %133 = arith.mulf %31, %101 : vector<8x1xf32>
    %134 = arith.addf %132, %133 : vector<8x1xf32>
    %135 = arith.mulf %32, %104 : vector<8x1xf32>
    %136 = arith.addf %134, %135 : vector<8x1xf32>
    %137 = arith.mulf %30, %99 : vector<8x1xf32>
    %138 = arith.mulf %31, %102 : vector<8x1xf32>
    %139 = arith.addf %137, %138 : vector<8x1xf32>
    %140 = arith.mulf %32, %105 : vector<8x1xf32>
    %141 = arith.addf %139, %140 : vector<8x1xf32>
    %142 = arith.mulf %33, %97 : vector<8x1xf32>
    %143 = arith.mulf %34, %100 : vector<8x1xf32>
    %144 = arith.addf %142, %143 : vector<8x1xf32>
    %145 = arith.mulf %35, %103 : vector<8x1xf32>
    %146 = arith.addf %144, %145 : vector<8x1xf32>
    %147 = arith.mulf %33, %98 : vector<8x1xf32>
    %148 = arith.mulf %34, %101 : vector<8x1xf32>
    %149 = arith.addf %147, %148 : vector<8x1xf32>
    %150 = arith.mulf %35, %104 : vector<8x1xf32>
    %151 = arith.addf %149, %150 : vector<8x1xf32>
    %152 = arith.mulf %33, %99 : vector<8x1xf32>
    %153 = arith.mulf %34, %102 : vector<8x1xf32>
    %154 = arith.addf %152, %153 : vector<8x1xf32>
    %155 = arith.mulf %35, %105 : vector<8x1xf32>
    %156 = arith.addf %154, %155 : vector<8x1xf32>
    %157 = arith.subf %106, %109 : vector<8x1xf32>
    %158 = arith.subf %107, %110 : vector<8x1xf32>
    %159 = arith.subf %108, %111 : vector<8x1xf32>
    %160 = arith.mulf %27, %157 : vector<8x1xf32>
    %161 = arith.mulf %28, %158 : vector<8x1xf32>
    %162 = arith.addf %160, %161 : vector<8x1xf32>
    %163 = arith.mulf %29, %159 : vector<8x1xf32>
    %164 = arith.addf %162, %163 : vector<8x1xf32>
    %165 = arith.mulf %30, %157 : vector<8x1xf32>
    %166 = arith.mulf %31, %158 : vector<8x1xf32>
    %167 = arith.addf %165, %166 : vector<8x1xf32>
    %168 = arith.mulf %32, %159 : vector<8x1xf32>
    %169 = arith.addf %167, %168 : vector<8x1xf32>
    %170 = arith.mulf %33, %157 : vector<8x1xf32>
    %171 = arith.mulf %34, %158 : vector<8x1xf32>
    %172 = arith.addf %170, %171 : vector<8x1xf32>
    %173 = arith.mulf %35, %159 : vector<8x1xf32>
    %174 = arith.addf %172, %173 : vector<8x1xf32>
    %175 = arith.addf %164, %36 : vector<8x1xf32>
    %176 = arith.addf %169, %37 : vector<8x1xf32>
    %177 = arith.addf %174, %38 : vector<8x1xf32>
    %178 = arith.mulf %116, %106 : vector<8x1xf32>
    %179 = arith.mulf %121, %107 : vector<8x1xf32>
    %180 = arith.addf %178, %179 : vector<8x1xf32>
    %181 = arith.mulf %126, %108 : vector<8x1xf32>
    %182 = arith.addf %180, %181 : vector<8x1xf32>
    %183 = arith.mulf %131, %106 : vector<8x1xf32>
    %184 = arith.mulf %136, %107 : vector<8x1xf32>
    %185 = arith.addf %183, %184 : vector<8x1xf32>
    %186 = arith.mulf %141, %108 : vector<8x1xf32>
    %187 = arith.addf %185, %186 : vector<8x1xf32>
    %188 = arith.mulf %146, %106 : vector<8x1xf32>
    %189 = arith.mulf %151, %107 : vector<8x1xf32>
    %190 = arith.addf %188, %189 : vector<8x1xf32>
    %191 = arith.mulf %156, %108 : vector<8x1xf32>
    %192 = arith.addf %190, %191 : vector<8x1xf32>
    %193 = arith.subf %175, %182 : vector<8x1xf32>
    %194 = arith.subf %176, %187 : vector<8x1xf32>
    %195 = arith.subf %177, %192 : vector<8x1xf32>
    %c1_i32 = arith.constant 1 : i32
    %196 = vector.broadcast %c1_i32 : i32 to vector<1x16xi32>
    %197 = arith.cmpi eq, %26, %196 : vector<1x16xi32>
    %198 = arith.extui %197 : vector<1x16xi1> to vector<1x16xi32>
    %199 = arith.sitofp %198 : vector<1x16xi32> to vector<1x16xf32>
    %200 = vector.broadcast %116 : vector<8x1xf32> to vector<8x16xf32>
    %201 = vector.broadcast %199 : vector<1x16xf32> to vector<8x16xf32>
    %202 = arith.mulf %200, %201 : vector<8x16xf32>
    %203 = arith.addf %63, %202 : vector<8x16xf32>
    %204 = vector.broadcast %131 : vector<8x1xf32> to vector<8x16xf32>
    %205 = vector.broadcast %199 : vector<1x16xf32> to vector<8x16xf32>
    %206 = arith.mulf %204, %205 : vector<8x16xf32>
    %207 = arith.addf %66, %206 : vector<8x16xf32>
    %208 = vector.broadcast %146 : vector<8x1xf32> to vector<8x16xf32>
    %209 = vector.broadcast %199 : vector<1x16xf32> to vector<8x16xf32>
    %210 = arith.mulf %208, %209 : vector<8x16xf32>
    %211 = arith.addf %69, %210 : vector<8x16xf32>
    %212 = vector.broadcast %121 : vector<8x1xf32> to vector<8x16xf32>
    %213 = vector.broadcast %199 : vector<1x16xf32> to vector<8x16xf32>
    %214 = arith.mulf %212, %213 : vector<8x16xf32>
    %215 = arith.addf %72, %214 : vector<8x16xf32>
    %216 = vector.broadcast %136 : vector<8x1xf32> to vector<8x16xf32>
    %217 = vector.broadcast %199 : vector<1x16xf32> to vector<8x16xf32>
    %218 = arith.mulf %216, %217 : vector<8x16xf32>
    %219 = arith.addf %75, %218 : vector<8x16xf32>
    %220 = vector.broadcast %151 : vector<8x1xf32> to vector<8x16xf32>
    %221 = vector.broadcast %199 : vector<1x16xf32> to vector<8x16xf32>
    %222 = arith.mulf %220, %221 : vector<8x16xf32>
    %223 = arith.addf %78, %222 : vector<8x16xf32>
    %224 = vector.broadcast %126 : vector<8x1xf32> to vector<8x16xf32>
    %225 = vector.broadcast %199 : vector<1x16xf32> to vector<8x16xf32>
    %226 = arith.mulf %224, %225 : vector<8x16xf32>
    %227 = arith.addf %81, %226 : vector<8x16xf32>
    %228 = vector.broadcast %141 : vector<8x1xf32> to vector<8x16xf32>
    %229 = vector.broadcast %199 : vector<1x16xf32> to vector<8x16xf32>
    %230 = arith.mulf %228, %229 : vector<8x16xf32>
    %231 = arith.addf %84, %230 : vector<8x16xf32>
    %232 = vector.broadcast %156 : vector<8x1xf32> to vector<8x16xf32>
    %233 = vector.broadcast %199 : vector<1x16xf32> to vector<8x16xf32>
    %234 = arith.mulf %232, %233 : vector<8x16xf32>
    %235 = arith.addf %87, %234 : vector<8x16xf32>
    %236 = vector.broadcast %193 : vector<8x1xf32> to vector<8x16xf32>
    %237 = vector.broadcast %199 : vector<1x16xf32> to vector<8x16xf32>
    %238 = arith.mulf %236, %237 : vector<8x16xf32>
    %239 = arith.addf %90, %238 : vector<8x16xf32>
    %240 = vector.broadcast %194 : vector<8x1xf32> to vector<8x16xf32>
    %241 = vector.broadcast %199 : vector<1x16xf32> to vector<8x16xf32>
    %242 = arith.mulf %240, %241 : vector<8x16xf32>
    %243 = arith.addf %93, %242 : vector<8x16xf32>
    %244 = vector.broadcast %195 : vector<8x1xf32> to vector<8x16xf32>
    %245 = vector.broadcast %199 : vector<1x16xf32> to vector<8x16xf32>
    %246 = arith.mulf %244, %245 : vector<8x16xf32>
    %247 = arith.addf %96, %246 : vector<8x16xf32>
    %248 = vector.extract_strided_slice %25 {offsets = [0, 18], sizes = [8, 1], strides = [1, 1]} : vector<8x144xf32> to vector<8x1xf32>
    %249 = vector.extract_strided_slice %25 {offsets = [0, 19], sizes = [8, 1], strides = [1, 1]} : vector<8x144xf32> to vector<8x1xf32>
    %250 = vector.extract_strided_slice %25 {offsets = [0, 20], sizes = [8, 1], strides = [1, 1]} : vector<8x144xf32> to vector<8x1xf32>
    %251 = vector.extract_strided_slice %25 {offsets = [0, 21], sizes = [8, 1], strides = [1, 1]} : vector<8x144xf32> to vector<8x1xf32>
    %252 = vector.extract_strided_slice %25 {offsets = [0, 22], sizes = [8, 1], strides = [1, 1]} : vector<8x144xf32> to vector<8x1xf32>
    %253 = vector.extract_strided_slice %25 {offsets = [0, 23], sizes = [8, 1], strides = [1, 1]} : vector<8x144xf32> to vector<8x1xf32>
    %254 = vector.extract_strided_slice %25 {offsets = [0, 24], sizes = [8, 1], strides = [1, 1]} : vector<8x144xf32> to vector<8x1xf32>
    %255 = vector.extract_strided_slice %25 {offsets = [0, 25], sizes = [8, 1], strides = [1, 1]} : vector<8x144xf32> to vector<8x1xf32>
    %256 = vector.extract_strided_slice %25 {offsets = [0, 26], sizes = [8, 1], strides = [1, 1]} : vector<8x144xf32> to vector<8x1xf32>
    %257 = vector.extract_strided_slice %16 {offsets = [0, 2], sizes = [8, 1], strides = [1, 1]} : vector<8x16xf32> to vector<8x1xf32>
    %258 = vector.extract_strided_slice %20 {offsets = [0, 2], sizes = [8, 1], strides = [1, 1]} : vector<8x16xf32> to vector<8x1xf32>
    %259 = vector.extract_strided_slice %24 {offsets = [0, 2], sizes = [8, 1], strides = [1, 1]} : vector<8x16xf32> to vector<8x1xf32>
    %260 = vector.extract_strided_slice %16 {offsets = [0, 1], sizes = [8, 1], strides = [1, 1]} : vector<8x16xf32> to vector<8x1xf32>
    %261 = vector.extract_strided_slice %20 {offsets = [0, 1], sizes = [8, 1], strides = [1, 1]} : vector<8x16xf32> to vector<8x1xf32>
    %262 = vector.extract_strided_slice %24 {offsets = [0, 1], sizes = [8, 1], strides = [1, 1]} : vector<8x16xf32> to vector<8x1xf32>
    %263 = arith.mulf %116, %248 : vector<8x1xf32>
    %264 = arith.mulf %121, %251 : vector<8x1xf32>
    %265 = arith.addf %263, %264 : vector<8x1xf32>
    %266 = arith.mulf %126, %254 : vector<8x1xf32>
    %267 = arith.addf %265, %266 : vector<8x1xf32>
    %268 = arith.mulf %116, %249 : vector<8x1xf32>
    %269 = arith.mulf %121, %252 : vector<8x1xf32>
    %270 = arith.addf %268, %269 : vector<8x1xf32>
    %271 = arith.mulf %126, %255 : vector<8x1xf32>
    %272 = arith.addf %270, %271 : vector<8x1xf32>
    %273 = arith.mulf %116, %250 : vector<8x1xf32>
    %274 = arith.mulf %121, %253 : vector<8x1xf32>
    %275 = arith.addf %273, %274 : vector<8x1xf32>
    %276 = arith.mulf %126, %256 : vector<8x1xf32>
    %277 = arith.addf %275, %276 : vector<8x1xf32>
    %278 = arith.mulf %131, %248 : vector<8x1xf32>
    %279 = arith.mulf %136, %251 : vector<8x1xf32>
    %280 = arith.addf %278, %279 : vector<8x1xf32>
    %281 = arith.mulf %141, %254 : vector<8x1xf32>
    %282 = arith.addf %280, %281 : vector<8x1xf32>
    %283 = arith.mulf %131, %249 : vector<8x1xf32>
    %284 = arith.mulf %136, %252 : vector<8x1xf32>
    %285 = arith.addf %283, %284 : vector<8x1xf32>
    %286 = arith.mulf %141, %255 : vector<8x1xf32>
    %287 = arith.addf %285, %286 : vector<8x1xf32>
    %288 = arith.mulf %131, %250 : vector<8x1xf32>
    %289 = arith.mulf %136, %253 : vector<8x1xf32>
    %290 = arith.addf %288, %289 : vector<8x1xf32>
    %291 = arith.mulf %141, %256 : vector<8x1xf32>
    %292 = arith.addf %290, %291 : vector<8x1xf32>
    %293 = arith.mulf %146, %248 : vector<8x1xf32>
    %294 = arith.mulf %151, %251 : vector<8x1xf32>
    %295 = arith.addf %293, %294 : vector<8x1xf32>
    %296 = arith.mulf %156, %254 : vector<8x1xf32>
    %297 = arith.addf %295, %296 : vector<8x1xf32>
    %298 = arith.mulf %146, %249 : vector<8x1xf32>
    %299 = arith.mulf %151, %252 : vector<8x1xf32>
    %300 = arith.addf %298, %299 : vector<8x1xf32>
    %301 = arith.mulf %156, %255 : vector<8x1xf32>
    %302 = arith.addf %300, %301 : vector<8x1xf32>
    %303 = arith.mulf %146, %250 : vector<8x1xf32>
    %304 = arith.mulf %151, %253 : vector<8x1xf32>
    %305 = arith.addf %303, %304 : vector<8x1xf32>
    %306 = arith.mulf %156, %256 : vector<8x1xf32>
    %307 = arith.addf %305, %306 : vector<8x1xf32>
    %308 = arith.subf %257, %260 : vector<8x1xf32>
    %309 = arith.subf %258, %261 : vector<8x1xf32>
    %310 = arith.subf %259, %262 : vector<8x1xf32>
    %311 = arith.mulf %116, %308 : vector<8x1xf32>
    %312 = arith.mulf %121, %309 : vector<8x1xf32>
    %313 = arith.addf %311, %312 : vector<8x1xf32>
    %314 = arith.mulf %126, %310 : vector<8x1xf32>
    %315 = arith.addf %313, %314 : vector<8x1xf32>
    %316 = arith.mulf %131, %308 : vector<8x1xf32>
    %317 = arith.mulf %136, %309 : vector<8x1xf32>
    %318 = arith.addf %316, %317 : vector<8x1xf32>
    %319 = arith.mulf %141, %310 : vector<8x1xf32>
    %320 = arith.addf %318, %319 : vector<8x1xf32>
    %321 = arith.mulf %146, %308 : vector<8x1xf32>
    %322 = arith.mulf %151, %309 : vector<8x1xf32>
    %323 = arith.addf %321, %322 : vector<8x1xf32>
    %324 = arith.mulf %156, %310 : vector<8x1xf32>
    %325 = arith.addf %323, %324 : vector<8x1xf32>
    %326 = arith.addf %315, %175 : vector<8x1xf32>
    %327 = arith.addf %320, %176 : vector<8x1xf32>
    %328 = arith.addf %325, %177 : vector<8x1xf32>
    %329 = arith.mulf %267, %257 : vector<8x1xf32>
    %330 = arith.mulf %272, %258 : vector<8x1xf32>
    %331 = arith.addf %329, %330 : vector<8x1xf32>
    %332 = arith.mulf %277, %259 : vector<8x1xf32>
    %333 = arith.addf %331, %332 : vector<8x1xf32>
    %334 = arith.mulf %282, %257 : vector<8x1xf32>
    %335 = arith.mulf %287, %258 : vector<8x1xf32>
    %336 = arith.addf %334, %335 : vector<8x1xf32>
    %337 = arith.mulf %292, %259 : vector<8x1xf32>
    %338 = arith.addf %336, %337 : vector<8x1xf32>
    %339 = arith.mulf %297, %257 : vector<8x1xf32>
    %340 = arith.mulf %302, %258 : vector<8x1xf32>
    %341 = arith.addf %339, %340 : vector<8x1xf32>
    %342 = arith.mulf %307, %259 : vector<8x1xf32>
    %343 = arith.addf %341, %342 : vector<8x1xf32>
    %344 = arith.subf %326, %333 : vector<8x1xf32>
    %345 = arith.subf %327, %338 : vector<8x1xf32>
    %346 = arith.subf %328, %343 : vector<8x1xf32>
    %c2_i32 = arith.constant 2 : i32
    %347 = vector.broadcast %c2_i32 : i32 to vector<1x16xi32>
    %348 = arith.cmpi eq, %26, %347 : vector<1x16xi32>
    %349 = arith.extui %348 : vector<1x16xi1> to vector<1x16xi32>
    %350 = arith.sitofp %349 : vector<1x16xi32> to vector<1x16xf32>
    %351 = vector.broadcast %267 : vector<8x1xf32> to vector<8x16xf32>
    %352 = vector.broadcast %350 : vector<1x16xf32> to vector<8x16xf32>
    %353 = arith.mulf %351, %352 : vector<8x16xf32>
    %354 = arith.addf %203, %353 : vector<8x16xf32>
    %355 = vector.broadcast %282 : vector<8x1xf32> to vector<8x16xf32>
    %356 = vector.broadcast %350 : vector<1x16xf32> to vector<8x16xf32>
    %357 = arith.mulf %355, %356 : vector<8x16xf32>
    %358 = arith.addf %207, %357 : vector<8x16xf32>
    %359 = vector.broadcast %297 : vector<8x1xf32> to vector<8x16xf32>
    %360 = vector.broadcast %350 : vector<1x16xf32> to vector<8x16xf32>
    %361 = arith.mulf %359, %360 : vector<8x16xf32>
    %362 = arith.addf %211, %361 : vector<8x16xf32>
    %363 = vector.broadcast %272 : vector<8x1xf32> to vector<8x16xf32>
    %364 = vector.broadcast %350 : vector<1x16xf32> to vector<8x16xf32>
    %365 = arith.mulf %363, %364 : vector<8x16xf32>
    %366 = arith.addf %215, %365 : vector<8x16xf32>
    %367 = vector.broadcast %287 : vector<8x1xf32> to vector<8x16xf32>
    %368 = vector.broadcast %350 : vector<1x16xf32> to vector<8x16xf32>
    %369 = arith.mulf %367, %368 : vector<8x16xf32>
    %370 = arith.addf %219, %369 : vector<8x16xf32>
    %371 = vector.broadcast %302 : vector<8x1xf32> to vector<8x16xf32>
    %372 = vector.broadcast %350 : vector<1x16xf32> to vector<8x16xf32>
    %373 = arith.mulf %371, %372 : vector<8x16xf32>
    %374 = arith.addf %223, %373 : vector<8x16xf32>
    %375 = vector.broadcast %277 : vector<8x1xf32> to vector<8x16xf32>
    %376 = vector.broadcast %350 : vector<1x16xf32> to vector<8x16xf32>
    %377 = arith.mulf %375, %376 : vector<8x16xf32>
    %378 = arith.addf %227, %377 : vector<8x16xf32>
    %379 = vector.broadcast %292 : vector<8x1xf32> to vector<8x16xf32>
    %380 = vector.broadcast %350 : vector<1x16xf32> to vector<8x16xf32>
    %381 = arith.mulf %379, %380 : vector<8x16xf32>
    %382 = arith.addf %231, %381 : vector<8x16xf32>
    %383 = vector.broadcast %307 : vector<8x1xf32> to vector<8x16xf32>
    %384 = vector.broadcast %350 : vector<1x16xf32> to vector<8x16xf32>
    %385 = arith.mulf %383, %384 : vector<8x16xf32>
    %386 = arith.addf %235, %385 : vector<8x16xf32>
    %387 = vector.broadcast %344 : vector<8x1xf32> to vector<8x16xf32>
    %388 = vector.broadcast %350 : vector<1x16xf32> to vector<8x16xf32>
    %389 = arith.mulf %387, %388 : vector<8x16xf32>
    %390 = arith.addf %239, %389 : vector<8x16xf32>
    %391 = vector.broadcast %345 : vector<8x1xf32> to vector<8x16xf32>
    %392 = vector.broadcast %350 : vector<1x16xf32> to vector<8x16xf32>
    %393 = arith.mulf %391, %392 : vector<8x16xf32>
    %394 = arith.addf %243, %393 : vector<8x16xf32>
    %395 = vector.broadcast %346 : vector<8x1xf32> to vector<8x16xf32>
    %396 = vector.broadcast %350 : vector<1x16xf32> to vector<8x16xf32>
    %397 = arith.mulf %395, %396 : vector<8x16xf32>
    %398 = arith.addf %247, %397 : vector<8x16xf32>
    %399 = vector.extract_strided_slice %25 {offsets = [0, 27], sizes = [8, 1], strides = [1, 1]} : vector<8x144xf32> to vector<8x1xf32>
    %400 = vector.extract_strided_slice %25 {offsets = [0, 28], sizes = [8, 1], strides = [1, 1]} : vector<8x144xf32> to vector<8x1xf32>
    %401 = vector.extract_strided_slice %25 {offsets = [0, 29], sizes = [8, 1], strides = [1, 1]} : vector<8x144xf32> to vector<8x1xf32>
    %402 = vector.extract_strided_slice %25 {offsets = [0, 30], sizes = [8, 1], strides = [1, 1]} : vector<8x144xf32> to vector<8x1xf32>
    %403 = vector.extract_strided_slice %25 {offsets = [0, 31], sizes = [8, 1], strides = [1, 1]} : vector<8x144xf32> to vector<8x1xf32>
    %404 = vector.extract_strided_slice %25 {offsets = [0, 32], sizes = [8, 1], strides = [1, 1]} : vector<8x144xf32> to vector<8x1xf32>
    %405 = vector.extract_strided_slice %25 {offsets = [0, 33], sizes = [8, 1], strides = [1, 1]} : vector<8x144xf32> to vector<8x1xf32>
    %406 = vector.extract_strided_slice %25 {offsets = [0, 34], sizes = [8, 1], strides = [1, 1]} : vector<8x144xf32> to vector<8x1xf32>
    %407 = vector.extract_strided_slice %25 {offsets = [0, 35], sizes = [8, 1], strides = [1, 1]} : vector<8x144xf32> to vector<8x1xf32>
    %408 = vector.extract_strided_slice %16 {offsets = [0, 3], sizes = [8, 1], strides = [1, 1]} : vector<8x16xf32> to vector<8x1xf32>
    %409 = vector.extract_strided_slice %20 {offsets = [0, 3], sizes = [8, 1], strides = [1, 1]} : vector<8x16xf32> to vector<8x1xf32>
    %410 = vector.extract_strided_slice %24 {offsets = [0, 3], sizes = [8, 1], strides = [1, 1]} : vector<8x16xf32> to vector<8x1xf32>
    %411 = vector.extract_strided_slice %16 {offsets = [0, 2], sizes = [8, 1], strides = [1, 1]} : vector<8x16xf32> to vector<8x1xf32>
    %412 = vector.extract_strided_slice %20 {offsets = [0, 2], sizes = [8, 1], strides = [1, 1]} : vector<8x16xf32> to vector<8x1xf32>
    %413 = vector.extract_strided_slice %24 {offsets = [0, 2], sizes = [8, 1], strides = [1, 1]} : vector<8x16xf32> to vector<8x1xf32>
    %414 = arith.mulf %267, %399 : vector<8x1xf32>
    %415 = arith.mulf %272, %402 : vector<8x1xf32>
    %416 = arith.addf %414, %415 : vector<8x1xf32>
    %417 = arith.mulf %277, %405 : vector<8x1xf32>
    %418 = arith.addf %416, %417 : vector<8x1xf32>
    %419 = arith.mulf %267, %400 : vector<8x1xf32>
    %420 = arith.mulf %272, %403 : vector<8x1xf32>
    %421 = arith.addf %419, %420 : vector<8x1xf32>
    %422 = arith.mulf %277, %406 : vector<8x1xf32>
    %423 = arith.addf %421, %422 : vector<8x1xf32>
    %424 = arith.mulf %267, %401 : vector<8x1xf32>
    %425 = arith.mulf %272, %404 : vector<8x1xf32>
    %426 = arith.addf %424, %425 : vector<8x1xf32>
    %427 = arith.mulf %277, %407 : vector<8x1xf32>
    %428 = arith.addf %426, %427 : vector<8x1xf32>
    %429 = arith.mulf %282, %399 : vector<8x1xf32>
    %430 = arith.mulf %287, %402 : vector<8x1xf32>
    %431 = arith.addf %429, %430 : vector<8x1xf32>
    %432 = arith.mulf %292, %405 : vector<8x1xf32>
    %433 = arith.addf %431, %432 : vector<8x1xf32>
    %434 = arith.mulf %282, %400 : vector<8x1xf32>
    %435 = arith.mulf %287, %403 : vector<8x1xf32>
    %436 = arith.addf %434, %435 : vector<8x1xf32>
    %437 = arith.mulf %292, %406 : vector<8x1xf32>
    %438 = arith.addf %436, %437 : vector<8x1xf32>
    %439 = arith.mulf %282, %401 : vector<8x1xf32>
    %440 = arith.mulf %287, %404 : vector<8x1xf32>
    %441 = arith.addf %439, %440 : vector<8x1xf32>
    %442 = arith.mulf %292, %407 : vector<8x1xf32>
    %443 = arith.addf %441, %442 : vector<8x1xf32>
    %444 = arith.mulf %297, %399 : vector<8x1xf32>
    %445 = arith.mulf %302, %402 : vector<8x1xf32>
    %446 = arith.addf %444, %445 : vector<8x1xf32>
    %447 = arith.mulf %307, %405 : vector<8x1xf32>
    %448 = arith.addf %446, %447 : vector<8x1xf32>
    %449 = arith.mulf %297, %400 : vector<8x1xf32>
    %450 = arith.mulf %302, %403 : vector<8x1xf32>
    %451 = arith.addf %449, %450 : vector<8x1xf32>
    %452 = arith.mulf %307, %406 : vector<8x1xf32>
    %453 = arith.addf %451, %452 : vector<8x1xf32>
    %454 = arith.mulf %297, %401 : vector<8x1xf32>
    %455 = arith.mulf %302, %404 : vector<8x1xf32>
    %456 = arith.addf %454, %455 : vector<8x1xf32>
    %457 = arith.mulf %307, %407 : vector<8x1xf32>
    %458 = arith.addf %456, %457 : vector<8x1xf32>
    %459 = arith.subf %408, %411 : vector<8x1xf32>
    %460 = arith.subf %409, %412 : vector<8x1xf32>
    %461 = arith.subf %410, %413 : vector<8x1xf32>
    %462 = arith.mulf %267, %459 : vector<8x1xf32>
    %463 = arith.mulf %272, %460 : vector<8x1xf32>
    %464 = arith.addf %462, %463 : vector<8x1xf32>
    %465 = arith.mulf %277, %461 : vector<8x1xf32>
    %466 = arith.addf %464, %465 : vector<8x1xf32>
    %467 = arith.mulf %282, %459 : vector<8x1xf32>
    %468 = arith.mulf %287, %460 : vector<8x1xf32>
    %469 = arith.addf %467, %468 : vector<8x1xf32>
    %470 = arith.mulf %292, %461 : vector<8x1xf32>
    %471 = arith.addf %469, %470 : vector<8x1xf32>
    %472 = arith.mulf %297, %459 : vector<8x1xf32>
    %473 = arith.mulf %302, %460 : vector<8x1xf32>
    %474 = arith.addf %472, %473 : vector<8x1xf32>
    %475 = arith.mulf %307, %461 : vector<8x1xf32>
    %476 = arith.addf %474, %475 : vector<8x1xf32>
    %477 = arith.addf %466, %326 : vector<8x1xf32>
    %478 = arith.addf %471, %327 : vector<8x1xf32>
    %479 = arith.addf %476, %328 : vector<8x1xf32>
    %480 = arith.mulf %418, %408 : vector<8x1xf32>
    %481 = arith.mulf %423, %409 : vector<8x1xf32>
    %482 = arith.addf %480, %481 : vector<8x1xf32>
    %483 = arith.mulf %428, %410 : vector<8x1xf32>
    %484 = arith.addf %482, %483 : vector<8x1xf32>
    %485 = arith.mulf %433, %408 : vector<8x1xf32>
    %486 = arith.mulf %438, %409 : vector<8x1xf32>
    %487 = arith.addf %485, %486 : vector<8x1xf32>
    %488 = arith.mulf %443, %410 : vector<8x1xf32>
    %489 = arith.addf %487, %488 : vector<8x1xf32>
    %490 = arith.mulf %448, %408 : vector<8x1xf32>
    %491 = arith.mulf %453, %409 : vector<8x1xf32>
    %492 = arith.addf %490, %491 : vector<8x1xf32>
    %493 = arith.mulf %458, %410 : vector<8x1xf32>
    %494 = arith.addf %492, %493 : vector<8x1xf32>
    %495 = arith.subf %477, %484 : vector<8x1xf32>
    %496 = arith.subf %478, %489 : vector<8x1xf32>
    %497 = arith.subf %479, %494 : vector<8x1xf32>
    %c3_i32 = arith.constant 3 : i32
    %498 = vector.broadcast %c3_i32 : i32 to vector<1x16xi32>
    %499 = arith.cmpi eq, %26, %498 : vector<1x16xi32>
    %500 = arith.extui %499 : vector<1x16xi1> to vector<1x16xi32>
    %501 = arith.sitofp %500 : vector<1x16xi32> to vector<1x16xf32>
    %502 = vector.broadcast %418 : vector<8x1xf32> to vector<8x16xf32>
    %503 = vector.broadcast %501 : vector<1x16xf32> to vector<8x16xf32>
    %504 = arith.mulf %502, %503 : vector<8x16xf32>
    %505 = arith.addf %354, %504 : vector<8x16xf32>
    %506 = vector.broadcast %433 : vector<8x1xf32> to vector<8x16xf32>
    %507 = vector.broadcast %501 : vector<1x16xf32> to vector<8x16xf32>
    %508 = arith.mulf %506, %507 : vector<8x16xf32>
    %509 = arith.addf %358, %508 : vector<8x16xf32>
    %510 = vector.broadcast %448 : vector<8x1xf32> to vector<8x16xf32>
    %511 = vector.broadcast %501 : vector<1x16xf32> to vector<8x16xf32>
    %512 = arith.mulf %510, %511 : vector<8x16xf32>
    %513 = arith.addf %362, %512 : vector<8x16xf32>
    %514 = vector.broadcast %423 : vector<8x1xf32> to vector<8x16xf32>
    %515 = vector.broadcast %501 : vector<1x16xf32> to vector<8x16xf32>
    %516 = arith.mulf %514, %515 : vector<8x16xf32>
    %517 = arith.addf %366, %516 : vector<8x16xf32>
    %518 = vector.broadcast %438 : vector<8x1xf32> to vector<8x16xf32>
    %519 = vector.broadcast %501 : vector<1x16xf32> to vector<8x16xf32>
    %520 = arith.mulf %518, %519 : vector<8x16xf32>
    %521 = arith.addf %370, %520 : vector<8x16xf32>
    %522 = vector.broadcast %453 : vector<8x1xf32> to vector<8x16xf32>
    %523 = vector.broadcast %501 : vector<1x16xf32> to vector<8x16xf32>
    %524 = arith.mulf %522, %523 : vector<8x16xf32>
    %525 = arith.addf %374, %524 : vector<8x16xf32>
    %526 = vector.broadcast %428 : vector<8x1xf32> to vector<8x16xf32>
    %527 = vector.broadcast %501 : vector<1x16xf32> to vector<8x16xf32>
    %528 = arith.mulf %526, %527 : vector<8x16xf32>
    %529 = arith.addf %378, %528 : vector<8x16xf32>
    %530 = vector.broadcast %443 : vector<8x1xf32> to vector<8x16xf32>
    %531 = vector.broadcast %501 : vector<1x16xf32> to vector<8x16xf32>
    %532 = arith.mulf %530, %531 : vector<8x16xf32>
    %533 = arith.addf %382, %532 : vector<8x16xf32>
    %534 = vector.broadcast %458 : vector<8x1xf32> to vector<8x16xf32>
    %535 = vector.broadcast %501 : vector<1x16xf32> to vector<8x16xf32>
    %536 = arith.mulf %534, %535 : vector<8x16xf32>
    %537 = arith.addf %386, %536 : vector<8x16xf32>
    %538 = vector.broadcast %495 : vector<8x1xf32> to vector<8x16xf32>
    %539 = vector.broadcast %501 : vector<1x16xf32> to vector<8x16xf32>
    %540 = arith.mulf %538, %539 : vector<8x16xf32>
    %541 = arith.addf %390, %540 : vector<8x16xf32>
    %542 = vector.broadcast %496 : vector<8x1xf32> to vector<8x16xf32>
    %543 = vector.broadcast %501 : vector<1x16xf32> to vector<8x16xf32>
    %544 = arith.mulf %542, %543 : vector<8x16xf32>
    %545 = arith.addf %394, %544 : vector<8x16xf32>
    %546 = vector.broadcast %497 : vector<8x1xf32> to vector<8x16xf32>
    %547 = vector.broadcast %501 : vector<1x16xf32> to vector<8x16xf32>
    %548 = arith.mulf %546, %547 : vector<8x16xf32>
    %549 = arith.addf %398, %548 : vector<8x16xf32>
    %550 = vector.extract_strided_slice %25 {offsets = [0, 36], sizes = [8, 1], strides = [1, 1]} : vector<8x144xf32> to vector<8x1xf32>
    %551 = vector.extract_strided_slice %25 {offsets = [0, 37], sizes = [8, 1], strides = [1, 1]} : vector<8x144xf32> to vector<8x1xf32>
    %552 = vector.extract_strided_slice %25 {offsets = [0, 38], sizes = [8, 1], strides = [1, 1]} : vector<8x144xf32> to vector<8x1xf32>
    %553 = vector.extract_strided_slice %25 {offsets = [0, 39], sizes = [8, 1], strides = [1, 1]} : vector<8x144xf32> to vector<8x1xf32>
    %554 = vector.extract_strided_slice %25 {offsets = [0, 40], sizes = [8, 1], strides = [1, 1]} : vector<8x144xf32> to vector<8x1xf32>
    %555 = vector.extract_strided_slice %25 {offsets = [0, 41], sizes = [8, 1], strides = [1, 1]} : vector<8x144xf32> to vector<8x1xf32>
    %556 = vector.extract_strided_slice %25 {offsets = [0, 42], sizes = [8, 1], strides = [1, 1]} : vector<8x144xf32> to vector<8x1xf32>
    %557 = vector.extract_strided_slice %25 {offsets = [0, 43], sizes = [8, 1], strides = [1, 1]} : vector<8x144xf32> to vector<8x1xf32>
    %558 = vector.extract_strided_slice %25 {offsets = [0, 44], sizes = [8, 1], strides = [1, 1]} : vector<8x144xf32> to vector<8x1xf32>
    %559 = vector.extract_strided_slice %16 {offsets = [0, 4], sizes = [8, 1], strides = [1, 1]} : vector<8x16xf32> to vector<8x1xf32>
    %560 = vector.extract_strided_slice %20 {offsets = [0, 4], sizes = [8, 1], strides = [1, 1]} : vector<8x16xf32> to vector<8x1xf32>
    %561 = vector.extract_strided_slice %24 {offsets = [0, 4], sizes = [8, 1], strides = [1, 1]} : vector<8x16xf32> to vector<8x1xf32>
    %562 = vector.extract_strided_slice %16 {offsets = [0, 0], sizes = [8, 1], strides = [1, 1]} : vector<8x16xf32> to vector<8x1xf32>
    %563 = vector.extract_strided_slice %20 {offsets = [0, 0], sizes = [8, 1], strides = [1, 1]} : vector<8x16xf32> to vector<8x1xf32>
    %564 = vector.extract_strided_slice %24 {offsets = [0, 0], sizes = [8, 1], strides = [1, 1]} : vector<8x16xf32> to vector<8x1xf32>
    %565 = arith.mulf %27, %550 : vector<8x1xf32>
    %566 = arith.mulf %28, %553 : vector<8x1xf32>
    %567 = arith.addf %565, %566 : vector<8x1xf32>
    %568 = arith.mulf %29, %556 : vector<8x1xf32>
    %569 = arith.addf %567, %568 : vector<8x1xf32>
    %570 = arith.mulf %27, %551 : vector<8x1xf32>
    %571 = arith.mulf %28, %554 : vector<8x1xf32>
    %572 = arith.addf %570, %571 : vector<8x1xf32>
    %573 = arith.mulf %29, %557 : vector<8x1xf32>
    %574 = arith.addf %572, %573 : vector<8x1xf32>
    %575 = arith.mulf %27, %552 : vector<8x1xf32>
    %576 = arith.mulf %28, %555 : vector<8x1xf32>
    %577 = arith.addf %575, %576 : vector<8x1xf32>
    %578 = arith.mulf %29, %558 : vector<8x1xf32>
    %579 = arith.addf %577, %578 : vector<8x1xf32>
    %580 = arith.mulf %30, %550 : vector<8x1xf32>
    %581 = arith.mulf %31, %553 : vector<8x1xf32>
    %582 = arith.addf %580, %581 : vector<8x1xf32>
    %583 = arith.mulf %32, %556 : vector<8x1xf32>
    %584 = arith.addf %582, %583 : vector<8x1xf32>
    %585 = arith.mulf %30, %551 : vector<8x1xf32>
    %586 = arith.mulf %31, %554 : vector<8x1xf32>
    %587 = arith.addf %585, %586 : vector<8x1xf32>
    %588 = arith.mulf %32, %557 : vector<8x1xf32>
    %589 = arith.addf %587, %588 : vector<8x1xf32>
    %590 = arith.mulf %30, %552 : vector<8x1xf32>
    %591 = arith.mulf %31, %555 : vector<8x1xf32>
    %592 = arith.addf %590, %591 : vector<8x1xf32>
    %593 = arith.mulf %32, %558 : vector<8x1xf32>
    %594 = arith.addf %592, %593 : vector<8x1xf32>
    %595 = arith.mulf %33, %550 : vector<8x1xf32>
    %596 = arith.mulf %34, %553 : vector<8x1xf32>
    %597 = arith.addf %595, %596 : vector<8x1xf32>
    %598 = arith.mulf %35, %556 : vector<8x1xf32>
    %599 = arith.addf %597, %598 : vector<8x1xf32>
    %600 = arith.mulf %33, %551 : vector<8x1xf32>
    %601 = arith.mulf %34, %554 : vector<8x1xf32>
    %602 = arith.addf %600, %601 : vector<8x1xf32>
    %603 = arith.mulf %35, %557 : vector<8x1xf32>
    %604 = arith.addf %602, %603 : vector<8x1xf32>
    %605 = arith.mulf %33, %552 : vector<8x1xf32>
    %606 = arith.mulf %34, %555 : vector<8x1xf32>
    %607 = arith.addf %605, %606 : vector<8x1xf32>
    %608 = arith.mulf %35, %558 : vector<8x1xf32>
    %609 = arith.addf %607, %608 : vector<8x1xf32>
    %610 = arith.subf %559, %562 : vector<8x1xf32>
    %611 = arith.subf %560, %563 : vector<8x1xf32>
    %612 = arith.subf %561, %564 : vector<8x1xf32>
    %613 = arith.mulf %27, %610 : vector<8x1xf32>
    %614 = arith.mulf %28, %611 : vector<8x1xf32>
    %615 = arith.addf %613, %614 : vector<8x1xf32>
    %616 = arith.mulf %29, %612 : vector<8x1xf32>
    %617 = arith.addf %615, %616 : vector<8x1xf32>
    %618 = arith.mulf %30, %610 : vector<8x1xf32>
    %619 = arith.mulf %31, %611 : vector<8x1xf32>
    %620 = arith.addf %618, %619 : vector<8x1xf32>
    %621 = arith.mulf %32, %612 : vector<8x1xf32>
    %622 = arith.addf %620, %621 : vector<8x1xf32>
    %623 = arith.mulf %33, %610 : vector<8x1xf32>
    %624 = arith.mulf %34, %611 : vector<8x1xf32>
    %625 = arith.addf %623, %624 : vector<8x1xf32>
    %626 = arith.mulf %35, %612 : vector<8x1xf32>
    %627 = arith.addf %625, %626 : vector<8x1xf32>
    %628 = arith.addf %617, %36 : vector<8x1xf32>
    %629 = arith.addf %622, %37 : vector<8x1xf32>
    %630 = arith.addf %627, %38 : vector<8x1xf32>
    %631 = arith.mulf %569, %559 : vector<8x1xf32>
    %632 = arith.mulf %574, %560 : vector<8x1xf32>
    %633 = arith.addf %631, %632 : vector<8x1xf32>
    %634 = arith.mulf %579, %561 : vector<8x1xf32>
    %635 = arith.addf %633, %634 : vector<8x1xf32>
    %636 = arith.mulf %584, %559 : vector<8x1xf32>
    %637 = arith.mulf %589, %560 : vector<8x1xf32>
    %638 = arith.addf %636, %637 : vector<8x1xf32>
    %639 = arith.mulf %594, %561 : vector<8x1xf32>
    %640 = arith.addf %638, %639 : vector<8x1xf32>
    %641 = arith.mulf %599, %559 : vector<8x1xf32>
    %642 = arith.mulf %604, %560 : vector<8x1xf32>
    %643 = arith.addf %641, %642 : vector<8x1xf32>
    %644 = arith.mulf %609, %561 : vector<8x1xf32>
    %645 = arith.addf %643, %644 : vector<8x1xf32>
    %646 = arith.subf %628, %635 : vector<8x1xf32>
    %647 = arith.subf %629, %640 : vector<8x1xf32>
    %648 = arith.subf %630, %645 : vector<8x1xf32>
    %c4_i32 = arith.constant 4 : i32
    %649 = vector.broadcast %c4_i32 : i32 to vector<1x16xi32>
    %650 = arith.cmpi eq, %26, %649 : vector<1x16xi32>
    %651 = arith.extui %650 : vector<1x16xi1> to vector<1x16xi32>
    %652 = arith.sitofp %651 : vector<1x16xi32> to vector<1x16xf32>
    %653 = vector.broadcast %569 : vector<8x1xf32> to vector<8x16xf32>
    %654 = vector.broadcast %652 : vector<1x16xf32> to vector<8x16xf32>
    %655 = arith.mulf %653, %654 : vector<8x16xf32>
    %656 = arith.addf %505, %655 : vector<8x16xf32>
    %657 = vector.broadcast %584 : vector<8x1xf32> to vector<8x16xf32>
    %658 = vector.broadcast %652 : vector<1x16xf32> to vector<8x16xf32>
    %659 = arith.mulf %657, %658 : vector<8x16xf32>
    %660 = arith.addf %509, %659 : vector<8x16xf32>
    %661 = vector.broadcast %599 : vector<8x1xf32> to vector<8x16xf32>
    %662 = vector.broadcast %652 : vector<1x16xf32> to vector<8x16xf32>
    %663 = arith.mulf %661, %662 : vector<8x16xf32>
    %664 = arith.addf %513, %663 : vector<8x16xf32>
    %665 = vector.broadcast %574 : vector<8x1xf32> to vector<8x16xf32>
    %666 = vector.broadcast %652 : vector<1x16xf32> to vector<8x16xf32>
    %667 = arith.mulf %665, %666 : vector<8x16xf32>
    %668 = arith.addf %517, %667 : vector<8x16xf32>
    %669 = vector.broadcast %589 : vector<8x1xf32> to vector<8x16xf32>
    %670 = vector.broadcast %652 : vector<1x16xf32> to vector<8x16xf32>
    %671 = arith.mulf %669, %670 : vector<8x16xf32>
    %672 = arith.addf %521, %671 : vector<8x16xf32>
    %673 = vector.broadcast %604 : vector<8x1xf32> to vector<8x16xf32>
    %674 = vector.broadcast %652 : vector<1x16xf32> to vector<8x16xf32>
    %675 = arith.mulf %673, %674 : vector<8x16xf32>
    %676 = arith.addf %525, %675 : vector<8x16xf32>
    %677 = vector.broadcast %579 : vector<8x1xf32> to vector<8x16xf32>
    %678 = vector.broadcast %652 : vector<1x16xf32> to vector<8x16xf32>
    %679 = arith.mulf %677, %678 : vector<8x16xf32>
    %680 = arith.addf %529, %679 : vector<8x16xf32>
    %681 = vector.broadcast %594 : vector<8x1xf32> to vector<8x16xf32>
    %682 = vector.broadcast %652 : vector<1x16xf32> to vector<8x16xf32>
    %683 = arith.mulf %681, %682 : vector<8x16xf32>
    %684 = arith.addf %533, %683 : vector<8x16xf32>
    %685 = vector.broadcast %609 : vector<8x1xf32> to vector<8x16xf32>
    %686 = vector.broadcast %652 : vector<1x16xf32> to vector<8x16xf32>
    %687 = arith.mulf %685, %686 : vector<8x16xf32>
    %688 = arith.addf %537, %687 : vector<8x16xf32>
    %689 = vector.broadcast %646 : vector<8x1xf32> to vector<8x16xf32>
    %690 = vector.broadcast %652 : vector<1x16xf32> to vector<8x16xf32>
    %691 = arith.mulf %689, %690 : vector<8x16xf32>
    %692 = arith.addf %541, %691 : vector<8x16xf32>
    %693 = vector.broadcast %647 : vector<8x1xf32> to vector<8x16xf32>
    %694 = vector.broadcast %652 : vector<1x16xf32> to vector<8x16xf32>
    %695 = arith.mulf %693, %694 : vector<8x16xf32>
    %696 = arith.addf %545, %695 : vector<8x16xf32>
    %697 = vector.broadcast %648 : vector<8x1xf32> to vector<8x16xf32>
    %698 = vector.broadcast %652 : vector<1x16xf32> to vector<8x16xf32>
    %699 = arith.mulf %697, %698 : vector<8x16xf32>
    %700 = arith.addf %549, %699 : vector<8x16xf32>
    %701 = vector.extract_strided_slice %25 {offsets = [0, 45], sizes = [8, 1], strides = [1, 1]} : vector<8x144xf32> to vector<8x1xf32>
    %702 = vector.extract_strided_slice %25 {offsets = [0, 46], sizes = [8, 1], strides = [1, 1]} : vector<8x144xf32> to vector<8x1xf32>
    %703 = vector.extract_strided_slice %25 {offsets = [0, 47], sizes = [8, 1], strides = [1, 1]} : vector<8x144xf32> to vector<8x1xf32>
    %704 = vector.extract_strided_slice %25 {offsets = [0, 48], sizes = [8, 1], strides = [1, 1]} : vector<8x144xf32> to vector<8x1xf32>
    %705 = vector.extract_strided_slice %25 {offsets = [0, 49], sizes = [8, 1], strides = [1, 1]} : vector<8x144xf32> to vector<8x1xf32>
    %706 = vector.extract_strided_slice %25 {offsets = [0, 50], sizes = [8, 1], strides = [1, 1]} : vector<8x144xf32> to vector<8x1xf32>
    %707 = vector.extract_strided_slice %25 {offsets = [0, 51], sizes = [8, 1], strides = [1, 1]} : vector<8x144xf32> to vector<8x1xf32>
    %708 = vector.extract_strided_slice %25 {offsets = [0, 52], sizes = [8, 1], strides = [1, 1]} : vector<8x144xf32> to vector<8x1xf32>
    %709 = vector.extract_strided_slice %25 {offsets = [0, 53], sizes = [8, 1], strides = [1, 1]} : vector<8x144xf32> to vector<8x1xf32>
    %710 = vector.extract_strided_slice %16 {offsets = [0, 5], sizes = [8, 1], strides = [1, 1]} : vector<8x16xf32> to vector<8x1xf32>
    %711 = vector.extract_strided_slice %20 {offsets = [0, 5], sizes = [8, 1], strides = [1, 1]} : vector<8x16xf32> to vector<8x1xf32>
    %712 = vector.extract_strided_slice %24 {offsets = [0, 5], sizes = [8, 1], strides = [1, 1]} : vector<8x16xf32> to vector<8x1xf32>
    %713 = vector.extract_strided_slice %16 {offsets = [0, 4], sizes = [8, 1], strides = [1, 1]} : vector<8x16xf32> to vector<8x1xf32>
    %714 = vector.extract_strided_slice %20 {offsets = [0, 4], sizes = [8, 1], strides = [1, 1]} : vector<8x16xf32> to vector<8x1xf32>
    %715 = vector.extract_strided_slice %24 {offsets = [0, 4], sizes = [8, 1], strides = [1, 1]} : vector<8x16xf32> to vector<8x1xf32>
    %716 = arith.mulf %569, %701 : vector<8x1xf32>
    %717 = arith.mulf %574, %704 : vector<8x1xf32>
    %718 = arith.addf %716, %717 : vector<8x1xf32>
    %719 = arith.mulf %579, %707 : vector<8x1xf32>
    %720 = arith.addf %718, %719 : vector<8x1xf32>
    %721 = arith.mulf %569, %702 : vector<8x1xf32>
    %722 = arith.mulf %574, %705 : vector<8x1xf32>
    %723 = arith.addf %721, %722 : vector<8x1xf32>
    %724 = arith.mulf %579, %708 : vector<8x1xf32>
    %725 = arith.addf %723, %724 : vector<8x1xf32>
    %726 = arith.mulf %569, %703 : vector<8x1xf32>
    %727 = arith.mulf %574, %706 : vector<8x1xf32>
    %728 = arith.addf %726, %727 : vector<8x1xf32>
    %729 = arith.mulf %579, %709 : vector<8x1xf32>
    %730 = arith.addf %728, %729 : vector<8x1xf32>
    %731 = arith.mulf %584, %701 : vector<8x1xf32>
    %732 = arith.mulf %589, %704 : vector<8x1xf32>
    %733 = arith.addf %731, %732 : vector<8x1xf32>
    %734 = arith.mulf %594, %707 : vector<8x1xf32>
    %735 = arith.addf %733, %734 : vector<8x1xf32>
    %736 = arith.mulf %584, %702 : vector<8x1xf32>
    %737 = arith.mulf %589, %705 : vector<8x1xf32>
    %738 = arith.addf %736, %737 : vector<8x1xf32>
    %739 = arith.mulf %594, %708 : vector<8x1xf32>
    %740 = arith.addf %738, %739 : vector<8x1xf32>
    %741 = arith.mulf %584, %703 : vector<8x1xf32>
    %742 = arith.mulf %589, %706 : vector<8x1xf32>
    %743 = arith.addf %741, %742 : vector<8x1xf32>
    %744 = arith.mulf %594, %709 : vector<8x1xf32>
    %745 = arith.addf %743, %744 : vector<8x1xf32>
    %746 = arith.mulf %599, %701 : vector<8x1xf32>
    %747 = arith.mulf %604, %704 : vector<8x1xf32>
    %748 = arith.addf %746, %747 : vector<8x1xf32>
    %749 = arith.mulf %609, %707 : vector<8x1xf32>
    %750 = arith.addf %748, %749 : vector<8x1xf32>
    %751 = arith.mulf %599, %702 : vector<8x1xf32>
    %752 = arith.mulf %604, %705 : vector<8x1xf32>
    %753 = arith.addf %751, %752 : vector<8x1xf32>
    %754 = arith.mulf %609, %708 : vector<8x1xf32>
    %755 = arith.addf %753, %754 : vector<8x1xf32>
    %756 = arith.mulf %599, %703 : vector<8x1xf32>
    %757 = arith.mulf %604, %706 : vector<8x1xf32>
    %758 = arith.addf %756, %757 : vector<8x1xf32>
    %759 = arith.mulf %609, %709 : vector<8x1xf32>
    %760 = arith.addf %758, %759 : vector<8x1xf32>
    %761 = arith.subf %710, %713 : vector<8x1xf32>
    %762 = arith.subf %711, %714 : vector<8x1xf32>
    %763 = arith.subf %712, %715 : vector<8x1xf32>
    %764 = arith.mulf %569, %761 : vector<8x1xf32>
    %765 = arith.mulf %574, %762 : vector<8x1xf32>
    %766 = arith.addf %764, %765 : vector<8x1xf32>
    %767 = arith.mulf %579, %763 : vector<8x1xf32>
    %768 = arith.addf %766, %767 : vector<8x1xf32>
    %769 = arith.mulf %584, %761 : vector<8x1xf32>
    %770 = arith.mulf %589, %762 : vector<8x1xf32>
    %771 = arith.addf %769, %770 : vector<8x1xf32>
    %772 = arith.mulf %594, %763 : vector<8x1xf32>
    %773 = arith.addf %771, %772 : vector<8x1xf32>
    %774 = arith.mulf %599, %761 : vector<8x1xf32>
    %775 = arith.mulf %604, %762 : vector<8x1xf32>
    %776 = arith.addf %774, %775 : vector<8x1xf32>
    %777 = arith.mulf %609, %763 : vector<8x1xf32>
    %778 = arith.addf %776, %777 : vector<8x1xf32>
    %779 = arith.addf %768, %628 : vector<8x1xf32>
    %780 = arith.addf %773, %629 : vector<8x1xf32>
    %781 = arith.addf %778, %630 : vector<8x1xf32>
    %782 = arith.mulf %720, %710 : vector<8x1xf32>
    %783 = arith.mulf %725, %711 : vector<8x1xf32>
    %784 = arith.addf %782, %783 : vector<8x1xf32>
    %785 = arith.mulf %730, %712 : vector<8x1xf32>
    %786 = arith.addf %784, %785 : vector<8x1xf32>
    %787 = arith.mulf %735, %710 : vector<8x1xf32>
    %788 = arith.mulf %740, %711 : vector<8x1xf32>
    %789 = arith.addf %787, %788 : vector<8x1xf32>
    %790 = arith.mulf %745, %712 : vector<8x1xf32>
    %791 = arith.addf %789, %790 : vector<8x1xf32>
    %792 = arith.mulf %750, %710 : vector<8x1xf32>
    %793 = arith.mulf %755, %711 : vector<8x1xf32>
    %794 = arith.addf %792, %793 : vector<8x1xf32>
    %795 = arith.mulf %760, %712 : vector<8x1xf32>
    %796 = arith.addf %794, %795 : vector<8x1xf32>
    %797 = arith.subf %779, %786 : vector<8x1xf32>
    %798 = arith.subf %780, %791 : vector<8x1xf32>
    %799 = arith.subf %781, %796 : vector<8x1xf32>
    %c5_i32 = arith.constant 5 : i32
    %800 = vector.broadcast %c5_i32 : i32 to vector<1x16xi32>
    %801 = arith.cmpi eq, %26, %800 : vector<1x16xi32>
    %802 = arith.extui %801 : vector<1x16xi1> to vector<1x16xi32>
    %803 = arith.sitofp %802 : vector<1x16xi32> to vector<1x16xf32>
    %804 = vector.broadcast %720 : vector<8x1xf32> to vector<8x16xf32>
    %805 = vector.broadcast %803 : vector<1x16xf32> to vector<8x16xf32>
    %806 = arith.mulf %804, %805 : vector<8x16xf32>
    %807 = arith.addf %656, %806 : vector<8x16xf32>
    %808 = vector.broadcast %735 : vector<8x1xf32> to vector<8x16xf32>
    %809 = vector.broadcast %803 : vector<1x16xf32> to vector<8x16xf32>
    %810 = arith.mulf %808, %809 : vector<8x16xf32>
    %811 = arith.addf %660, %810 : vector<8x16xf32>
    %812 = vector.broadcast %750 : vector<8x1xf32> to vector<8x16xf32>
    %813 = vector.broadcast %803 : vector<1x16xf32> to vector<8x16xf32>
    %814 = arith.mulf %812, %813 : vector<8x16xf32>
    %815 = arith.addf %664, %814 : vector<8x16xf32>
    %816 = vector.broadcast %725 : vector<8x1xf32> to vector<8x16xf32>
    %817 = vector.broadcast %803 : vector<1x16xf32> to vector<8x16xf32>
    %818 = arith.mulf %816, %817 : vector<8x16xf32>
    %819 = arith.addf %668, %818 : vector<8x16xf32>
    %820 = vector.broadcast %740 : vector<8x1xf32> to vector<8x16xf32>
    %821 = vector.broadcast %803 : vector<1x16xf32> to vector<8x16xf32>
    %822 = arith.mulf %820, %821 : vector<8x16xf32>
    %823 = arith.addf %672, %822 : vector<8x16xf32>
    %824 = vector.broadcast %755 : vector<8x1xf32> to vector<8x16xf32>
    %825 = vector.broadcast %803 : vector<1x16xf32> to vector<8x16xf32>
    %826 = arith.mulf %824, %825 : vector<8x16xf32>
    %827 = arith.addf %676, %826 : vector<8x16xf32>
    %828 = vector.broadcast %730 : vector<8x1xf32> to vector<8x16xf32>
    %829 = vector.broadcast %803 : vector<1x16xf32> to vector<8x16xf32>
    %830 = arith.mulf %828, %829 : vector<8x16xf32>
    %831 = arith.addf %680, %830 : vector<8x16xf32>
    %832 = vector.broadcast %745 : vector<8x1xf32> to vector<8x16xf32>
    %833 = vector.broadcast %803 : vector<1x16xf32> to vector<8x16xf32>
    %834 = arith.mulf %832, %833 : vector<8x16xf32>
    %835 = arith.addf %684, %834 : vector<8x16xf32>
    %836 = vector.broadcast %760 : vector<8x1xf32> to vector<8x16xf32>
    %837 = vector.broadcast %803 : vector<1x16xf32> to vector<8x16xf32>
    %838 = arith.mulf %836, %837 : vector<8x16xf32>
    %839 = arith.addf %688, %838 : vector<8x16xf32>
    %840 = vector.broadcast %797 : vector<8x1xf32> to vector<8x16xf32>
    %841 = vector.broadcast %803 : vector<1x16xf32> to vector<8x16xf32>
    %842 = arith.mulf %840, %841 : vector<8x16xf32>
    %843 = arith.addf %692, %842 : vector<8x16xf32>
    %844 = vector.broadcast %798 : vector<8x1xf32> to vector<8x16xf32>
    %845 = vector.broadcast %803 : vector<1x16xf32> to vector<8x16xf32>
    %846 = arith.mulf %844, %845 : vector<8x16xf32>
    %847 = arith.addf %696, %846 : vector<8x16xf32>
    %848 = vector.broadcast %799 : vector<8x1xf32> to vector<8x16xf32>
    %849 = vector.broadcast %803 : vector<1x16xf32> to vector<8x16xf32>
    %850 = arith.mulf %848, %849 : vector<8x16xf32>
    %851 = arith.addf %700, %850 : vector<8x16xf32>
    %852 = vector.extract_strided_slice %25 {offsets = [0, 54], sizes = [8, 1], strides = [1, 1]} : vector<8x144xf32> to vector<8x1xf32>
    %853 = vector.extract_strided_slice %25 {offsets = [0, 55], sizes = [8, 1], strides = [1, 1]} : vector<8x144xf32> to vector<8x1xf32>
    %854 = vector.extract_strided_slice %25 {offsets = [0, 56], sizes = [8, 1], strides = [1, 1]} : vector<8x144xf32> to vector<8x1xf32>
    %855 = vector.extract_strided_slice %25 {offsets = [0, 57], sizes = [8, 1], strides = [1, 1]} : vector<8x144xf32> to vector<8x1xf32>
    %856 = vector.extract_strided_slice %25 {offsets = [0, 58], sizes = [8, 1], strides = [1, 1]} : vector<8x144xf32> to vector<8x1xf32>
    %857 = vector.extract_strided_slice %25 {offsets = [0, 59], sizes = [8, 1], strides = [1, 1]} : vector<8x144xf32> to vector<8x1xf32>
    %858 = vector.extract_strided_slice %25 {offsets = [0, 60], sizes = [8, 1], strides = [1, 1]} : vector<8x144xf32> to vector<8x1xf32>
    %859 = vector.extract_strided_slice %25 {offsets = [0, 61], sizes = [8, 1], strides = [1, 1]} : vector<8x144xf32> to vector<8x1xf32>
    %860 = vector.extract_strided_slice %25 {offsets = [0, 62], sizes = [8, 1], strides = [1, 1]} : vector<8x144xf32> to vector<8x1xf32>
    %861 = vector.extract_strided_slice %16 {offsets = [0, 6], sizes = [8, 1], strides = [1, 1]} : vector<8x16xf32> to vector<8x1xf32>
    %862 = vector.extract_strided_slice %20 {offsets = [0, 6], sizes = [8, 1], strides = [1, 1]} : vector<8x16xf32> to vector<8x1xf32>
    %863 = vector.extract_strided_slice %24 {offsets = [0, 6], sizes = [8, 1], strides = [1, 1]} : vector<8x16xf32> to vector<8x1xf32>
    %864 = vector.extract_strided_slice %16 {offsets = [0, 5], sizes = [8, 1], strides = [1, 1]} : vector<8x16xf32> to vector<8x1xf32>
    %865 = vector.extract_strided_slice %20 {offsets = [0, 5], sizes = [8, 1], strides = [1, 1]} : vector<8x16xf32> to vector<8x1xf32>
    %866 = vector.extract_strided_slice %24 {offsets = [0, 5], sizes = [8, 1], strides = [1, 1]} : vector<8x16xf32> to vector<8x1xf32>
    %867 = arith.mulf %720, %852 : vector<8x1xf32>
    %868 = arith.mulf %725, %855 : vector<8x1xf32>
    %869 = arith.addf %867, %868 : vector<8x1xf32>
    %870 = arith.mulf %730, %858 : vector<8x1xf32>
    %871 = arith.addf %869, %870 : vector<8x1xf32>
    %872 = arith.mulf %720, %853 : vector<8x1xf32>
    %873 = arith.mulf %725, %856 : vector<8x1xf32>
    %874 = arith.addf %872, %873 : vector<8x1xf32>
    %875 = arith.mulf %730, %859 : vector<8x1xf32>
    %876 = arith.addf %874, %875 : vector<8x1xf32>
    %877 = arith.mulf %720, %854 : vector<8x1xf32>
    %878 = arith.mulf %725, %857 : vector<8x1xf32>
    %879 = arith.addf %877, %878 : vector<8x1xf32>
    %880 = arith.mulf %730, %860 : vector<8x1xf32>
    %881 = arith.addf %879, %880 : vector<8x1xf32>
    %882 = arith.mulf %735, %852 : vector<8x1xf32>
    %883 = arith.mulf %740, %855 : vector<8x1xf32>
    %884 = arith.addf %882, %883 : vector<8x1xf32>
    %885 = arith.mulf %745, %858 : vector<8x1xf32>
    %886 = arith.addf %884, %885 : vector<8x1xf32>
    %887 = arith.mulf %735, %853 : vector<8x1xf32>
    %888 = arith.mulf %740, %856 : vector<8x1xf32>
    %889 = arith.addf %887, %888 : vector<8x1xf32>
    %890 = arith.mulf %745, %859 : vector<8x1xf32>
    %891 = arith.addf %889, %890 : vector<8x1xf32>
    %892 = arith.mulf %735, %854 : vector<8x1xf32>
    %893 = arith.mulf %740, %857 : vector<8x1xf32>
    %894 = arith.addf %892, %893 : vector<8x1xf32>
    %895 = arith.mulf %745, %860 : vector<8x1xf32>
    %896 = arith.addf %894, %895 : vector<8x1xf32>
    %897 = arith.mulf %750, %852 : vector<8x1xf32>
    %898 = arith.mulf %755, %855 : vector<8x1xf32>
    %899 = arith.addf %897, %898 : vector<8x1xf32>
    %900 = arith.mulf %760, %858 : vector<8x1xf32>
    %901 = arith.addf %899, %900 : vector<8x1xf32>
    %902 = arith.mulf %750, %853 : vector<8x1xf32>
    %903 = arith.mulf %755, %856 : vector<8x1xf32>
    %904 = arith.addf %902, %903 : vector<8x1xf32>
    %905 = arith.mulf %760, %859 : vector<8x1xf32>
    %906 = arith.addf %904, %905 : vector<8x1xf32>
    %907 = arith.mulf %750, %854 : vector<8x1xf32>
    %908 = arith.mulf %755, %857 : vector<8x1xf32>
    %909 = arith.addf %907, %908 : vector<8x1xf32>
    %910 = arith.mulf %760, %860 : vector<8x1xf32>
    %911 = arith.addf %909, %910 : vector<8x1xf32>
    %912 = arith.subf %861, %864 : vector<8x1xf32>
    %913 = arith.subf %862, %865 : vector<8x1xf32>
    %914 = arith.subf %863, %866 : vector<8x1xf32>
    %915 = arith.mulf %720, %912 : vector<8x1xf32>
    %916 = arith.mulf %725, %913 : vector<8x1xf32>
    %917 = arith.addf %915, %916 : vector<8x1xf32>
    %918 = arith.mulf %730, %914 : vector<8x1xf32>
    %919 = arith.addf %917, %918 : vector<8x1xf32>
    %920 = arith.mulf %735, %912 : vector<8x1xf32>
    %921 = arith.mulf %740, %913 : vector<8x1xf32>
    %922 = arith.addf %920, %921 : vector<8x1xf32>
    %923 = arith.mulf %745, %914 : vector<8x1xf32>
    %924 = arith.addf %922, %923 : vector<8x1xf32>
    %925 = arith.mulf %750, %912 : vector<8x1xf32>
    %926 = arith.mulf %755, %913 : vector<8x1xf32>
    %927 = arith.addf %925, %926 : vector<8x1xf32>
    %928 = arith.mulf %760, %914 : vector<8x1xf32>
    %929 = arith.addf %927, %928 : vector<8x1xf32>
    %930 = arith.addf %919, %779 : vector<8x1xf32>
    %931 = arith.addf %924, %780 : vector<8x1xf32>
    %932 = arith.addf %929, %781 : vector<8x1xf32>
    %933 = arith.mulf %871, %861 : vector<8x1xf32>
    %934 = arith.mulf %876, %862 : vector<8x1xf32>
    %935 = arith.addf %933, %934 : vector<8x1xf32>
    %936 = arith.mulf %881, %863 : vector<8x1xf32>
    %937 = arith.addf %935, %936 : vector<8x1xf32>
    %938 = arith.mulf %886, %861 : vector<8x1xf32>
    %939 = arith.mulf %891, %862 : vector<8x1xf32>
    %940 = arith.addf %938, %939 : vector<8x1xf32>
    %941 = arith.mulf %896, %863 : vector<8x1xf32>
    %942 = arith.addf %940, %941 : vector<8x1xf32>
    %943 = arith.mulf %901, %861 : vector<8x1xf32>
    %944 = arith.mulf %906, %862 : vector<8x1xf32>
    %945 = arith.addf %943, %944 : vector<8x1xf32>
    %946 = arith.mulf %911, %863 : vector<8x1xf32>
    %947 = arith.addf %945, %946 : vector<8x1xf32>
    %948 = arith.subf %930, %937 : vector<8x1xf32>
    %949 = arith.subf %931, %942 : vector<8x1xf32>
    %950 = arith.subf %932, %947 : vector<8x1xf32>
    %c6_i32 = arith.constant 6 : i32
    %951 = vector.broadcast %c6_i32 : i32 to vector<1x16xi32>
    %952 = arith.cmpi eq, %26, %951 : vector<1x16xi32>
    %953 = arith.extui %952 : vector<1x16xi1> to vector<1x16xi32>
    %954 = arith.sitofp %953 : vector<1x16xi32> to vector<1x16xf32>
    %955 = vector.broadcast %871 : vector<8x1xf32> to vector<8x16xf32>
    %956 = vector.broadcast %954 : vector<1x16xf32> to vector<8x16xf32>
    %957 = arith.mulf %955, %956 : vector<8x16xf32>
    %958 = arith.addf %807, %957 : vector<8x16xf32>
    %959 = vector.broadcast %886 : vector<8x1xf32> to vector<8x16xf32>
    %960 = vector.broadcast %954 : vector<1x16xf32> to vector<8x16xf32>
    %961 = arith.mulf %959, %960 : vector<8x16xf32>
    %962 = arith.addf %811, %961 : vector<8x16xf32>
    %963 = vector.broadcast %901 : vector<8x1xf32> to vector<8x16xf32>
    %964 = vector.broadcast %954 : vector<1x16xf32> to vector<8x16xf32>
    %965 = arith.mulf %963, %964 : vector<8x16xf32>
    %966 = arith.addf %815, %965 : vector<8x16xf32>
    %967 = vector.broadcast %876 : vector<8x1xf32> to vector<8x16xf32>
    %968 = vector.broadcast %954 : vector<1x16xf32> to vector<8x16xf32>
    %969 = arith.mulf %967, %968 : vector<8x16xf32>
    %970 = arith.addf %819, %969 : vector<8x16xf32>
    %971 = vector.broadcast %891 : vector<8x1xf32> to vector<8x16xf32>
    %972 = vector.broadcast %954 : vector<1x16xf32> to vector<8x16xf32>
    %973 = arith.mulf %971, %972 : vector<8x16xf32>
    %974 = arith.addf %823, %973 : vector<8x16xf32>
    %975 = vector.broadcast %906 : vector<8x1xf32> to vector<8x16xf32>
    %976 = vector.broadcast %954 : vector<1x16xf32> to vector<8x16xf32>
    %977 = arith.mulf %975, %976 : vector<8x16xf32>
    %978 = arith.addf %827, %977 : vector<8x16xf32>
    %979 = vector.broadcast %881 : vector<8x1xf32> to vector<8x16xf32>
    %980 = vector.broadcast %954 : vector<1x16xf32> to vector<8x16xf32>
    %981 = arith.mulf %979, %980 : vector<8x16xf32>
    %982 = arith.addf %831, %981 : vector<8x16xf32>
    %983 = vector.broadcast %896 : vector<8x1xf32> to vector<8x16xf32>
    %984 = vector.broadcast %954 : vector<1x16xf32> to vector<8x16xf32>
    %985 = arith.mulf %983, %984 : vector<8x16xf32>
    %986 = arith.addf %835, %985 : vector<8x16xf32>
    %987 = vector.broadcast %911 : vector<8x1xf32> to vector<8x16xf32>
    %988 = vector.broadcast %954 : vector<1x16xf32> to vector<8x16xf32>
    %989 = arith.mulf %987, %988 : vector<8x16xf32>
    %990 = arith.addf %839, %989 : vector<8x16xf32>
    %991 = vector.broadcast %948 : vector<8x1xf32> to vector<8x16xf32>
    %992 = vector.broadcast %954 : vector<1x16xf32> to vector<8x16xf32>
    %993 = arith.mulf %991, %992 : vector<8x16xf32>
    %994 = arith.addf %843, %993 : vector<8x16xf32>
    %995 = vector.broadcast %949 : vector<8x1xf32> to vector<8x16xf32>
    %996 = vector.broadcast %954 : vector<1x16xf32> to vector<8x16xf32>
    %997 = arith.mulf %995, %996 : vector<8x16xf32>
    %998 = arith.addf %847, %997 : vector<8x16xf32>
    %999 = vector.broadcast %950 : vector<8x1xf32> to vector<8x16xf32>
    %1000 = vector.broadcast %954 : vector<1x16xf32> to vector<8x16xf32>
    %1001 = arith.mulf %999, %1000 : vector<8x16xf32>
    %1002 = arith.addf %851, %1001 : vector<8x16xf32>
    %1003 = vector.extract_strided_slice %25 {offsets = [0, 63], sizes = [8, 1], strides = [1, 1]} : vector<8x144xf32> to vector<8x1xf32>
    %1004 = vector.extract_strided_slice %25 {offsets = [0, 64], sizes = [8, 1], strides = [1, 1]} : vector<8x144xf32> to vector<8x1xf32>
    %1005 = vector.extract_strided_slice %25 {offsets = [0, 65], sizes = [8, 1], strides = [1, 1]} : vector<8x144xf32> to vector<8x1xf32>
    %1006 = vector.extract_strided_slice %25 {offsets = [0, 66], sizes = [8, 1], strides = [1, 1]} : vector<8x144xf32> to vector<8x1xf32>
    %1007 = vector.extract_strided_slice %25 {offsets = [0, 67], sizes = [8, 1], strides = [1, 1]} : vector<8x144xf32> to vector<8x1xf32>
    %1008 = vector.extract_strided_slice %25 {offsets = [0, 68], sizes = [8, 1], strides = [1, 1]} : vector<8x144xf32> to vector<8x1xf32>
    %1009 = vector.extract_strided_slice %25 {offsets = [0, 69], sizes = [8, 1], strides = [1, 1]} : vector<8x144xf32> to vector<8x1xf32>
    %1010 = vector.extract_strided_slice %25 {offsets = [0, 70], sizes = [8, 1], strides = [1, 1]} : vector<8x144xf32> to vector<8x1xf32>
    %1011 = vector.extract_strided_slice %25 {offsets = [0, 71], sizes = [8, 1], strides = [1, 1]} : vector<8x144xf32> to vector<8x1xf32>
    %1012 = vector.extract_strided_slice %16 {offsets = [0, 7], sizes = [8, 1], strides = [1, 1]} : vector<8x16xf32> to vector<8x1xf32>
    %1013 = vector.extract_strided_slice %20 {offsets = [0, 7], sizes = [8, 1], strides = [1, 1]} : vector<8x16xf32> to vector<8x1xf32>
    %1014 = vector.extract_strided_slice %24 {offsets = [0, 7], sizes = [8, 1], strides = [1, 1]} : vector<8x16xf32> to vector<8x1xf32>
    %1015 = vector.extract_strided_slice %16 {offsets = [0, 0], sizes = [8, 1], strides = [1, 1]} : vector<8x16xf32> to vector<8x1xf32>
    %1016 = vector.extract_strided_slice %20 {offsets = [0, 0], sizes = [8, 1], strides = [1, 1]} : vector<8x16xf32> to vector<8x1xf32>
    %1017 = vector.extract_strided_slice %24 {offsets = [0, 0], sizes = [8, 1], strides = [1, 1]} : vector<8x16xf32> to vector<8x1xf32>
    %1018 = arith.mulf %27, %1003 : vector<8x1xf32>
    %1019 = arith.mulf %28, %1006 : vector<8x1xf32>
    %1020 = arith.addf %1018, %1019 : vector<8x1xf32>
    %1021 = arith.mulf %29, %1009 : vector<8x1xf32>
    %1022 = arith.addf %1020, %1021 : vector<8x1xf32>
    %1023 = arith.mulf %27, %1004 : vector<8x1xf32>
    %1024 = arith.mulf %28, %1007 : vector<8x1xf32>
    %1025 = arith.addf %1023, %1024 : vector<8x1xf32>
    %1026 = arith.mulf %29, %1010 : vector<8x1xf32>
    %1027 = arith.addf %1025, %1026 : vector<8x1xf32>
    %1028 = arith.mulf %27, %1005 : vector<8x1xf32>
    %1029 = arith.mulf %28, %1008 : vector<8x1xf32>
    %1030 = arith.addf %1028, %1029 : vector<8x1xf32>
    %1031 = arith.mulf %29, %1011 : vector<8x1xf32>
    %1032 = arith.addf %1030, %1031 : vector<8x1xf32>
    %1033 = arith.mulf %30, %1003 : vector<8x1xf32>
    %1034 = arith.mulf %31, %1006 : vector<8x1xf32>
    %1035 = arith.addf %1033, %1034 : vector<8x1xf32>
    %1036 = arith.mulf %32, %1009 : vector<8x1xf32>
    %1037 = arith.addf %1035, %1036 : vector<8x1xf32>
    %1038 = arith.mulf %30, %1004 : vector<8x1xf32>
    %1039 = arith.mulf %31, %1007 : vector<8x1xf32>
    %1040 = arith.addf %1038, %1039 : vector<8x1xf32>
    %1041 = arith.mulf %32, %1010 : vector<8x1xf32>
    %1042 = arith.addf %1040, %1041 : vector<8x1xf32>
    %1043 = arith.mulf %30, %1005 : vector<8x1xf32>
    %1044 = arith.mulf %31, %1008 : vector<8x1xf32>
    %1045 = arith.addf %1043, %1044 : vector<8x1xf32>
    %1046 = arith.mulf %32, %1011 : vector<8x1xf32>
    %1047 = arith.addf %1045, %1046 : vector<8x1xf32>
    %1048 = arith.mulf %33, %1003 : vector<8x1xf32>
    %1049 = arith.mulf %34, %1006 : vector<8x1xf32>
    %1050 = arith.addf %1048, %1049 : vector<8x1xf32>
    %1051 = arith.mulf %35, %1009 : vector<8x1xf32>
    %1052 = arith.addf %1050, %1051 : vector<8x1xf32>
    %1053 = arith.mulf %33, %1004 : vector<8x1xf32>
    %1054 = arith.mulf %34, %1007 : vector<8x1xf32>
    %1055 = arith.addf %1053, %1054 : vector<8x1xf32>
    %1056 = arith.mulf %35, %1010 : vector<8x1xf32>
    %1057 = arith.addf %1055, %1056 : vector<8x1xf32>
    %1058 = arith.mulf %33, %1005 : vector<8x1xf32>
    %1059 = arith.mulf %34, %1008 : vector<8x1xf32>
    %1060 = arith.addf %1058, %1059 : vector<8x1xf32>
    %1061 = arith.mulf %35, %1011 : vector<8x1xf32>
    %1062 = arith.addf %1060, %1061 : vector<8x1xf32>
    %1063 = arith.subf %1012, %1015 : vector<8x1xf32>
    %1064 = arith.subf %1013, %1016 : vector<8x1xf32>
    %1065 = arith.subf %1014, %1017 : vector<8x1xf32>
    %1066 = arith.mulf %27, %1063 : vector<8x1xf32>
    %1067 = arith.mulf %28, %1064 : vector<8x1xf32>
    %1068 = arith.addf %1066, %1067 : vector<8x1xf32>
    %1069 = arith.mulf %29, %1065 : vector<8x1xf32>
    %1070 = arith.addf %1068, %1069 : vector<8x1xf32>
    %1071 = arith.mulf %30, %1063 : vector<8x1xf32>
    %1072 = arith.mulf %31, %1064 : vector<8x1xf32>
    %1073 = arith.addf %1071, %1072 : vector<8x1xf32>
    %1074 = arith.mulf %32, %1065 : vector<8x1xf32>
    %1075 = arith.addf %1073, %1074 : vector<8x1xf32>
    %1076 = arith.mulf %33, %1063 : vector<8x1xf32>
    %1077 = arith.mulf %34, %1064 : vector<8x1xf32>
    %1078 = arith.addf %1076, %1077 : vector<8x1xf32>
    %1079 = arith.mulf %35, %1065 : vector<8x1xf32>
    %1080 = arith.addf %1078, %1079 : vector<8x1xf32>
    %1081 = arith.addf %1070, %36 : vector<8x1xf32>
    %1082 = arith.addf %1075, %37 : vector<8x1xf32>
    %1083 = arith.addf %1080, %38 : vector<8x1xf32>
    %1084 = arith.mulf %1022, %1012 : vector<8x1xf32>
    %1085 = arith.mulf %1027, %1013 : vector<8x1xf32>
    %1086 = arith.addf %1084, %1085 : vector<8x1xf32>
    %1087 = arith.mulf %1032, %1014 : vector<8x1xf32>
    %1088 = arith.addf %1086, %1087 : vector<8x1xf32>
    %1089 = arith.mulf %1037, %1012 : vector<8x1xf32>
    %1090 = arith.mulf %1042, %1013 : vector<8x1xf32>
    %1091 = arith.addf %1089, %1090 : vector<8x1xf32>
    %1092 = arith.mulf %1047, %1014 : vector<8x1xf32>
    %1093 = arith.addf %1091, %1092 : vector<8x1xf32>
    %1094 = arith.mulf %1052, %1012 : vector<8x1xf32>
    %1095 = arith.mulf %1057, %1013 : vector<8x1xf32>
    %1096 = arith.addf %1094, %1095 : vector<8x1xf32>
    %1097 = arith.mulf %1062, %1014 : vector<8x1xf32>
    %1098 = arith.addf %1096, %1097 : vector<8x1xf32>
    %1099 = arith.subf %1081, %1088 : vector<8x1xf32>
    %1100 = arith.subf %1082, %1093 : vector<8x1xf32>
    %1101 = arith.subf %1083, %1098 : vector<8x1xf32>
    %c7_i32 = arith.constant 7 : i32
    %1102 = vector.broadcast %c7_i32 : i32 to vector<1x16xi32>
    %1103 = arith.cmpi eq, %26, %1102 : vector<1x16xi32>
    %1104 = arith.extui %1103 : vector<1x16xi1> to vector<1x16xi32>
    %1105 = arith.sitofp %1104 : vector<1x16xi32> to vector<1x16xf32>
    %1106 = vector.broadcast %1022 : vector<8x1xf32> to vector<8x16xf32>
    %1107 = vector.broadcast %1105 : vector<1x16xf32> to vector<8x16xf32>
    %1108 = arith.mulf %1106, %1107 : vector<8x16xf32>
    %1109 = arith.addf %958, %1108 : vector<8x16xf32>
    %1110 = vector.broadcast %1037 : vector<8x1xf32> to vector<8x16xf32>
    %1111 = vector.broadcast %1105 : vector<1x16xf32> to vector<8x16xf32>
    %1112 = arith.mulf %1110, %1111 : vector<8x16xf32>
    %1113 = arith.addf %962, %1112 : vector<8x16xf32>
    %1114 = vector.broadcast %1052 : vector<8x1xf32> to vector<8x16xf32>
    %1115 = vector.broadcast %1105 : vector<1x16xf32> to vector<8x16xf32>
    %1116 = arith.mulf %1114, %1115 : vector<8x16xf32>
    %1117 = arith.addf %966, %1116 : vector<8x16xf32>
    %1118 = vector.broadcast %1027 : vector<8x1xf32> to vector<8x16xf32>
    %1119 = vector.broadcast %1105 : vector<1x16xf32> to vector<8x16xf32>
    %1120 = arith.mulf %1118, %1119 : vector<8x16xf32>
    %1121 = arith.addf %970, %1120 : vector<8x16xf32>
    %1122 = vector.broadcast %1042 : vector<8x1xf32> to vector<8x16xf32>
    %1123 = vector.broadcast %1105 : vector<1x16xf32> to vector<8x16xf32>
    %1124 = arith.mulf %1122, %1123 : vector<8x16xf32>
    %1125 = arith.addf %974, %1124 : vector<8x16xf32>
    %1126 = vector.broadcast %1057 : vector<8x1xf32> to vector<8x16xf32>
    %1127 = vector.broadcast %1105 : vector<1x16xf32> to vector<8x16xf32>
    %1128 = arith.mulf %1126, %1127 : vector<8x16xf32>
    %1129 = arith.addf %978, %1128 : vector<8x16xf32>
    %1130 = vector.broadcast %1032 : vector<8x1xf32> to vector<8x16xf32>
    %1131 = vector.broadcast %1105 : vector<1x16xf32> to vector<8x16xf32>
    %1132 = arith.mulf %1130, %1131 : vector<8x16xf32>
    %1133 = arith.addf %982, %1132 : vector<8x16xf32>
    %1134 = vector.broadcast %1047 : vector<8x1xf32> to vector<8x16xf32>
    %1135 = vector.broadcast %1105 : vector<1x16xf32> to vector<8x16xf32>
    %1136 = arith.mulf %1134, %1135 : vector<8x16xf32>
    %1137 = arith.addf %986, %1136 : vector<8x16xf32>
    %1138 = vector.broadcast %1062 : vector<8x1xf32> to vector<8x16xf32>
    %1139 = vector.broadcast %1105 : vector<1x16xf32> to vector<8x16xf32>
    %1140 = arith.mulf %1138, %1139 : vector<8x16xf32>
    %1141 = arith.addf %990, %1140 : vector<8x16xf32>
    %1142 = vector.broadcast %1099 : vector<8x1xf32> to vector<8x16xf32>
    %1143 = vector.broadcast %1105 : vector<1x16xf32> to vector<8x16xf32>
    %1144 = arith.mulf %1142, %1143 : vector<8x16xf32>
    %1145 = arith.addf %994, %1144 : vector<8x16xf32>
    %1146 = vector.broadcast %1100 : vector<8x1xf32> to vector<8x16xf32>
    %1147 = vector.broadcast %1105 : vector<1x16xf32> to vector<8x16xf32>
    %1148 = arith.mulf %1146, %1147 : vector<8x16xf32>
    %1149 = arith.addf %998, %1148 : vector<8x16xf32>
    %1150 = vector.broadcast %1101 : vector<8x1xf32> to vector<8x16xf32>
    %1151 = vector.broadcast %1105 : vector<1x16xf32> to vector<8x16xf32>
    %1152 = arith.mulf %1150, %1151 : vector<8x16xf32>
    %1153 = arith.addf %1002, %1152 : vector<8x16xf32>
    %1154 = vector.extract_strided_slice %25 {offsets = [0, 72], sizes = [8, 1], strides = [1, 1]} : vector<8x144xf32> to vector<8x1xf32>
    %1155 = vector.extract_strided_slice %25 {offsets = [0, 73], sizes = [8, 1], strides = [1, 1]} : vector<8x144xf32> to vector<8x1xf32>
    %1156 = vector.extract_strided_slice %25 {offsets = [0, 74], sizes = [8, 1], strides = [1, 1]} : vector<8x144xf32> to vector<8x1xf32>
    %1157 = vector.extract_strided_slice %25 {offsets = [0, 75], sizes = [8, 1], strides = [1, 1]} : vector<8x144xf32> to vector<8x1xf32>
    %1158 = vector.extract_strided_slice %25 {offsets = [0, 76], sizes = [8, 1], strides = [1, 1]} : vector<8x144xf32> to vector<8x1xf32>
    %1159 = vector.extract_strided_slice %25 {offsets = [0, 77], sizes = [8, 1], strides = [1, 1]} : vector<8x144xf32> to vector<8x1xf32>
    %1160 = vector.extract_strided_slice %25 {offsets = [0, 78], sizes = [8, 1], strides = [1, 1]} : vector<8x144xf32> to vector<8x1xf32>
    %1161 = vector.extract_strided_slice %25 {offsets = [0, 79], sizes = [8, 1], strides = [1, 1]} : vector<8x144xf32> to vector<8x1xf32>
    %1162 = vector.extract_strided_slice %25 {offsets = [0, 80], sizes = [8, 1], strides = [1, 1]} : vector<8x144xf32> to vector<8x1xf32>
    %1163 = vector.extract_strided_slice %16 {offsets = [0, 8], sizes = [8, 1], strides = [1, 1]} : vector<8x16xf32> to vector<8x1xf32>
    %1164 = vector.extract_strided_slice %20 {offsets = [0, 8], sizes = [8, 1], strides = [1, 1]} : vector<8x16xf32> to vector<8x1xf32>
    %1165 = vector.extract_strided_slice %24 {offsets = [0, 8], sizes = [8, 1], strides = [1, 1]} : vector<8x16xf32> to vector<8x1xf32>
    %1166 = vector.extract_strided_slice %16 {offsets = [0, 7], sizes = [8, 1], strides = [1, 1]} : vector<8x16xf32> to vector<8x1xf32>
    %1167 = vector.extract_strided_slice %20 {offsets = [0, 7], sizes = [8, 1], strides = [1, 1]} : vector<8x16xf32> to vector<8x1xf32>
    %1168 = vector.extract_strided_slice %24 {offsets = [0, 7], sizes = [8, 1], strides = [1, 1]} : vector<8x16xf32> to vector<8x1xf32>
    %1169 = arith.mulf %1022, %1154 : vector<8x1xf32>
    %1170 = arith.mulf %1027, %1157 : vector<8x1xf32>
    %1171 = arith.addf %1169, %1170 : vector<8x1xf32>
    %1172 = arith.mulf %1032, %1160 : vector<8x1xf32>
    %1173 = arith.addf %1171, %1172 : vector<8x1xf32>
    %1174 = arith.mulf %1022, %1155 : vector<8x1xf32>
    %1175 = arith.mulf %1027, %1158 : vector<8x1xf32>
    %1176 = arith.addf %1174, %1175 : vector<8x1xf32>
    %1177 = arith.mulf %1032, %1161 : vector<8x1xf32>
    %1178 = arith.addf %1176, %1177 : vector<8x1xf32>
    %1179 = arith.mulf %1022, %1156 : vector<8x1xf32>
    %1180 = arith.mulf %1027, %1159 : vector<8x1xf32>
    %1181 = arith.addf %1179, %1180 : vector<8x1xf32>
    %1182 = arith.mulf %1032, %1162 : vector<8x1xf32>
    %1183 = arith.addf %1181, %1182 : vector<8x1xf32>
    %1184 = arith.mulf %1037, %1154 : vector<8x1xf32>
    %1185 = arith.mulf %1042, %1157 : vector<8x1xf32>
    %1186 = arith.addf %1184, %1185 : vector<8x1xf32>
    %1187 = arith.mulf %1047, %1160 : vector<8x1xf32>
    %1188 = arith.addf %1186, %1187 : vector<8x1xf32>
    %1189 = arith.mulf %1037, %1155 : vector<8x1xf32>
    %1190 = arith.mulf %1042, %1158 : vector<8x1xf32>
    %1191 = arith.addf %1189, %1190 : vector<8x1xf32>
    %1192 = arith.mulf %1047, %1161 : vector<8x1xf32>
    %1193 = arith.addf %1191, %1192 : vector<8x1xf32>
    %1194 = arith.mulf %1037, %1156 : vector<8x1xf32>
    %1195 = arith.mulf %1042, %1159 : vector<8x1xf32>
    %1196 = arith.addf %1194, %1195 : vector<8x1xf32>
    %1197 = arith.mulf %1047, %1162 : vector<8x1xf32>
    %1198 = arith.addf %1196, %1197 : vector<8x1xf32>
    %1199 = arith.mulf %1052, %1154 : vector<8x1xf32>
    %1200 = arith.mulf %1057, %1157 : vector<8x1xf32>
    %1201 = arith.addf %1199, %1200 : vector<8x1xf32>
    %1202 = arith.mulf %1062, %1160 : vector<8x1xf32>
    %1203 = arith.addf %1201, %1202 : vector<8x1xf32>
    %1204 = arith.mulf %1052, %1155 : vector<8x1xf32>
    %1205 = arith.mulf %1057, %1158 : vector<8x1xf32>
    %1206 = arith.addf %1204, %1205 : vector<8x1xf32>
    %1207 = arith.mulf %1062, %1161 : vector<8x1xf32>
    %1208 = arith.addf %1206, %1207 : vector<8x1xf32>
    %1209 = arith.mulf %1052, %1156 : vector<8x1xf32>
    %1210 = arith.mulf %1057, %1159 : vector<8x1xf32>
    %1211 = arith.addf %1209, %1210 : vector<8x1xf32>
    %1212 = arith.mulf %1062, %1162 : vector<8x1xf32>
    %1213 = arith.addf %1211, %1212 : vector<8x1xf32>
    %1214 = arith.subf %1163, %1166 : vector<8x1xf32>
    %1215 = arith.subf %1164, %1167 : vector<8x1xf32>
    %1216 = arith.subf %1165, %1168 : vector<8x1xf32>
    %1217 = arith.mulf %1022, %1214 : vector<8x1xf32>
    %1218 = arith.mulf %1027, %1215 : vector<8x1xf32>
    %1219 = arith.addf %1217, %1218 : vector<8x1xf32>
    %1220 = arith.mulf %1032, %1216 : vector<8x1xf32>
    %1221 = arith.addf %1219, %1220 : vector<8x1xf32>
    %1222 = arith.mulf %1037, %1214 : vector<8x1xf32>
    %1223 = arith.mulf %1042, %1215 : vector<8x1xf32>
    %1224 = arith.addf %1222, %1223 : vector<8x1xf32>
    %1225 = arith.mulf %1047, %1216 : vector<8x1xf32>
    %1226 = arith.addf %1224, %1225 : vector<8x1xf32>
    %1227 = arith.mulf %1052, %1214 : vector<8x1xf32>
    %1228 = arith.mulf %1057, %1215 : vector<8x1xf32>
    %1229 = arith.addf %1227, %1228 : vector<8x1xf32>
    %1230 = arith.mulf %1062, %1216 : vector<8x1xf32>
    %1231 = arith.addf %1229, %1230 : vector<8x1xf32>
    %1232 = arith.addf %1221, %1081 : vector<8x1xf32>
    %1233 = arith.addf %1226, %1082 : vector<8x1xf32>
    %1234 = arith.addf %1231, %1083 : vector<8x1xf32>
    %1235 = arith.mulf %1173, %1163 : vector<8x1xf32>
    %1236 = arith.mulf %1178, %1164 : vector<8x1xf32>
    %1237 = arith.addf %1235, %1236 : vector<8x1xf32>
    %1238 = arith.mulf %1183, %1165 : vector<8x1xf32>
    %1239 = arith.addf %1237, %1238 : vector<8x1xf32>
    %1240 = arith.mulf %1188, %1163 : vector<8x1xf32>
    %1241 = arith.mulf %1193, %1164 : vector<8x1xf32>
    %1242 = arith.addf %1240, %1241 : vector<8x1xf32>
    %1243 = arith.mulf %1198, %1165 : vector<8x1xf32>
    %1244 = arith.addf %1242, %1243 : vector<8x1xf32>
    %1245 = arith.mulf %1203, %1163 : vector<8x1xf32>
    %1246 = arith.mulf %1208, %1164 : vector<8x1xf32>
    %1247 = arith.addf %1245, %1246 : vector<8x1xf32>
    %1248 = arith.mulf %1213, %1165 : vector<8x1xf32>
    %1249 = arith.addf %1247, %1248 : vector<8x1xf32>
    %1250 = arith.subf %1232, %1239 : vector<8x1xf32>
    %1251 = arith.subf %1233, %1244 : vector<8x1xf32>
    %1252 = arith.subf %1234, %1249 : vector<8x1xf32>
    %c8_i32 = arith.constant 8 : i32
    %1253 = vector.broadcast %c8_i32 : i32 to vector<1x16xi32>
    %1254 = arith.cmpi eq, %26, %1253 : vector<1x16xi32>
    %1255 = arith.extui %1254 : vector<1x16xi1> to vector<1x16xi32>
    %1256 = arith.sitofp %1255 : vector<1x16xi32> to vector<1x16xf32>
    %1257 = vector.broadcast %1173 : vector<8x1xf32> to vector<8x16xf32>
    %1258 = vector.broadcast %1256 : vector<1x16xf32> to vector<8x16xf32>
    %1259 = arith.mulf %1257, %1258 : vector<8x16xf32>
    %1260 = arith.addf %1109, %1259 : vector<8x16xf32>
    %1261 = vector.broadcast %1188 : vector<8x1xf32> to vector<8x16xf32>
    %1262 = vector.broadcast %1256 : vector<1x16xf32> to vector<8x16xf32>
    %1263 = arith.mulf %1261, %1262 : vector<8x16xf32>
    %1264 = arith.addf %1113, %1263 : vector<8x16xf32>
    %1265 = vector.broadcast %1203 : vector<8x1xf32> to vector<8x16xf32>
    %1266 = vector.broadcast %1256 : vector<1x16xf32> to vector<8x16xf32>
    %1267 = arith.mulf %1265, %1266 : vector<8x16xf32>
    %1268 = arith.addf %1117, %1267 : vector<8x16xf32>
    %1269 = vector.broadcast %1178 : vector<8x1xf32> to vector<8x16xf32>
    %1270 = vector.broadcast %1256 : vector<1x16xf32> to vector<8x16xf32>
    %1271 = arith.mulf %1269, %1270 : vector<8x16xf32>
    %1272 = arith.addf %1121, %1271 : vector<8x16xf32>
    %1273 = vector.broadcast %1193 : vector<8x1xf32> to vector<8x16xf32>
    %1274 = vector.broadcast %1256 : vector<1x16xf32> to vector<8x16xf32>
    %1275 = arith.mulf %1273, %1274 : vector<8x16xf32>
    %1276 = arith.addf %1125, %1275 : vector<8x16xf32>
    %1277 = vector.broadcast %1208 : vector<8x1xf32> to vector<8x16xf32>
    %1278 = vector.broadcast %1256 : vector<1x16xf32> to vector<8x16xf32>
    %1279 = arith.mulf %1277, %1278 : vector<8x16xf32>
    %1280 = arith.addf %1129, %1279 : vector<8x16xf32>
    %1281 = vector.broadcast %1183 : vector<8x1xf32> to vector<8x16xf32>
    %1282 = vector.broadcast %1256 : vector<1x16xf32> to vector<8x16xf32>
    %1283 = arith.mulf %1281, %1282 : vector<8x16xf32>
    %1284 = arith.addf %1133, %1283 : vector<8x16xf32>
    %1285 = vector.broadcast %1198 : vector<8x1xf32> to vector<8x16xf32>
    %1286 = vector.broadcast %1256 : vector<1x16xf32> to vector<8x16xf32>
    %1287 = arith.mulf %1285, %1286 : vector<8x16xf32>
    %1288 = arith.addf %1137, %1287 : vector<8x16xf32>
    %1289 = vector.broadcast %1213 : vector<8x1xf32> to vector<8x16xf32>
    %1290 = vector.broadcast %1256 : vector<1x16xf32> to vector<8x16xf32>
    %1291 = arith.mulf %1289, %1290 : vector<8x16xf32>
    %1292 = arith.addf %1141, %1291 : vector<8x16xf32>
    %1293 = vector.broadcast %1250 : vector<8x1xf32> to vector<8x16xf32>
    %1294 = vector.broadcast %1256 : vector<1x16xf32> to vector<8x16xf32>
    %1295 = arith.mulf %1293, %1294 : vector<8x16xf32>
    %1296 = arith.addf %1145, %1295 : vector<8x16xf32>
    %1297 = vector.broadcast %1251 : vector<8x1xf32> to vector<8x16xf32>
    %1298 = vector.broadcast %1256 : vector<1x16xf32> to vector<8x16xf32>
    %1299 = arith.mulf %1297, %1298 : vector<8x16xf32>
    %1300 = arith.addf %1149, %1299 : vector<8x16xf32>
    %1301 = vector.broadcast %1252 : vector<8x1xf32> to vector<8x16xf32>
    %1302 = vector.broadcast %1256 : vector<1x16xf32> to vector<8x16xf32>
    %1303 = arith.mulf %1301, %1302 : vector<8x16xf32>
    %1304 = arith.addf %1153, %1303 : vector<8x16xf32>
    %1305 = vector.extract_strided_slice %25 {offsets = [0, 81], sizes = [8, 1], strides = [1, 1]} : vector<8x144xf32> to vector<8x1xf32>
    %1306 = vector.extract_strided_slice %25 {offsets = [0, 82], sizes = [8, 1], strides = [1, 1]} : vector<8x144xf32> to vector<8x1xf32>
    %1307 = vector.extract_strided_slice %25 {offsets = [0, 83], sizes = [8, 1], strides = [1, 1]} : vector<8x144xf32> to vector<8x1xf32>
    %1308 = vector.extract_strided_slice %25 {offsets = [0, 84], sizes = [8, 1], strides = [1, 1]} : vector<8x144xf32> to vector<8x1xf32>
    %1309 = vector.extract_strided_slice %25 {offsets = [0, 85], sizes = [8, 1], strides = [1, 1]} : vector<8x144xf32> to vector<8x1xf32>
    %1310 = vector.extract_strided_slice %25 {offsets = [0, 86], sizes = [8, 1], strides = [1, 1]} : vector<8x144xf32> to vector<8x1xf32>
    %1311 = vector.extract_strided_slice %25 {offsets = [0, 87], sizes = [8, 1], strides = [1, 1]} : vector<8x144xf32> to vector<8x1xf32>
    %1312 = vector.extract_strided_slice %25 {offsets = [0, 88], sizes = [8, 1], strides = [1, 1]} : vector<8x144xf32> to vector<8x1xf32>
    %1313 = vector.extract_strided_slice %25 {offsets = [0, 89], sizes = [8, 1], strides = [1, 1]} : vector<8x144xf32> to vector<8x1xf32>
    %1314 = vector.extract_strided_slice %16 {offsets = [0, 9], sizes = [8, 1], strides = [1, 1]} : vector<8x16xf32> to vector<8x1xf32>
    %1315 = vector.extract_strided_slice %20 {offsets = [0, 9], sizes = [8, 1], strides = [1, 1]} : vector<8x16xf32> to vector<8x1xf32>
    %1316 = vector.extract_strided_slice %24 {offsets = [0, 9], sizes = [8, 1], strides = [1, 1]} : vector<8x16xf32> to vector<8x1xf32>
    %1317 = vector.extract_strided_slice %16 {offsets = [0, 8], sizes = [8, 1], strides = [1, 1]} : vector<8x16xf32> to vector<8x1xf32>
    %1318 = vector.extract_strided_slice %20 {offsets = [0, 8], sizes = [8, 1], strides = [1, 1]} : vector<8x16xf32> to vector<8x1xf32>
    %1319 = vector.extract_strided_slice %24 {offsets = [0, 8], sizes = [8, 1], strides = [1, 1]} : vector<8x16xf32> to vector<8x1xf32>
    %1320 = arith.mulf %1173, %1305 : vector<8x1xf32>
    %1321 = arith.mulf %1178, %1308 : vector<8x1xf32>
    %1322 = arith.addf %1320, %1321 : vector<8x1xf32>
    %1323 = arith.mulf %1183, %1311 : vector<8x1xf32>
    %1324 = arith.addf %1322, %1323 : vector<8x1xf32>
    %1325 = arith.mulf %1173, %1306 : vector<8x1xf32>
    %1326 = arith.mulf %1178, %1309 : vector<8x1xf32>
    %1327 = arith.addf %1325, %1326 : vector<8x1xf32>
    %1328 = arith.mulf %1183, %1312 : vector<8x1xf32>
    %1329 = arith.addf %1327, %1328 : vector<8x1xf32>
    %1330 = arith.mulf %1173, %1307 : vector<8x1xf32>
    %1331 = arith.mulf %1178, %1310 : vector<8x1xf32>
    %1332 = arith.addf %1330, %1331 : vector<8x1xf32>
    %1333 = arith.mulf %1183, %1313 : vector<8x1xf32>
    %1334 = arith.addf %1332, %1333 : vector<8x1xf32>
    %1335 = arith.mulf %1188, %1305 : vector<8x1xf32>
    %1336 = arith.mulf %1193, %1308 : vector<8x1xf32>
    %1337 = arith.addf %1335, %1336 : vector<8x1xf32>
    %1338 = arith.mulf %1198, %1311 : vector<8x1xf32>
    %1339 = arith.addf %1337, %1338 : vector<8x1xf32>
    %1340 = arith.mulf %1188, %1306 : vector<8x1xf32>
    %1341 = arith.mulf %1193, %1309 : vector<8x1xf32>
    %1342 = arith.addf %1340, %1341 : vector<8x1xf32>
    %1343 = arith.mulf %1198, %1312 : vector<8x1xf32>
    %1344 = arith.addf %1342, %1343 : vector<8x1xf32>
    %1345 = arith.mulf %1188, %1307 : vector<8x1xf32>
    %1346 = arith.mulf %1193, %1310 : vector<8x1xf32>
    %1347 = arith.addf %1345, %1346 : vector<8x1xf32>
    %1348 = arith.mulf %1198, %1313 : vector<8x1xf32>
    %1349 = arith.addf %1347, %1348 : vector<8x1xf32>
    %1350 = arith.mulf %1203, %1305 : vector<8x1xf32>
    %1351 = arith.mulf %1208, %1308 : vector<8x1xf32>
    %1352 = arith.addf %1350, %1351 : vector<8x1xf32>
    %1353 = arith.mulf %1213, %1311 : vector<8x1xf32>
    %1354 = arith.addf %1352, %1353 : vector<8x1xf32>
    %1355 = arith.mulf %1203, %1306 : vector<8x1xf32>
    %1356 = arith.mulf %1208, %1309 : vector<8x1xf32>
    %1357 = arith.addf %1355, %1356 : vector<8x1xf32>
    %1358 = arith.mulf %1213, %1312 : vector<8x1xf32>
    %1359 = arith.addf %1357, %1358 : vector<8x1xf32>
    %1360 = arith.mulf %1203, %1307 : vector<8x1xf32>
    %1361 = arith.mulf %1208, %1310 : vector<8x1xf32>
    %1362 = arith.addf %1360, %1361 : vector<8x1xf32>
    %1363 = arith.mulf %1213, %1313 : vector<8x1xf32>
    %1364 = arith.addf %1362, %1363 : vector<8x1xf32>
    %1365 = arith.subf %1314, %1317 : vector<8x1xf32>
    %1366 = arith.subf %1315, %1318 : vector<8x1xf32>
    %1367 = arith.subf %1316, %1319 : vector<8x1xf32>
    %1368 = arith.mulf %1173, %1365 : vector<8x1xf32>
    %1369 = arith.mulf %1178, %1366 : vector<8x1xf32>
    %1370 = arith.addf %1368, %1369 : vector<8x1xf32>
    %1371 = arith.mulf %1183, %1367 : vector<8x1xf32>
    %1372 = arith.addf %1370, %1371 : vector<8x1xf32>
    %1373 = arith.mulf %1188, %1365 : vector<8x1xf32>
    %1374 = arith.mulf %1193, %1366 : vector<8x1xf32>
    %1375 = arith.addf %1373, %1374 : vector<8x1xf32>
    %1376 = arith.mulf %1198, %1367 : vector<8x1xf32>
    %1377 = arith.addf %1375, %1376 : vector<8x1xf32>
    %1378 = arith.mulf %1203, %1365 : vector<8x1xf32>
    %1379 = arith.mulf %1208, %1366 : vector<8x1xf32>
    %1380 = arith.addf %1378, %1379 : vector<8x1xf32>
    %1381 = arith.mulf %1213, %1367 : vector<8x1xf32>
    %1382 = arith.addf %1380, %1381 : vector<8x1xf32>
    %1383 = arith.addf %1372, %1232 : vector<8x1xf32>
    %1384 = arith.addf %1377, %1233 : vector<8x1xf32>
    %1385 = arith.addf %1382, %1234 : vector<8x1xf32>
    %1386 = arith.mulf %1324, %1314 : vector<8x1xf32>
    %1387 = arith.mulf %1329, %1315 : vector<8x1xf32>
    %1388 = arith.addf %1386, %1387 : vector<8x1xf32>
    %1389 = arith.mulf %1334, %1316 : vector<8x1xf32>
    %1390 = arith.addf %1388, %1389 : vector<8x1xf32>
    %1391 = arith.mulf %1339, %1314 : vector<8x1xf32>
    %1392 = arith.mulf %1344, %1315 : vector<8x1xf32>
    %1393 = arith.addf %1391, %1392 : vector<8x1xf32>
    %1394 = arith.mulf %1349, %1316 : vector<8x1xf32>
    %1395 = arith.addf %1393, %1394 : vector<8x1xf32>
    %1396 = arith.mulf %1354, %1314 : vector<8x1xf32>
    %1397 = arith.mulf %1359, %1315 : vector<8x1xf32>
    %1398 = arith.addf %1396, %1397 : vector<8x1xf32>
    %1399 = arith.mulf %1364, %1316 : vector<8x1xf32>
    %1400 = arith.addf %1398, %1399 : vector<8x1xf32>
    %1401 = arith.subf %1383, %1390 : vector<8x1xf32>
    %1402 = arith.subf %1384, %1395 : vector<8x1xf32>
    %1403 = arith.subf %1385, %1400 : vector<8x1xf32>
    %c9_i32 = arith.constant 9 : i32
    %1404 = vector.broadcast %c9_i32 : i32 to vector<1x16xi32>
    %1405 = arith.cmpi eq, %26, %1404 : vector<1x16xi32>
    %1406 = arith.extui %1405 : vector<1x16xi1> to vector<1x16xi32>
    %1407 = arith.sitofp %1406 : vector<1x16xi32> to vector<1x16xf32>
    %1408 = vector.broadcast %1324 : vector<8x1xf32> to vector<8x16xf32>
    %1409 = vector.broadcast %1407 : vector<1x16xf32> to vector<8x16xf32>
    %1410 = arith.mulf %1408, %1409 : vector<8x16xf32>
    %1411 = arith.addf %1260, %1410 : vector<8x16xf32>
    %1412 = vector.broadcast %1339 : vector<8x1xf32> to vector<8x16xf32>
    %1413 = vector.broadcast %1407 : vector<1x16xf32> to vector<8x16xf32>
    %1414 = arith.mulf %1412, %1413 : vector<8x16xf32>
    %1415 = arith.addf %1264, %1414 : vector<8x16xf32>
    %1416 = vector.broadcast %1354 : vector<8x1xf32> to vector<8x16xf32>
    %1417 = vector.broadcast %1407 : vector<1x16xf32> to vector<8x16xf32>
    %1418 = arith.mulf %1416, %1417 : vector<8x16xf32>
    %1419 = arith.addf %1268, %1418 : vector<8x16xf32>
    %1420 = vector.broadcast %1329 : vector<8x1xf32> to vector<8x16xf32>
    %1421 = vector.broadcast %1407 : vector<1x16xf32> to vector<8x16xf32>
    %1422 = arith.mulf %1420, %1421 : vector<8x16xf32>
    %1423 = arith.addf %1272, %1422 : vector<8x16xf32>
    %1424 = vector.broadcast %1344 : vector<8x1xf32> to vector<8x16xf32>
    %1425 = vector.broadcast %1407 : vector<1x16xf32> to vector<8x16xf32>
    %1426 = arith.mulf %1424, %1425 : vector<8x16xf32>
    %1427 = arith.addf %1276, %1426 : vector<8x16xf32>
    %1428 = vector.broadcast %1359 : vector<8x1xf32> to vector<8x16xf32>
    %1429 = vector.broadcast %1407 : vector<1x16xf32> to vector<8x16xf32>
    %1430 = arith.mulf %1428, %1429 : vector<8x16xf32>
    %1431 = arith.addf %1280, %1430 : vector<8x16xf32>
    %1432 = vector.broadcast %1334 : vector<8x1xf32> to vector<8x16xf32>
    %1433 = vector.broadcast %1407 : vector<1x16xf32> to vector<8x16xf32>
    %1434 = arith.mulf %1432, %1433 : vector<8x16xf32>
    %1435 = arith.addf %1284, %1434 : vector<8x16xf32>
    %1436 = vector.broadcast %1349 : vector<8x1xf32> to vector<8x16xf32>
    %1437 = vector.broadcast %1407 : vector<1x16xf32> to vector<8x16xf32>
    %1438 = arith.mulf %1436, %1437 : vector<8x16xf32>
    %1439 = arith.addf %1288, %1438 : vector<8x16xf32>
    %1440 = vector.broadcast %1364 : vector<8x1xf32> to vector<8x16xf32>
    %1441 = vector.broadcast %1407 : vector<1x16xf32> to vector<8x16xf32>
    %1442 = arith.mulf %1440, %1441 : vector<8x16xf32>
    %1443 = arith.addf %1292, %1442 : vector<8x16xf32>
    %1444 = vector.broadcast %1401 : vector<8x1xf32> to vector<8x16xf32>
    %1445 = vector.broadcast %1407 : vector<1x16xf32> to vector<8x16xf32>
    %1446 = arith.mulf %1444, %1445 : vector<8x16xf32>
    %1447 = arith.addf %1296, %1446 : vector<8x16xf32>
    %1448 = vector.broadcast %1402 : vector<8x1xf32> to vector<8x16xf32>
    %1449 = vector.broadcast %1407 : vector<1x16xf32> to vector<8x16xf32>
    %1450 = arith.mulf %1448, %1449 : vector<8x16xf32>
    %1451 = arith.addf %1300, %1450 : vector<8x16xf32>
    %1452 = vector.broadcast %1403 : vector<8x1xf32> to vector<8x16xf32>
    %1453 = vector.broadcast %1407 : vector<1x16xf32> to vector<8x16xf32>
    %1454 = arith.mulf %1452, %1453 : vector<8x16xf32>
    %1455 = arith.addf %1304, %1454 : vector<8x16xf32>
    %1456 = vector.extract_strided_slice %25 {offsets = [0, 90], sizes = [8, 1], strides = [1, 1]} : vector<8x144xf32> to vector<8x1xf32>
    %1457 = vector.extract_strided_slice %25 {offsets = [0, 91], sizes = [8, 1], strides = [1, 1]} : vector<8x144xf32> to vector<8x1xf32>
    %1458 = vector.extract_strided_slice %25 {offsets = [0, 92], sizes = [8, 1], strides = [1, 1]} : vector<8x144xf32> to vector<8x1xf32>
    %1459 = vector.extract_strided_slice %25 {offsets = [0, 93], sizes = [8, 1], strides = [1, 1]} : vector<8x144xf32> to vector<8x1xf32>
    %1460 = vector.extract_strided_slice %25 {offsets = [0, 94], sizes = [8, 1], strides = [1, 1]} : vector<8x144xf32> to vector<8x1xf32>
    %1461 = vector.extract_strided_slice %25 {offsets = [0, 95], sizes = [8, 1], strides = [1, 1]} : vector<8x144xf32> to vector<8x1xf32>
    %1462 = vector.extract_strided_slice %25 {offsets = [0, 96], sizes = [8, 1], strides = [1, 1]} : vector<8x144xf32> to vector<8x1xf32>
    %1463 = vector.extract_strided_slice %25 {offsets = [0, 97], sizes = [8, 1], strides = [1, 1]} : vector<8x144xf32> to vector<8x1xf32>
    %1464 = vector.extract_strided_slice %25 {offsets = [0, 98], sizes = [8, 1], strides = [1, 1]} : vector<8x144xf32> to vector<8x1xf32>
    %1465 = vector.extract_strided_slice %16 {offsets = [0, 10], sizes = [8, 1], strides = [1, 1]} : vector<8x16xf32> to vector<8x1xf32>
    %1466 = vector.extract_strided_slice %20 {offsets = [0, 10], sizes = [8, 1], strides = [1, 1]} : vector<8x16xf32> to vector<8x1xf32>
    %1467 = vector.extract_strided_slice %24 {offsets = [0, 10], sizes = [8, 1], strides = [1, 1]} : vector<8x16xf32> to vector<8x1xf32>
    %1468 = vector.extract_strided_slice %16 {offsets = [0, 0], sizes = [8, 1], strides = [1, 1]} : vector<8x16xf32> to vector<8x1xf32>
    %1469 = vector.extract_strided_slice %20 {offsets = [0, 0], sizes = [8, 1], strides = [1, 1]} : vector<8x16xf32> to vector<8x1xf32>
    %1470 = vector.extract_strided_slice %24 {offsets = [0, 0], sizes = [8, 1], strides = [1, 1]} : vector<8x16xf32> to vector<8x1xf32>
    %1471 = arith.mulf %27, %1456 : vector<8x1xf32>
    %1472 = arith.mulf %28, %1459 : vector<8x1xf32>
    %1473 = arith.addf %1471, %1472 : vector<8x1xf32>
    %1474 = arith.mulf %29, %1462 : vector<8x1xf32>
    %1475 = arith.addf %1473, %1474 : vector<8x1xf32>
    %1476 = arith.mulf %27, %1457 : vector<8x1xf32>
    %1477 = arith.mulf %28, %1460 : vector<8x1xf32>
    %1478 = arith.addf %1476, %1477 : vector<8x1xf32>
    %1479 = arith.mulf %29, %1463 : vector<8x1xf32>
    %1480 = arith.addf %1478, %1479 : vector<8x1xf32>
    %1481 = arith.mulf %27, %1458 : vector<8x1xf32>
    %1482 = arith.mulf %28, %1461 : vector<8x1xf32>
    %1483 = arith.addf %1481, %1482 : vector<8x1xf32>
    %1484 = arith.mulf %29, %1464 : vector<8x1xf32>
    %1485 = arith.addf %1483, %1484 : vector<8x1xf32>
    %1486 = arith.mulf %30, %1456 : vector<8x1xf32>
    %1487 = arith.mulf %31, %1459 : vector<8x1xf32>
    %1488 = arith.addf %1486, %1487 : vector<8x1xf32>
    %1489 = arith.mulf %32, %1462 : vector<8x1xf32>
    %1490 = arith.addf %1488, %1489 : vector<8x1xf32>
    %1491 = arith.mulf %30, %1457 : vector<8x1xf32>
    %1492 = arith.mulf %31, %1460 : vector<8x1xf32>
    %1493 = arith.addf %1491, %1492 : vector<8x1xf32>
    %1494 = arith.mulf %32, %1463 : vector<8x1xf32>
    %1495 = arith.addf %1493, %1494 : vector<8x1xf32>
    %1496 = arith.mulf %30, %1458 : vector<8x1xf32>
    %1497 = arith.mulf %31, %1461 : vector<8x1xf32>
    %1498 = arith.addf %1496, %1497 : vector<8x1xf32>
    %1499 = arith.mulf %32, %1464 : vector<8x1xf32>
    %1500 = arith.addf %1498, %1499 : vector<8x1xf32>
    %1501 = arith.mulf %33, %1456 : vector<8x1xf32>
    %1502 = arith.mulf %34, %1459 : vector<8x1xf32>
    %1503 = arith.addf %1501, %1502 : vector<8x1xf32>
    %1504 = arith.mulf %35, %1462 : vector<8x1xf32>
    %1505 = arith.addf %1503, %1504 : vector<8x1xf32>
    %1506 = arith.mulf %33, %1457 : vector<8x1xf32>
    %1507 = arith.mulf %34, %1460 : vector<8x1xf32>
    %1508 = arith.addf %1506, %1507 : vector<8x1xf32>
    %1509 = arith.mulf %35, %1463 : vector<8x1xf32>
    %1510 = arith.addf %1508, %1509 : vector<8x1xf32>
    %1511 = arith.mulf %33, %1458 : vector<8x1xf32>
    %1512 = arith.mulf %34, %1461 : vector<8x1xf32>
    %1513 = arith.addf %1511, %1512 : vector<8x1xf32>
    %1514 = arith.mulf %35, %1464 : vector<8x1xf32>
    %1515 = arith.addf %1513, %1514 : vector<8x1xf32>
    %1516 = arith.subf %1465, %1468 : vector<8x1xf32>
    %1517 = arith.subf %1466, %1469 : vector<8x1xf32>
    %1518 = arith.subf %1467, %1470 : vector<8x1xf32>
    %1519 = arith.mulf %27, %1516 : vector<8x1xf32>
    %1520 = arith.mulf %28, %1517 : vector<8x1xf32>
    %1521 = arith.addf %1519, %1520 : vector<8x1xf32>
    %1522 = arith.mulf %29, %1518 : vector<8x1xf32>
    %1523 = arith.addf %1521, %1522 : vector<8x1xf32>
    %1524 = arith.mulf %30, %1516 : vector<8x1xf32>
    %1525 = arith.mulf %31, %1517 : vector<8x1xf32>
    %1526 = arith.addf %1524, %1525 : vector<8x1xf32>
    %1527 = arith.mulf %32, %1518 : vector<8x1xf32>
    %1528 = arith.addf %1526, %1527 : vector<8x1xf32>
    %1529 = arith.mulf %33, %1516 : vector<8x1xf32>
    %1530 = arith.mulf %34, %1517 : vector<8x1xf32>
    %1531 = arith.addf %1529, %1530 : vector<8x1xf32>
    %1532 = arith.mulf %35, %1518 : vector<8x1xf32>
    %1533 = arith.addf %1531, %1532 : vector<8x1xf32>
    %1534 = arith.addf %1523, %36 : vector<8x1xf32>
    %1535 = arith.addf %1528, %37 : vector<8x1xf32>
    %1536 = arith.addf %1533, %38 : vector<8x1xf32>
    %1537 = arith.mulf %1475, %1465 : vector<8x1xf32>
    %1538 = arith.mulf %1480, %1466 : vector<8x1xf32>
    %1539 = arith.addf %1537, %1538 : vector<8x1xf32>
    %1540 = arith.mulf %1485, %1467 : vector<8x1xf32>
    %1541 = arith.addf %1539, %1540 : vector<8x1xf32>
    %1542 = arith.mulf %1490, %1465 : vector<8x1xf32>
    %1543 = arith.mulf %1495, %1466 : vector<8x1xf32>
    %1544 = arith.addf %1542, %1543 : vector<8x1xf32>
    %1545 = arith.mulf %1500, %1467 : vector<8x1xf32>
    %1546 = arith.addf %1544, %1545 : vector<8x1xf32>
    %1547 = arith.mulf %1505, %1465 : vector<8x1xf32>
    %1548 = arith.mulf %1510, %1466 : vector<8x1xf32>
    %1549 = arith.addf %1547, %1548 : vector<8x1xf32>
    %1550 = arith.mulf %1515, %1467 : vector<8x1xf32>
    %1551 = arith.addf %1549, %1550 : vector<8x1xf32>
    %1552 = arith.subf %1534, %1541 : vector<8x1xf32>
    %1553 = arith.subf %1535, %1546 : vector<8x1xf32>
    %1554 = arith.subf %1536, %1551 : vector<8x1xf32>
    %c10_i32 = arith.constant 10 : i32
    %1555 = vector.broadcast %c10_i32 : i32 to vector<1x16xi32>
    %1556 = arith.cmpi eq, %26, %1555 : vector<1x16xi32>
    %1557 = arith.extui %1556 : vector<1x16xi1> to vector<1x16xi32>
    %1558 = arith.sitofp %1557 : vector<1x16xi32> to vector<1x16xf32>
    %1559 = vector.broadcast %1475 : vector<8x1xf32> to vector<8x16xf32>
    %1560 = vector.broadcast %1558 : vector<1x16xf32> to vector<8x16xf32>
    %1561 = arith.mulf %1559, %1560 : vector<8x16xf32>
    %1562 = arith.addf %1411, %1561 : vector<8x16xf32>
    %1563 = vector.broadcast %1490 : vector<8x1xf32> to vector<8x16xf32>
    %1564 = vector.broadcast %1558 : vector<1x16xf32> to vector<8x16xf32>
    %1565 = arith.mulf %1563, %1564 : vector<8x16xf32>
    %1566 = arith.addf %1415, %1565 : vector<8x16xf32>
    %1567 = vector.broadcast %1505 : vector<8x1xf32> to vector<8x16xf32>
    %1568 = vector.broadcast %1558 : vector<1x16xf32> to vector<8x16xf32>
    %1569 = arith.mulf %1567, %1568 : vector<8x16xf32>
    %1570 = arith.addf %1419, %1569 : vector<8x16xf32>
    %1571 = vector.broadcast %1480 : vector<8x1xf32> to vector<8x16xf32>
    %1572 = vector.broadcast %1558 : vector<1x16xf32> to vector<8x16xf32>
    %1573 = arith.mulf %1571, %1572 : vector<8x16xf32>
    %1574 = arith.addf %1423, %1573 : vector<8x16xf32>
    %1575 = vector.broadcast %1495 : vector<8x1xf32> to vector<8x16xf32>
    %1576 = vector.broadcast %1558 : vector<1x16xf32> to vector<8x16xf32>
    %1577 = arith.mulf %1575, %1576 : vector<8x16xf32>
    %1578 = arith.addf %1427, %1577 : vector<8x16xf32>
    %1579 = vector.broadcast %1510 : vector<8x1xf32> to vector<8x16xf32>
    %1580 = vector.broadcast %1558 : vector<1x16xf32> to vector<8x16xf32>
    %1581 = arith.mulf %1579, %1580 : vector<8x16xf32>
    %1582 = arith.addf %1431, %1581 : vector<8x16xf32>
    %1583 = vector.broadcast %1485 : vector<8x1xf32> to vector<8x16xf32>
    %1584 = vector.broadcast %1558 : vector<1x16xf32> to vector<8x16xf32>
    %1585 = arith.mulf %1583, %1584 : vector<8x16xf32>
    %1586 = arith.addf %1435, %1585 : vector<8x16xf32>
    %1587 = vector.broadcast %1500 : vector<8x1xf32> to vector<8x16xf32>
    %1588 = vector.broadcast %1558 : vector<1x16xf32> to vector<8x16xf32>
    %1589 = arith.mulf %1587, %1588 : vector<8x16xf32>
    %1590 = arith.addf %1439, %1589 : vector<8x16xf32>
    %1591 = vector.broadcast %1515 : vector<8x1xf32> to vector<8x16xf32>
    %1592 = vector.broadcast %1558 : vector<1x16xf32> to vector<8x16xf32>
    %1593 = arith.mulf %1591, %1592 : vector<8x16xf32>
    %1594 = arith.addf %1443, %1593 : vector<8x16xf32>
    %1595 = vector.broadcast %1552 : vector<8x1xf32> to vector<8x16xf32>
    %1596 = vector.broadcast %1558 : vector<1x16xf32> to vector<8x16xf32>
    %1597 = arith.mulf %1595, %1596 : vector<8x16xf32>
    %1598 = arith.addf %1447, %1597 : vector<8x16xf32>
    %1599 = vector.broadcast %1553 : vector<8x1xf32> to vector<8x16xf32>
    %1600 = vector.broadcast %1558 : vector<1x16xf32> to vector<8x16xf32>
    %1601 = arith.mulf %1599, %1600 : vector<8x16xf32>
    %1602 = arith.addf %1451, %1601 : vector<8x16xf32>
    %1603 = vector.broadcast %1554 : vector<8x1xf32> to vector<8x16xf32>
    %1604 = vector.broadcast %1558 : vector<1x16xf32> to vector<8x16xf32>
    %1605 = arith.mulf %1603, %1604 : vector<8x16xf32>
    %1606 = arith.addf %1455, %1605 : vector<8x16xf32>
    %1607 = vector.extract_strided_slice %25 {offsets = [0, 99], sizes = [8, 1], strides = [1, 1]} : vector<8x144xf32> to vector<8x1xf32>
    %1608 = vector.extract_strided_slice %25 {offsets = [0, 100], sizes = [8, 1], strides = [1, 1]} : vector<8x144xf32> to vector<8x1xf32>
    %1609 = vector.extract_strided_slice %25 {offsets = [0, 101], sizes = [8, 1], strides = [1, 1]} : vector<8x144xf32> to vector<8x1xf32>
    %1610 = vector.extract_strided_slice %25 {offsets = [0, 102], sizes = [8, 1], strides = [1, 1]} : vector<8x144xf32> to vector<8x1xf32>
    %1611 = vector.extract_strided_slice %25 {offsets = [0, 103], sizes = [8, 1], strides = [1, 1]} : vector<8x144xf32> to vector<8x1xf32>
    %1612 = vector.extract_strided_slice %25 {offsets = [0, 104], sizes = [8, 1], strides = [1, 1]} : vector<8x144xf32> to vector<8x1xf32>
    %1613 = vector.extract_strided_slice %25 {offsets = [0, 105], sizes = [8, 1], strides = [1, 1]} : vector<8x144xf32> to vector<8x1xf32>
    %1614 = vector.extract_strided_slice %25 {offsets = [0, 106], sizes = [8, 1], strides = [1, 1]} : vector<8x144xf32> to vector<8x1xf32>
    %1615 = vector.extract_strided_slice %25 {offsets = [0, 107], sizes = [8, 1], strides = [1, 1]} : vector<8x144xf32> to vector<8x1xf32>
    %1616 = vector.extract_strided_slice %16 {offsets = [0, 11], sizes = [8, 1], strides = [1, 1]} : vector<8x16xf32> to vector<8x1xf32>
    %1617 = vector.extract_strided_slice %20 {offsets = [0, 11], sizes = [8, 1], strides = [1, 1]} : vector<8x16xf32> to vector<8x1xf32>
    %1618 = vector.extract_strided_slice %24 {offsets = [0, 11], sizes = [8, 1], strides = [1, 1]} : vector<8x16xf32> to vector<8x1xf32>
    %1619 = vector.extract_strided_slice %16 {offsets = [0, 10], sizes = [8, 1], strides = [1, 1]} : vector<8x16xf32> to vector<8x1xf32>
    %1620 = vector.extract_strided_slice %20 {offsets = [0, 10], sizes = [8, 1], strides = [1, 1]} : vector<8x16xf32> to vector<8x1xf32>
    %1621 = vector.extract_strided_slice %24 {offsets = [0, 10], sizes = [8, 1], strides = [1, 1]} : vector<8x16xf32> to vector<8x1xf32>
    %1622 = arith.mulf %1475, %1607 : vector<8x1xf32>
    %1623 = arith.mulf %1480, %1610 : vector<8x1xf32>
    %1624 = arith.addf %1622, %1623 : vector<8x1xf32>
    %1625 = arith.mulf %1485, %1613 : vector<8x1xf32>
    %1626 = arith.addf %1624, %1625 : vector<8x1xf32>
    %1627 = arith.mulf %1475, %1608 : vector<8x1xf32>
    %1628 = arith.mulf %1480, %1611 : vector<8x1xf32>
    %1629 = arith.addf %1627, %1628 : vector<8x1xf32>
    %1630 = arith.mulf %1485, %1614 : vector<8x1xf32>
    %1631 = arith.addf %1629, %1630 : vector<8x1xf32>
    %1632 = arith.mulf %1475, %1609 : vector<8x1xf32>
    %1633 = arith.mulf %1480, %1612 : vector<8x1xf32>
    %1634 = arith.addf %1632, %1633 : vector<8x1xf32>
    %1635 = arith.mulf %1485, %1615 : vector<8x1xf32>
    %1636 = arith.addf %1634, %1635 : vector<8x1xf32>
    %1637 = arith.mulf %1490, %1607 : vector<8x1xf32>
    %1638 = arith.mulf %1495, %1610 : vector<8x1xf32>
    %1639 = arith.addf %1637, %1638 : vector<8x1xf32>
    %1640 = arith.mulf %1500, %1613 : vector<8x1xf32>
    %1641 = arith.addf %1639, %1640 : vector<8x1xf32>
    %1642 = arith.mulf %1490, %1608 : vector<8x1xf32>
    %1643 = arith.mulf %1495, %1611 : vector<8x1xf32>
    %1644 = arith.addf %1642, %1643 : vector<8x1xf32>
    %1645 = arith.mulf %1500, %1614 : vector<8x1xf32>
    %1646 = arith.addf %1644, %1645 : vector<8x1xf32>
    %1647 = arith.mulf %1490, %1609 : vector<8x1xf32>
    %1648 = arith.mulf %1495, %1612 : vector<8x1xf32>
    %1649 = arith.addf %1647, %1648 : vector<8x1xf32>
    %1650 = arith.mulf %1500, %1615 : vector<8x1xf32>
    %1651 = arith.addf %1649, %1650 : vector<8x1xf32>
    %1652 = arith.mulf %1505, %1607 : vector<8x1xf32>
    %1653 = arith.mulf %1510, %1610 : vector<8x1xf32>
    %1654 = arith.addf %1652, %1653 : vector<8x1xf32>
    %1655 = arith.mulf %1515, %1613 : vector<8x1xf32>
    %1656 = arith.addf %1654, %1655 : vector<8x1xf32>
    %1657 = arith.mulf %1505, %1608 : vector<8x1xf32>
    %1658 = arith.mulf %1510, %1611 : vector<8x1xf32>
    %1659 = arith.addf %1657, %1658 : vector<8x1xf32>
    %1660 = arith.mulf %1515, %1614 : vector<8x1xf32>
    %1661 = arith.addf %1659, %1660 : vector<8x1xf32>
    %1662 = arith.mulf %1505, %1609 : vector<8x1xf32>
    %1663 = arith.mulf %1510, %1612 : vector<8x1xf32>
    %1664 = arith.addf %1662, %1663 : vector<8x1xf32>
    %1665 = arith.mulf %1515, %1615 : vector<8x1xf32>
    %1666 = arith.addf %1664, %1665 : vector<8x1xf32>
    %1667 = arith.subf %1616, %1619 : vector<8x1xf32>
    %1668 = arith.subf %1617, %1620 : vector<8x1xf32>
    %1669 = arith.subf %1618, %1621 : vector<8x1xf32>
    %1670 = arith.mulf %1475, %1667 : vector<8x1xf32>
    %1671 = arith.mulf %1480, %1668 : vector<8x1xf32>
    %1672 = arith.addf %1670, %1671 : vector<8x1xf32>
    %1673 = arith.mulf %1485, %1669 : vector<8x1xf32>
    %1674 = arith.addf %1672, %1673 : vector<8x1xf32>
    %1675 = arith.mulf %1490, %1667 : vector<8x1xf32>
    %1676 = arith.mulf %1495, %1668 : vector<8x1xf32>
    %1677 = arith.addf %1675, %1676 : vector<8x1xf32>
    %1678 = arith.mulf %1500, %1669 : vector<8x1xf32>
    %1679 = arith.addf %1677, %1678 : vector<8x1xf32>
    %1680 = arith.mulf %1505, %1667 : vector<8x1xf32>
    %1681 = arith.mulf %1510, %1668 : vector<8x1xf32>
    %1682 = arith.addf %1680, %1681 : vector<8x1xf32>
    %1683 = arith.mulf %1515, %1669 : vector<8x1xf32>
    %1684 = arith.addf %1682, %1683 : vector<8x1xf32>
    %1685 = arith.addf %1674, %1534 : vector<8x1xf32>
    %1686 = arith.addf %1679, %1535 : vector<8x1xf32>
    %1687 = arith.addf %1684, %1536 : vector<8x1xf32>
    %1688 = arith.mulf %1626, %1616 : vector<8x1xf32>
    %1689 = arith.mulf %1631, %1617 : vector<8x1xf32>
    %1690 = arith.addf %1688, %1689 : vector<8x1xf32>
    %1691 = arith.mulf %1636, %1618 : vector<8x1xf32>
    %1692 = arith.addf %1690, %1691 : vector<8x1xf32>
    %1693 = arith.mulf %1641, %1616 : vector<8x1xf32>
    %1694 = arith.mulf %1646, %1617 : vector<8x1xf32>
    %1695 = arith.addf %1693, %1694 : vector<8x1xf32>
    %1696 = arith.mulf %1651, %1618 : vector<8x1xf32>
    %1697 = arith.addf %1695, %1696 : vector<8x1xf32>
    %1698 = arith.mulf %1656, %1616 : vector<8x1xf32>
    %1699 = arith.mulf %1661, %1617 : vector<8x1xf32>
    %1700 = arith.addf %1698, %1699 : vector<8x1xf32>
    %1701 = arith.mulf %1666, %1618 : vector<8x1xf32>
    %1702 = arith.addf %1700, %1701 : vector<8x1xf32>
    %1703 = arith.subf %1685, %1692 : vector<8x1xf32>
    %1704 = arith.subf %1686, %1697 : vector<8x1xf32>
    %1705 = arith.subf %1687, %1702 : vector<8x1xf32>
    %c11_i32 = arith.constant 11 : i32
    %1706 = vector.broadcast %c11_i32 : i32 to vector<1x16xi32>
    %1707 = arith.cmpi eq, %26, %1706 : vector<1x16xi32>
    %1708 = arith.extui %1707 : vector<1x16xi1> to vector<1x16xi32>
    %1709 = arith.sitofp %1708 : vector<1x16xi32> to vector<1x16xf32>
    %1710 = vector.broadcast %1626 : vector<8x1xf32> to vector<8x16xf32>
    %1711 = vector.broadcast %1709 : vector<1x16xf32> to vector<8x16xf32>
    %1712 = arith.mulf %1710, %1711 : vector<8x16xf32>
    %1713 = arith.addf %1562, %1712 : vector<8x16xf32>
    %1714 = vector.broadcast %1641 : vector<8x1xf32> to vector<8x16xf32>
    %1715 = vector.broadcast %1709 : vector<1x16xf32> to vector<8x16xf32>
    %1716 = arith.mulf %1714, %1715 : vector<8x16xf32>
    %1717 = arith.addf %1566, %1716 : vector<8x16xf32>
    %1718 = vector.broadcast %1656 : vector<8x1xf32> to vector<8x16xf32>
    %1719 = vector.broadcast %1709 : vector<1x16xf32> to vector<8x16xf32>
    %1720 = arith.mulf %1718, %1719 : vector<8x16xf32>
    %1721 = arith.addf %1570, %1720 : vector<8x16xf32>
    %1722 = vector.broadcast %1631 : vector<8x1xf32> to vector<8x16xf32>
    %1723 = vector.broadcast %1709 : vector<1x16xf32> to vector<8x16xf32>
    %1724 = arith.mulf %1722, %1723 : vector<8x16xf32>
    %1725 = arith.addf %1574, %1724 : vector<8x16xf32>
    %1726 = vector.broadcast %1646 : vector<8x1xf32> to vector<8x16xf32>
    %1727 = vector.broadcast %1709 : vector<1x16xf32> to vector<8x16xf32>
    %1728 = arith.mulf %1726, %1727 : vector<8x16xf32>
    %1729 = arith.addf %1578, %1728 : vector<8x16xf32>
    %1730 = vector.broadcast %1661 : vector<8x1xf32> to vector<8x16xf32>
    %1731 = vector.broadcast %1709 : vector<1x16xf32> to vector<8x16xf32>
    %1732 = arith.mulf %1730, %1731 : vector<8x16xf32>
    %1733 = arith.addf %1582, %1732 : vector<8x16xf32>
    %1734 = vector.broadcast %1636 : vector<8x1xf32> to vector<8x16xf32>
    %1735 = vector.broadcast %1709 : vector<1x16xf32> to vector<8x16xf32>
    %1736 = arith.mulf %1734, %1735 : vector<8x16xf32>
    %1737 = arith.addf %1586, %1736 : vector<8x16xf32>
    %1738 = vector.broadcast %1651 : vector<8x1xf32> to vector<8x16xf32>
    %1739 = vector.broadcast %1709 : vector<1x16xf32> to vector<8x16xf32>
    %1740 = arith.mulf %1738, %1739 : vector<8x16xf32>
    %1741 = arith.addf %1590, %1740 : vector<8x16xf32>
    %1742 = vector.broadcast %1666 : vector<8x1xf32> to vector<8x16xf32>
    %1743 = vector.broadcast %1709 : vector<1x16xf32> to vector<8x16xf32>
    %1744 = arith.mulf %1742, %1743 : vector<8x16xf32>
    %1745 = arith.addf %1594, %1744 : vector<8x16xf32>
    %1746 = vector.broadcast %1703 : vector<8x1xf32> to vector<8x16xf32>
    %1747 = vector.broadcast %1709 : vector<1x16xf32> to vector<8x16xf32>
    %1748 = arith.mulf %1746, %1747 : vector<8x16xf32>
    %1749 = arith.addf %1598, %1748 : vector<8x16xf32>
    %1750 = vector.broadcast %1704 : vector<8x1xf32> to vector<8x16xf32>
    %1751 = vector.broadcast %1709 : vector<1x16xf32> to vector<8x16xf32>
    %1752 = arith.mulf %1750, %1751 : vector<8x16xf32>
    %1753 = arith.addf %1602, %1752 : vector<8x16xf32>
    %1754 = vector.broadcast %1705 : vector<8x1xf32> to vector<8x16xf32>
    %1755 = vector.broadcast %1709 : vector<1x16xf32> to vector<8x16xf32>
    %1756 = arith.mulf %1754, %1755 : vector<8x16xf32>
    %1757 = arith.addf %1606, %1756 : vector<8x16xf32>
    %1758 = vector.extract_strided_slice %25 {offsets = [0, 108], sizes = [8, 1], strides = [1, 1]} : vector<8x144xf32> to vector<8x1xf32>
    %1759 = vector.extract_strided_slice %25 {offsets = [0, 109], sizes = [8, 1], strides = [1, 1]} : vector<8x144xf32> to vector<8x1xf32>
    %1760 = vector.extract_strided_slice %25 {offsets = [0, 110], sizes = [8, 1], strides = [1, 1]} : vector<8x144xf32> to vector<8x1xf32>
    %1761 = vector.extract_strided_slice %25 {offsets = [0, 111], sizes = [8, 1], strides = [1, 1]} : vector<8x144xf32> to vector<8x1xf32>
    %1762 = vector.extract_strided_slice %25 {offsets = [0, 112], sizes = [8, 1], strides = [1, 1]} : vector<8x144xf32> to vector<8x1xf32>
    %1763 = vector.extract_strided_slice %25 {offsets = [0, 113], sizes = [8, 1], strides = [1, 1]} : vector<8x144xf32> to vector<8x1xf32>
    %1764 = vector.extract_strided_slice %25 {offsets = [0, 114], sizes = [8, 1], strides = [1, 1]} : vector<8x144xf32> to vector<8x1xf32>
    %1765 = vector.extract_strided_slice %25 {offsets = [0, 115], sizes = [8, 1], strides = [1, 1]} : vector<8x144xf32> to vector<8x1xf32>
    %1766 = vector.extract_strided_slice %25 {offsets = [0, 116], sizes = [8, 1], strides = [1, 1]} : vector<8x144xf32> to vector<8x1xf32>
    %1767 = vector.extract_strided_slice %16 {offsets = [0, 12], sizes = [8, 1], strides = [1, 1]} : vector<8x16xf32> to vector<8x1xf32>
    %1768 = vector.extract_strided_slice %20 {offsets = [0, 12], sizes = [8, 1], strides = [1, 1]} : vector<8x16xf32> to vector<8x1xf32>
    %1769 = vector.extract_strided_slice %24 {offsets = [0, 12], sizes = [8, 1], strides = [1, 1]} : vector<8x16xf32> to vector<8x1xf32>
    %1770 = vector.extract_strided_slice %16 {offsets = [0, 11], sizes = [8, 1], strides = [1, 1]} : vector<8x16xf32> to vector<8x1xf32>
    %1771 = vector.extract_strided_slice %20 {offsets = [0, 11], sizes = [8, 1], strides = [1, 1]} : vector<8x16xf32> to vector<8x1xf32>
    %1772 = vector.extract_strided_slice %24 {offsets = [0, 11], sizes = [8, 1], strides = [1, 1]} : vector<8x16xf32> to vector<8x1xf32>
    %1773 = arith.mulf %1626, %1758 : vector<8x1xf32>
    %1774 = arith.mulf %1631, %1761 : vector<8x1xf32>
    %1775 = arith.addf %1773, %1774 : vector<8x1xf32>
    %1776 = arith.mulf %1636, %1764 : vector<8x1xf32>
    %1777 = arith.addf %1775, %1776 : vector<8x1xf32>
    %1778 = arith.mulf %1626, %1759 : vector<8x1xf32>
    %1779 = arith.mulf %1631, %1762 : vector<8x1xf32>
    %1780 = arith.addf %1778, %1779 : vector<8x1xf32>
    %1781 = arith.mulf %1636, %1765 : vector<8x1xf32>
    %1782 = arith.addf %1780, %1781 : vector<8x1xf32>
    %1783 = arith.mulf %1626, %1760 : vector<8x1xf32>
    %1784 = arith.mulf %1631, %1763 : vector<8x1xf32>
    %1785 = arith.addf %1783, %1784 : vector<8x1xf32>
    %1786 = arith.mulf %1636, %1766 : vector<8x1xf32>
    %1787 = arith.addf %1785, %1786 : vector<8x1xf32>
    %1788 = arith.mulf %1641, %1758 : vector<8x1xf32>
    %1789 = arith.mulf %1646, %1761 : vector<8x1xf32>
    %1790 = arith.addf %1788, %1789 : vector<8x1xf32>
    %1791 = arith.mulf %1651, %1764 : vector<8x1xf32>
    %1792 = arith.addf %1790, %1791 : vector<8x1xf32>
    %1793 = arith.mulf %1641, %1759 : vector<8x1xf32>
    %1794 = arith.mulf %1646, %1762 : vector<8x1xf32>
    %1795 = arith.addf %1793, %1794 : vector<8x1xf32>
    %1796 = arith.mulf %1651, %1765 : vector<8x1xf32>
    %1797 = arith.addf %1795, %1796 : vector<8x1xf32>
    %1798 = arith.mulf %1641, %1760 : vector<8x1xf32>
    %1799 = arith.mulf %1646, %1763 : vector<8x1xf32>
    %1800 = arith.addf %1798, %1799 : vector<8x1xf32>
    %1801 = arith.mulf %1651, %1766 : vector<8x1xf32>
    %1802 = arith.addf %1800, %1801 : vector<8x1xf32>
    %1803 = arith.mulf %1656, %1758 : vector<8x1xf32>
    %1804 = arith.mulf %1661, %1761 : vector<8x1xf32>
    %1805 = arith.addf %1803, %1804 : vector<8x1xf32>
    %1806 = arith.mulf %1666, %1764 : vector<8x1xf32>
    %1807 = arith.addf %1805, %1806 : vector<8x1xf32>
    %1808 = arith.mulf %1656, %1759 : vector<8x1xf32>
    %1809 = arith.mulf %1661, %1762 : vector<8x1xf32>
    %1810 = arith.addf %1808, %1809 : vector<8x1xf32>
    %1811 = arith.mulf %1666, %1765 : vector<8x1xf32>
    %1812 = arith.addf %1810, %1811 : vector<8x1xf32>
    %1813 = arith.mulf %1656, %1760 : vector<8x1xf32>
    %1814 = arith.mulf %1661, %1763 : vector<8x1xf32>
    %1815 = arith.addf %1813, %1814 : vector<8x1xf32>
    %1816 = arith.mulf %1666, %1766 : vector<8x1xf32>
    %1817 = arith.addf %1815, %1816 : vector<8x1xf32>
    %1818 = arith.subf %1767, %1770 : vector<8x1xf32>
    %1819 = arith.subf %1768, %1771 : vector<8x1xf32>
    %1820 = arith.subf %1769, %1772 : vector<8x1xf32>
    %1821 = arith.mulf %1626, %1818 : vector<8x1xf32>
    %1822 = arith.mulf %1631, %1819 : vector<8x1xf32>
    %1823 = arith.addf %1821, %1822 : vector<8x1xf32>
    %1824 = arith.mulf %1636, %1820 : vector<8x1xf32>
    %1825 = arith.addf %1823, %1824 : vector<8x1xf32>
    %1826 = arith.mulf %1641, %1818 : vector<8x1xf32>
    %1827 = arith.mulf %1646, %1819 : vector<8x1xf32>
    %1828 = arith.addf %1826, %1827 : vector<8x1xf32>
    %1829 = arith.mulf %1651, %1820 : vector<8x1xf32>
    %1830 = arith.addf %1828, %1829 : vector<8x1xf32>
    %1831 = arith.mulf %1656, %1818 : vector<8x1xf32>
    %1832 = arith.mulf %1661, %1819 : vector<8x1xf32>
    %1833 = arith.addf %1831, %1832 : vector<8x1xf32>
    %1834 = arith.mulf %1666, %1820 : vector<8x1xf32>
    %1835 = arith.addf %1833, %1834 : vector<8x1xf32>
    %1836 = arith.addf %1825, %1685 : vector<8x1xf32>
    %1837 = arith.addf %1830, %1686 : vector<8x1xf32>
    %1838 = arith.addf %1835, %1687 : vector<8x1xf32>
    %1839 = arith.mulf %1777, %1767 : vector<8x1xf32>
    %1840 = arith.mulf %1782, %1768 : vector<8x1xf32>
    %1841 = arith.addf %1839, %1840 : vector<8x1xf32>
    %1842 = arith.mulf %1787, %1769 : vector<8x1xf32>
    %1843 = arith.addf %1841, %1842 : vector<8x1xf32>
    %1844 = arith.mulf %1792, %1767 : vector<8x1xf32>
    %1845 = arith.mulf %1797, %1768 : vector<8x1xf32>
    %1846 = arith.addf %1844, %1845 : vector<8x1xf32>
    %1847 = arith.mulf %1802, %1769 : vector<8x1xf32>
    %1848 = arith.addf %1846, %1847 : vector<8x1xf32>
    %1849 = arith.mulf %1807, %1767 : vector<8x1xf32>
    %1850 = arith.mulf %1812, %1768 : vector<8x1xf32>
    %1851 = arith.addf %1849, %1850 : vector<8x1xf32>
    %1852 = arith.mulf %1817, %1769 : vector<8x1xf32>
    %1853 = arith.addf %1851, %1852 : vector<8x1xf32>
    %1854 = arith.subf %1836, %1843 : vector<8x1xf32>
    %1855 = arith.subf %1837, %1848 : vector<8x1xf32>
    %1856 = arith.subf %1838, %1853 : vector<8x1xf32>
    %c12_i32 = arith.constant 12 : i32
    %1857 = vector.broadcast %c12_i32 : i32 to vector<1x16xi32>
    %1858 = arith.cmpi eq, %26, %1857 : vector<1x16xi32>
    %1859 = arith.extui %1858 : vector<1x16xi1> to vector<1x16xi32>
    %1860 = arith.sitofp %1859 : vector<1x16xi32> to vector<1x16xf32>
    %1861 = vector.broadcast %1777 : vector<8x1xf32> to vector<8x16xf32>
    %1862 = vector.broadcast %1860 : vector<1x16xf32> to vector<8x16xf32>
    %1863 = arith.mulf %1861, %1862 : vector<8x16xf32>
    %1864 = arith.addf %1713, %1863 : vector<8x16xf32>
    %1865 = vector.broadcast %1792 : vector<8x1xf32> to vector<8x16xf32>
    %1866 = vector.broadcast %1860 : vector<1x16xf32> to vector<8x16xf32>
    %1867 = arith.mulf %1865, %1866 : vector<8x16xf32>
    %1868 = arith.addf %1717, %1867 : vector<8x16xf32>
    %1869 = vector.broadcast %1807 : vector<8x1xf32> to vector<8x16xf32>
    %1870 = vector.broadcast %1860 : vector<1x16xf32> to vector<8x16xf32>
    %1871 = arith.mulf %1869, %1870 : vector<8x16xf32>
    %1872 = arith.addf %1721, %1871 : vector<8x16xf32>
    %1873 = vector.broadcast %1782 : vector<8x1xf32> to vector<8x16xf32>
    %1874 = vector.broadcast %1860 : vector<1x16xf32> to vector<8x16xf32>
    %1875 = arith.mulf %1873, %1874 : vector<8x16xf32>
    %1876 = arith.addf %1725, %1875 : vector<8x16xf32>
    %1877 = vector.broadcast %1797 : vector<8x1xf32> to vector<8x16xf32>
    %1878 = vector.broadcast %1860 : vector<1x16xf32> to vector<8x16xf32>
    %1879 = arith.mulf %1877, %1878 : vector<8x16xf32>
    %1880 = arith.addf %1729, %1879 : vector<8x16xf32>
    %1881 = vector.broadcast %1812 : vector<8x1xf32> to vector<8x16xf32>
    %1882 = vector.broadcast %1860 : vector<1x16xf32> to vector<8x16xf32>
    %1883 = arith.mulf %1881, %1882 : vector<8x16xf32>
    %1884 = arith.addf %1733, %1883 : vector<8x16xf32>
    %1885 = vector.broadcast %1787 : vector<8x1xf32> to vector<8x16xf32>
    %1886 = vector.broadcast %1860 : vector<1x16xf32> to vector<8x16xf32>
    %1887 = arith.mulf %1885, %1886 : vector<8x16xf32>
    %1888 = arith.addf %1737, %1887 : vector<8x16xf32>
    %1889 = vector.broadcast %1802 : vector<8x1xf32> to vector<8x16xf32>
    %1890 = vector.broadcast %1860 : vector<1x16xf32> to vector<8x16xf32>
    %1891 = arith.mulf %1889, %1890 : vector<8x16xf32>
    %1892 = arith.addf %1741, %1891 : vector<8x16xf32>
    %1893 = vector.broadcast %1817 : vector<8x1xf32> to vector<8x16xf32>
    %1894 = vector.broadcast %1860 : vector<1x16xf32> to vector<8x16xf32>
    %1895 = arith.mulf %1893, %1894 : vector<8x16xf32>
    %1896 = arith.addf %1745, %1895 : vector<8x16xf32>
    %1897 = vector.broadcast %1854 : vector<8x1xf32> to vector<8x16xf32>
    %1898 = vector.broadcast %1860 : vector<1x16xf32> to vector<8x16xf32>
    %1899 = arith.mulf %1897, %1898 : vector<8x16xf32>
    %1900 = arith.addf %1749, %1899 : vector<8x16xf32>
    %1901 = vector.broadcast %1855 : vector<8x1xf32> to vector<8x16xf32>
    %1902 = vector.broadcast %1860 : vector<1x16xf32> to vector<8x16xf32>
    %1903 = arith.mulf %1901, %1902 : vector<8x16xf32>
    %1904 = arith.addf %1753, %1903 : vector<8x16xf32>
    %1905 = vector.broadcast %1856 : vector<8x1xf32> to vector<8x16xf32>
    %1906 = vector.broadcast %1860 : vector<1x16xf32> to vector<8x16xf32>
    %1907 = arith.mulf %1905, %1906 : vector<8x16xf32>
    %1908 = arith.addf %1757, %1907 : vector<8x16xf32>
    %1909 = vector.extract_strided_slice %25 {offsets = [0, 117], sizes = [8, 1], strides = [1, 1]} : vector<8x144xf32> to vector<8x1xf32>
    %1910 = vector.extract_strided_slice %25 {offsets = [0, 118], sizes = [8, 1], strides = [1, 1]} : vector<8x144xf32> to vector<8x1xf32>
    %1911 = vector.extract_strided_slice %25 {offsets = [0, 119], sizes = [8, 1], strides = [1, 1]} : vector<8x144xf32> to vector<8x1xf32>
    %1912 = vector.extract_strided_slice %25 {offsets = [0, 120], sizes = [8, 1], strides = [1, 1]} : vector<8x144xf32> to vector<8x1xf32>
    %1913 = vector.extract_strided_slice %25 {offsets = [0, 121], sizes = [8, 1], strides = [1, 1]} : vector<8x144xf32> to vector<8x1xf32>
    %1914 = vector.extract_strided_slice %25 {offsets = [0, 122], sizes = [8, 1], strides = [1, 1]} : vector<8x144xf32> to vector<8x1xf32>
    %1915 = vector.extract_strided_slice %25 {offsets = [0, 123], sizes = [8, 1], strides = [1, 1]} : vector<8x144xf32> to vector<8x1xf32>
    %1916 = vector.extract_strided_slice %25 {offsets = [0, 124], sizes = [8, 1], strides = [1, 1]} : vector<8x144xf32> to vector<8x1xf32>
    %1917 = vector.extract_strided_slice %25 {offsets = [0, 125], sizes = [8, 1], strides = [1, 1]} : vector<8x144xf32> to vector<8x1xf32>
    %1918 = vector.extract_strided_slice %16 {offsets = [0, 13], sizes = [8, 1], strides = [1, 1]} : vector<8x16xf32> to vector<8x1xf32>
    %1919 = vector.extract_strided_slice %20 {offsets = [0, 13], sizes = [8, 1], strides = [1, 1]} : vector<8x16xf32> to vector<8x1xf32>
    %1920 = vector.extract_strided_slice %24 {offsets = [0, 13], sizes = [8, 1], strides = [1, 1]} : vector<8x16xf32> to vector<8x1xf32>
    %1921 = vector.extract_strided_slice %16 {offsets = [0, 0], sizes = [8, 1], strides = [1, 1]} : vector<8x16xf32> to vector<8x1xf32>
    %1922 = vector.extract_strided_slice %20 {offsets = [0, 0], sizes = [8, 1], strides = [1, 1]} : vector<8x16xf32> to vector<8x1xf32>
    %1923 = vector.extract_strided_slice %24 {offsets = [0, 0], sizes = [8, 1], strides = [1, 1]} : vector<8x16xf32> to vector<8x1xf32>
    %1924 = arith.mulf %27, %1909 : vector<8x1xf32>
    %1925 = arith.mulf %28, %1912 : vector<8x1xf32>
    %1926 = arith.addf %1924, %1925 : vector<8x1xf32>
    %1927 = arith.mulf %29, %1915 : vector<8x1xf32>
    %1928 = arith.addf %1926, %1927 : vector<8x1xf32>
    %1929 = arith.mulf %27, %1910 : vector<8x1xf32>
    %1930 = arith.mulf %28, %1913 : vector<8x1xf32>
    %1931 = arith.addf %1929, %1930 : vector<8x1xf32>
    %1932 = arith.mulf %29, %1916 : vector<8x1xf32>
    %1933 = arith.addf %1931, %1932 : vector<8x1xf32>
    %1934 = arith.mulf %27, %1911 : vector<8x1xf32>
    %1935 = arith.mulf %28, %1914 : vector<8x1xf32>
    %1936 = arith.addf %1934, %1935 : vector<8x1xf32>
    %1937 = arith.mulf %29, %1917 : vector<8x1xf32>
    %1938 = arith.addf %1936, %1937 : vector<8x1xf32>
    %1939 = arith.mulf %30, %1909 : vector<8x1xf32>
    %1940 = arith.mulf %31, %1912 : vector<8x1xf32>
    %1941 = arith.addf %1939, %1940 : vector<8x1xf32>
    %1942 = arith.mulf %32, %1915 : vector<8x1xf32>
    %1943 = arith.addf %1941, %1942 : vector<8x1xf32>
    %1944 = arith.mulf %30, %1910 : vector<8x1xf32>
    %1945 = arith.mulf %31, %1913 : vector<8x1xf32>
    %1946 = arith.addf %1944, %1945 : vector<8x1xf32>
    %1947 = arith.mulf %32, %1916 : vector<8x1xf32>
    %1948 = arith.addf %1946, %1947 : vector<8x1xf32>
    %1949 = arith.mulf %30, %1911 : vector<8x1xf32>
    %1950 = arith.mulf %31, %1914 : vector<8x1xf32>
    %1951 = arith.addf %1949, %1950 : vector<8x1xf32>
    %1952 = arith.mulf %32, %1917 : vector<8x1xf32>
    %1953 = arith.addf %1951, %1952 : vector<8x1xf32>
    %1954 = arith.mulf %33, %1909 : vector<8x1xf32>
    %1955 = arith.mulf %34, %1912 : vector<8x1xf32>
    %1956 = arith.addf %1954, %1955 : vector<8x1xf32>
    %1957 = arith.mulf %35, %1915 : vector<8x1xf32>
    %1958 = arith.addf %1956, %1957 : vector<8x1xf32>
    %1959 = arith.mulf %33, %1910 : vector<8x1xf32>
    %1960 = arith.mulf %34, %1913 : vector<8x1xf32>
    %1961 = arith.addf %1959, %1960 : vector<8x1xf32>
    %1962 = arith.mulf %35, %1916 : vector<8x1xf32>
    %1963 = arith.addf %1961, %1962 : vector<8x1xf32>
    %1964 = arith.mulf %33, %1911 : vector<8x1xf32>
    %1965 = arith.mulf %34, %1914 : vector<8x1xf32>
    %1966 = arith.addf %1964, %1965 : vector<8x1xf32>
    %1967 = arith.mulf %35, %1917 : vector<8x1xf32>
    %1968 = arith.addf %1966, %1967 : vector<8x1xf32>
    %1969 = arith.subf %1918, %1921 : vector<8x1xf32>
    %1970 = arith.subf %1919, %1922 : vector<8x1xf32>
    %1971 = arith.subf %1920, %1923 : vector<8x1xf32>
    %1972 = arith.mulf %27, %1969 : vector<8x1xf32>
    %1973 = arith.mulf %28, %1970 : vector<8x1xf32>
    %1974 = arith.addf %1972, %1973 : vector<8x1xf32>
    %1975 = arith.mulf %29, %1971 : vector<8x1xf32>
    %1976 = arith.addf %1974, %1975 : vector<8x1xf32>
    %1977 = arith.mulf %30, %1969 : vector<8x1xf32>
    %1978 = arith.mulf %31, %1970 : vector<8x1xf32>
    %1979 = arith.addf %1977, %1978 : vector<8x1xf32>
    %1980 = arith.mulf %32, %1971 : vector<8x1xf32>
    %1981 = arith.addf %1979, %1980 : vector<8x1xf32>
    %1982 = arith.mulf %33, %1969 : vector<8x1xf32>
    %1983 = arith.mulf %34, %1970 : vector<8x1xf32>
    %1984 = arith.addf %1982, %1983 : vector<8x1xf32>
    %1985 = arith.mulf %35, %1971 : vector<8x1xf32>
    %1986 = arith.addf %1984, %1985 : vector<8x1xf32>
    %1987 = arith.addf %1976, %36 : vector<8x1xf32>
    %1988 = arith.addf %1981, %37 : vector<8x1xf32>
    %1989 = arith.addf %1986, %38 : vector<8x1xf32>
    %1990 = arith.mulf %1928, %1918 : vector<8x1xf32>
    %1991 = arith.mulf %1933, %1919 : vector<8x1xf32>
    %1992 = arith.addf %1990, %1991 : vector<8x1xf32>
    %1993 = arith.mulf %1938, %1920 : vector<8x1xf32>
    %1994 = arith.addf %1992, %1993 : vector<8x1xf32>
    %1995 = arith.mulf %1943, %1918 : vector<8x1xf32>
    %1996 = arith.mulf %1948, %1919 : vector<8x1xf32>
    %1997 = arith.addf %1995, %1996 : vector<8x1xf32>
    %1998 = arith.mulf %1953, %1920 : vector<8x1xf32>
    %1999 = arith.addf %1997, %1998 : vector<8x1xf32>
    %2000 = arith.mulf %1958, %1918 : vector<8x1xf32>
    %2001 = arith.mulf %1963, %1919 : vector<8x1xf32>
    %2002 = arith.addf %2000, %2001 : vector<8x1xf32>
    %2003 = arith.mulf %1968, %1920 : vector<8x1xf32>
    %2004 = arith.addf %2002, %2003 : vector<8x1xf32>
    %2005 = arith.subf %1987, %1994 : vector<8x1xf32>
    %2006 = arith.subf %1988, %1999 : vector<8x1xf32>
    %2007 = arith.subf %1989, %2004 : vector<8x1xf32>
    %c13_i32 = arith.constant 13 : i32
    %2008 = vector.broadcast %c13_i32 : i32 to vector<1x16xi32>
    %2009 = arith.cmpi eq, %26, %2008 : vector<1x16xi32>
    %2010 = arith.extui %2009 : vector<1x16xi1> to vector<1x16xi32>
    %2011 = arith.sitofp %2010 : vector<1x16xi32> to vector<1x16xf32>
    %2012 = vector.broadcast %1928 : vector<8x1xf32> to vector<8x16xf32>
    %2013 = vector.broadcast %2011 : vector<1x16xf32> to vector<8x16xf32>
    %2014 = arith.mulf %2012, %2013 : vector<8x16xf32>
    %2015 = arith.addf %1864, %2014 : vector<8x16xf32>
    %2016 = vector.broadcast %1943 : vector<8x1xf32> to vector<8x16xf32>
    %2017 = vector.broadcast %2011 : vector<1x16xf32> to vector<8x16xf32>
    %2018 = arith.mulf %2016, %2017 : vector<8x16xf32>
    %2019 = arith.addf %1868, %2018 : vector<8x16xf32>
    %2020 = vector.broadcast %1958 : vector<8x1xf32> to vector<8x16xf32>
    %2021 = vector.broadcast %2011 : vector<1x16xf32> to vector<8x16xf32>
    %2022 = arith.mulf %2020, %2021 : vector<8x16xf32>
    %2023 = arith.addf %1872, %2022 : vector<8x16xf32>
    %2024 = vector.broadcast %1933 : vector<8x1xf32> to vector<8x16xf32>
    %2025 = vector.broadcast %2011 : vector<1x16xf32> to vector<8x16xf32>
    %2026 = arith.mulf %2024, %2025 : vector<8x16xf32>
    %2027 = arith.addf %1876, %2026 : vector<8x16xf32>
    %2028 = vector.broadcast %1948 : vector<8x1xf32> to vector<8x16xf32>
    %2029 = vector.broadcast %2011 : vector<1x16xf32> to vector<8x16xf32>
    %2030 = arith.mulf %2028, %2029 : vector<8x16xf32>
    %2031 = arith.addf %1880, %2030 : vector<8x16xf32>
    %2032 = vector.broadcast %1963 : vector<8x1xf32> to vector<8x16xf32>
    %2033 = vector.broadcast %2011 : vector<1x16xf32> to vector<8x16xf32>
    %2034 = arith.mulf %2032, %2033 : vector<8x16xf32>
    %2035 = arith.addf %1884, %2034 : vector<8x16xf32>
    %2036 = vector.broadcast %1938 : vector<8x1xf32> to vector<8x16xf32>
    %2037 = vector.broadcast %2011 : vector<1x16xf32> to vector<8x16xf32>
    %2038 = arith.mulf %2036, %2037 : vector<8x16xf32>
    %2039 = arith.addf %1888, %2038 : vector<8x16xf32>
    %2040 = vector.broadcast %1953 : vector<8x1xf32> to vector<8x16xf32>
    %2041 = vector.broadcast %2011 : vector<1x16xf32> to vector<8x16xf32>
    %2042 = arith.mulf %2040, %2041 : vector<8x16xf32>
    %2043 = arith.addf %1892, %2042 : vector<8x16xf32>
    %2044 = vector.broadcast %1968 : vector<8x1xf32> to vector<8x16xf32>
    %2045 = vector.broadcast %2011 : vector<1x16xf32> to vector<8x16xf32>
    %2046 = arith.mulf %2044, %2045 : vector<8x16xf32>
    %2047 = arith.addf %1896, %2046 : vector<8x16xf32>
    %2048 = vector.broadcast %2005 : vector<8x1xf32> to vector<8x16xf32>
    %2049 = vector.broadcast %2011 : vector<1x16xf32> to vector<8x16xf32>
    %2050 = arith.mulf %2048, %2049 : vector<8x16xf32>
    %2051 = arith.addf %1900, %2050 : vector<8x16xf32>
    %2052 = vector.broadcast %2006 : vector<8x1xf32> to vector<8x16xf32>
    %2053 = vector.broadcast %2011 : vector<1x16xf32> to vector<8x16xf32>
    %2054 = arith.mulf %2052, %2053 : vector<8x16xf32>
    %2055 = arith.addf %1904, %2054 : vector<8x16xf32>
    %2056 = vector.broadcast %2007 : vector<8x1xf32> to vector<8x16xf32>
    %2057 = vector.broadcast %2011 : vector<1x16xf32> to vector<8x16xf32>
    %2058 = arith.mulf %2056, %2057 : vector<8x16xf32>
    %2059 = arith.addf %1908, %2058 : vector<8x16xf32>
    %2060 = vector.extract_strided_slice %25 {offsets = [0, 126], sizes = [8, 1], strides = [1, 1]} : vector<8x144xf32> to vector<8x1xf32>
    %2061 = vector.extract_strided_slice %25 {offsets = [0, 127], sizes = [8, 1], strides = [1, 1]} : vector<8x144xf32> to vector<8x1xf32>
    %2062 = vector.extract_strided_slice %25 {offsets = [0, 128], sizes = [8, 1], strides = [1, 1]} : vector<8x144xf32> to vector<8x1xf32>
    %2063 = vector.extract_strided_slice %25 {offsets = [0, 129], sizes = [8, 1], strides = [1, 1]} : vector<8x144xf32> to vector<8x1xf32>
    %2064 = vector.extract_strided_slice %25 {offsets = [0, 130], sizes = [8, 1], strides = [1, 1]} : vector<8x144xf32> to vector<8x1xf32>
    %2065 = vector.extract_strided_slice %25 {offsets = [0, 131], sizes = [8, 1], strides = [1, 1]} : vector<8x144xf32> to vector<8x1xf32>
    %2066 = vector.extract_strided_slice %25 {offsets = [0, 132], sizes = [8, 1], strides = [1, 1]} : vector<8x144xf32> to vector<8x1xf32>
    %2067 = vector.extract_strided_slice %25 {offsets = [0, 133], sizes = [8, 1], strides = [1, 1]} : vector<8x144xf32> to vector<8x1xf32>
    %2068 = vector.extract_strided_slice %25 {offsets = [0, 134], sizes = [8, 1], strides = [1, 1]} : vector<8x144xf32> to vector<8x1xf32>
    %2069 = vector.extract_strided_slice %16 {offsets = [0, 14], sizes = [8, 1], strides = [1, 1]} : vector<8x16xf32> to vector<8x1xf32>
    %2070 = vector.extract_strided_slice %20 {offsets = [0, 14], sizes = [8, 1], strides = [1, 1]} : vector<8x16xf32> to vector<8x1xf32>
    %2071 = vector.extract_strided_slice %24 {offsets = [0, 14], sizes = [8, 1], strides = [1, 1]} : vector<8x16xf32> to vector<8x1xf32>
    %2072 = vector.extract_strided_slice %16 {offsets = [0, 13], sizes = [8, 1], strides = [1, 1]} : vector<8x16xf32> to vector<8x1xf32>
    %2073 = vector.extract_strided_slice %20 {offsets = [0, 13], sizes = [8, 1], strides = [1, 1]} : vector<8x16xf32> to vector<8x1xf32>
    %2074 = vector.extract_strided_slice %24 {offsets = [0, 13], sizes = [8, 1], strides = [1, 1]} : vector<8x16xf32> to vector<8x1xf32>
    %2075 = arith.mulf %1928, %2060 : vector<8x1xf32>
    %2076 = arith.mulf %1933, %2063 : vector<8x1xf32>
    %2077 = arith.addf %2075, %2076 : vector<8x1xf32>
    %2078 = arith.mulf %1938, %2066 : vector<8x1xf32>
    %2079 = arith.addf %2077, %2078 : vector<8x1xf32>
    %2080 = arith.mulf %1928, %2061 : vector<8x1xf32>
    %2081 = arith.mulf %1933, %2064 : vector<8x1xf32>
    %2082 = arith.addf %2080, %2081 : vector<8x1xf32>
    %2083 = arith.mulf %1938, %2067 : vector<8x1xf32>
    %2084 = arith.addf %2082, %2083 : vector<8x1xf32>
    %2085 = arith.mulf %1928, %2062 : vector<8x1xf32>
    %2086 = arith.mulf %1933, %2065 : vector<8x1xf32>
    %2087 = arith.addf %2085, %2086 : vector<8x1xf32>
    %2088 = arith.mulf %1938, %2068 : vector<8x1xf32>
    %2089 = arith.addf %2087, %2088 : vector<8x1xf32>
    %2090 = arith.mulf %1943, %2060 : vector<8x1xf32>
    %2091 = arith.mulf %1948, %2063 : vector<8x1xf32>
    %2092 = arith.addf %2090, %2091 : vector<8x1xf32>
    %2093 = arith.mulf %1953, %2066 : vector<8x1xf32>
    %2094 = arith.addf %2092, %2093 : vector<8x1xf32>
    %2095 = arith.mulf %1943, %2061 : vector<8x1xf32>
    %2096 = arith.mulf %1948, %2064 : vector<8x1xf32>
    %2097 = arith.addf %2095, %2096 : vector<8x1xf32>
    %2098 = arith.mulf %1953, %2067 : vector<8x1xf32>
    %2099 = arith.addf %2097, %2098 : vector<8x1xf32>
    %2100 = arith.mulf %1943, %2062 : vector<8x1xf32>
    %2101 = arith.mulf %1948, %2065 : vector<8x1xf32>
    %2102 = arith.addf %2100, %2101 : vector<8x1xf32>
    %2103 = arith.mulf %1953, %2068 : vector<8x1xf32>
    %2104 = arith.addf %2102, %2103 : vector<8x1xf32>
    %2105 = arith.mulf %1958, %2060 : vector<8x1xf32>
    %2106 = arith.mulf %1963, %2063 : vector<8x1xf32>
    %2107 = arith.addf %2105, %2106 : vector<8x1xf32>
    %2108 = arith.mulf %1968, %2066 : vector<8x1xf32>
    %2109 = arith.addf %2107, %2108 : vector<8x1xf32>
    %2110 = arith.mulf %1958, %2061 : vector<8x1xf32>
    %2111 = arith.mulf %1963, %2064 : vector<8x1xf32>
    %2112 = arith.addf %2110, %2111 : vector<8x1xf32>
    %2113 = arith.mulf %1968, %2067 : vector<8x1xf32>
    %2114 = arith.addf %2112, %2113 : vector<8x1xf32>
    %2115 = arith.mulf %1958, %2062 : vector<8x1xf32>
    %2116 = arith.mulf %1963, %2065 : vector<8x1xf32>
    %2117 = arith.addf %2115, %2116 : vector<8x1xf32>
    %2118 = arith.mulf %1968, %2068 : vector<8x1xf32>
    %2119 = arith.addf %2117, %2118 : vector<8x1xf32>
    %2120 = arith.subf %2069, %2072 : vector<8x1xf32>
    %2121 = arith.subf %2070, %2073 : vector<8x1xf32>
    %2122 = arith.subf %2071, %2074 : vector<8x1xf32>
    %2123 = arith.mulf %1928, %2120 : vector<8x1xf32>
    %2124 = arith.mulf %1933, %2121 : vector<8x1xf32>
    %2125 = arith.addf %2123, %2124 : vector<8x1xf32>
    %2126 = arith.mulf %1938, %2122 : vector<8x1xf32>
    %2127 = arith.addf %2125, %2126 : vector<8x1xf32>
    %2128 = arith.mulf %1943, %2120 : vector<8x1xf32>
    %2129 = arith.mulf %1948, %2121 : vector<8x1xf32>
    %2130 = arith.addf %2128, %2129 : vector<8x1xf32>
    %2131 = arith.mulf %1953, %2122 : vector<8x1xf32>
    %2132 = arith.addf %2130, %2131 : vector<8x1xf32>
    %2133 = arith.mulf %1958, %2120 : vector<8x1xf32>
    %2134 = arith.mulf %1963, %2121 : vector<8x1xf32>
    %2135 = arith.addf %2133, %2134 : vector<8x1xf32>
    %2136 = arith.mulf %1968, %2122 : vector<8x1xf32>
    %2137 = arith.addf %2135, %2136 : vector<8x1xf32>
    %2138 = arith.addf %2127, %1987 : vector<8x1xf32>
    %2139 = arith.addf %2132, %1988 : vector<8x1xf32>
    %2140 = arith.addf %2137, %1989 : vector<8x1xf32>
    %2141 = arith.mulf %2079, %2069 : vector<8x1xf32>
    %2142 = arith.mulf %2084, %2070 : vector<8x1xf32>
    %2143 = arith.addf %2141, %2142 : vector<8x1xf32>
    %2144 = arith.mulf %2089, %2071 : vector<8x1xf32>
    %2145 = arith.addf %2143, %2144 : vector<8x1xf32>
    %2146 = arith.mulf %2094, %2069 : vector<8x1xf32>
    %2147 = arith.mulf %2099, %2070 : vector<8x1xf32>
    %2148 = arith.addf %2146, %2147 : vector<8x1xf32>
    %2149 = arith.mulf %2104, %2071 : vector<8x1xf32>
    %2150 = arith.addf %2148, %2149 : vector<8x1xf32>
    %2151 = arith.mulf %2109, %2069 : vector<8x1xf32>
    %2152 = arith.mulf %2114, %2070 : vector<8x1xf32>
    %2153 = arith.addf %2151, %2152 : vector<8x1xf32>
    %2154 = arith.mulf %2119, %2071 : vector<8x1xf32>
    %2155 = arith.addf %2153, %2154 : vector<8x1xf32>
    %2156 = arith.subf %2138, %2145 : vector<8x1xf32>
    %2157 = arith.subf %2139, %2150 : vector<8x1xf32>
    %2158 = arith.subf %2140, %2155 : vector<8x1xf32>
    %c14_i32 = arith.constant 14 : i32
    %2159 = vector.broadcast %c14_i32 : i32 to vector<1x16xi32>
    %2160 = arith.cmpi eq, %26, %2159 : vector<1x16xi32>
    %2161 = arith.extui %2160 : vector<1x16xi1> to vector<1x16xi32>
    %2162 = arith.sitofp %2161 : vector<1x16xi32> to vector<1x16xf32>
    %2163 = vector.broadcast %2079 : vector<8x1xf32> to vector<8x16xf32>
    %2164 = vector.broadcast %2162 : vector<1x16xf32> to vector<8x16xf32>
    %2165 = arith.mulf %2163, %2164 : vector<8x16xf32>
    %2166 = arith.addf %2015, %2165 : vector<8x16xf32>
    %2167 = vector.broadcast %2094 : vector<8x1xf32> to vector<8x16xf32>
    %2168 = vector.broadcast %2162 : vector<1x16xf32> to vector<8x16xf32>
    %2169 = arith.mulf %2167, %2168 : vector<8x16xf32>
    %2170 = arith.addf %2019, %2169 : vector<8x16xf32>
    %2171 = vector.broadcast %2109 : vector<8x1xf32> to vector<8x16xf32>
    %2172 = vector.broadcast %2162 : vector<1x16xf32> to vector<8x16xf32>
    %2173 = arith.mulf %2171, %2172 : vector<8x16xf32>
    %2174 = arith.addf %2023, %2173 : vector<8x16xf32>
    %2175 = vector.broadcast %2084 : vector<8x1xf32> to vector<8x16xf32>
    %2176 = vector.broadcast %2162 : vector<1x16xf32> to vector<8x16xf32>
    %2177 = arith.mulf %2175, %2176 : vector<8x16xf32>
    %2178 = arith.addf %2027, %2177 : vector<8x16xf32>
    %2179 = vector.broadcast %2099 : vector<8x1xf32> to vector<8x16xf32>
    %2180 = vector.broadcast %2162 : vector<1x16xf32> to vector<8x16xf32>
    %2181 = arith.mulf %2179, %2180 : vector<8x16xf32>
    %2182 = arith.addf %2031, %2181 : vector<8x16xf32>
    %2183 = vector.broadcast %2114 : vector<8x1xf32> to vector<8x16xf32>
    %2184 = vector.broadcast %2162 : vector<1x16xf32> to vector<8x16xf32>
    %2185 = arith.mulf %2183, %2184 : vector<8x16xf32>
    %2186 = arith.addf %2035, %2185 : vector<8x16xf32>
    %2187 = vector.broadcast %2089 : vector<8x1xf32> to vector<8x16xf32>
    %2188 = vector.broadcast %2162 : vector<1x16xf32> to vector<8x16xf32>
    %2189 = arith.mulf %2187, %2188 : vector<8x16xf32>
    %2190 = arith.addf %2039, %2189 : vector<8x16xf32>
    %2191 = vector.broadcast %2104 : vector<8x1xf32> to vector<8x16xf32>
    %2192 = vector.broadcast %2162 : vector<1x16xf32> to vector<8x16xf32>
    %2193 = arith.mulf %2191, %2192 : vector<8x16xf32>
    %2194 = arith.addf %2043, %2193 : vector<8x16xf32>
    %2195 = vector.broadcast %2119 : vector<8x1xf32> to vector<8x16xf32>
    %2196 = vector.broadcast %2162 : vector<1x16xf32> to vector<8x16xf32>
    %2197 = arith.mulf %2195, %2196 : vector<8x16xf32>
    %2198 = arith.addf %2047, %2197 : vector<8x16xf32>
    %2199 = vector.broadcast %2156 : vector<8x1xf32> to vector<8x16xf32>
    %2200 = vector.broadcast %2162 : vector<1x16xf32> to vector<8x16xf32>
    %2201 = arith.mulf %2199, %2200 : vector<8x16xf32>
    %2202 = arith.addf %2051, %2201 : vector<8x16xf32>
    %2203 = vector.broadcast %2157 : vector<8x1xf32> to vector<8x16xf32>
    %2204 = vector.broadcast %2162 : vector<1x16xf32> to vector<8x16xf32>
    %2205 = arith.mulf %2203, %2204 : vector<8x16xf32>
    %2206 = arith.addf %2055, %2205 : vector<8x16xf32>
    %2207 = vector.broadcast %2158 : vector<8x1xf32> to vector<8x16xf32>
    %2208 = vector.broadcast %2162 : vector<1x16xf32> to vector<8x16xf32>
    %2209 = arith.mulf %2207, %2208 : vector<8x16xf32>
    %2210 = arith.addf %2059, %2209 : vector<8x16xf32>
    %2211 = vector.extract_strided_slice %25 {offsets = [0, 135], sizes = [8, 1], strides = [1, 1]} : vector<8x144xf32> to vector<8x1xf32>
    %2212 = vector.extract_strided_slice %25 {offsets = [0, 136], sizes = [8, 1], strides = [1, 1]} : vector<8x144xf32> to vector<8x1xf32>
    %2213 = vector.extract_strided_slice %25 {offsets = [0, 137], sizes = [8, 1], strides = [1, 1]} : vector<8x144xf32> to vector<8x1xf32>
    %2214 = vector.extract_strided_slice %25 {offsets = [0, 138], sizes = [8, 1], strides = [1, 1]} : vector<8x144xf32> to vector<8x1xf32>
    %2215 = vector.extract_strided_slice %25 {offsets = [0, 139], sizes = [8, 1], strides = [1, 1]} : vector<8x144xf32> to vector<8x1xf32>
    %2216 = vector.extract_strided_slice %25 {offsets = [0, 140], sizes = [8, 1], strides = [1, 1]} : vector<8x144xf32> to vector<8x1xf32>
    %2217 = vector.extract_strided_slice %25 {offsets = [0, 141], sizes = [8, 1], strides = [1, 1]} : vector<8x144xf32> to vector<8x1xf32>
    %2218 = vector.extract_strided_slice %25 {offsets = [0, 142], sizes = [8, 1], strides = [1, 1]} : vector<8x144xf32> to vector<8x1xf32>
    %2219 = vector.extract_strided_slice %25 {offsets = [0, 143], sizes = [8, 1], strides = [1, 1]} : vector<8x144xf32> to vector<8x1xf32>
    %2220 = vector.extract_strided_slice %16 {offsets = [0, 15], sizes = [8, 1], strides = [1, 1]} : vector<8x16xf32> to vector<8x1xf32>
    %2221 = vector.extract_strided_slice %20 {offsets = [0, 15], sizes = [8, 1], strides = [1, 1]} : vector<8x16xf32> to vector<8x1xf32>
    %2222 = vector.extract_strided_slice %24 {offsets = [0, 15], sizes = [8, 1], strides = [1, 1]} : vector<8x16xf32> to vector<8x1xf32>
    %2223 = vector.extract_strided_slice %16 {offsets = [0, 14], sizes = [8, 1], strides = [1, 1]} : vector<8x16xf32> to vector<8x1xf32>
    %2224 = vector.extract_strided_slice %20 {offsets = [0, 14], sizes = [8, 1], strides = [1, 1]} : vector<8x16xf32> to vector<8x1xf32>
    %2225 = vector.extract_strided_slice %24 {offsets = [0, 14], sizes = [8, 1], strides = [1, 1]} : vector<8x16xf32> to vector<8x1xf32>
    %2226 = arith.mulf %2079, %2211 : vector<8x1xf32>
    %2227 = arith.mulf %2084, %2214 : vector<8x1xf32>
    %2228 = arith.addf %2226, %2227 : vector<8x1xf32>
    %2229 = arith.mulf %2089, %2217 : vector<8x1xf32>
    %2230 = arith.addf %2228, %2229 : vector<8x1xf32>
    %2231 = arith.mulf %2079, %2212 : vector<8x1xf32>
    %2232 = arith.mulf %2084, %2215 : vector<8x1xf32>
    %2233 = arith.addf %2231, %2232 : vector<8x1xf32>
    %2234 = arith.mulf %2089, %2218 : vector<8x1xf32>
    %2235 = arith.addf %2233, %2234 : vector<8x1xf32>
    %2236 = arith.mulf %2079, %2213 : vector<8x1xf32>
    %2237 = arith.mulf %2084, %2216 : vector<8x1xf32>
    %2238 = arith.addf %2236, %2237 : vector<8x1xf32>
    %2239 = arith.mulf %2089, %2219 : vector<8x1xf32>
    %2240 = arith.addf %2238, %2239 : vector<8x1xf32>
    %2241 = arith.mulf %2094, %2211 : vector<8x1xf32>
    %2242 = arith.mulf %2099, %2214 : vector<8x1xf32>
    %2243 = arith.addf %2241, %2242 : vector<8x1xf32>
    %2244 = arith.mulf %2104, %2217 : vector<8x1xf32>
    %2245 = arith.addf %2243, %2244 : vector<8x1xf32>
    %2246 = arith.mulf %2094, %2212 : vector<8x1xf32>
    %2247 = arith.mulf %2099, %2215 : vector<8x1xf32>
    %2248 = arith.addf %2246, %2247 : vector<8x1xf32>
    %2249 = arith.mulf %2104, %2218 : vector<8x1xf32>
    %2250 = arith.addf %2248, %2249 : vector<8x1xf32>
    %2251 = arith.mulf %2094, %2213 : vector<8x1xf32>
    %2252 = arith.mulf %2099, %2216 : vector<8x1xf32>
    %2253 = arith.addf %2251, %2252 : vector<8x1xf32>
    %2254 = arith.mulf %2104, %2219 : vector<8x1xf32>
    %2255 = arith.addf %2253, %2254 : vector<8x1xf32>
    %2256 = arith.mulf %2109, %2211 : vector<8x1xf32>
    %2257 = arith.mulf %2114, %2214 : vector<8x1xf32>
    %2258 = arith.addf %2256, %2257 : vector<8x1xf32>
    %2259 = arith.mulf %2119, %2217 : vector<8x1xf32>
    %2260 = arith.addf %2258, %2259 : vector<8x1xf32>
    %2261 = arith.mulf %2109, %2212 : vector<8x1xf32>
    %2262 = arith.mulf %2114, %2215 : vector<8x1xf32>
    %2263 = arith.addf %2261, %2262 : vector<8x1xf32>
    %2264 = arith.mulf %2119, %2218 : vector<8x1xf32>
    %2265 = arith.addf %2263, %2264 : vector<8x1xf32>
    %2266 = arith.mulf %2109, %2213 : vector<8x1xf32>
    %2267 = arith.mulf %2114, %2216 : vector<8x1xf32>
    %2268 = arith.addf %2266, %2267 : vector<8x1xf32>
    %2269 = arith.mulf %2119, %2219 : vector<8x1xf32>
    %2270 = arith.addf %2268, %2269 : vector<8x1xf32>
    %2271 = arith.subf %2220, %2223 : vector<8x1xf32>
    %2272 = arith.subf %2221, %2224 : vector<8x1xf32>
    %2273 = arith.subf %2222, %2225 : vector<8x1xf32>
    %2274 = arith.mulf %2079, %2271 : vector<8x1xf32>
    %2275 = arith.mulf %2084, %2272 : vector<8x1xf32>
    %2276 = arith.addf %2274, %2275 : vector<8x1xf32>
    %2277 = arith.mulf %2089, %2273 : vector<8x1xf32>
    %2278 = arith.addf %2276, %2277 : vector<8x1xf32>
    %2279 = arith.mulf %2094, %2271 : vector<8x1xf32>
    %2280 = arith.mulf %2099, %2272 : vector<8x1xf32>
    %2281 = arith.addf %2279, %2280 : vector<8x1xf32>
    %2282 = arith.mulf %2104, %2273 : vector<8x1xf32>
    %2283 = arith.addf %2281, %2282 : vector<8x1xf32>
    %2284 = arith.mulf %2109, %2271 : vector<8x1xf32>
    %2285 = arith.mulf %2114, %2272 : vector<8x1xf32>
    %2286 = arith.addf %2284, %2285 : vector<8x1xf32>
    %2287 = arith.mulf %2119, %2273 : vector<8x1xf32>
    %2288 = arith.addf %2286, %2287 : vector<8x1xf32>
    %2289 = arith.addf %2278, %2138 : vector<8x1xf32>
    %2290 = arith.addf %2283, %2139 : vector<8x1xf32>
    %2291 = arith.addf %2288, %2140 : vector<8x1xf32>
    %2292 = arith.mulf %2230, %2220 : vector<8x1xf32>
    %2293 = arith.mulf %2235, %2221 : vector<8x1xf32>
    %2294 = arith.addf %2292, %2293 : vector<8x1xf32>
    %2295 = arith.mulf %2240, %2222 : vector<8x1xf32>
    %2296 = arith.addf %2294, %2295 : vector<8x1xf32>
    %2297 = arith.mulf %2245, %2220 : vector<8x1xf32>
    %2298 = arith.mulf %2250, %2221 : vector<8x1xf32>
    %2299 = arith.addf %2297, %2298 : vector<8x1xf32>
    %2300 = arith.mulf %2255, %2222 : vector<8x1xf32>
    %2301 = arith.addf %2299, %2300 : vector<8x1xf32>
    %2302 = arith.mulf %2260, %2220 : vector<8x1xf32>
    %2303 = arith.mulf %2265, %2221 : vector<8x1xf32>
    %2304 = arith.addf %2302, %2303 : vector<8x1xf32>
    %2305 = arith.mulf %2270, %2222 : vector<8x1xf32>
    %2306 = arith.addf %2304, %2305 : vector<8x1xf32>
    %2307 = arith.subf %2289, %2296 : vector<8x1xf32>
    %2308 = arith.subf %2290, %2301 : vector<8x1xf32>
    %2309 = arith.subf %2291, %2306 : vector<8x1xf32>
    %c15_i32 = arith.constant 15 : i32
    %2310 = vector.broadcast %c15_i32 : i32 to vector<1x16xi32>
    %2311 = arith.cmpi eq, %26, %2310 : vector<1x16xi32>
    %2312 = arith.extui %2311 : vector<1x16xi1> to vector<1x16xi32>
    %2313 = arith.sitofp %2312 : vector<1x16xi32> to vector<1x16xf32>
    %2314 = vector.broadcast %2230 : vector<8x1xf32> to vector<8x16xf32>
    %2315 = vector.broadcast %2313 : vector<1x16xf32> to vector<8x16xf32>
    %2316 = arith.mulf %2314, %2315 : vector<8x16xf32>
    %2317 = arith.addf %2166, %2316 : vector<8x16xf32>
    %2318 = vector.broadcast %2245 : vector<8x1xf32> to vector<8x16xf32>
    %2319 = vector.broadcast %2313 : vector<1x16xf32> to vector<8x16xf32>
    %2320 = arith.mulf %2318, %2319 : vector<8x16xf32>
    %2321 = arith.addf %2170, %2320 : vector<8x16xf32>
    %2322 = vector.broadcast %2260 : vector<8x1xf32> to vector<8x16xf32>
    %2323 = vector.broadcast %2313 : vector<1x16xf32> to vector<8x16xf32>
    %2324 = arith.mulf %2322, %2323 : vector<8x16xf32>
    %2325 = arith.addf %2174, %2324 : vector<8x16xf32>
    %2326 = vector.broadcast %2235 : vector<8x1xf32> to vector<8x16xf32>
    %2327 = vector.broadcast %2313 : vector<1x16xf32> to vector<8x16xf32>
    %2328 = arith.mulf %2326, %2327 : vector<8x16xf32>
    %2329 = arith.addf %2178, %2328 : vector<8x16xf32>
    %2330 = vector.broadcast %2250 : vector<8x1xf32> to vector<8x16xf32>
    %2331 = vector.broadcast %2313 : vector<1x16xf32> to vector<8x16xf32>
    %2332 = arith.mulf %2330, %2331 : vector<8x16xf32>
    %2333 = arith.addf %2182, %2332 : vector<8x16xf32>
    %2334 = vector.broadcast %2265 : vector<8x1xf32> to vector<8x16xf32>
    %2335 = vector.broadcast %2313 : vector<1x16xf32> to vector<8x16xf32>
    %2336 = arith.mulf %2334, %2335 : vector<8x16xf32>
    %2337 = arith.addf %2186, %2336 : vector<8x16xf32>
    %2338 = vector.broadcast %2240 : vector<8x1xf32> to vector<8x16xf32>
    %2339 = vector.broadcast %2313 : vector<1x16xf32> to vector<8x16xf32>
    %2340 = arith.mulf %2338, %2339 : vector<8x16xf32>
    %2341 = arith.addf %2190, %2340 : vector<8x16xf32>
    %2342 = vector.broadcast %2255 : vector<8x1xf32> to vector<8x16xf32>
    %2343 = vector.broadcast %2313 : vector<1x16xf32> to vector<8x16xf32>
    %2344 = arith.mulf %2342, %2343 : vector<8x16xf32>
    %2345 = arith.addf %2194, %2344 : vector<8x16xf32>
    %2346 = vector.broadcast %2270 : vector<8x1xf32> to vector<8x16xf32>
    %2347 = vector.broadcast %2313 : vector<1x16xf32> to vector<8x16xf32>
    %2348 = arith.mulf %2346, %2347 : vector<8x16xf32>
    %2349 = arith.addf %2198, %2348 : vector<8x16xf32>
    %2350 = vector.broadcast %2307 : vector<8x1xf32> to vector<8x16xf32>
    %2351 = vector.broadcast %2313 : vector<1x16xf32> to vector<8x16xf32>
    %2352 = arith.mulf %2350, %2351 : vector<8x16xf32>
    %2353 = arith.addf %2202, %2352 : vector<8x16xf32>
    %2354 = vector.broadcast %2308 : vector<8x1xf32> to vector<8x16xf32>
    %2355 = vector.broadcast %2313 : vector<1x16xf32> to vector<8x16xf32>
    %2356 = arith.mulf %2354, %2355 : vector<8x16xf32>
    %2357 = arith.addf %2206, %2356 : vector<8x16xf32>
    %2358 = vector.broadcast %2309 : vector<8x1xf32> to vector<8x16xf32>
    %2359 = vector.broadcast %2313 : vector<1x16xf32> to vector<8x16xf32>
    %2360 = arith.mulf %2358, %2359 : vector<8x16xf32>
    %2361 = arith.addf %2210, %2360 : vector<8x16xf32>
    %2362 = tpu.concatenate %2317, %2321, %2325, %2329, %2333, %2337, %2341, %2345, %2349, %2353, %2357, %2361 in 0 : vector<8x16xf32>, vector<8x16xf32>, vector<8x16xf32>, vector<8x16xf32>, vector<8x16xf32>, vector<8x16xf32>, vector<8x16xf32>, vector<8x16xf32>, vector<8x16xf32>, vector<8x16xf32>, vector<8x16xf32>, vector<8x16xf32> -> vector<96x16xf32>
    %2363 = arith.truncf %2362 : vector<96x16xf32> to vector<96x16xbf16>
    %c0_17 = arith.constant 0 : index
    %c0_18 = arith.constant 0 : index
    %2364 = vector.load %arg8[%c0_17, %c0_18] : memref<16x896xbf16, #tpu.memory_space<vmem>>, vector<16x896xbf16>
    %cst_19 = arith.constant dense<0.000000e+00> : vector<96x896xf32>
    %2365 = tpu.matmul %2363, %2364, %cst_19 {dimension_numbers = #tpu.dot_dimension_numbers<[1], [0], [0], [1], [0, 0, 1, 1], [], []>} : vector<96x16xbf16>, vector<16x896xbf16>, vector<96x896xf32> -> vector<96x896xf32>
    %2366 = vector.shape_cast %2365 : vector<96x896xf32> to vector<12x8x896xf32>
    %c0_20 = arith.constant 0 : index
    %c0_21 = arith.constant 0 : index
    %2367 = vector.load %arg7[%c0_20, %c0_21] : memref<21x896xbf16, #tpu.memory_space<vmem>>, vector<21x896xbf16>
    %2368 = vector.extract_strided_slice %2366 {offsets = [0, 0, 0], sizes = [1, 8, 896], strides = [1, 1, 1]} : vector<12x8x896xf32> to vector<1x8x896xf32>
    %2369 = vector.shape_cast %2368 : vector<1x8x896xf32> to vector<8x896xf32>
    %2370 = arith.mulf %2369, %13 : vector<8x896xf32>
    %2371 = vector.extract_strided_slice %2366 {offsets = [3, 0, 0], sizes = [1, 8, 896], strides = [1, 1, 1]} : vector<12x8x896xf32> to vector<1x8x896xf32>
    %2372 = vector.shape_cast %2371 : vector<1x8x896xf32> to vector<8x896xf32>
    %2373 = arith.mulf %2372, %17 : vector<8x896xf32>
    %2374 = arith.addf %2370, %2373 : vector<8x896xf32>
    %2375 = vector.extract_strided_slice %2366 {offsets = [6, 0, 0], sizes = [1, 8, 896], strides = [1, 1, 1]} : vector<12x8x896xf32> to vector<1x8x896xf32>
    %2376 = vector.shape_cast %2375 : vector<1x8x896xf32> to vector<8x896xf32>
    %2377 = arith.mulf %2376, %21 : vector<8x896xf32>
    %2378 = arith.addf %2374, %2377 : vector<8x896xf32>
    %2379 = vector.extract_strided_slice %2366 {offsets = [9, 0, 0], sizes = [1, 8, 896], strides = [1, 1, 1]} : vector<12x8x896xf32> to vector<1x8x896xf32>
    %2380 = vector.shape_cast %2379 : vector<1x8x896xf32> to vector<8x896xf32>
    %2381 = arith.addf %2378, %2380 : vector<8x896xf32>
    %c0_22 = arith.constant 0 : index
    %c0_23 = arith.constant 0 : index
    %c0_24 = arith.constant 0 : index
    %2382 = vector.load %arg9[%c0_22, %c0_23, %c0_24] : memref<3x8x896xf32, #tpu.memory_space<vmem>>, vector<1x8x896xf32>
    %2383 = vector.shape_cast %2382 : vector<1x8x896xf32> to vector<8x896xf32>
    %2384 = vector.shape_cast %2381 : vector<8x896xf32> to vector<1x8x896xf32>
    tpu.vector_store %arg9[%c0_22, %c0_23, %c0_24], %2384 {strides = array<i32>} : memref<3x8x896xf32, #tpu.memory_space<vmem>>, vector<1x8x896xf32>,
    %2385 = arith.truncf %2381 : vector<8x896xf32> to vector<8x896xbf16>
    %cst_25 = arith.constant dense<0.000000e+00> : vector<8x21xf32>
    %2386 = tpu.matmul %2385, %2367, %cst_25 {dimension_numbers = #tpu.dot_dimension_numbers<[1], [1], [0], [0], [0, 0, 1, 0], [], []>} : vector<8x896xbf16>, vector<21x896xbf16>, vector<8x21xf32> -> vector<8x21xf32>
    %c0_26 = arith.constant 0 : index
    %c0_27 = arith.constant 0 : index
    %c0_28 = arith.constant 0 : index
    %2387 = vector.load %arg10[%c0_26, %c0_27, %c0_28] : memref<3x8x21xf32, #tpu.memory_space<vmem>>, vector<1x8x21xf32>
    %2388 = vector.shape_cast %2387 : vector<1x8x21xf32> to vector<8x21xf32>
    %2389 = vector.shape_cast %2386 : vector<8x21xf32> to vector<1x8x21xf32>
    tpu.vector_store %arg10[%c0_26, %c0_27, %c0_28], %2389 {strides = array<i32>} : memref<3x8x21xf32, #tpu.memory_space<vmem>>, vector<1x8x21xf32>,
    %2390 = vector.extract_strided_slice %2366 {offsets = [1, 0, 0], sizes = [1, 8, 896], strides = [1, 1, 1]} : vector<12x8x896xf32> to vector<1x8x896xf32>
    %2391 = vector.shape_cast %2390 : vector<1x8x896xf32> to vector<8x896xf32>
    %2392 = arith.mulf %2391, %13 : vector<8x896xf32>
    %2393 = vector.extract_strided_slice %2366 {offsets = [4, 0, 0], sizes = [1, 8, 896], strides = [1, 1, 1]} : vector<12x8x896xf32> to vector<1x8x896xf32>
    %2394 = vector.shape_cast %2393 : vector<1x8x896xf32> to vector<8x896xf32>
    %2395 = arith.mulf %2394, %17 : vector<8x896xf32>
    %2396 = arith.addf %2392, %2395 : vector<8x896xf32>
    %2397 = vector.extract_strided_slice %2366 {offsets = [7, 0, 0], sizes = [1, 8, 896], strides = [1, 1, 1]} : vector<12x8x896xf32> to vector<1x8x896xf32>
    %2398 = vector.shape_cast %2397 : vector<1x8x896xf32> to vector<8x896xf32>
    %2399 = arith.mulf %2398, %21 : vector<8x896xf32>
    %2400 = arith.addf %2396, %2399 : vector<8x896xf32>
    %2401 = vector.extract_strided_slice %2366 {offsets = [10, 0, 0], sizes = [1, 8, 896], strides = [1, 1, 1]} : vector<12x8x896xf32> to vector<1x8x896xf32>
    %2402 = vector.shape_cast %2401 : vector<1x8x896xf32> to vector<8x896xf32>
    %2403 = arith.addf %2400, %2402 : vector<8x896xf32>
    %c1 = arith.constant 1 : index
    %c0_29 = arith.constant 0 : index
    %c0_30 = arith.constant 0 : index
    %2404 = vector.load %arg9[%c1, %c0_29, %c0_30] : memref<3x8x896xf32, #tpu.memory_space<vmem>>, vector<1x8x896xf32>
    %2405 = vector.shape_cast %2404 : vector<1x8x896xf32> to vector<8x896xf32>
    %2406 = vector.shape_cast %2403 : vector<8x896xf32> to vector<1x8x896xf32>
    tpu.vector_store %arg9[%c1, %c0_29, %c0_30], %2406 {strides = array<i32>} : memref<3x8x896xf32, #tpu.memory_space<vmem>>, vector<1x8x896xf32>,
    %2407 = arith.truncf %2403 : vector<8x896xf32> to vector<8x896xbf16>
    %cst_31 = arith.constant dense<0.000000e+00> : vector<8x21xf32>
    %2408 = tpu.matmul %2407, %2367, %cst_31 {dimension_numbers = #tpu.dot_dimension_numbers<[1], [1], [0], [0], [0, 0, 1, 0], [], []>} : vector<8x896xbf16>, vector<21x896xbf16>, vector<8x21xf32> -> vector<8x21xf32>
    %c1_32 = arith.constant 1 : index
    %c0_33 = arith.constant 0 : index
    %c0_34 = arith.constant 0 : index
    %2409 = vector.load %arg10[%c1_32, %c0_33, %c0_34] : memref<3x8x21xf32, #tpu.memory_space<vmem>>, vector<1x8x21xf32>
    %2410 = vector.shape_cast %2409 : vector<1x8x21xf32> to vector<8x21xf32>
    %2411 = vector.shape_cast %2408 : vector<8x21xf32> to vector<1x8x21xf32>
    tpu.vector_store %arg10[%c1_32, %c0_33, %c0_34], %2411 {strides = array<i32>} : memref<3x8x21xf32, #tpu.memory_space<vmem>>, vector<1x8x21xf32>,
    %2412 = vector.extract_strided_slice %2366 {offsets = [2, 0, 0], sizes = [1, 8, 896], strides = [1, 1, 1]} : vector<12x8x896xf32> to vector<1x8x896xf32>
    %2413 = vector.shape_cast %2412 : vector<1x8x896xf32> to vector<8x896xf32>
    %2414 = arith.mulf %2413, %13 : vector<8x896xf32>
    %2415 = vector.extract_strided_slice %2366 {offsets = [5, 0, 0], sizes = [1, 8, 896], strides = [1, 1, 1]} : vector<12x8x896xf32> to vector<1x8x896xf32>
    %2416 = vector.shape_cast %2415 : vector<1x8x896xf32> to vector<8x896xf32>
    %2417 = arith.mulf %2416, %17 : vector<8x896xf32>
    %2418 = arith.addf %2414, %2417 : vector<8x896xf32>
    %2419 = vector.extract_strided_slice %2366 {offsets = [8, 0, 0], sizes = [1, 8, 896], strides = [1, 1, 1]} : vector<12x8x896xf32> to vector<1x8x896xf32>
    %2420 = vector.shape_cast %2419 : vector<1x8x896xf32> to vector<8x896xf32>
    %2421 = arith.mulf %2420, %21 : vector<8x896xf32>
    %2422 = arith.addf %2418, %2421 : vector<8x896xf32>
    %2423 = vector.extract_strided_slice %2366 {offsets = [11, 0, 0], sizes = [1, 8, 896], strides = [1, 1, 1]} : vector<12x8x896xf32> to vector<1x8x896xf32>
    %2424 = vector.shape_cast %2423 : vector<1x8x896xf32> to vector<8x896xf32>
    %2425 = arith.addf %2422, %2424 : vector<8x896xf32>
    %c2 = arith.constant 2 : index
    %c0_35 = arith.constant 0 : index
    %c0_36 = arith.constant 0 : index
    %2426 = vector.load %arg9[%c2, %c0_35, %c0_36] : memref<3x8x896xf32, #tpu.memory_space<vmem>>, vector<1x8x896xf32>
    %2427 = vector.shape_cast %2426 : vector<1x8x896xf32> to vector<8x896xf32>
    %2428 = vector.shape_cast %2425 : vector<8x896xf32> to vector<1x8x896xf32>
    tpu.vector_store %arg9[%c2, %c0_35, %c0_36], %2428 {strides = array<i32>} : memref<3x8x896xf32, #tpu.memory_space<vmem>>, vector<1x8x896xf32>,
    %2429 = arith.truncf %2425 : vector<8x896xf32> to vector<8x896xbf16>
    %cst_37 = arith.constant dense<0.000000e+00> : vector<8x21xf32>
    %2430 = tpu.matmul %2429, %2367, %cst_37 {dimension_numbers = #tpu.dot_dimension_numbers<[1], [1], [0], [0], [0, 0, 1, 0], [], []>} : vector<8x896xbf16>, vector<21x896xbf16>, vector<8x21xf32> -> vector<8x21xf32>
    %c2_38 = arith.constant 2 : index
    %c0_39 = arith.constant 0 : index
    %c0_40 = arith.constant 0 : index
    %2431 = vector.load %arg10[%c2_38, %c0_39, %c0_40] : memref<3x8x21xf32, #tpu.memory_space<vmem>>, vector<1x8x21xf32>
    %2432 = vector.shape_cast %2431 : vector<1x8x21xf32> to vector<8x21xf32>
    %2433 = vector.shape_cast %2430 : vector<8x21xf32> to vector<1x8x21xf32>
    tpu.vector_store %arg10[%c2_38, %c0_39, %c0_40], %2433 {strides = array<i32>} : memref<3x8x21xf32, #tpu.memory_space<vmem>>, vector<1x8x21xf32>,
    return
  }
}

</mosaic_0001>

<llo_original>
// kernel: mano_forward_pallas.1
$region0: #{mano_forward_pallas.1}
  #allocation0 [shape = 'u32[]', space=smem, size = 0x4, offset = 0x4, fixed_abs, tag = 'smem constant byte address 0x4 - core index']
  #allocation1 [shape = 'u32[144,128]{1,0:T(1,128)}', space=vmem, size = 0x12000, scoped, tag = 'internal scratch']
  %s0 = inlined_call_operand.vmem [shape: f32[8,10], index: 0, kind: input, shape index: {}]
  %s1 = inlined_call_operand.vmem [shape: f32[8,135], index: 1, kind: input, shape index: {}]
  %s2 = inlined_call_operand.vmem [shape: f32[8,144], index: 2, kind: input, shape index: {}]
  %s3 = inlined_call_operand.vmem [shape: bf16[10,2688], index: 3, kind: input, shape index: {}]
  %s4 = inlined_call_operand.vmem [shape: bf16[135,2688], index: 4, kind: input, shape index: {}]
  %s5 = inlined_call_operand.vmem [shape: f32[1,2688], index: 5, kind: input, shape index: {}]
  %s6 = inlined_call_operand.vmem [shape: bf16[16,896], index: 6, kind: input, shape index: {}]
  %s7 = inlined_call_operand.vmem [shape: bf16[21,896], index: 7, kind: input, shape index: {}]
  %s8 = inlined_call_operand.vmem [shape: bf16[16,896], index: 8, kind: input, shape index: {}]
  %s9 = inlined_call_operand.hbm [shape: f32[3,8,896], index: 9, kind: output, shape index: {0}]
  %s10 = inlined_call_operand.hbm [shape: f32[3,8,21], index: 10, kind: output, shape index: {1}]
  %11 = xla_tuple %s9, %s10
  %s12 = sld [smem:[#allocation0]]
  $region54: #{mano_forward_pallas.1} parent=0
    _
  %s14 = ssub.s32 1, %s12
  %s15 = scalar_select 0, %s14, %s12
  $region1: #{mano_forward_pallas.1} parent=0
    #allocation2 [shape = 'u8[86016]{0}', space=vmem, size = 0x15000, scoped, tag = 'output window, operand 0, single buffered']
    #allocation3 [shape = 's32[1]{0}', space=sflag, size = 0x4, scoped, tag = 'scoped memory for mano_forward_pallas.1']
    #allocation4 [shape = 'u8[12288]{0}', space=vmem, size = 0x3000, scoped, tag = 'output window, operand 1, single buffered']
    #allocation5 [shape = 's32[1]{0}', space=sflag, size = 0x4, scoped, tag = 'scoped memory for mano_forward_pallas.1']
    %16 = vsyncpa [#allocation3], 0
    %17 = vsyncpa [#allocation5], 0
    // Predicated region
    $region2: #{mano_forward_pallas.1} parent=1 // pred_check
      _
    $region3: #{mano_forward_pallas.1} parent=1 // pred_check_branch
      %19 = sbr.rel (0) target = $region5
    $region4: #{mano_forward_pallas.1} parent=1 // pred_region
      _
    $region5: #{mano_forward_pallas.1} parent=1 // pred_fallthru
      _
    // Predicated region
    $region6: #{mano_forward_pallas.1} parent=1 // pred_check
      _
    $region7: #{mano_forward_pallas.1} parent=1 // pred_check_branch
      %21 = sbr.rel (0) target = $region9
    $region8: #{mano_forward_pallas.1} parent=1 // pred_region
      _
    $region9: #{mano_forward_pallas.1} parent=1 // pred_fallthru
      _
    // Predicated region
    $region10: #{mano_forward_pallas.1} parent=1 // pred_check
      _
    $region11: #{mano_forward_pallas.1} parent=1 // pred_check_branch
      %23 = sbr.rel (0) target = $region13
    $region12: #{mano_forward_pallas.1} parent=1 // pred_region
      _
    $region13: #{mano_forward_pallas.1} parent=1 // pred_fallthru
      _
    // Predicated region
    $region14: #{mano_forward_pallas.1} parent=1 // pred_check
      _
    $region15: #{mano_forward_pallas.1} parent=1 // pred_check_branch
      %25 = sbr.rel (0) target = $region17
    $region16: #{mano_forward_pallas.1} parent=1 // pred_region
      _
    $region17: #{mano_forward_pallas.1} parent=1 // pred_fallthru
      _
    // Predicated region
    $region18: #{mano_forward_pallas.1} parent=1 // pred_check
      _
    $region19: #{mano_forward_pallas.1} parent=1 // pred_check_branch
      %27 = sbr.rel (0) target = $region21
    $region20: #{mano_forward_pallas.1} parent=1 // pred_region
      _
    $region21: #{mano_forward_pallas.1} parent=1 // pred_fallthru
      _
    // Predicated region
    $region22: #{mano_forward_pallas.1} parent=1 // pred_check
      _
    $region23: #{mano_forward_pallas.1} parent=1 // pred_check_branch
      %29 = sbr.rel (0) target = $region25
    $region24: #{mano_forward_pallas.1} parent=1 // pred_region
      _
    $region25: #{mano_forward_pallas.1} parent=1 // pred_fallthru
      _
    // Predicated region
    $region26: #{mano_forward_pallas.1} parent=1 // pred_check
      _
    $region27: #{mano_forward_pallas.1} parent=1 // pred_check_branch
      %31 = sbr.rel (0) target = $region29
    $region28: #{mano_forward_pallas.1} parent=1 // pred_region
      _
    $region29: #{mano_forward_pallas.1} parent=1 // pred_fallthru
      _
    // Predicated region
    $region30: #{mano_forward_pallas.1} parent=1 // pred_check
      _
    $region31: #{mano_forward_pallas.1} parent=1 // pred_check_branch
      %33 = sbr.rel (0) target = $region33
    $region32: #{mano_forward_pallas.1} parent=1 // pred_region
      _
    $region33: #{mano_forward_pallas.1} parent=1 // pred_fallthru
      _
    // Predicated region
    $region34: #{mano_forward_pallas.1} parent=1 // pred_check
      _
    $region35: #{mano_forward_pallas.1} parent=1 // pred_check_branch
      %35 = sbr.rel (0) target = $region37
    $region36: #{mano_forward_pallas.1} parent=1 // pred_region
      _
    $region37: #{mano_forward_pallas.1} parent=1 // pred_fallthru
      _
    %v37 = vld [vmem:[%s0] sm:$0xff]
    %v38 = vpack.c.bf16 %v37, %v37
    %v39 = vld [vmem:[%s3] sm:$0xff]
    %v40 = vld [vmem:[%s3 + $0x8] sm:$0xff]
    %v41 = vld [vmem:[%s3 + $0x10] sm:$0xff]
    %v42 = vld [vmem:[%s3 + $0x18] sm:$0xff]
    %v43 = vld [vmem:[%s3 + $0x20] sm:$0xff]
    %v44 = vld [vmem:[%s3 + $0x28] sm:$0xff]
    %v45 = vld [vmem:[%s3 + $0x30] sm:$0xff]
    %v46 = vld [vmem:[%s3 + $0x38] sm:$0xff]
    %v47 = vld [vmem:[%s3 + $0x40] sm:$0xff]
    %v48 = vld [vmem:[%s3 + $0x48] sm:$0xff]
    %v49 = vld [vmem:[%s3 + $0x50] sm:$0xf]
    %v50 = vld [vmem:[%s3 + $0x54] sm:$0x11]
    %v51 = vld [vmem:[%s3 + $0x5c] sm:$0x11]
    %v52 = vld [vmem:[%s3 + $0x64] sm:$0x11]
    %v53 = vld [vmem:[%s3 + $0x6c] sm:$0x11]
    %v54 = vld [vmem:[%s3 + $0x74] sm:$0x11]
    %v55 = vld [vmem:[%s3 + $0x7c] sm:$0x11]
    %v56 = vld [vmem:[%s3 + $0x84] sm:$0x11]
    %v57 = vld [vmem:[%s3 + $0x8c] sm:$0x11]
    %v58 = vld [vmem:[%s3 + $0x94] sm:$0x11]
    %v59 = vld [vmem:[%s3 + $0x9c] sm:$0x11]
    %v60 = vld [vmem:[%s3 + $0xa4] sm:$0x1]
    %v61 = vld [vmem:[%s5] sm:$0xff]
    %v62 = vld [vmem:[%s5 + $0x8] sm:$0xff]
    %v63 = vld [vmem:[%s5 + $0x10] sm:$0x1f]
    %v67 = vlaneseq
    %v68 = vshrl.u32 %v67, 7
    %v69 = vsub.s32 0, %v68
    %v70 = vrot.slane %v61, %v69
    %v71 = vlaneseq
    %v72 = vshrl.u32 %v71, 7
    %v73 = vsub.s32 1, %v72
    %v74 = vrot.slane %v61, %v73
    %v75 = vlaneseq
    %v76 = vshrl.u32 %v75, 7
    %v77 = vsub.s32 2, %v76
    %v78 = vrot.slane %v61, %v77
    %v79 = vlaneseq
    %v80 = vshrl.u32 %v79, 7
    %v81 = vsub.s32 3, %v80
    %v82 = vrot.slane %v61, %v81
    %v83 = vlaneseq
    %v84 = vshrl.u32 %v83, 7
    %v85 = vsub.s32 4, %v84
    %v86 = vrot.slane %v61, %v85
    %v87 = vlaneseq
    %v88 = vshrl.u32 %v87, 7
    %v89 = vsub.s32 5, %v88
    %v90 = vrot.slane %v61, %v89
    %v91 = vlaneseq
    %v92 = vshrl.u32 %v91, 7
    %v93 = vsub.s32 6, %v92
    %v94 = vrot.slane %v61, %v93
    %v95 = vlaneseq
    %v96 = vshrl.u32 %v95, 7
    %v97 = vsub.s32 7, %v96
    %v98 = vrot.slane %v61, %v97
    %v99 = vlaneseq
    %v100 = vshrl.u32 %v99, 7
    %v101 = vsub.s32 0, %v100
    %v102 = vrot.slane %v62, %v101
    %v103 = vlaneseq
    %v104 = vshrl.u32 %v103, 7
    %v105 = vsub.s32 1, %v104
    %v106 = vrot.slane %v62, %v105
    %v107 = vlaneseq
    %v108 = vshrl.u32 %v107, 7
    %v109 = vsub.s32 2, %v108
    %v110 = vrot.slane %v62, %v109
    %v111 = vlaneseq
    %v112 = vshrl.u32 %v111, 7
    %v113 = vsub.s32 3, %v112
    %v114 = vrot.slane %v62, %v113
    %v115 = vlaneseq
    %v116 = vshrl.u32 %v115, 7
    %v117 = vsub.s32 4, %v116
    %v118 = vrot.slane %v62, %v117
    %v119 = vlaneseq
    %v120 = vshrl.u32 %v119, 7
    %v121 = vsub.s32 5, %v120
    %v122 = vrot.slane %v62, %v121
    %v123 = vlaneseq
    %v124 = vshrl.u32 %v123, 7
    %v125 = vsub.s32 6, %v124
    %v126 = vrot.slane %v62, %v125
    %v127 = vlaneseq
    %v128 = vshrl.u32 %v127, 7
    %v129 = vsub.s32 7, %v128
    %v130 = vrot.slane %v62, %v129
    %v131 = vlaneseq
    %v132 = vshrl.u32 %v131, 7
    %v133 = vsub.s32 0, %v132
    %v134 = vrot.slane %v63, %v133
    %v135 = vlaneseq
    %v136 = vshrl.u32 %v135, 7
    %v137 = vsub.s32 1, %v136
    %v138 = vrot.slane %v63, %v137
    %v139 = vlaneseq
    %v140 = vshrl.u32 %v139, 7
    %v141 = vsub.s32 2, %v140
    %v142 = vrot.slane %v63, %v141
    %v143 = vlaneseq
    %v144 = vshrl.u32 %v143, 7
    %v145 = vsub.s32 3, %v144
    %v146 = vrot.slane %v63, %v145
    %v147 = vlaneseq
    %v148 = vshrl.u32 %v147, 7
    %v149 = vsub.s32 4, %v148
    %v150 = vrot.slane %v63, %v149
    %v194 = vunpack.c.l.b16 %v39
    %v195 = vunpack.c.h.b16 %v39
    %v196 = vunpack.c.l.b16 %v40
    %v197 = vunpack.c.h.b16 %v40
    %v198 = vunpack.c.l.b16 %v41
    %v199 = vunpack.c.h.b16 %v41
    %v200 = vunpack.c.l.b16 %v42
    %v201 = vunpack.c.h.b16 %v42
    %v202 = vunpack.c.l.b16 %v43
    %v203 = vunpack.c.h.b16 %v43
    %v204 = vunpack.c.l.b16 %v44
    %v205 = vunpack.c.h.b16 %v44
    %v206 = vunpack.c.l.b16 %v45
    %v207 = vunpack.c.h.b16 %v45
    %v208 = vunpack.c.l.b16 %v46
    %v209 = vunpack.c.h.b16 %v46
    %v210 = vunpack.c.l.b16 %v47
    %v211 = vunpack.c.h.b16 %v47
    %v212 = vunpack.c.l.b16 %v48
    %v213 = vunpack.c.h.b16 %v48
    %v214 = vunpack.c.l.b16 %v49
    %v215 = vunpack.c.l.b16 %v50
    %v216 = vunpack.c.h.b16 %v50
    %v217 = vunpack.c.l.b16 %v51
    %v218 = vunpack.c.h.b16 %v51
    %v219 = vunpack.c.l.b16 %v52
    %v220 = vunpack.c.h.b16 %v52
    %v221 = vunpack.c.l.b16 %v53
    %v222 = vunpack.c.h.b16 %v53
    %v223 = vunpack.c.l.b16 %v54
    %v224 = vunpack.c.h.b16 %v54
    %v225 = vunpack.c.l.b16 %v55
    %v226 = vunpack.c.h.b16 %v55
    %v227 = vunpack.c.l.b16 %v56
    %v228 = vunpack.c.h.b16 %v56
    %v229 = vunpack.c.l.b16 %v57
    %v230 = vunpack.c.h.b16 %v57
    %v231 = vunpack.c.l.b16 %v58
    %v232 = vunpack.c.h.b16 %v58
    %v233 = vunpack.c.l.b16 %v59
    %v234 = vunpack.c.h.b16 %v59
    %v235 = vunpack.c.l.b16 %v60
    %v236 = vpack.c.b16 %v215, %v194
    %v237 = vpack.c.b16 %v216, %v195
    %v238 = vpack.c.b16 %v217, %v196
    %v239 = vpack.c.b16 %v218, %v197
    %v240 = vpack.c.b16 %v219, %v198
    %v241 = vpack.c.b16 %v220, %v199
    %v242 = vpack.c.b16 %v221, %v200
    %v243 = vpack.c.b16 %v222, %v201
    %v244 = vpack.c.b16 %v223, %v202
    %v245 = vpack.c.b16 %v224, %v203
    %v246 = vpack.c.b16 %v225, %v204
    %v247 = vpack.c.b16 %v226, %v205
    %v248 = vpack.c.b16 %v227, %v206
    %v249 = vpack.c.b16 %v228, %v207
    %v250 = vpack.c.b16 %v229, %v208
    %v251 = vpack.c.b16 %v230, %v209
    %v252 = vpack.c.b16 %v231, %v210
    %v253 = vpack.c.b16 %v232, %v211
    %v254 = vpack.c.b16 %v233, %v212
    %v255 = vpack.c.b16 %v234, %v213
    %v256 = vpack.c.b16 %v235, %v214
    %vm257 = vcmask 80896
    %v259 = vsel %vm257, %v38, 0
    %vm261 = vcmask 1044480
    %v263 = vsel %vm261, %v236, 0
    %v266 = vsel %vm261, %v237, 0
    %v269 = vsel %vm261, %v238, 0
    %v272 = vsel %vm261, %v239, 0
    %v275 = vsel %vm261, %v240, 0
    %v278 = vsel %vm261, %v241, 0
    %v281 = vsel %vm261, %v242, 0
    %v284 = vsel %vm261, %v243, 0
    %v287 = vsel %vm261, %v244, 0
    %v290 = vsel %vm261, %v245, 0
    %v293 = vsel %vm261, %v246, 0
    %v296 = vsel %vm261, %v247, 0
    %v299 = vsel %vm261, %v248, 0
    %v302 = vsel %vm261, %v249, 0
    %v305 = vsel %vm261, %v250, 0
    %v308 = vsel %vm261, %v251, 0
    %v311 = vsel %vm261, %v252, 0
    %v314 = vsel %vm261, %v253, 0
    %v317 = vsel %vm261, %v254, 0
    %v320 = vsel %vm261, %v255, 0
    %v323 = vsel %vm261, %v256, 0
    %325 = vmatprep.subr.bf16.mxu0 %v266
    %326 = vmatpush1.bf16.msra.mxu0 %v263
    %327 = vmatprep.subr.bf16.mxu0 0
    %328 = vmatpush1.bf16.msra.mxu0 0
    %329 = vmatprep.subr.bf16.mxu0 0
    %330 = vmatpush1.bf16.msra.mxu0 0
    %331 = vmatprep.subr.bf16.mxu0 0
    %332 = vmatpush1.bf16.msra.mxu0 0
    %333 = vmatprep.subr.bf16.mxu0 0
    %334 = vmatpush1.bf16.msra.mxu0 0
    %335 = vmatprep.subr.bf16.mxu0 0
    %336 = vmatpush1.bf16.msra.mxu0 0
    %337 = vmatprep.subr.bf16.mxu0 0
    %338 = vmatpush1.bf16.msra.mxu0 0
    %339 = vmatprep.subr.bf16.mxu0 0
    %340 = vmatpush1.bf16.msra.mxu0 0
    %341 = vmatprep.subr.bf16.mxu0 0
    %342 = vmatpush1.bf16.msra.mxu0 0
    %343 = vmatprep.subr.bf16.mxu0 0
    %344 = vmatpush1.bf16.msra.mxu0 0
    %345 = vmatprep.subr.bf16.mxu0 0
    %346 = vmatpush1.bf16.msra.mxu0 0
    %347 = vmatprep.subr.bf16.mxu0 0
    %348 = vmatpush1.bf16.msra.mxu0 0
    %349 = vmatprep.subr.bf16.mxu0 0
    %350 = vmatpush1.bf16.msra.mxu0 0
    %351 = vmatprep.subr.bf16.mxu0 0
    %352 = vmatpush1.bf16.msra.mxu0 0
    %353 = vmatprep.subr.bf16.mxu0 0
    %354 = vmatpush1.bf16.msra.mxu0 0
    %355 = vmatprep.subr.bf16.mxu0 0
    %356 = vmatpush1.bf16.msra.mxu0 0
    %357 = vmatprep.mubr.bf16.mxu0 0
    %358 = vmatmul.mubr.bf16.gmra.mrb[0].mxu0 %v259
    %v359 = vpop.f32.mrb[0].mxu0
    %v360 = vadd.f32 %v70, %v359
    %v361 = vpop.f32.mrb[0].mxu0
    %v362 = vadd.f32 %v74, %v361
    %v363 = vpop.f32.mrb[0].mxu0
    %v364 = vpop.f32.mrb[0].mxu0
    %365 = vdwg.mxu0
    %366 = vmatprep.subr.bf16.mxu0 %v272
    %367 = vmatpush1.bf16.msra.mxu0 %v269
    %368 = vmatprep.subr.bf16.mxu0 0
    %369 = vmatpush1.bf16.msra.mxu0 0
    %370 = vmatprep.subr.bf16.mxu0 0
    %371 = vmatpush1.bf16.msra.mxu0 0
    %372 = vmatprep.subr.bf16.mxu0 0
    %373 = vmatpush1.bf16.msra.mxu0 0
    %374 = vmatprep.subr.bf16.mxu0 0
    %375 = vmatpush1.bf16.msra.mxu0 0
    %376 = vmatprep.subr.bf16.mxu0 0
    %377 = vmatpush1.bf16.msra.mxu0 0
    %378 = vmatprep.subr.bf16.mxu0 0
    %379 = vmatpush1.bf16.msra.mxu0 0
    %380 = vmatprep.subr.bf16.mxu0 0
    %381 = vmatpush1.bf16.msra.mxu0 0
    %382 = vmatprep.subr.bf16.mxu0 0
    %383 = vmatpush1.bf16.msra.mxu0 0
    %384 = vmatprep.subr.bf16.mxu0 0
    %385 = vmatpush1.bf16.msra.mxu0 0
    %386 = vmatprep.subr.bf16.mxu0 0
    %387 = vmatpush1.bf16.msra.mxu0 0
    %388 = vmatprep.subr.bf16.mxu0 0
    %389 = vmatpush1.bf16.msra.mxu0 0
    %390 = vmatprep.subr.bf16.mxu0 0
    %391 = vmatpush1.bf16.msra.mxu0 0
    %392 = vmatprep.subr.bf16.mxu0 0
    %393 = vmatpush1.bf16.msra.mxu0 0
    %394 = vmatprep.subr.bf16.mxu0 0
    %395 = vmatpush1.bf16.msra.mxu0 0
    %396 = vmatprep.subr.bf16.mxu0 0
    %397 = vmatpush1.bf16.msra.mxu0 0
    %398 = vmatprep.mubr.bf16.mxu0 0
    %399 = vmatmul.mubr.bf16.gmra.mrb[0].mxu0 %v259
    %v400 = vpop.f32.mrb[0].mxu0
    %v401 = vadd.f32 %v78, %v400
    %v402 = vpop.f32.mrb[0].mxu0
    %v403 = vadd.f32 %v82, %v402
    %v404 = vpop.f32.mrb[0].mxu0
    %v405 = vpop.f32.mrb[0].mxu0
    %406 = vdwg.mxu0
    %407 = vmatprep.subr.bf16.mxu0 %v278
    %408 = vmatpush1.bf16.msra.mxu0 %v275
    %409 = vmatprep.subr.bf16.mxu0 0
    %410 = vmatpush1.bf16.msra.mxu0 0
    %411 = vmatprep.subr.bf16.mxu0 0
    %412 = vmatpush1.bf16.msra.mxu0 0
    %413 = vmatprep.subr.bf16.mxu0 0
    %414 = vmatpush1.bf16.msra.mxu0 0
    %415 = vmatprep.subr.bf16.mxu0 0
    %416 = vmatpush1.bf16.msra.mxu0 0
    %417 = vmatprep.subr.bf16.mxu0 0
    %418 = vmatpush1.bf16.msra.mxu0 0
    %419 = vmatprep.subr.bf16.mxu0 0
    %420 = vmatpush1.bf16.msra.mxu0 0
    %421 = vmatprep.subr.bf16.mxu0 0
    %422 = vmatpush1.bf16.msra.mxu0 0
    %423 = vmatprep.subr.bf16.mxu0 0
    %424 = vmatpush1.bf16.msra.mxu0 0
    %425 = vmatprep.subr.bf16.mxu0 0
    %426 = vmatpush1.bf16.msra.mxu0 0
    %427 = vmatprep.subr.bf16.mxu0 0
    %428 = vmatpush1.bf16.msra.mxu0 0
    %429 = vmatprep.subr.bf16.mxu0 0
    %430 = vmatpush1.bf16.msra.mxu0 0
    %431 = vmatprep.subr.bf16.mxu0 0
    %432 = vmatpush1.bf16.msra.mxu0 0
    %433 = vmatprep.subr.bf16.mxu0 0
    %434 = vmatpush1.bf16.msra.mxu0 0
    %435 = vmatprep.subr.bf16.mxu0 0
    %436 = vmatpush1.bf16.msra.mxu0 0
    %437 = vmatprep.subr.bf16.mxu0 0
    %438 = vmatpush1.bf16.msra.mxu0 0
    %439 = vmatprep.mubr.bf16.mxu0 0
    %440 = vmatmul.mubr.bf16.gmra.mrb[0].mxu0 %v259
    %v441 = vpop.f32.mrb[0].mxu0
    %v442 = vadd.f32 %v86, %v441
    %v443 = vpop.f32.mrb[0].mxu0
    %v444 = vadd.f32 %v90, %v443
    %v445 = vpop.f32.mrb[0].mxu0
    %v446 = vpop.f32.mrb[0].mxu0
    %447 = vdwg.mxu0
    %448 = vmatprep.subr.bf16.mxu0 %v284
    %449 = vmatpush1.bf16.msra.mxu0 %v281
    %450 = vmatprep.subr.bf16.mxu0 0
    %451 = vmatpush1.bf16.msra.mxu0 0
    %452 = vmatprep.subr.bf16.mxu0 0
    %453 = vmatpush1.bf16.msra.mxu0 0
    %454 = vmatprep.subr.bf16.mxu0 0
    %455 = vmatpush1.bf16.msra.mxu0 0
    %456 = vmatprep.subr.bf16.mxu0 0
    %457 = vmatpush1.bf16.msra.mxu0 0
    %458 = vmatprep.subr.bf16.mxu0 0
    %459 = vmatpush1.bf16.msra.mxu0 0
    %460 = vmatprep.subr.bf16.mxu0 0
    %461 = vmatpush1.bf16.msra.mxu0 0
    %462 = vmatprep.subr.bf16.mxu0 0
    %463 = vmatpush1.bf16.msra.mxu0 0
    %464 = vmatprep.subr.bf16.mxu0 0
    %465 = vmatpush1.bf16.msra.mxu0 0
    %466 = vmatprep.subr.bf16.mxu0 0
    %467 = vmatpush1.bf16.msra.mxu0 0
    %468 = vmatprep.subr.bf16.mxu0 0
    %469 = vmatpush1.bf16.msra.mxu0 0
    %470 = vmatprep.subr.bf16.mxu0 0
    %471 = vmatpush1.bf16.msra.mxu0 0
    %472 = vmatprep.subr.bf16.mxu0 0
    %473 = vmatpush1.bf16.msra.mxu0 0
    %474 = vmatprep.subr.bf16.mxu0 0
    %475 = vmatpush1.bf16.msra.mxu0 0
    %476 = vmatprep.subr.bf16.mxu0 0
    %477 = vmatpush1.bf16.msra.mxu0 0
    %478 = vmatprep.subr.bf16.mxu0 0
    %479 = vmatpush1.bf16.msra.mxu0 0
    %480 = vmatprep.mubr.bf16.mxu0 0
    %481 = vmatmul.mubr.bf16.gmra.mrb[0].mxu0 %v259
    %v482 = vpop.f32.mrb[0].mxu0
    %v483 = vadd.f32 %v94, %v482
    %v484 = vpop.f32.mrb[0].mxu0
    %v485 = vadd.f32 %v98, %v484
    %v486 = vpop.f32.mrb[0].mxu0
    %v487 = vpop.f32.mrb[0].mxu0
    %488 = vdwg.mxu0
    %489 = vmatprep.subr.bf16.mxu0 %v290
    %490 = vmatpush1.bf16.msra.mxu0 %v287
    %491 = vmatprep.subr.bf16.mxu0 0
    %492 = vmatpush1.bf16.msra.mxu0 0
    %493 = vmatprep.subr.bf16.mxu0 0
    %494 = vmatpush1.bf16.msra.mxu0 0
    %495 = vmatprep.subr.bf16.mxu0 0
    %496 = vmatpush1.bf16.msra.mxu0 0
    %497 = vmatprep.subr.bf16.mxu0 0
    %498 = vmatpush1.bf16.msra.mxu0 0
    %499 = vmatprep.subr.bf16.mxu0 0
    %500 = vmatpush1.bf16.msra.mxu0 0
    %501 = vmatprep.subr.bf16.mxu0 0
    %502 = vmatpush1.bf16.msra.mxu0 0
    %503 = vmatprep.subr.bf16.mxu0 0
    %504 = vmatpush1.bf16.msra.mxu0 0
    %505 = vmatprep.subr.bf16.mxu0 0
    %506 = vmatpush1.bf16.msra.mxu0 0
    %507 = vmatprep.subr.bf16.mxu0 0
    %508 = vmatpush1.bf16.msra.mxu0 0
    %509 = vmatprep.subr.bf16.mxu0 0
    %510 = vmatpush1.bf16.msra.mxu0 0
    %511 = vmatprep.subr.bf16.mxu0 0
    %512 = vmatpush1.bf16.msra.mxu0 0
    %513 = vmatprep.subr.bf16.mxu0 0
    %514 = vmatpush1.bf16.msra.mxu0 0
    %515 = vmatprep.subr.bf16.mxu0 0
    %516 = vmatpush1.bf16.msra.mxu0 0
    %517 = vmatprep.subr.bf16.mxu0 0
    %518 = vmatpush1.bf16.msra.mxu0 0
    %519 = vmatprep.subr.bf16.mxu0 0
    %520 = vmatpush1.bf16.msra.mxu0 0
    %521 = vmatprep.mubr.bf16.mxu0 0
    %522 = vmatmul.mubr.bf16.gmra.mrb[0].mxu0 %v259
    %v523 = vpop.f32.mrb[0].mxu0
    %v524 = vadd.f32 %v102, %v523
    %v525 = vpop.f32.mrb[0].mxu0
    %v526 = vadd.f32 %v106, %v525
    %v527 = vpop.f32.mrb[0].mxu0
    %v528 = vpop.f32.mrb[0].mxu0
    %529 = vdwg.mxu0
    %530 = vmatprep.subr.bf16.mxu0 %v296
    %531 = vmatpush1.bf16.msra.mxu0 %v293
    %532 = vmatprep.subr.bf16.mxu0 0
    %533 = vmatpush1.bf16.msra.mxu0 0
    %534 = vmatprep.subr.bf16.mxu0 0
    %535 = vmatpush1.bf16.msra.mxu0 0
    %536 = vmatprep.subr.bf16.mxu0 0
    %537 = vmatpush1.bf16.msra.mxu0 0
    %538 = vmatprep.subr.bf16.mxu0 0
    %539 = vmatpush1.bf16.msra.mxu0 0
    %540 = vmatprep.subr.bf16.mxu0 0
    %541 = vmatpush1.bf16.msra.mxu0 0
    %542 = vmatprep.subr.bf16.mxu0 0
    %543 = vmatpush1.bf16.msra.mxu0 0
    %544 = vmatprep.subr.bf16.mxu0 0
    %545 = vmatpush1.bf16.msra.mxu0 0
    %546 = vmatprep.subr.bf16.mxu0 0
    %547 = vmatpush1.bf16.msra.mxu0 0
    %548 = vmatprep.subr.bf16.mxu0 0
    %549 = vmatpush1.bf16.msra.mxu0 0
    %550 = vmatprep.subr.bf16.mxu0 0
    %551 = vmatpush1.bf16.msra.mxu0 0
    %552 = vmatprep.subr.bf16.mxu0 0
    %553 = vmatpush1.bf16.msra.mxu0 0
    %554 = vmatprep.subr.bf16.mxu0 0
    %555 = vmatpush1.bf16.msra.mxu0 0
    %556 = vmatprep.subr.bf16.mxu0 0
    %557 = vmatpush1.bf16.msra.mxu0 0
    %558 = vmatprep.subr.bf16.mxu0 0
    %559 = vmatpush1.bf16.msra.mxu0 0
    %560 = vmatprep.subr.bf16.mxu0 0
    %561 = vmatpush1.bf16.msra.mxu0 0
    %562 = vmatprep.mubr.bf16.mxu0 0
    %563 = vmatmul.mubr.bf16.gmra.mrb[0].mxu0 %v259
    %v564 = vpop.f32.mrb[0].mxu0
    %v565 = vadd.f32 %v110, %v564
    %v566 = vpop.f32.mrb[0].mxu0
    %v567 = vadd.f32 %v114, %v566
    %v568 = vpop.f32.mrb[0].mxu0
    %v569 = vpop.f32.mrb[0].mxu0
    %570 = vdwg.mxu0
    %571 = vmatprep.subr.bf16.mxu0 %v302
    %572 = vmatpush1.bf16.msra.mxu0 %v299
    %573 = vmatprep.subr.bf16.mxu0 0
    %574 = vmatpush1.bf16.msra.mxu0 0
    %575 = vmatprep.subr.bf16.mxu0 0
    %576 = vmatpush1.bf16.msra.mxu0 0
    %577 = vmatprep.subr.bf16.mxu0 0
    %578 = vmatpush1.bf16.msra.mxu0 0
    %579 = vmatprep.subr.bf16.mxu0 0
    %580 = vmatpush1.bf16.msra.mxu0 0
    %581 = vmatprep.subr.bf16.mxu0 0
    %582 = vmatpush1.bf16.msra.mxu0 0
    %583 = vmatprep.subr.bf16.mxu0 0
    %584 = vmatpush1.bf16.msra.mxu0 0
    %585 = vmatprep.subr.bf16.mxu0 0
    %586 = vmatpush1.bf16.msra.mxu0 0
    %587 = vmatprep.subr.bf16.mxu0 0
    %588 = vmatpush1.bf16.msra.mxu0 0
    %589 = vmatprep.subr.bf16.mxu0 0
    %590 = vmatpush1.bf16.msra.mxu0 0
    %591 = vmatprep.subr.bf16.mxu0 0
    %592 = vmatpush1.bf16.msra.mxu0 0
    %593 = vmatprep.subr.bf16.mxu0 0
    %594 = vmatpush1.bf16.msra.mxu0 0
    %595 = vmatprep.subr.bf16.mxu0 0
    %596 = vmatpush1.bf16.msra.mxu0 0
    %597 = vmatprep.subr.bf16.mxu0 0
    %598 = vmatpush1.bf16.msra.mxu0 0
    %599 = vmatprep.subr.bf16.mxu0 0
    %600 = vmatpush1.bf16.msra.mxu0 0
    %601 = vmatprep.subr.bf16.mxu0 0
    %602 = vmatpush1.bf16.msra.mxu0 0
    %603 = vmatprep.mubr.bf16.mxu0 0
    %604 = vmatmul.mubr.bf16.gmra.mrb[0].mxu0 %v259
    %v605 = vpop.f32.mrb[0].mxu0
    %v606 = vadd.f32 %v118, %v605
    %v607 = vpop.f32.mrb[0].mxu0
    %v608 = vadd.f32 %v122, %v607
    %v609 = vpop.f32.mrb[0].mxu0
    %v610 = vpop.f32.mrb[0].mxu0
    %611 = vdwg.mxu0
    %612 = vmatprep.subr.bf16.mxu0 %v308
    %613 = vmatpush1.bf16.msra.mxu0 %v305
    %614 = vmatprep.subr.bf16.mxu0 0
    %615 = vmatpush1.bf16.msra.mxu0 0
    %616 = vmatprep.subr.bf16.mxu0 0
    %617 = vmatpush1.bf16.msra.mxu0 0
    %618 = vmatprep.subr.bf16.mxu0 0
    %619 = vmatpush1.bf16.msra.mxu0 0
    %620 = vmatprep.subr.bf16.mxu0 0
    %621 = vmatpush1.bf16.msra.mxu0 0
    %622 = vmatprep.subr.bf16.mxu0 0
    %623 = vmatpush1.bf16.msra.mxu0 0
    %624 = vmatprep.subr.bf16.mxu0 0
    %625 = vmatpush1.bf16.msra.mxu0 0
    %626 = vmatprep.subr.bf16.mxu0 0
    %627 = vmatpush1.bf16.msra.mxu0 0
    %628 = vmatprep.subr.bf16.mxu0 0
    %629 = vmatpush1.bf16.msra.mxu0 0
    %630 = vmatprep.subr.bf16.mxu0 0
    %631 = vmatpush1.bf16.msra.mxu0 0
    %632 = vmatprep.subr.bf16.mxu0 0
    %633 = vmatpush1.bf16.msra.mxu0 0
    %634 = vmatprep.subr.bf16.mxu0 0
    %635 = vmatpush1.bf16.msra.mxu0 0
    %636 = vmatprep.subr.bf16.mxu0 0
    %637 = vmatpush1.bf16.msra.mxu0 0
    %638 = vmatprep.subr.bf16.mxu0 0
    %639 = vmatpush1.bf16.msra.mxu0 0
    %640 = vmatprep.subr.bf16.mxu0 0
    %641 = vmatpush1.bf16.msra.mxu0 0
    %642 = vmatprep.subr.bf16.mxu0 0
    %643 = vmatpush1.bf16.msra.mxu0 0
    %644 = vmatprep.mubr.bf16.mxu0 0
    %645 = vmatmul.mubr.bf16.gmra.mrb[0].mxu0 %v259
    %v646 = vpop.f32.mrb[0].mxu0
    %v647 = vadd.f32 %v126, %v646
    %v648 = vpop.f32.mrb[0].mxu0
    %v649 = vadd.f32 %v130, %v648
    %v650 = vpop.f32.mrb[0].mxu0
    %v651 = vpop.f32.mrb[0].mxu0
    %652 = vdwg.mxu0
    %653 = vmatprep.subr.bf16.mxu0 %v314
    %654 = vmatpush1.bf16.msra.mxu0 %v311
    %655 = vmatprep.subr.bf16.mxu0 0
    %656 = vmatpush1.bf16.msra.mxu0 0
    %657 = vmatprep.subr.bf16.mxu0 0
    %658 = vmatpush1.bf16.msra.mxu0 0
    %659 = vmatprep.subr.bf16.mxu0 0
    %660 = vmatpush1.bf16.msra.mxu0 0
    %661 = vmatprep.subr.bf16.mxu0 0
    %662 = vmatpush1.bf16.msra.mxu0 0
    %663 = vmatprep.subr.bf16.mxu0 0
    %664 = vmatpush1.bf16.msra.mxu0 0
    %665 = vmatprep.subr.bf16.mxu0 0
    %666 = vmatpush1.bf16.msra.mxu0 0
    %667 = vmatprep.subr.bf16.mxu0 0
    %668 = vmatpush1.bf16.msra.mxu0 0
    %669 = vmatprep.subr.bf16.mxu0 0
    %670 = vmatpush1.bf16.msra.mxu0 0
    %671 = vmatprep.subr.bf16.mxu0 0
    %672 = vmatpush1.bf16.msra.mxu0 0
    %673 = vmatprep.subr.bf16.mxu0 0
    %674 = vmatpush1.bf16.msra.mxu0 0
    %675 = vmatprep.subr.bf16.mxu0 0
    %676 = vmatpush1.bf16.msra.mxu0 0
    %677 = vmatprep.subr.bf16.mxu0 0
    %678 = vmatpush1.bf16.msra.mxu0 0
    %679 = vmatprep.subr.bf16.mxu0 0
    %680 = vmatpush1.bf16.msra.mxu0 0
    %681 = vmatprep.subr.bf16.mxu0 0
    %682 = vmatpush1.bf16.msra.mxu0 0
    %683 = vmatprep.subr.bf16.mxu0 0
    %684 = vmatpush1.bf16.msra.mxu0 0
    %685 = vmatprep.mubr.bf16.mxu0 0
    %686 = vmatmul.mubr.bf16.gmra.mrb[0].mxu0 %v259
    %v687 = vpop.f32.mrb[0].mxu0
    %v688 = vadd.f32 %v134, %v687
    %v689 = vpop.f32.mrb[0].mxu0
    %v690 = vadd.f32 %v138, %v689
    %v691 = vpop.f32.mrb[0].mxu0
    %v692 = vpop.f32.mrb[0].mxu0
    %693 = vdwg.mxu0
    %694 = vmatprep.subr.bf16.mxu0 %v320
    %695 = vmatpush1.bf16.msra.mxu0 %v317
    %696 = vmatprep.subr.bf16.mxu0 0
    %697 = vmatpush1.bf16.msra.mxu0 0
    %698 = vmatprep.subr.bf16.mxu0 0
    %699 = vmatpush1.bf16.msra.mxu0 0
    %700 = vmatprep.subr.bf16.mxu0 0
    %701 = vmatpush1.bf16.msra.mxu0 0
    %702 = vmatprep.subr.bf16.mxu0 0
    %703 = vmatpush1.bf16.msra.mxu0 0
    %704 = vmatprep.subr.bf16.mxu0 0
    %705 = vmatpush1.bf16.msra.mxu0 0
    %706 = vmatprep.subr.bf16.mxu0 0
    %707 = vmatpush1.bf16.msra.mxu0 0
    %708 = vmatprep.subr.bf16.mxu0 0
    %709 = vmatpush1.bf16.msra.mxu0 0
    %710 = vmatprep.subr.bf16.mxu0 0
    %711 = vmatpush1.bf16.msra.mxu0 0
    %712 = vmatprep.subr.bf16.mxu0 0
    %713 = vmatpush1.bf16.msra.mxu0 0
    %714 = vmatprep.subr.bf16.mxu0 0
    %715 = vmatpush1.bf16.msra.mxu0 0
    %716 = vmatprep.subr.bf16.mxu0 0
    %717 = vmatpush1.bf16.msra.mxu0 0
    %718 = vmatprep.subr.bf16.mxu0 0
    %719 = vmatpush1.bf16.msra.mxu0 0
    %720 = vmatprep.subr.bf16.mxu0 0
    %721 = vmatpush1.bf16.msra.mxu0 0
    %722 = vmatprep.subr.bf16.mxu0 0
    %723 = vmatpush1.bf16.msra.mxu0 0
    %724 = vmatprep.subr.bf16.mxu0 0
    %725 = vmatpush1.bf16.msra.mxu0 0
    %726 = vmatprep.mubr.bf16.mxu0 0
    %727 = vmatmul.mubr.bf16.gmra.mrb[0].mxu0 %v259
    %v728 = vpop.f32.mrb[0].mxu0
    %v729 = vadd.f32 %v142, %v728
    %v730 = vpop.f32.mrb[0].mxu0
    %v731 = vadd.f32 %v146, %v730
    %v732 = vpop.f32.mrb[0].mxu0
    %v733 = vpop.f32.mrb[0].mxu0
    %734 = vdwg.mxu0
    %735 = vmatprep.subr.bf16.mxu0 0
    %736 = vmatpush1.bf16.msra.mxu0 %v323
    %737 = vmatprep.subr.bf16.mxu0 0
    %738 = vmatpush1.bf16.msra.mxu0 0
    %739 = vmatprep.subr.bf16.mxu0 0
    %740 = vmatpush1.bf16.msra.mxu0 0
    %741 = vmatprep.subr.bf16.mxu0 0
    %742 = vmatpush1.bf16.msra.mxu0 0
    %743 = vmatprep.subr.bf16.mxu0 0
    %744 = vmatpush1.bf16.msra.mxu0 0
    %745 = vmatprep.subr.bf16.mxu0 0
    %746 = vmatpush1.bf16.msra.mxu0 0
    %747 = vmatprep.subr.bf16.mxu0 0
    %748 = vmatpush1.bf16.msra.mxu0 0
    %749 = vmatprep.subr.bf16.mxu0 0
    %750 = vmatpush1.bf16.msra.mxu0 0
    %751 = vmatprep.subr.bf16.mxu0 0
    %752 = vmatpush1.bf16.msra.mxu0 0
    %753 = vmatprep.subr.bf16.mxu0 0
    %754 = vmatpush1.bf16.msra.mxu0 0
    %755 = vmatprep.subr.bf16.mxu0 0
    %756 = vmatpush1.bf16.msra.mxu0 0
    %757 = vmatprep.subr.bf16.mxu0 0
    %758 = vmatpush1.bf16.msra.mxu0 0
    %759 = vmatprep.subr.bf16.mxu0 0
    %760 = vmatpush1.bf16.msra.mxu0 0
    %761 = vmatprep.subr.bf16.mxu0 0
    %762 = vmatpush1.bf16.msra.mxu0 0
    %763 = vmatprep.subr.bf16.mxu0 0
    %764 = vmatpush1.bf16.msra.mxu0 0
    %765 = vmatprep.subr.bf16.mxu0 0
    %766 = vmatpush1.bf16.msra.mxu0 0
    %767 = vmatprep.mubr.bf16.mxu0 0
    %768 = vmatmul.mubr.bf16.gmra.mrb[0].mxu0 %v259
    %v769 = vpop.f32.mrb[0].mxu0
    %v770 = vadd.f32 %v150, %v769
    %v771 = vpop.f32.mrb[0].mxu0
    %v772 = vpop.f32.mrb[0].mxu0
    %v773 = vpop.f32.mrb[0].mxu0
    %774 = vdwg.mxu0
    %v775 = vld [vmem:[%s1] sm:$0xff]
    %v776 = vld [vmem:[%s1 + $0x8] sm:$0xff]
    %v777 = vpack.c.bf16 %v775, %v775
    %v778 = vpack.c.bf16 %v776, %v776
    %v779 = vld [vmem:[%s4] sm:$0xff]
    %v780 = vld [vmem:[%s4 + $0x8] sm:$0xff]
    %v781 = vld [vmem:[%s4 + $0x10] sm:$0xff]
    %v782 = vld [vmem:[%s4 + $0x18] sm:$0xff]
    %v783 = vld [vmem:[%s4 + $0x20] sm:$0xff]
    %v784 = vld [vmem:[%s4 + $0x28] sm:$0xff]
    %v785 = vld [vmem:[%s4 + $0x30] sm:$0xff]
    %v786 = vld [vmem:[%s4 + $0x38] sm:$0xff]
    %v787 = vld [vmem:[%s4 + $0x40] sm:$0xff]
    %v788 = vld [vmem:[%s4 + $0x48] sm:$0xff]
    %v789 = vld [vmem:[%s4 + $0x50] sm:$0xf]
    %v790 = vld [vmem:[%s4 + $0x54] sm:$0xff]
    %v791 = vld [vmem:[%s4 + $0x5c] sm:$0xff]
    %v792 = vld [vmem:[%s4 + $0x64] sm:$0xff]
    %v793 = vld [vmem:[%s4 + $0x6c] sm:$0xff]
    %v794 = vld [vmem:[%s4 + $0x74] sm:$0xff]
    %v795 = vld [vmem:[%s4 + $0x7c] sm:$0xff]
    %v796 = vld [vmem:[%s4 + $0x84] sm:$0xff]
    %v797 = vld [vmem:[%s4 + $0x8c] sm:$0xff]
    %v798 = vld [vmem:[%s4 + $0x94] sm:$0xff]
    %v799 = vld [vmem:[%s4 + $0x9c] sm:$0xff]
    %v800 = vld [vmem:[%s4 + $0xa4] sm:$0xf]
    %v801 = vld [vmem:[%s4 + $0xa8] sm:$0xff]
    %v802 = vld [vmem:[%s4 + $0xb0] sm:$0xff]
    %v803 = vld [vmem:[%s4 + $0xb8] sm:$0xff]
    %v804 = vld [vmem:[%s4 + $0xc0] sm:$0xff]
    %v805 = vld [vmem:[%s4 + $0xc8] sm:$0xff]
    %v806 = vld [vmem:[%s4 + $0xd0] sm:$0xff]
    %v807 = vld [vmem:[%s4 + $0xd8] sm:$0xff]
    %v808 = vld [vmem:[%s4 + $0xe0] sm:$0xff]
    %v809 = vld [vmem:[%s4 + $0xe8] sm:$0xff]
    %v810 = vld [vmem:[%s4 + $0xf0] sm:$0xff]
    %v811 = vld [vmem:[%s4 + $0xf8] sm:$0xf]
    %v812 = vld [vmem:[%s4 + $0xfc] sm:$0xff]
    %v813 = vld [vmem:[%s4 + $0x104] sm:$0xff]
    %v814 = vld [vmem:[%s4 + $0x10c] sm:$0xff]
    %v815 = vld [vmem:[%s4 + $0x114] sm:$0xff]
    %v816 = vld [vmem:[%s4 + $0x11c] sm:$0xff]
    %v817 = vld [vmem:[%s4 + $0x124] sm:$0xff]
    %v818 = vld [vmem:[%s4 + $0x12c] sm:$0xff]
    %v819 = vld [vmem:[%s4 + $0x134] sm:$0xff]
    %v820 = vld [vmem:[%s4 + $0x13c] sm:$0xff]
    %v821 = vld [vmem:[%s4 + $0x144] sm:$0xff]
    %v822 = vld [vmem:[%s4 + $0x14c] sm:$0xf]
    %v823 = vld [vmem:[%s4 + $0x150] sm:$0xff]
    %v824 = vld [vmem:[%s4 + $0x158] sm:$0xff]
    %v825 = vld [vmem:[%s4 + $0x160] sm:$0xff]
    %v826 = vld [vmem:[%s4 + $0x168] sm:$0xff]
    %v827 = vld [vmem:[%s4 + $0x170] sm:$0xff]
    %v828 = vld [vmem:[%s4 + $0x178] sm:$0xff]
    %v829 = vld [vmem:[%s4 + $0x180] sm:$0xff]
    %v830 = vld [vmem:[%s4 + $0x188] sm:$0xff]
    %v831 = vld [vmem:[%s4 + $0x190] sm:$0xff]
    %v832 = vld [vmem:[%s4 + $0x198] sm:$0xff]
    %v833 = vld [vmem:[%s4 + $0x1a0] sm:$0xf]
    %v834 = vld [vmem:[%s4 + $0x1a4] sm:$0xff]
    %v835 = vld [vmem:[%s4 + $0x1ac] sm:$0xff]
    %v836 = vld [vmem:[%s4 + $0x1b4] sm:$0xff]
    %v837 = vld [vmem:[%s4 + $0x1bc] sm:$0xff]
    %v838 = vld [vmem:[%s4 + $0x1c4] sm:$0xff]
    %v839 = vld [vmem:[%s4 + $0x1cc] sm:$0xff]
    %v840 = vld [vmem:[%s4 + $0x1d4] sm:$0xff]
    %v841 = vld [vmem:[%s4 + $0x1dc] sm:$0xff]
    %v842 = vld [vmem:[%s4 + $0x1e4] sm:$0xff]
    %v843 = vld [vmem:[%s4 + $0x1ec] sm:$0xff]
    %v844 = vld [vmem:[%s4 + $0x1f4] sm:$0xf]
    %v845 = vld [vmem:[%s4 + $0x1f8] sm:$0xff]
    %v846 = vld [vmem:[%s4 + $0x200] sm:$0xff]
    %v847 = vld [vmem:[%s4 + $0x208] sm:$0xff]
    %v848 = vld [vmem:[%s4 + $0x210] sm:$0xff]
    %v849 = vld [vmem:[%s4 + $0x218] sm:$0xff]
    %v850 = vld [vmem:[%s4 + $0x220] sm:$0xff]
    %v851 = vld [vmem:[%s4 + $0x228] sm:$0xff]
    %v852 = vld [vmem:[%s4 + $0x230] sm:$0xff]
    %v853 = vld [vmem:[%s4 + $0x238] sm:$0xff]
    %v854 = vld [vmem:[%s4 + $0x240] sm:$0xff]
    %v855 = vld [vmem:[%s4 + $0x248] sm:$0xf]
    %v856 = vld [vmem:[%s4 + $0x24c] sm:$0xff]
    %v857 = vld [vmem:[%s4 + $0x254] sm:$0xff]
    %v858 = vld [vmem:[%s4 + $0x25c] sm:$0xff]
    %v859 = vld [vmem:[%s4 + $0x264] sm:$0xff]
    %v860 = vld [vmem:[%s4 + $0x26c] sm:$0xff]
    %v861 = vld [vmem:[%s4 + $0x274] sm:$0xff]
    %v862 = vld [vmem:[%s4 + $0x27c] sm:$0xff]
    %v863 = vld [vmem:[%s4 + $0x284] sm:$0xff]
    %v864 = vld [vmem:[%s4 + $0x28c] sm:$0xff]
    %v865 = vld [vmem:[%s4 + $0x294] sm:$0xff]
    %v866 = vld [vmem:[%s4 + $0x29c] sm:$0xf]
    %v867 = vld [vmem:[%s4 + $0x2a0] sm:$0xff]
    %v868 = vld [vmem:[%s4 + $0x2a8] sm:$0xff]
    %v869 = vld [vmem:[%s4 + $0x2b0] sm:$0xff]
    %v870 = vld [vmem:[%s4 + $0x2b8] sm:$0xff]
    %v871 = vld [vmem:[%s4 + $0x2c0] sm:$0xff]
    %v872 = vld [vmem:[%s4 + $0x2c8] sm:$0xff]
    %v873 = vld [vmem:[%s4 + $0x2d0] sm:$0xff]
    %v874 = vld [vmem:[%s4 + $0x2d8] sm:$0xff]
    %v875 = vld [vmem:[%s4 + $0x2e0] sm:$0xff]
    %v876 = vld [vmem:[%s4 + $0x2e8] sm:$0xff]
    %v877 = vld [vmem:[%s4 + $0x2f0] sm:$0xf]
    %v878 = vld [vmem:[%s4 + $0x2f4] sm:$0xff]
    %v879 = vld [vmem:[%s4 + $0x2fc] sm:$0xff]
    %v880 = vld [vmem:[%s4 + $0x304] sm:$0xff]
    %v881 = vld [vmem:[%s4 + $0x30c] sm:$0xff]
    %v882 = vld [vmem:[%s4 + $0x314] sm:$0xff]
    %v883 = vld [vmem:[%s4 + $0x31c] sm:$0xff]
    %v884 = vld [vmem:[%s4 + $0x324] sm:$0xff]
    %v885 = vld [vmem:[%s4 + $0x32c] sm:$0xff]
    %v886 = vld [vmem:[%s4 + $0x334] sm:$0xff]
    %v887 = vld [vmem:[%s4 + $0x33c] sm:$0xff]
    %v888 = vld [vmem:[%s4 + $0x344] sm:$0xf]
    %v889 = vld [vmem:[%s4 + $0x348] sm:$0xff]
    %v890 = vld [vmem:[%s4 + $0x350] sm:$0xff]
    %v891 = vld [vmem:[%s4 + $0x358] sm:$0xff]
    %v892 = vld [vmem:[%s4 + $0x360] sm:$0xff]
    %v893 = vld [vmem:[%s4 + $0x368] sm:$0xff]
    %v894 = vld [vmem:[%s4 + $0x370] sm:$0xff]
    %v895 = vld [vmem:[%s4 + $0x378] sm:$0xff]
    %v896 = vld [vmem:[%s4 + $0x380] sm:$0xff]
    %v897 = vld [vmem:[%s4 + $0x388] sm:$0xff]
    %v898 = vld [vmem:[%s4 + $0x390] sm:$0xff]
    %v899 = vld [vmem:[%s4 + $0x398] sm:$0xf]
    %v900 = vld [vmem:[%s4 + $0x39c] sm:$0xff]
    %v901 = vld [vmem:[%s4 + $0x3a4] sm:$0xff]
    %v902 = vld [vmem:[%s4 + $0x3ac] sm:$0xff]
    %v903 = vld [vmem:[%s4 + $0x3b4] sm:$0xff]
    %v904 = vld [vmem:[%s4 + $0x3bc] sm:$0xff]
    %v905 = vld [vmem:[%s4 + $0x3c4] sm:$0xff]
    %v906 = vld [vmem:[%s4 + $0x3cc] sm:$0xff]
    %v907 = vld [vmem:[%s4 + $0x3d4] sm:$0xff]
    %v908 = vld [vmem:[%s4 + $0x3dc] sm:$0xff]
    %v909 = vld [vmem:[%s4 + $0x3e4] sm:$0xff]
    %v910 = vld [vmem:[%s4 + $0x3ec] sm:$0xf]
    %v911 = vld [vmem:[%s4 + $0x3f0] sm:$0xff]
    %v912 = vld [vmem:[%s4 + $0x3f8] sm:$0xff]
    %v913 = vld [vmem:[%s4 + $0x400] sm:$0xff]
    %v914 = vld [vmem:[%s4 + $0x408] sm:$0xff]
    %v915 = vld [vmem:[%s4 + $0x410] sm:$0xff]
    %v916 = vld [vmem:[%s4 + $0x418] sm:$0xff]
    %v917 = vld [vmem:[%s4 + $0x420] sm:$0xff]
    %v918 = vld [vmem:[%s4 + $0x428] sm:$0xff]
    %v919 = vld [vmem:[%s4 + $0x430] sm:$0xff]
    %v920 = vld [vmem:[%s4 + $0x438] sm:$0xff]
    %v921 = vld [vmem:[%s4 + $0x440] sm:$0xf]
    %v922 = vld [vmem:[%s4 + $0x444] sm:$0xff]
    %v923 = vld [vmem:[%s4 + $0x44c] sm:$0xff]
    %v924 = vld [vmem:[%s4 + $0x454] sm:$0xff]
    %v925 = vld [vmem:[%s4 + $0x45c] sm:$0xff]
    %v926 = vld [vmem:[%s4 + $0x464] sm:$0xff]
    %v927 = vld [vmem:[%s4 + $0x46c] sm:$0xff]
    %v928 = vld [vmem:[%s4 + $0x474] sm:$0xff]
    %v929 = vld [vmem:[%s4 + $0x47c] sm:$0xff]
    %v930 = vld [vmem:[%s4 + $0x484] sm:$0xff]
    %v931 = vld [vmem:[%s4 + $0x48c] sm:$0xff]
    %v932 = vld [vmem:[%s4 + $0x494] sm:$0xf]
    %v933 = vld [vmem:[%s4 + $0x498] sm:$0xff]
    %v934 = vld [vmem:[%s4 + $0x4a0] sm:$0xff]
    %v935 = vld [vmem:[%s4 + $0x4a8] sm:$0xff]
    %v936 = vld [vmem:[%s4 + $0x4b0] sm:$0xff]
    %v937 = vld [vmem:[%s4 + $0x4b8] sm:$0xff]
    %v938 = vld [vmem:[%s4 + $0x4c0] sm:$0xff]
    %v939 = vld [vmem:[%s4 + $0x4c8] sm:$0xff]
    %v940 = vld [vmem:[%s4 + $0x4d0] sm:$0xff]
    %v941 = vld [vmem:[%s4 + $0x4d8] sm:$0xff]
    %v942 = vld [vmem:[%s4 + $0x4e0] sm:$0xff]
    %v943 = vld [vmem:[%s4 + $0x4e8] sm:$0xf]
    %v944 = vld [vmem:[%s4 + $0x4ec] sm:$0xff]
    %v945 = vld [vmem:[%s4 + $0x4f4] sm:$0xff]
    %v946 = vld [vmem:[%s4 + $0x4fc] sm:$0xff]
    %v947 = vld [vmem:[%s4 + $0x504] sm:$0xff]
    %v948 = vld [vmem:[%s4 + $0x50c] sm:$0xff]
    %v949 = vld [vmem:[%s4 + $0x514] sm:$0xff]
    %v950 = vld [vmem:[%s4 + $0x51c] sm:$0xff]
    %v951 = vld [vmem:[%s4 + $0x524] sm:$0xff]
    %v952 = vld [vmem:[%s4 + $0x52c] sm:$0xff]
    %v953 = vld [vmem:[%s4 + $0x534] sm:$0xff]
    %v954 = vld [vmem:[%s4 + $0x53c] sm:$0xf]
    %v955 = vld [vmem:[%s4 + $0x540] sm:$0xff]
    %v956 = vld [vmem:[%s4 + $0x548] sm:$0xff]
    %v957 = vld [vmem:[%s4 + $0x550] sm:$0xff]
    %v958 = vld [vmem:[%s4 + $0x558] sm:$0xff]
    %v959 = vld [vmem:[%s4 + $0x560] sm:$0xff]
    %v960 = vld [vmem:[%s4 + $0x568] sm:$0xff]
    %v961 = vld [vmem:[%s4 + $0x570] sm:$0xff]
    %v962 = vld [vmem:[%s4 + $0x578] sm:$0xff]
    %v963 = vld [vmem:[%s4 + $0x580] sm:$0xff]
    %v964 = vld [vmem:[%s4 + $0x588] sm:$0xff]
    %v965 = vld [vmem:[%s4 + $0x590] sm:$0xf]
    %v1153 = vunpack.c.l.b16 %v779
    %v1154 = vunpack.c.h.b16 %v779
    %v1155 = vunpack.c.l.b16 %v780
    %v1156 = vunpack.c.h.b16 %v780
    %v1157 = vunpack.c.l.b16 %v781
    %v1158 = vunpack.c.h.b16 %v781
    %v1159 = vunpack.c.l.b16 %v782
    %v1160 = vunpack.c.h.b16 %v782
    %v1161 = vunpack.c.l.b16 %v783
    %v1162 = vunpack.c.h.b16 %v783
    %v1163 = vunpack.c.l.b16 %v784
    %v1164 = vunpack.c.h.b16 %v784
    %v1165 = vunpack.c.l.b16 %v785
    %v1166 = vunpack.c.h.b16 %v785
    %v1167 = vunpack.c.l.b16 %v786
    %v1168 = vunpack.c.h.b16 %v786
    %v1169 = vunpack.c.l.b16 %v787
    %v1170 = vunpack.c.h.b16 %v787
    %v1171 = vunpack.c.l.b16 %v788
    %v1172 = vunpack.c.h.b16 %v788
    %v1173 = vunpack.c.l.b16 %v789
    %v1174 = vunpack.c.l.b16 %v790
    %v1175 = vunpack.c.h.b16 %v790
    %v1176 = vunpack.c.l.b16 %v791
    %v1177 = vunpack.c.h.b16 %v791
    %v1178 = vunpack.c.l.b16 %v792
    %v1179 = vunpack.c.h.b16 %v792
    %v1180 = vunpack.c.l.b16 %v793
    %v1181 = vunpack.c.h.b16 %v793
    %v1182 = vunpack.c.l.b16 %v794
    %v1183 = vunpack.c.h.b16 %v794
    %v1184 = vunpack.c.l.b16 %v795
    %v1185 = vunpack.c.h.b16 %v795
    %v1186 = vunpack.c.l.b16 %v796
    %v1187 = vunpack.c.h.b16 %v796
    %v1188 = vunpack.c.l.b16 %v797
    %v1189 = vunpack.c.h.b16 %v797
    %v1190 = vunpack.c.l.b16 %v798
    %v1191 = vunpack.c.h.b16 %v798
    %v1192 = vunpack.c.l.b16 %v799
    %v1193 = vunpack.c.h.b16 %v799
    %v1194 = vunpack.c.l.b16 %v800
    %v1195 = vunpack.c.l.b16 %v801
    %v1196 = vunpack.c.h.b16 %v801
    %v1197 = vunpack.c.l.b16 %v802
    %v1198 = vunpack.c.h.b16 %v802
    %v1199 = vunpack.c.l.b16 %v803
    %v1200 = vunpack.c.h.b16 %v803
    %v1201 = vunpack.c.l.b16 %v804
    %v1202 = vunpack.c.h.b16 %v804
    %v1203 = vunpack.c.l.b16 %v805
    %v1204 = vunpack.c.h.b16 %v805
    %v1205 = vunpack.c.l.b16 %v806
    %v1206 = vunpack.c.h.b16 %v806
    %v1207 = vunpack.c.l.b16 %v807
    %v1208 = vunpack.c.h.b16 %v807
    %v1209 = vunpack.c.l.b16 %v808
    %v1210 = vunpack.c.h.b16 %v808
    %v1211 = vunpack.c.l.b16 %v809
    %v1212 = vunpack.c.h.b16 %v809
    %v1213 = vunpack.c.l.b16 %v810
    %v1214 = vunpack.c.h.b16 %v810
    %v1215 = vunpack.c.l.b16 %v811
    %v1216 = vunpack.c.l.b16 %v812
    %v1217 = vunpack.c.h.b16 %v812
    %v1218 = vunpack.c.l.b16 %v813
    %v1219 = vunpack.c.h.b16 %v813
    %v1220 = vunpack.c.l.b16 %v814
    %v1221 = vunpack.c.h.b16 %v814
    %v1222 = vunpack.c.l.b16 %v815
    %v1223 = vunpack.c.h.b16 %v815
    %v1224 = vunpack.c.l.b16 %v816
    %v1225 = vunpack.c.h.b16 %v816
    %v1226 = vunpack.c.l.b16 %v817
    %v1227 = vunpack.c.h.b16 %v817
    %v1228 = vunpack.c.l.b16 %v818
    %v1229 = vunpack.c.h.b16 %v818
    %v1230 = vunpack.c.l.b16 %v819
    %v1231 = vunpack.c.h.b16 %v819
    %v1232 = vunpack.c.l.b16 %v820
    %v1233 = vunpack.c.h.b16 %v820
    %v1234 = vunpack.c.l.b16 %v821
    %v1235 = vunpack.c.h.b16 %v821
    %v1236 = vunpack.c.l.b16 %v822
    %v1237 = vunpack.c.l.b16 %v823
    %v1238 = vunpack.c.h.b16 %v823
    %v1239 = vunpack.c.l.b16 %v824
    %v1240 = vunpack.c.h.b16 %v824
    %v1241 = vunpack.c.l.b16 %v825
    %v1242 = vunpack.c.h.b16 %v825
    %v1243 = vunpack.c.l.b16 %v826
    %v1244 = vunpack.c.h.b16 %v826
    %v1245 = vunpack.c.l.b16 %v827
    %v1246 = vunpack.c.h.b16 %v827
    %v1247 = vunpack.c.l.b16 %v828
    %v1248 = vunpack.c.h.b16 %v828
    %v1249 = vunpack.c.l.b16 %v829
    %v1250 = vunpack.c.h.b16 %v829
    %v1251 = vunpack.c.l.b16 %v830
    %v1252 = vunpack.c.h.b16 %v830
    %v1253 = vunpack.c.l.b16 %v831
    %v1254 = vunpack.c.h.b16 %v831
    %v1255 = vunpack.c.l.b16 %v832
    %v1256 = vunpack.c.h.b16 %v832
    %v1257 = vunpack.c.l.b16 %v833
    %v1258 = vunpack.c.l.b16 %v834
    %v1259 = vunpack.c.h.b16 %v834
    %v1260 = vunpack.c.l.b16 %v835
    %v1261 = vunpack.c.h.b16 %v835
    %v1262 = vunpack.c.l.b16 %v836
    %v1263 = vunpack.c.h.b16 %v836
    %v1264 = vunpack.c.l.b16 %v837
    %v1265 = vunpack.c.h.b16 %v837
    %v1266 = vunpack.c.l.b16 %v838
    %v1267 = vunpack.c.h.b16 %v838
    %v1268 = vunpack.c.l.b16 %v839
    %v1269 = vunpack.c.h.b16 %v839
    %v1270 = vunpack.c.l.b16 %v840
    %v1271 = vunpack.c.h.b16 %v840
    %v1272 = vunpack.c.l.b16 %v841
    %v1273 = vunpack.c.h.b16 %v841
    %v1274 = vunpack.c.l.b16 %v842
    %v1275 = vunpack.c.h.b16 %v842
    %v1276 = vunpack.c.l.b16 %v843
    %v1277 = vunpack.c.h.b16 %v843
    %v1278 = vunpack.c.l.b16 %v844
    %v1279 = vunpack.c.l.b16 %v845
    %v1280 = vunpack.c.h.b16 %v845
    %v1281 = vunpack.c.l.b16 %v846
    %v1282 = vunpack.c.h.b16 %v846
    %v1283 = vunpack.c.l.b16 %v847
    %v1284 = vunpack.c.h.b16 %v847
    %v1285 = vunpack.c.l.b16 %v848
    %v1286 = vunpack.c.h.b16 %v848
    %v1287 = vunpack.c.l.b16 %v849
    %v1288 = vunpack.c.h.b16 %v849
    %v1289 = vunpack.c.l.b16 %v850
    %v1290 = vunpack.c.h.b16 %v850
    %v1291 = vunpack.c.l.b16 %v851
    %v1292 = vunpack.c.h.b16 %v851
    %v1293 = vunpack.c.l.b16 %v852
    %v1294 = vunpack.c.h.b16 %v852
    %v1295 = vunpack.c.l.b16 %v853
    %v1296 = vunpack.c.h.b16 %v853
    %v1297 = vunpack.c.l.b16 %v854
    %v1298 = vunpack.c.h.b16 %v854
    %v1299 = vunpack.c.l.b16 %v855
    %v1300 = vunpack.c.l.b16 %v856
    %v1301 = vunpack.c.h.b16 %v856
    %v1302 = vunpack.c.l.b16 %v857
    %v1303 = vunpack.c.h.b16 %v857
    %v1304 = vunpack.c.l.b16 %v858
    %v1305 = vunpack.c.h.b16 %v858
    %v1306 = vunpack.c.l.b16 %v859
    %v1307 = vunpack.c.h.b16 %v859
    %v1308 = vunpack.c.l.b16 %v860
    %v1309 = vunpack.c.h.b16 %v860
    %v1310 = vunpack.c.l.b16 %v861
    %v1311 = vunpack.c.h.b16 %v861
    %v1312 = vunpack.c.l.b16 %v862
    %v1313 = vunpack.c.h.b16 %v862
    %v1314 = vunpack.c.l.b16 %v863
    %v1315 = vunpack.c.h.b16 %v863
    %v1316 = vunpack.c.l.b16 %v864
    %v1317 = vunpack.c.h.b16 %v864
    %v1318 = vunpack.c.l.b16 %v865
    %v1319 = vunpack.c.h.b16 %v865
    %v1320 = vunpack.c.l.b16 %v866
    %v1321 = vunpack.c.l.b16 %v867
    %v1322 = vunpack.c.h.b16 %v867
    %v1323 = vunpack.c.l.b16 %v868
    %v1324 = vunpack.c.h.b16 %v868
    %v1325 = vunpack.c.l.b16 %v869
    %v1326 = vunpack.c.h.b16 %v869
    %v1327 = vunpack.c.l.b16 %v870
    %v1328 = vunpack.c.h.b16 %v870
    %v1329 = vunpack.c.l.b16 %v871
    %v1330 = vunpack.c.h.b16 %v871
    %v1331 = vunpack.c.l.b16 %v872
    %v1332 = vunpack.c.h.b16 %v872
    %v1333 = vunpack.c.l.b16 %v873
    %v1334 = vunpack.c.h.b16 %v873
    %v1335 = vunpack.c.l.b16 %v874
    %v1336 = vunpack.c.h.b16 %v874
    %v1337 = vunpack.c.l.b16 %v875
    %v1338 = vunpack.c.h.b16 %v875
    %v1339 = vunpack.c.l.b16 %v876
    %v1340 = vunpack.c.h.b16 %v876
    %v1341 = vunpack.c.l.b16 %v877
    %v1342 = vunpack.c.l.b16 %v878
    %v1343 = vunpack.c.h.b16 %v878
    %v1344 = vunpack.c.l.b16 %v879
    %v1345 = vunpack.c.h.b16 %v879
    %v1346 = vunpack.c.l.b16 %v880
    %v1347 = vunpack.c.h.b16 %v880
    %v1348 = vunpack.c.l.b16 %v881
    %v1349 = vunpack.c.h.b16 %v881
    %v1350 = vunpack.c.l.b16 %v882
    %v1351 = vunpack.c.h.b16 %v882
    %v1352 = vunpack.c.l.b16 %v883
    %v1353 = vunpack.c.h.b16 %v883
    %v1354 = vunpack.c.l.b16 %v884
    %v1355 = vunpack.c.h.b16 %v884
    %v1356 = vunpack.c.l.b16 %v885
    %v1357 = vunpack.c.h.b16 %v885
    %v1358 = vunpack.c.l.b16 %v886
    %v1359 = vunpack.c.h.b16 %v886
    %v1360 = vunpack.c.l.b16 %v887
    %v1361 = vunpack.c.h.b16 %v887
    %v1362 = vunpack.c.l.b16 %v888
    %v1363 = vunpack.c.l.b16 %v889
    %v1364 = vunpack.c.h.b16 %v889
    %v1365 = vunpack.c.l.b16 %v890
    %v1366 = vunpack.c.h.b16 %v890
    %v1367 = vunpack.c.l.b16 %v891
    %v1368 = vunpack.c.h.b16 %v891
    %v1369 = vunpack.c.l.b16 %v892
    %v1370 = vunpack.c.h.b16 %v892
    %v1371 = vunpack.c.l.b16 %v893
    %v1372 = vunpack.c.h.b16 %v893
    %v1373 = vunpack.c.l.b16 %v894
    %v1374 = vunpack.c.h.b16 %v894
    %v1375 = vunpack.c.l.b16 %v895
    %v1376 = vunpack.c.h.b16 %v895
    %v1377 = vunpack.c.l.b16 %v896
    %v1378 = vunpack.c.h.b16 %v896
    %v1379 = vunpack.c.l.b16 %v897
    %v1380 = vunpack.c.h.b16 %v897
    %v1381 = vunpack.c.l.b16 %v898
    %v1382 = vunpack.c.h.b16 %v898
    %v1383 = vunpack.c.l.b16 %v899
    %v1384 = vunpack.c.l.b16 %v900
    %v1385 = vunpack.c.h.b16 %v900
    %v1386 = vunpack.c.l.b16 %v901
    %v1387 = vunpack.c.h.b16 %v901
    %v1388 = vunpack.c.l.b16 %v902
    %v1389 = vunpack.c.h.b16 %v902
    %v1390 = vunpack.c.l.b16 %v903
    %v1391 = vunpack.c.h.b16 %v903
    %v1392 = vunpack.c.l.b16 %v904
    %v1393 = vunpack.c.h.b16 %v904
    %v1394 = vunpack.c.l.b16 %v905
    %v1395 = vunpack.c.h.b16 %v905
    %v1396 = vunpack.c.l.b16 %v906
    %v1397 = vunpack.c.h.b16 %v906
    %v1398 = vunpack.c.l.b16 %v907
    %v1399 = vunpack.c.h.b16 %v907
    %v1400 = vunpack.c.l.b16 %v908
    %v1401 = vunpack.c.h.b16 %v908
    %v1402 = vunpack.c.l.b16 %v909
    %v1403 = vunpack.c.h.b16 %v909
    %v1404 = vunpack.c.l.b16 %v910
    %v1405 = vunpack.c.l.b16 %v911
    %v1406 = vunpack.c.h.b16 %v911
    %v1407 = vunpack.c.l.b16 %v912
    %v1408 = vunpack.c.h.b16 %v912
    %v1409 = vunpack.c.l.b16 %v913
    %v1410 = vunpack.c.h.b16 %v913
    %v1411 = vunpack.c.l.b16 %v914
    %v1412 = vunpack.c.h.b16 %v914
    %v1413 = vunpack.c.l.b16 %v915
    %v1414 = vunpack.c.h.b16 %v915
    %v1415 = vunpack.c.l.b16 %v916
    %v1416 = vunpack.c.h.b16 %v916
    %v1417 = vunpack.c.l.b16 %v917
    %v1418 = vunpack.c.h.b16 %v917
    %v1419 = vunpack.c.l.b16 %v918
    %v1420 = vunpack.c.h.b16 %v918
    %v1421 = vunpack.c.l.b16 %v919
    %v1422 = vunpack.c.h.b16 %v919
    %v1423 = vunpack.c.l.b16 %v920
    %v1424 = vunpack.c.h.b16 %v920
    %v1425 = vunpack.c.l.b16 %v921
    %v1426 = vunpack.c.l.b16 %v922
    %v1427 = vunpack.c.h.b16 %v922
    %v1428 = vunpack.c.l.b16 %v923
    %v1429 = vunpack.c.h.b16 %v923
    %v1430 = vunpack.c.l.b16 %v924
    %v1431 = vunpack.c.h.b16 %v924
    %v1432 = vunpack.c.l.b16 %v925
    %v1433 = vunpack.c.h.b16 %v925
    %v1434 = vunpack.c.l.b16 %v926
    %v1435 = vunpack.c.h.b16 %v926
    %v1436 = vunpack.c.l.b16 %v927
    %v1437 = vunpack.c.h.b16 %v927
    %v1438 = vunpack.c.l.b16 %v928
    %v1439 = vunpack.c.h.b16 %v928
    %v1440 = vunpack.c.l.b16 %v929
    %v1441 = vunpack.c.h.b16 %v929
    %v1442 = vunpack.c.l.b16 %v930
    %v1443 = vunpack.c.h.b16 %v930
    %v1444 = vunpack.c.l.b16 %v931
    %v1445 = vunpack.c.h.b16 %v931
    %v1446 = vunpack.c.l.b16 %v932
    %v1447 = vunpack.c.l.b16 %v933
    %v1448 = vunpack.c.h.b16 %v933
    %v1449 = vunpack.c.l.b16 %v934
    %v1450 = vunpack.c.h.b16 %v934
    %v1451 = vunpack.c.l.b16 %v935
    %v1452 = vunpack.c.h.b16 %v935
    %v1453 = vunpack.c.l.b16 %v936
    %v1454 = vunpack.c.h.b16 %v936
    %v1455 = vunpack.c.l.b16 %v937
    %v1456 = vunpack.c.h.b16 %v937
    %v1457 = vunpack.c.l.b16 %v938
    %v1458 = vunpack.c.h.b16 %v938
    %v1459 = vunpack.c.l.b16 %v939
    %v1460 = vunpack.c.h.b16 %v939
    %v1461 = vunpack.c.l.b16 %v940
    %v1462 = vunpack.c.h.b16 %v940
    %v1463 = vunpack.c.l.b16 %v941
    %v1464 = vunpack.c.h.b16 %v941
    %v1465 = vunpack.c.l.b16 %v942
    %v1466 = vunpack.c.h.b16 %v942
    %v1467 = vunpack.c.l.b16 %v943
    %v1468 = vunpack.c.l.b16 %v944
    %v1469 = vunpack.c.h.b16 %v944
    %v1470 = vunpack.c.l.b16 %v945
    %v1471 = vunpack.c.h.b16 %v945
    %v1472 = vunpack.c.l.b16 %v946
    %v1473 = vunpack.c.h.b16 %v946
    %v1474 = vunpack.c.l.b16 %v947
    %v1475 = vunpack.c.h.b16 %v947
    %v1476 = vunpack.c.l.b16 %v948
    %v1477 = vunpack.c.h.b16 %v948
    %v1478 = vunpack.c.l.b16 %v949
    %v1479 = vunpack.c.h.b16 %v949
    %v1480 = vunpack.c.l.b16 %v950
    %v1481 = vunpack.c.h.b16 %v950
    %v1482 = vunpack.c.l.b16 %v951
    %v1483 = vunpack.c.h.b16 %v951
    %v1484 = vunpack.c.l.b16 %v952
    %v1485 = vunpack.c.h.b16 %v952
    %v1486 = vunpack.c.l.b16 %v953
    %v1487 = vunpack.c.h.b16 %v953
    %v1488 = vunpack.c.l.b16 %v954
    %v1489 = vunpack.c.l.b16 %v955
    %v1490 = vunpack.c.h.b16 %v955
    %v1491 = vunpack.c.l.b16 %v956
    %v1492 = vunpack.c.h.b16 %v956
    %v1493 = vunpack.c.l.b16 %v957
    %v1494 = vunpack.c.h.b16 %v957
    %v1495 = vunpack.c.l.b16 %v958
    %v1496 = vunpack.c.h.b16 %v958
    %v1497 = vunpack.c.l.b16 %v959
    %v1498 = vunpack.c.h.b16 %v959
    %v1499 = vunpack.c.l.b16 %v960
    %v1500 = vunpack.c.h.b16 %v960
    %v1501 = vunpack.c.l.b16 %v961
    %v1502 = vunpack.c.h.b16 %v961
    %v1503 = vunpack.c.l.b16 %v962
    %v1504 = vunpack.c.h.b16 %v962
    %v1505 = vunpack.c.l.b16 %v963
    %v1506 = vunpack.c.h.b16 %v963
    %v1507 = vunpack.c.l.b16 %v964
    %v1508 = vunpack.c.h.b16 %v964
    %v1509 = vunpack.c.l.b16 %v965
    %v1510 = vpack.c.b16 %v1174, %v1153
    %v1511 = vpack.c.b16 %v1175, %v1154
    %v1512 = vpack.c.b16 %v1176, %v1155
    %v1513 = vpack.c.b16 %v1177, %v1156
    %v1514 = vpack.c.b16 %v1178, %v1157
    %v1515 = vpack.c.b16 %v1179, %v1158
    %v1516 = vpack.c.b16 %v1180, %v1159
    %v1517 = vpack.c.b16 %v1181, %v1160
    %v1518 = vpack.c.b16 %v1182, %v1161
    %v1519 = vpack.c.b16 %v1183, %v1162
    %v1520 = vpack.c.b16 %v1184, %v1163
    %v1521 = vpack.c.b16 %v1185, %v1164
    %v1522 = vpack.c.b16 %v1186, %v1165
    %v1523 = vpack.c.b16 %v1187, %v1166
    %v1524 = vpack.c.b16 %v1188, %v1167
    %v1525 = vpack.c.b16 %v1189, %v1168
    %v1526 = vpack.c.b16 %v1190, %v1169
    %v1527 = vpack.c.b16 %v1191, %v1170
    %v1528 = vpack.c.b16 %v1192, %v1171
    %v1529 = vpack.c.b16 %v1193, %v1172
    %v1530 = vpack.c.b16 %v1194, %v1173
    %v1531 = vpack.c.b16 %v1216, %v1195
    %v1532 = vpack.c.b16 %v1217, %v1196
    %v1533 = vpack.c.b16 %v1218, %v1197
    %v1534 = vpack.c.b16 %v1219, %v1198
    %v1535 = vpack.c.b16 %v1220, %v1199
    %v1536 = vpack.c.b16 %v1221, %v1200
    %v1537 = vpack.c.b16 %v1222, %v1201
    %v1538 = vpack.c.b16 %v1223, %v1202
    %v1539 = vpack.c.b16 %v1224, %v1203
    %v1540 = vpack.c.b16 %v1225, %v1204
    %v1541 = vpack.c.b16 %v1226, %v1205
    %v1542 = vpack.c.b16 %v1227, %v1206
    %v1543 = vpack.c.b16 %v1228, %v1207
    %v1544 = vpack.c.b16 %v1229, %v1208
    %v1545 = vpack.c.b16 %v1230, %v1209
    %v1546 = vpack.c.b16 %v1231, %v1210
    %v1547 = vpack.c.b16 %v1232, %v1211
    %v1548 = vpack.c.b16 %v1233, %v1212
    %v1549 = vpack.c.b16 %v1234, %v1213
    %v1550 = vpack.c.b16 %v1235, %v1214
    %v1551 = vpack.c.b16 %v1236, %v1215
    %v1552 = vpack.c.b16 %v1258, %v1237
    %v1553 = vpack.c.b16 %v1259, %v1238
    %v1554 = vpack.c.b16 %v1260, %v1239
    %v1555 = vpack.c.b16 %v1261, %v1240
    %v1556 = vpack.c.b16 %v1262, %v1241
    %v1557 = vpack.c.b16 %v1263, %v1242
    %v1558 = vpack.c.b16 %v1264, %v1243
    %v1559 = vpack.c.b16 %v1265, %v1244
    %v1560 = vpack.c.b16 %v1266, %v1245
    %v1561 = vpack.c.b16 %v1267, %v1246
    %v1562 = vpack.c.b16 %v1268, %v1247
    %v1563 = vpack.c.b16 %v1269, %v1248
    %v1564 = vpack.c.b16 %v1270, %v1249
    %v1565 = vpack.c.b16 %v1271, %v1250
    %v1566 = vpack.c.b16 %v1272, %v1251
    %v1567 = vpack.c.b16 %v1273, %v1252
    %v1568 = vpack.c.b16 %v1274, %v1253
    %v1569 = vpack.c.b16 %v1275, %v1254
    %v1570 = vpack.c.b16 %v1276, %v1255
    %v1571 = vpack.c.b16 %v1277, %v1256
    %v1572 = vpack.c.b16 %v1278, %v1257
    %v1573 = vpack.c.b16 %v1300, %v1279
    %v1574 = vpack.c.b16 %v1301, %v1280
    %v1575 = vpack.c.b16 %v1302, %v1281
    %v1576 = vpack.c.b16 %v1303, %v1282
    %v1577 = vpack.c.b16 %v1304, %v1283
    %v1578 = vpack.c.b16 %v1305, %v1284
    %v1579 = vpack.c.b16 %v1306, %v1285
    %v1580 = vpack.c.b16 %v1307, %v1286
    %v1581 = vpack.c.b16 %v1308, %v1287
    %v1582 = vpack.c.b16 %v1309, %v1288
    %v1583 = vpack.c.b16 %v1310, %v1289
    %v1584 = vpack.c.b16 %v1311, %v1290
    %v1585 = vpack.c.b16 %v1312, %v1291
    %v1586 = vpack.c.b16 %v1313, %v1292
    %v1587 = vpack.c.b16 %v1314, %v1293
    %v1588 = vpack.c.b16 %v1315, %v1294
    %v1589 = vpack.c.b16 %v1316, %v1295
    %v1590 = vpack.c.b16 %v1317, %v1296
    %v1591 = vpack.c.b16 %v1318, %v1297
    %v1592 = vpack.c.b16 %v1319, %v1298
    %v1593 = vpack.c.b16 %v1320, %v1299
    %v1594 = vpack.c.b16 %v1342, %v1321
    %v1595 = vpack.c.b16 %v1343, %v1322
    %v1596 = vpack.c.b16 %v1344, %v1323
    %v1597 = vpack.c.b16 %v1345, %v1324
    %v1598 = vpack.c.b16 %v1346, %v1325
    %v1599 = vpack.c.b16 %v1347, %v1326
    %v1600 = vpack.c.b16 %v1348, %v1327
    %v1601 = vpack.c.b16 %v1349, %v1328
    %v1602 = vpack.c.b16 %v1350, %v1329
    %v1603 = vpack.c.b16 %v1351, %v1330
    %v1604 = vpack.c.b16 %v1352, %v1331
    %v1605 = vpack.c.b16 %v1353, %v1332
    %v1606 = vpack.c.b16 %v1354, %v1333
    %v1607 = vpack.c.b16 %v1355, %v1334
    %v1608 = vpack.c.b16 %v1356, %v1335
    %v1609 = vpack.c.b16 %v1357, %v1336
    %v1610 = vpack.c.b16 %v1358, %v1337
    %v1611 = vpack.c.b16 %v1359, %v1338
    %v1612 = vpack.c.b16 %v1360, %v1339
    %v1613 = vpack.c.b16 %v1361, %v1340
    %v1614 = vpack.c.b16 %v1362, %v1341
    %v1615 = vpack.c.b16 %v1384, %v1363
    %v1616 = vpack.c.b16 %v1385, %v1364
    %v1617 = vpack.c.b16 %v1386, %v1365
    %v1618 = vpack.c.b16 %v1387, %v1366
    %v1619 = vpack.c.b16 %v1388, %v1367
    %v1620 = vpack.c.b16 %v1389, %v1368
    %v1621 = vpack.c.b16 %v1390, %v1369
    %v1622 = vpack.c.b16 %v1391, %v1370
    %v1623 = vpack.c.b16 %v1392, %v1371
    %v1624 = vpack.c.b16 %v1393, %v1372
    %v1625 = vpack.c.b16 %v1394, %v1373
    %v1626 = vpack.c.b16 %v1395, %v1374
    %v1627 = vpack.c.b16 %v1396, %v1375
    %v1628 = vpack.c.b16 %v1397, %v1376
    %v1629 = vpack.c.b16 %v1398, %v1377
    %v1630 = vpack.c.b16 %v1399, %v1378
    %v1631 = vpack.c.b16 %v1400, %v1379
    %v1632 = vpack.c.b16 %v1401, %v1380
    %v1633 = vpack.c.b16 %v1402, %v1381
    %v1634 = vpack.c.b16 %v1403, %v1382
    %v1635 = vpack.c.b16 %v1404, %v1383
    %v1636 = vpack.c.b16 %v1426, %v1405
    %v1637 = vpack.c.b16 %v1427, %v1406
    %v1638 = vpack.c.b16 %v1428, %v1407
    %v1639 = vpack.c.b16 %v1429, %v1408
    %v1640 = vpack.c.b16 %v1430, %v1409
    %v1641 = vpack.c.b16 %v1431, %v1410
    %v1642 = vpack.c.b16 %v1432, %v1411
    %v1643 = vpack.c.b16 %v1433, %v1412
    %v1644 = vpack.c.b16 %v1434, %v1413
    %v1645 = vpack.c.b16 %v1435, %v1414
    %v1646 = vpack.c.b16 %v1436, %v1415
    %v1647 = vpack.c.b16 %v1437, %v1416
    %v1648 = vpack.c.b16 %v1438, %v1417
    %v1649 = vpack.c.b16 %v1439, %v1418
    %v1650 = vpack.c.b16 %v1440, %v1419
    %v1651 = vpack.c.b16 %v1441, %v1420
    %v1652 = vpack.c.b16 %v1442, %v1421
    %v1653 = vpack.c.b16 %v1443, %v1422
    %v1654 = vpack.c.b16 %v1444, %v1423
    %v1655 = vpack.c.b16 %v1445, %v1424
    %v1656 = vpack.c.b16 %v1446, %v1425
    %v1657 = vpack.c.b16 %v1468, %v1447
    %v1658 = vpack.c.b16 %v1469, %v1448
    %v1659 = vpack.c.b16 %v1470, %v1449
    %v1660 = vpack.c.b16 %v1471, %v1450
    %v1661 = vpack.c.b16 %v1472, %v1451
    %v1662 = vpack.c.b16 %v1473, %v1452
    %v1663 = vpack.c.b16 %v1474, %v1453
    %v1664 = vpack.c.b16 %v1475, %v1454
    %v1665 = vpack.c.b16 %v1476, %v1455
    %v1666 = vpack.c.b16 %v1477, %v1456
    %v1667 = vpack.c.b16 %v1478, %v1457
    %v1668 = vpack.c.b16 %v1479, %v1458
    %v1669 = vpack.c.b16 %v1480, %v1459
    %v1670 = vpack.c.b16 %v1481, %v1460
    %v1671 = vpack.c.b16 %v1482, %v1461
    %v1672 = vpack.c.b16 %v1483, %v1462
    %v1673 = vpack.c.b16 %v1484, %v1463
    %v1674 = vpack.c.b16 %v1485, %v1464
    %v1675 = vpack.c.b16 %v1486, %v1465
    %v1676 = vpack.c.b16 %v1487, %v1466
    %v1677 = vpack.c.b16 %v1488, %v1467
    %v1678 = vpack.c.b16 %v1489, %v1489
    %v1679 = vpack.c.b16 %v1490, %v1490
    %v1680 = vpack.c.b16 %v1491, %v1491
    %v1681 = vpack.c.b16 %v1492, %v1492
    %v1682 = vpack.c.b16 %v1493, %v1493
    %v1683 = vpack.c.b16 %v1494, %v1494
    %v1684 = vpack.c.b16 %v1495, %v1495
    %v1685 = vpack.c.b16 %v1496, %v1496
    %v1686 = vpack.c.b16 %v1497, %v1497
    %v1687 = vpack.c.b16 %v1498, %v1498
    %v1688 = vpack.c.b16 %v1499, %v1499
    %v1689 = vpack.c.b16 %v1500, %v1500
    %v1690 = vpack.c.b16 %v1501, %v1501
    %v1691 = vpack.c.b16 %v1502, %v1502
    %v1692 = vpack.c.b16 %v1503, %v1503
    %v1693 = vpack.c.b16 %v1504, %v1504
    %v1694 = vpack.c.b16 %v1505, %v1505
    %v1695 = vpack.c.b16 %v1506, %v1506
    %v1696 = vpack.c.b16 %v1507, %v1507
    %v1697 = vpack.c.b16 %v1508, %v1508
    %v1698 = vpack.c.b16 %v1509, %v1509
    %vm1867 = vcmask 56320
    %v1869 = vsel %vm1867, %v778, 0
    %vm1871 = vcmask 1042432
    %vm1872 = vcmask 1043456
    %v1873 = vsel %vm1871, 4294967295, 65535
    %v1874 = vsel %vm1872, %v1873, 0
    %v1876 = vand.u32 %v1678, %v1874
    %v1879 = vand.u32 %v1679, %v1874
    %v1882 = vand.u32 %v1680, %v1874
    %v1885 = vand.u32 %v1681, %v1874
    %v1888 = vand.u32 %v1682, %v1874
    %v1891 = vand.u32 %v1683, %v1874
    %v1894 = vand.u32 %v1684, %v1874
    %v1897 = vand.u32 %v1685, %v1874
    %v1900 = vand.u32 %v1686, %v1874
    %v1903 = vand.u32 %v1687, %v1874
    %v1906 = vand.u32 %v1688, %v1874
    %v1909 = vand.u32 %v1689, %v1874
    %v1912 = vand.u32 %v1690, %v1874
    %v1915 = vand.u32 %v1691, %v1874
    %v1918 = vand.u32 %v1692, %v1874
    %v1921 = vand.u32 %v1693, %v1874
    %v1924 = vand.u32 %v1694, %v1874
    %v1927 = vand.u32 %v1695, %v1874
    %v1930 = vand.u32 %v1696, %v1874
    %v1933 = vand.u32 %v1697, %v1874
    %v1936 = vand.u32 %v1698, %v1874
    %1938 = vmatprep.subr.bf16.mxu0 %v1511
    %1939 = vmatpush1.bf16.msra.mxu0 %v1510
    %1940 = vmatprep.subr.bf16.mxu0 %v1532
    %1941 = vmatpush1.bf16.msra.mxu0 %v1531
    %1942 = vmatprep.subr.bf16.mxu0 %v1553
    %1943 = vmatpush1.bf16.msra.mxu0 %v1552
    %1944 = vmatprep.subr.bf16.mxu0 %v1574
    %1945 = vmatpush1.bf16.msra.mxu0 %v1573
    %1946 = vmatprep.subr.bf16.mxu0 %v1595
    %1947 = vmatpush1.bf16.msra.mxu0 %v1594
    %1948 = vmatprep.subr.bf16.mxu0 %v1616
    %1949 = vmatpush1.bf16.msra.mxu0 %v1615
    %1950 = vmatprep.subr.bf16.mxu0 %v1637
    %1951 = vmatpush1.bf16.msra.mxu0 %v1636
    %1952 = vmatprep.subr.bf16.mxu0 %v1658
    %1953 = vmatpush1.bf16.msra.mxu0 %v1657
    %1954 = vmatprep.subr.bf16.mxu0 %v1879
    %1955 = vmatpush1.bf16.msra.mxu0 %v1876
    %1956 = vmatprep.subr.bf16.mxu0 0
    %1957 = vmatpush1.bf16.msra.mxu0 0
    %1958 = vmatprep.subr.bf16.mxu0 0
    %1959 = vmatpush1.bf16.msra.mxu0 0
    %1960 = vmatprep.subr.bf16.mxu0 0
    %1961 = vmatpush1.bf16.msra.mxu0 0
    %1962 = vmatprep.subr.bf16.mxu0 0
    %1963 = vmatpush1.bf16.msra.mxu0 0
    %1964 = vmatprep.subr.bf16.mxu0 0
    %1965 = vmatpush1.bf16.msra.mxu0 0
    %1966 = vmatprep.subr.bf16.mxu0 0
    %1967 = vmatpush1.bf16.msra.mxu0 0
    %1968 = vmatprep.subr.bf16.mxu0 0
    %1969 = vmatpush1.bf16.msra.mxu0 0
    %1970 = vmatprep.mubr.bf16.mxu0 %v1869
    %1971 = vmatmul.mubr.bf16.gmra.mrb[0].mxu0 %v777
    %v1972 = vpop.f32.mrb[0].mxu0
    %v1973 = vadd.f32 0.0, %v1972
    %v1974 = vpop.f32.mrb[0].mxu0
    %v1975 = vadd.f32 0.0, %v1974
    %v1976 = vpop.f32.mrb[0].mxu0
    %v1977 = vpop.f32.mrb[0].mxu0
    %1978 = vdwg.mxu0
    %1979 = vmatprep.subr.bf16.mxu0 %v1513
    %1980 = vmatpush1.bf16.msra.mxu0 %v1512
    %1981 = vmatprep.subr.bf16.mxu0 %v1534
    %1982 = vmatpush1.bf16.msra.mxu0 %v1533
    %1983 = vmatprep.subr.bf16.mxu0 %v1555
    %1984 = vmatpush1.bf16.msra.mxu0 %v1554
    %1985 = vmatprep.subr.bf16.mxu0 %v1576
    %1986 = vmatpush1.bf16.msra.mxu0 %v1575
    %1987 = vmatprep.subr.bf16.mxu0 %v1597
    %1988 = vmatpush1.bf16.msra.mxu0 %v1596
    %1989 = vmatprep.subr.bf16.mxu0 %v1618
    %1990 = vmatpush1.bf16.msra.mxu0 %v1617
    %1991 = vmatprep.subr.bf16.mxu0 %v1639
    %1992 = vmatpush1.bf16.msra.mxu0 %v1638
    %1993 = vmatprep.subr.bf16.mxu0 %v1660
    %1994 = vmatpush1.bf16.msra.mxu0 %v1659
    %1995 = vmatprep.subr.bf16.mxu0 %v1885
    %1996 = vmatpush1.bf16.msra.mxu0 %v1882
    %1997 = vmatprep.subr.bf16.mxu0 0
    %1998 = vmatpush1.bf16.msra.mxu0 0
    %1999 = vmatprep.subr.bf16.mxu0 0
    %2000 = vmatpush1.bf16.msra.mxu0 0
    %2001 = vmatprep.subr.bf16.mxu0 0
    %2002 = vmatpush1.bf16.msra.mxu0 0
    %2003 = vmatprep.subr.bf16.mxu0 0
    %2004 = vmatpush1.bf16.msra.mxu0 0
    %2005 = vmatprep.subr.bf16.mxu0 0
    %2006 = vmatpush1.bf16.msra.mxu0 0
    %2007 = vmatprep.subr.bf16.mxu0 0
    %2008 = vmatpush1.bf16.msra.mxu0 0
    %2009 = vmatprep.subr.bf16.mxu0 0
    %2010 = vmatpush1.bf16.msra.mxu0 0
    %2011 = vmatprep.mubr.bf16.mxu0 %v1869
    %2012 = vmatmul.mubr.bf16.gmra.mrb[0].mxu0 %v777
    %v2013 = vpop.f32.mrb[0].mxu0
    %v2014 = vadd.f32 0.0, %v2013
    %v2015 = vpop.f32.mrb[0].mxu0
    %v2016 = vadd.f32 0.0, %v2015
    %v2017 = vpop.f32.mrb[0].mxu0
    %v2018 = vpop.f32.mrb[0].mxu0
    %2019 = vdwg.mxu0
    %2020 = vmatprep.subr.bf16.mxu0 %v1515
    %2021 = vmatpush1.bf16.msra.mxu0 %v1514
    %2022 = vmatprep.subr.bf16.mxu0 %v1536
    %2023 = vmatpush1.bf16.msra.mxu0 %v1535
    %2024 = vmatprep.subr.bf16.mxu0 %v1557
    %2025 = vmatpush1.bf16.msra.mxu0 %v1556
    %2026 = vmatprep.subr.bf16.mxu0 %v1578
    %2027 = vmatpush1.bf16.msra.mxu0 %v1577
    %2028 = vmatprep.subr.bf16.mxu0 %v1599
    %2029 = vmatpush1.bf16.msra.mxu0 %v1598
    %2030 = vmatprep.subr.bf16.mxu0 %v1620
    %2031 = vmatpush1.bf16.msra.mxu0 %v1619
    %2032 = vmatprep.subr.bf16.mxu0 %v1641
    %2033 = vmatpush1.bf16.msra.mxu0 %v1640
    %2034 = vmatprep.subr.bf16.mxu0 %v1662
    %2035 = vmatpush1.bf16.msra.mxu0 %v1661
    %2036 = vmatprep.subr.bf16.mxu0 %v1891
    %2037 = vmatpush1.bf16.msra.mxu0 %v1888
    %2038 = vmatprep.subr.bf16.mxu0 0
    %2039 = vmatpush1.bf16.msra.mxu0 0
    %2040 = vmatprep.subr.bf16.mxu0 0
    %2041 = vmatpush1.bf16.msra.mxu0 0
    %2042 = vmatprep.subr.bf16.mxu0 0
    %2043 = vmatpush1.bf16.msra.mxu0 0
    %2044 = vmatprep.subr.bf16.mxu0 0
    %2045 = vmatpush1.bf16.msra.mxu0 0
    %2046 = vmatprep.subr.bf16.mxu0 0
    %2047 = vmatpush1.bf16.msra.mxu0 0
    %2048 = vmatprep.subr.bf16.mxu0 0
    %2049 = vmatpush1.bf16.msra.mxu0 0
    %2050 = vmatprep.subr.bf16.mxu0 0
    %2051 = vmatpush1.bf16.msra.mxu0 0
    %2052 = vmatprep.mubr.bf16.mxu0 %v1869
    %2053 = vmatmul.mubr.bf16.gmra.mrb[0].mxu0 %v777
    %v2054 = vpop.f32.mrb[0].mxu0
    %v2055 = vadd.f32 0.0, %v2054
    %v2056 = vpop.f32.mrb[0].mxu0
    %v2057 = vadd.f32 0.0, %v2056
    %v2058 = vpop.f32.mrb[0].mxu0
    %v2059 = vpop.f32.mrb[0].mxu0
    %2060 = vdwg.mxu0
    %2061 = vmatprep.subr.bf16.mxu0 %v1517
    %2062 = vmatpush1.bf16.msra.mxu0 %v1516
    %2063 = vmatprep.subr.bf16.mxu0 %v1538
    %2064 = vmatpush1.bf16.msra.mxu0 %v1537
    %2065 = vmatprep.subr.bf16.mxu0 %v1559
    %2066 = vmatpush1.bf16.msra.mxu0 %v1558
    %2067 = vmatprep.subr.bf16.mxu0 %v1580
    %2068 = vmatpush1.bf16.msra.mxu0 %v1579
    %2069 = vmatprep.subr.bf16.mxu0 %v1601
    %2070 = vmatpush1.bf16.msra.mxu0 %v1600
    %2071 = vmatprep.subr.bf16.mxu0 %v1622
    %2072 = vmatpush1.bf16.msra.mxu0 %v1621
    %2073 = vmatprep.subr.bf16.mxu0 %v1643
    %2074 = vmatpush1.bf16.msra.mxu0 %v1642
    %2075 = vmatprep.subr.bf16.mxu0 %v1664
    %2076 = vmatpush1.bf16.msra.mxu0 %v1663
    %2077 = vmatprep.subr.bf16.mxu0 %v1897
    %2078 = vmatpush1.bf16.msra.mxu0 %v1894
    %2079 = vmatprep.subr.bf16.mxu0 0
    %2080 = vmatpush1.bf16.msra.mxu0 0
    %2081 = vmatprep.subr.bf16.mxu0 0
    %2082 = vmatpush1.bf16.msra.mxu0 0
    %2083 = vmatprep.subr.bf16.mxu0 0
    %2084 = vmatpush1.bf16.msra.mxu0 0
    %2085 = vmatprep.subr.bf16.mxu0 0
    %2086 = vmatpush1.bf16.msra.mxu0 0
    %2087 = vmatprep.subr.bf16.mxu0 0
    %2088 = vmatpush1.bf16.msra.mxu0 0
    %2089 = vmatprep.subr.bf16.mxu0 0
    %2090 = vmatpush1.bf16.msra.mxu0 0
    %2091 = vmatprep.subr.bf16.mxu0 0
    %2092 = vmatpush1.bf16.msra.mxu0 0
    %2093 = vmatprep.mubr.bf16.mxu0 %v1869
    %2094 = vmatmul.mubr.bf16.gmra.mrb[0].mxu0 %v777
    %v2095 = vpop.f32.mrb[0].mxu0
    %v2096 = vadd.f32 0.0, %v2095
    %v2097 = vpop.f32.mrb[0].mxu0
    %v2098 = vadd.f32 0.0, %v2097
    %v2099 = vpop.f32.mrb[0].mxu0
    %v2100 = vpop.f32.mrb[0].mxu0
    %2101 = vdwg.mxu0
    %2102 = vmatprep.subr.bf16.mxu0 %v1519
    %2103 = vmatpush1.bf16.msra.mxu0 %v1518
    %2104 = vmatprep.subr.bf16.mxu0 %v1540
    %2105 = vmatpush1.bf16.msra.mxu0 %v1539
    %2106 = vmatprep.subr.bf16.mxu0 %v1561
    %2107 = vmatpush1.bf16.msra.mxu0 %v1560
    %2108 = vmatprep.subr.bf16.mxu0 %v1582
    %2109 = vmatpush1.bf16.msra.mxu0 %v1581
    %2110 = vmatprep.subr.bf16.mxu0 %v1603
    %2111 = vmatpush1.bf16.msra.mxu0 %v1602
    %2112 = vmatprep.subr.bf16.mxu0 %v1624
    %2113 = vmatpush1.bf16.msra.mxu0 %v1623
    %2114 = vmatprep.subr.bf16.mxu0 %v1645
    %2115 = vmatpush1.bf16.msra.mxu0 %v1644
    %2116 = vmatprep.subr.bf16.mxu0 %v1666
    %2117 = vmatpush1.bf16.msra.mxu0 %v1665
    %2118 = vmatprep.subr.bf16.mxu0 %v1903
    %2119 = vmatpush1.bf16.msra.mxu0 %v1900
    %2120 = vmatprep.subr.bf16.mxu0 0
    %2121 = vmatpush1.bf16.msra.mxu0 0
    %2122 = vmatprep.subr.bf16.mxu0 0
    %2123 = vmatpush1.bf16.msra.mxu0 0
    %2124 = vmatprep.subr.bf16.mxu0 0
    %2125 = vmatpush1.bf16.msra.mxu0 0
    %2126 = vmatprep.subr.bf16.mxu0 0
    %2127 = vmatpush1.bf16.msra.mxu0 0
    %2128 = vmatprep.subr.bf16.mxu0 0
    %2129 = vmatpush1.bf16.msra.mxu0 0
    %2130 = vmatprep.subr.bf16.mxu0 0
    %2131 = vmatpush1.bf16.msra.mxu0 0
    %2132 = vmatprep.subr.bf16.mxu0 0
    %2133 = vmatpush1.bf16.msra.mxu0 0
    %2134 = vmatprep.mubr.bf16.mxu0 %v1869
    %2135 = vmatmul.mubr.bf16.gmra.mrb[0].mxu0 %v777
    %v2136 = vpop.f32.mrb[0].mxu0
    %v2137 = vadd.f32 0.0, %v2136
    %v2138 = vpop.f32.mrb[0].mxu0
    %v2139 = vadd.f32 0.0, %v2138
    %v2140 = vpop.f32.mrb[0].mxu0
    %v2141 = vpop.f32.mrb[0].mxu0
    %2142 = vdwg.mxu0
    %2143 = vmatprep.subr.bf16.mxu0 %v1521
    %2144 = vmatpush1.bf16.msra.mxu0 %v1520
    %2145 = vmatprep.subr.bf16.mxu0 %v1542
    %2146 = vmatpush1.bf16.msra.mxu0 %v1541
    %2147 = vmatprep.subr.bf16.mxu0 %v1563
    %2148 = vmatpush1.bf16.msra.mxu0 %v1562
    %2149 = vmatprep.subr.bf16.mxu0 %v1584
    %2150 = vmatpush1.bf16.msra.mxu0 %v1583
    %2151 = vmatprep.subr.bf16.mxu0 %v1605
    %2152 = vmatpush1.bf16.msra.mxu0 %v1604
    %2153 = vmatprep.subr.bf16.mxu0 %v1626
    %2154 = vmatpush1.bf16.msra.mxu0 %v1625
    %2155 = vmatprep.subr.bf16.mxu0 %v1647
    %2156 = vmatpush1.bf16.msra.mxu0 %v1646
    %2157 = vmatprep.subr.bf16.mxu0 %v1668
    %2158 = vmatpush1.bf16.msra.mxu0 %v1667
    %2159 = vmatprep.subr.bf16.mxu0 %v1909
    %2160 = vmatpush1.bf16.msra.mxu0 %v1906
    %2161 = vmatprep.subr.bf16.mxu0 0
    %2162 = vmatpush1.bf16.msra.mxu0 0
    %2163 = vmatprep.subr.bf16.mxu0 0
    %2164 = vmatpush1.bf16.msra.mxu0 0
    %2165 = vmatprep.subr.bf16.mxu0 0
    %2166 = vmatpush1.bf16.msra.mxu0 0
    %2167 = vmatprep.subr.bf16.mxu0 0
    %2168 = vmatpush1.bf16.msra.mxu0 0
    %2169 = vmatprep.subr.bf16.mxu0 0
    %2170 = vmatpush1.bf16.msra.mxu0 0
    %2171 = vmatprep.subr.bf16.mxu0 0
    %2172 = vmatpush1.bf16.msra.mxu0 0
    %2173 = vmatprep.subr.bf16.mxu0 0
    %2174 = vmatpush1.bf16.msra.mxu0 0
    %2175 = vmatprep.mubr.bf16.mxu0 %v1869
    %2176 = vmatmul.mubr.bf16.gmra.mrb[0].mxu0 %v777
    %v2177 = vpop.f32.mrb[0].mxu0
    %v2178 = vadd.f32 0.0, %v2177
    %v2179 = vpop.f32.mrb[0].mxu0
    %v2180 = vadd.f32 0.0, %v2179
    %v2181 = vpop.f32.mrb[0].mxu0
    %v2182 = vpop.f32.mrb[0].mxu0
    %2183 = vdwg.mxu0
    %2184 = vmatprep.subr.bf16.mxu0 %v1523
    %2185 = vmatpush1.bf16.msra.mxu0 %v1522
    %2186 = vmatprep.subr.bf16.mxu0 %v1544
    %2187 = vmatpush1.bf16.msra.mxu0 %v1543
    %2188 = vmatprep.subr.bf16.mxu0 %v1565
    %2189 = vmatpush1.bf16.msra.mxu0 %v1564
    %2190 = vmatprep.subr.bf16.mxu0 %v1586
    %2191 = vmatpush1.bf16.msra.mxu0 %v1585
    %2192 = vmatprep.subr.bf16.mxu0 %v1607
    %2193 = vmatpush1.bf16.msra.mxu0 %v1606
    %2194 = vmatprep.subr.bf16.mxu0 %v1628
    %2195 = vmatpush1.bf16.msra.mxu0 %v1627
    %2196 = vmatprep.subr.bf16.mxu0 %v1649
    %2197 = vmatpush1.bf16.msra.mxu0 %v1648
    %2198 = vmatprep.subr.bf16.mxu0 %v1670
    %2199 = vmatpush1.bf16.msra.mxu0 %v1669
    %2200 = vmatprep.subr.bf16.mxu0 %v1915
    %2201 = vmatpush1.bf16.msra.mxu0 %v1912
    %2202 = vmatprep.subr.bf16.mxu0 0
    %2203 = vmatpush1.bf16.msra.mxu0 0
    %2204 = vmatprep.subr.bf16.mxu0 0
    %2205 = vmatpush1.bf16.msra.mxu0 0
    %2206 = vmatprep.subr.bf16.mxu0 0
    %2207 = vmatpush1.bf16.msra.mxu0 0
    %2208 = vmatprep.subr.bf16.mxu0 0
    %2209 = vmatpush1.bf16.msra.mxu0 0
    %2210 = vmatprep.subr.bf16.mxu0 0
    %2211 = vmatpush1.bf16.msra.mxu0 0
    %2212 = vmatprep.subr.bf16.mxu0 0
    %2213 = vmatpush1.bf16.msra.mxu0 0
    %2214 = vmatprep.subr.bf16.mxu0 0
    %2215 = vmatpush1.bf16.msra.mxu0 0
    %2216 = vmatprep.mubr.bf16.mxu0 %v1869
    %2217 = vmatmul.mubr.bf16.gmra.mrb[0].mxu0 %v777
    %v2218 = vpop.f32.mrb[0].mxu0
    %v2219 = vadd.f32 0.0, %v2218
    %v2220 = vpop.f32.mrb[0].mxu0
    %v2221 = vadd.f32 0.0, %v2220
    %v2222 = vpop.f32.mrb[0].mxu0
    %v2223 = vpop.f32.mrb[0].mxu0
    %2224 = vdwg.mxu0
    %2225 = vmatprep.subr.bf16.mxu0 %v1525
    %2226 = vmatpush1.bf16.msra.mxu0 %v1524
    %2227 = vmatprep.subr.bf16.mxu0 %v1546
    %2228 = vmatpush1.bf16.msra.mxu0 %v1545
    %2229 = vmatprep.subr.bf16.mxu0 %v1567
    %2230 = vmatpush1.bf16.msra.mxu0 %v1566
    %2231 = vmatprep.subr.bf16.mxu0 %v1588
    %2232 = vmatpush1.bf16.msra.mxu0 %v1587
    %2233 = vmatprep.subr.bf16.mxu0 %v1609
    %2234 = vmatpush1.bf16.msra.mxu0 %v1608
    %2235 = vmatprep.subr.bf16.mxu0 %v1630
    %2236 = vmatpush1.bf16.msra.mxu0 %v1629
    %2237 = vmatprep.subr.bf16.mxu0 %v1651
    %2238 = vmatpush1.bf16.msra.mxu0 %v1650
    %2239 = vmatprep.subr.bf16.mxu0 %v1672
    %2240 = vmatpush1.bf16.msra.mxu0 %v1671
    %2241 = vmatprep.subr.bf16.mxu0 %v1921
    %2242 = vmatpush1.bf16.msra.mxu0 %v1918
    %2243 = vmatprep.subr.bf16.mxu0 0
    %2244 = vmatpush1.bf16.msra.mxu0 0
    %2245 = vmatprep.subr.bf16.mxu0 0
    %2246 = vmatpush1.bf16.msra.mxu0 0
    %2247 = vmatprep.subr.bf16.mxu0 0
    %2248 = vmatpush1.bf16.msra.mxu0 0
    %2249 = vmatprep.subr.bf16.mxu0 0
    %2250 = vmatpush1.bf16.msra.mxu0 0
    %2251 = vmatprep.subr.bf16.mxu0 0
    %2252 = vmatpush1.bf16.msra.mxu0 0
    %2253 = vmatprep.subr.bf16.mxu0 0
    %2254 = vmatpush1.bf16.msra.mxu0 0
    %2255 = vmatprep.subr.bf16.mxu0 0
    %2256 = vmatpush1.bf16.msra.mxu0 0
    %2257 = vmatprep.mubr.bf16.mxu0 %v1869
    %2258 = vmatmul.mubr.bf16.gmra.mrb[0].mxu0 %v777
    %v2259 = vpop.f32.mrb[0].mxu0
    %v2260 = vadd.f32 0.0, %v2259
    %v2261 = vpop.f32.mrb[0].mxu0
    %v2262 = vadd.f32 0.0, %v2261
    %v2263 = vpop.f32.mrb[0].mxu0
    %v2264 = vpop.f32.mrb[0].mxu0
    %2265 = vdwg.mxu0
    %2266 = vmatprep.subr.bf16.mxu0 %v1527
    %2267 = vmatpush1.bf16.msra.mxu0 %v1526
    %2268 = vmatprep.subr.bf16.mxu0 %v1548
    %2269 = vmatpush1.bf16.msra.mxu0 %v1547
    %2270 = vmatprep.subr.bf16.mxu0 %v1569
    %2271 = vmatpush1.bf16.msra.mxu0 %v1568
    %2272 = vmatprep.subr.bf16.mxu0 %v1590
    %2273 = vmatpush1.bf16.msra.mxu0 %v1589
    %2274 = vmatprep.subr.bf16.mxu0 %v1611
    %2275 = vmatpush1.bf16.msra.mxu0 %v1610
    %2276 = vmatprep.subr.bf16.mxu0 %v1632
    %2277 = vmatpush1.bf16.msra.mxu0 %v1631
    %2278 = vmatprep.subr.bf16.mxu0 %v1653
    %2279 = vmatpush1.bf16.msra.mxu0 %v1652
    %2280 = vmatprep.subr.bf16.mxu0 %v1674
    %2281 = vmatpush1.bf16.msra.mxu0 %v1673
    %2282 = vmatprep.subr.bf16.mxu0 %v1927
    %2283 = vmatpush1.bf16.msra.mxu0 %v1924
    %2284 = vmatprep.subr.bf16.mxu0 0
    %2285 = vmatpush1.bf16.msra.mxu0 0
    %2286 = vmatprep.subr.bf16.mxu0 0
    %2287 = vmatpush1.bf16.msra.mxu0 0
    %2288 = vmatprep.subr.bf16.mxu0 0
    %2289 = vmatpush1.bf16.msra.mxu0 0
    %2290 = vmatprep.subr.bf16.mxu0 0
    %2291 = vmatpush1.bf16.msra.mxu0 0
    %2292 = vmatprep.subr.bf16.mxu0 0
    %2293 = vmatpush1.bf16.msra.mxu0 0
    %2294 = vmatprep.subr.bf16.mxu0 0
    %2295 = vmatpush1.bf16.msra.mxu0 0
    %2296 = vmatprep.subr.bf16.mxu0 0
    %2297 = vmatpush1.bf16.msra.mxu0 0
    %2298 = vmatprep.mubr.bf16.mxu0 %v1869
    %2299 = vmatmul.mubr.bf16.gmra.mrb[0].mxu0 %v777
    %v2300 = vpop.f32.mrb[0].mxu0
    %v2301 = vadd.f32 0.0, %v2300
    %v2302 = vpop.f32.mrb[0].mxu0
    %v2303 = vadd.f32 0.0, %v2302
    %v2304 = vpop.f32.mrb[0].mxu0
    %v2305 = vpop.f32.mrb[0].mxu0
    %2306 = vdwg.mxu0
    %2307 = vmatprep.subr.bf16.mxu0 %v1529
    %2308 = vmatpush1.bf16.msra.mxu0 %v1528
    %2309 = vmatprep.subr.bf16.mxu0 %v1550
    %2310 = vmatpush1.bf16.msra.mxu0 %v1549
    %2311 = vmatprep.subr.bf16.mxu0 %v1571
    %2312 = vmatpush1.bf16.msra.mxu0 %v1570
    %2313 = vmatprep.subr.bf16.mxu0 %v1592
    %2314 = vmatpush1.bf16.msra.mxu0 %v1591
    %2315 = vmatprep.subr.bf16.mxu0 %v1613
    %2316 = vmatpush1.bf16.msra.mxu0 %v1612
    %2317 = vmatprep.subr.bf16.mxu0 %v1634
    %2318 = vmatpush1.bf16.msra.mxu0 %v1633
    %2319 = vmatprep.subr.bf16.mxu0 %v1655
    %2320 = vmatpush1.bf16.msra.mxu0 %v1654
    %2321 = vmatprep.subr.bf16.mxu0 %v1676
    %2322 = vmatpush1.bf16.msra.mxu0 %v1675
    %2323 = vmatprep.subr.bf16.mxu0 %v1933
    %2324 = vmatpush1.bf16.msra.mxu0 %v1930
    %2325 = vmatprep.subr.bf16.mxu0 0
    %2326 = vmatpush1.bf16.msra.mxu0 0
    %2327 = vmatprep.subr.bf16.mxu0 0
    %2328 = vmatpush1.bf16.msra.mxu0 0
    %2329 = vmatprep.subr.bf16.mxu0 0
    %2330 = vmatpush1.bf16.msra.mxu0 0
    %2331 = vmatprep.subr.bf16.mxu0 0
    %2332 = vmatpush1.bf16.msra.mxu0 0
    %2333 = vmatprep.subr.bf16.mxu0 0
    %2334 = vmatpush1.bf16.msra.mxu0 0
    %2335 = vmatprep.subr.bf16.mxu0 0
    %2336 = vmatpush1.bf16.msra.mxu0 0
    %2337 = vmatprep.subr.bf16.mxu0 0
    %2338 = vmatpush1.bf16.msra.mxu0 0
    %2339 = vmatprep.mubr.bf16.mxu0 %v1869
    %2340 = vmatmul.mubr.bf16.gmra.mrb[0].mxu0 %v777
    %v2341 = vpop.f32.mrb[0].mxu0
    %v2342 = vadd.f32 0.0, %v2341
    %v2343 = vpop.f32.mrb[0].mxu0
    %v2344 = vadd.f32 0.0, %v2343
    %v2345 = vpop.f32.mrb[0].mxu0
    %v2346 = vpop.f32.mrb[0].mxu0
    %2347 = vdwg.mxu0
    %2348 = vmatprep.subr.bf16.mxu0 0
    %2349 = vmatpush1.bf16.msra.mxu0 %v1530
    %2350 = vmatprep.subr.bf16.mxu0 0
    %2351 = vmatpush1.bf16.msra.mxu0 %v1551
    %2352 = vmatprep.subr.bf16.mxu0 0
    %2353 = vmatpush1.bf16.msra.mxu0 %v1572
    %2354 = vmatprep.subr.bf16.mxu0 0
    %2355 = vmatpush1.bf16.msra.mxu0 %v1593
    %2356 = vmatprep.subr.bf16.mxu0 0
    %2357 = vmatpush1.bf16.msra.mxu0 %v1614
    %2358 = vmatprep.subr.bf16.mxu0 0
    %2359 = vmatpush1.bf16.msra.mxu0 %v1635
    %2360 = vmatprep.subr.bf16.mxu0 0
    %2361 = vmatpush1.bf16.msra.mxu0 %v1656
    %2362 = vmatprep.subr.bf16.mxu0 0
    %2363 = vmatpush1.bf16.msra.mxu0 %v1677
    %2364 = vmatprep.subr.bf16.mxu0 0
    %2365 = vmatpush1.bf16.msra.mxu0 %v1936
    %2366 = vmatprep.subr.bf16.mxu0 0
    %2367 = vmatpush1.bf16.msra.mxu0 0
    %2368 = vmatprep.subr.bf16.mxu0 0
    %2369 = vmatpush1.bf16.msra.mxu0 0
    %2370 = vmatprep.subr.bf16.mxu0 0
    %2371 = vmatpush1.bf16.msra.mxu0 0
    %2372 = vmatprep.subr.bf16.mxu0 0
    %2373 = vmatpush1.bf16.msra.mxu0 0
    %2374 = vmatprep.subr.bf16.mxu0 0
    %2375 = vmatpush1.bf16.msra.mxu0 0
    %2376 = vmatprep.subr.bf16.mxu0 0
    %2377 = vmatpush1.bf16.msra.mxu0 0
    %2378 = vmatprep.subr.bf16.mxu0 0
    %2379 = vmatpush1.bf16.msra.mxu0 0
    %2380 = vmatprep.mubr.bf16.mxu0 %v1869
    %2381 = vmatmul.mubr.bf16.gmra.mrb[0].mxu0 %v777
    %v2382 = vpop.f32.mrb[0].mxu0
    %v2383 = vadd.f32 0.0, %v2382
    %v2384 = vpop.f32.mrb[0].mxu0
    %v2385 = vpop.f32.mrb[0].mxu0
    %v2386 = vpop.f32.mrb[0].mxu0
    %2387 = vdwg.mxu0
    %v2388 = vadd.f32 %v360, %v1973
    %v2389 = vadd.f32 %v362, %v1975
    %v2390 = vadd.f32 %v401, %v2014
    %v2391 = vadd.f32 %v403, %v2016
    %v2392 = vadd.f32 %v442, %v2055
    %v2393 = vadd.f32 %v444, %v2057
    %v2394 = vadd.f32 %v483, %v2096
    %v2395 = vadd.f32 %v485, %v2098
    %v2396 = vadd.f32 %v524, %v2137
    %v2397 = vadd.f32 %v526, %v2139
    %v2398 = vadd.f32 %v565, %v2178
    %v2399 = vadd.f32 %v567, %v2180
    %v2400 = vadd.f32 %v606, %v2219
    %v2401 = vadd.f32 %v608, %v2221
    %v2402 = vadd.f32 %v647, %v2260
    %v2403 = vadd.f32 %v649, %v2262
    %v2404 = vadd.f32 %v688, %v2301
    %v2405 = vadd.f32 %v690, %v2303
    %v2406 = vadd.f32 %v729, %v2342
    %v2407 = vadd.f32 %v731, %v2344
    %v2408 = vadd.f32 %v770, %v2383
    %v2409 = vld [vmem:[%s6] sm:$0xff]
    %v2410 = vld [vmem:[%s6 + $0x8] sm:$0xff]
    %v2411 = vld [vmem:[%s6 + $0x10] sm:$0xff]
    %v2412 = vld [vmem:[%s6 + $0x18] sm:$0xf]
    %v2413 = vld [vmem:[%s6 + $0x1c] sm:$0xff]
    %v2414 = vld [vmem:[%s6 + $0x24] sm:$0xff]
    %v2415 = vld [vmem:[%s6 + $0x2c] sm:$0xff]
    %v2416 = vld [vmem:[%s6 + $0x34] sm:$0xf]
    %v2417 = vpack.c.bf16 %v360, %v360
    %v2418 = vpack.c.bf16 %v362, %v362
    %v2419 = vpack.c.bf16 %v401, %v401
    %v2420 = vpack.c.bf16 %v403, %v403
    %v2421 = vpack.c.bf16 %v442, %v442
    %v2422 = vpack.c.bf16 %v444, %v444
    %v2423 = vpack.c.bf16 %v483, %v483
    %v2432 = vunpack.c.l.b16 %v2409
    %v2433 = vunpack.c.h.b16 %v2409
    %v2434 = vunpack.c.l.b16 %v2410
    %v2435 = vunpack.c.h.b16 %v2410
    %v2436 = vunpack.c.l.b16 %v2411
    %v2437 = vunpack.c.h.b16 %v2411
    %v2438 = vunpack.c.l.b16 %v2412
    %v2439 = vunpack.c.l.b16 %v2413
    %v2440 = vunpack.c.h.b16 %v2413
    %v2441 = vunpack.c.l.b16 %v2414
    %v2442 = vunpack.c.h.b16 %v2414
    %v2443 = vunpack.c.l.b16 %v2415
    %v2444 = vunpack.c.h.b16 %v2415
    %v2445 = vunpack.c.l.b16 %v2416
    %v2446 = vpack.c.b16 %v2439, %v2432
    %v2447 = vpack.c.b16 %v2440, %v2433
    %v2448 = vpack.c.b16 %v2441, %v2434
    %v2449 = vpack.c.b16 %v2442, %v2435
    %v2450 = vpack.c.b16 %v2443, %v2436
    %v2451 = vpack.c.b16 %v2444, %v2437
    %v2452 = vpack.c.b16 %v2445, %v2438
    %2460 = vmatprep.subr.bf16.mxu0 %v2447
    %2461 = vmatpush1.bf16.xpose.msra.mxu0 %v2446
    %2462 = vmatprep.subr.bf16.mxu0 0
    %2463 = vmatpush1.bf16.xpose.msra.mxu0 0
    %2464 = vmatprep.subr.bf16.mxu0 0
    %2465 = vmatpush1.bf16.xpose.msra.mxu0 0
    %2466 = vmatprep.subr.bf16.mxu0 0
    %2467 = vmatpush1.bf16.xpose.msra.mxu0 0
    %2468 = vmatprep.subr.bf16.mxu0 0
    %2469 = vmatpush1.bf16.xpose.msra.mxu0 0
    %2470 = vmatprep.subr.bf16.mxu0 0
    %2471 = vmatpush1.bf16.xpose.msra.mxu0 0
    %2472 = vmatprep.subr.bf16.mxu0 0
    %2473 = vmatpush1.bf16.xpose.msra.mxu0 0
    %2474 = vmatprep.subr.bf16.mxu0 0
    %2475 = vmatpush1.bf16.xpose.msra.mxu0 0
    %2476 = vmatprep.subr.bf16.mxu0 0
    %2477 = vmatpush1.bf16.xpose.msra.mxu0 0
    %2478 = vmatprep.subr.bf16.mxu0 0
    %2479 = vmatpush1.bf16.xpose.msra.mxu0 0
    %2480 = vmatprep.subr.bf16.mxu0 0
    %2481 = vmatpush1.bf16.xpose.msra.mxu0 0
    %2482 = vmatprep.subr.bf16.mxu0 0
    %2483 = vmatpush1.bf16.xpose.msra.mxu0 0
    %2484 = vmatprep.subr.bf16.mxu0 0
    %2485 = vmatpush1.bf16.xpose.msra.mxu0 0
    %2486 = vmatprep.subr.bf16.mxu0 0
    %2487 = vmatpush1.bf16.xpose.msra.mxu0 0
    %2488 = vmatprep.subr.bf16.mxu0 0
    %2489 = vmatpush1.bf16.xpose.msra.mxu0 0
    %2490 = vmatprep.subr.bf16.mxu0 0
    %2491 = vmatpush1.bf16.xpose.msra.mxu0 0
    %2492 = vmatprep.mubr.bf16.mxu0 %v2418
    %2493 = vmatmul.mubr.bf16.gmra.mrb[0].mxu0 %v2417
    %v2494 = vpop.f32.mrb[0].mxu0
    %v2495 = vadd.f32 0.0, %v2494
    %v2496 = vpop.f32.mrb[0].mxu0
    %v2497 = vpop.f32.mrb[0].mxu0
    %v2498 = vpop.f32.mrb[0].mxu0
    %2499 = vdwg.mxu0
    %2500 = vmatprep.subr.bf16.mxu0 %v2449
    %2501 = vmatpush1.bf16.xpose.msra.mxu0 %v2448
    %2502 = vmatprep.subr.bf16.mxu0 0
    %2503 = vmatpush1.bf16.xpose.msra.mxu0 0
    %2504 = vmatprep.subr.bf16.mxu0 0
    %2505 = vmatpush1.bf16.xpose.msra.mxu0 0
    %2506 = vmatprep.subr.bf16.mxu0 0
    %2507 = vmatpush1.bf16.xpose.msra.mxu0 0
    %2508 = vmatprep.subr.bf16.mxu0 0
    %2509 = vmatpush1.bf16.xpose.msra.mxu0 0
    %2510 = vmatprep.subr.bf16.mxu0 0
    %2511 = vmatpush1.bf16.xpose.msra.mxu0 0
    %2512 = vmatprep.subr.bf16.mxu0 0
    %2513 = vmatpush1.bf16.xpose.msra.mxu0 0
    %2514 = vmatprep.subr.bf16.mxu0 0
    %2515 = vmatpush1.bf16.xpose.msra.mxu0 0
    %2516 = vmatprep.subr.bf16.mxu0 0
    %2517 = vmatpush1.bf16.xpose.msra.mxu0 0
    %2518 = vmatprep.subr.bf16.mxu0 0
    %2519 = vmatpush1.bf16.xpose.msra.mxu0 0
    %2520 = vmatprep.subr.bf16.mxu0 0
    %2521 = vmatpush1.bf16.xpose.msra.mxu0 0
    %2522 = vmatprep.subr.bf16.mxu0 0
    %2523 = vmatpush1.bf16.xpose.msra.mxu0 0
    %2524 = vmatprep.subr.bf16.mxu0 0
    %2525 = vmatpush1.bf16.xpose.msra.mxu0 0
    %2526 = vmatprep.subr.bf16.mxu0 0
    %2527 = vmatpush1.bf16.xpose.msra.mxu0 0
    %2528 = vmatprep.subr.bf16.mxu0 0
    %2529 = vmatpush1.bf16.xpose.msra.mxu0 0
    %2530 = vmatprep.subr.bf16.mxu0 0
    %2531 = vmatpush1.bf16.xpose.msra.mxu0 0
    %2532 = vmatprep.mubr.bf16.mxu0 %v2420
    %2533 = vmatmul.mubr.bf16.gmra.mrb[0].mxu0 %v2419
    %v2534 = vpop.f32.mrb[0].mxu0
    %v2535 = vadd.f32 %v2495, %v2534
    %v2536 = vpop.f32.mrb[0].mxu0
    %v2537 = vpop.f32.mrb[0].mxu0
    %v2538 = vpop.f32.mrb[0].mxu0
    %2539 = vdwg.mxu0
    %2540 = vmatprep.subr.bf16.mxu0 %v2451
    %2541 = vmatpush1.bf16.xpose.msra.mxu0 %v2450
    %2542 = vmatprep.subr.bf16.mxu0 0
    %2543 = vmatpush1.bf16.xpose.msra.mxu0 0
    %2544 = vmatprep.subr.bf16.mxu0 0
    %2545 = vmatpush1.bf16.xpose.msra.mxu0 0
    %2546 = vmatprep.subr.bf16.mxu0 0
    %2547 = vmatpush1.bf16.xpose.msra.mxu0 0
    %2548 = vmatprep.subr.bf16.mxu0 0
    %2549 = vmatpush1.bf16.xpose.msra.mxu0 0
    %2550 = vmatprep.subr.bf16.mxu0 0
    %2551 = vmatpush1.bf16.xpose.msra.mxu0 0
    %2552 = vmatprep.subr.bf16.mxu0 0
    %2553 = vmatpush1.bf16.xpose.msra.mxu0 0
    %2554 = vmatprep.subr.bf16.mxu0 0
    %2555 = vmatpush1.bf16.xpose.msra.mxu0 0
    %2556 = vmatprep.subr.bf16.mxu0 0
    %2557 = vmatpush1.bf16.xpose.msra.mxu0 0
    %2558 = vmatprep.subr.bf16.mxu0 0
    %2559 = vmatpush1.bf16.xpose.msra.mxu0 0
    %2560 = vmatprep.subr.bf16.mxu0 0
    %2561 = vmatpush1.bf16.xpose.msra.mxu0 0
    %2562 = vmatprep.subr.bf16.mxu0 0
    %2563 = vmatpush1.bf16.xpose.msra.mxu0 0
    %2564 = vmatprep.subr.bf16.mxu0 0
    %2565 = vmatpush1.bf16.xpose.msra.mxu0 0
    %2566 = vmatprep.subr.bf16.mxu0 0
    %2567 = vmatpush1.bf16.xpose.msra.mxu0 0
    %2568 = vmatprep.subr.bf16.mxu0 0
    %2569 = vmatpush1.bf16.xpose.msra.mxu0 0
    %2570 = vmatprep.subr.bf16.mxu0 0
    %2571 = vmatpush1.bf16.xpose.msra.mxu0 0
    %2572 = vmatprep.mubr.bf16.mxu0 %v2422
    %2573 = vmatmul.mubr.bf16.gmra.mrb[0].mxu0 %v2421
    %v2574 = vpop.f32.mrb[0].mxu0
    %v2575 = vadd.f32 %v2535, %v2574
    %v2576 = vpop.f32.mrb[0].mxu0
    %v2577 = vpop.f32.mrb[0].mxu0
    %v2578 = vpop.f32.mrb[0].mxu0
    %2579 = vdwg.mxu0
    %2580 = vmatprep.subr.bf16.mxu0 0
    %2581 = vmatpush1.bf16.xpose.msra.mxu0 %v2452
    %2582 = vmatprep.subr.bf16.mxu0 0
    %2583 = vmatpush1.bf16.xpose.msra.mxu0 0
    %2584 = vmatprep.subr.bf16.mxu0 0
    %2585 = vmatpush1.bf16.xpose.msra.mxu0 0
    %2586 = vmatprep.subr.bf16.mxu0 0
    %2587 = vmatpush1.bf16.xpose.msra.mxu0 0
    %2588 = vmatprep.subr.bf16.mxu0 0
    %2589 = vmatpush1.bf16.xpose.msra.mxu0 0
    %2590 = vmatprep.subr.bf16.mxu0 0
    %2591 = vmatpush1.bf16.xpose.msra.mxu0 0
    %2592 = vmatprep.subr.bf16.mxu0 0
    %2593 = vmatpush1.bf16.xpose.msra.mxu0 0
    %2594 = vmatprep.subr.bf16.mxu0 0
    %2595 = vmatpush1.bf16.xpose.msra.mxu0 0
    %2596 = vmatprep.subr.bf16.mxu0 0
    %2597 = vmatpush1.bf16.xpose.msra.mxu0 0
    %2598 = vmatprep.subr.bf16.mxu0 0
    %2599 = vmatpush1.bf16.xpose.msra.mxu0 0
    %2600 = vmatprep.subr.bf16.mxu0 0
    %2601 = vmatpush1.bf16.xpose.msra.mxu0 0
    %2602 = vmatprep.subr.bf16.mxu0 0
    %2603 = vmatpush1.bf16.xpose.msra.mxu0 0
    %2604 = vmatprep.subr.bf16.mxu0 0
    %2605 = vmatpush1.bf16.xpose.msra.mxu0 0
    %2606 = vmatprep.subr.bf16.mxu0 0
    %2607 = vmatpush1.bf16.xpose.msra.mxu0 0
    %2608 = vmatprep.subr.bf16.mxu0 0
    %2609 = vmatpush1.bf16.xpose.msra.mxu0 0
    %2610 = vmatprep.subr.bf16.mxu0 0
    %2611 = vmatpush1.bf16.xpose.msra.mxu0 0
    %2612 = vmatprep.mubr.bf16.mxu0 0
    %2613 = vmatmul.mubr.bf16.gmra.mrb[0].mxu0 %v2423
    %v2614 = vpop.f32.mrb[0].mxu0
    %v2615 = vadd.f32 %v2575, %v2614
    %v2616 = vpop.f32.mrb[0].mxu0
    %v2617 = vpop.f32.mrb[0].mxu0
    %v2618 = vpop.f32.mrb[0].mxu0
    %2619 = vdwg.mxu0
    %v2620 = vpack.c.bf16 %v485, %v485
    %v2621 = vpack.c.bf16 %v524, %v524
    %v2622 = vpack.c.bf16 %v526, %v526
    %v2623 = vpack.c.bf16 %v565, %v565
    %v2624 = vpack.c.bf16 %v567, %v567
    %v2625 = vpack.c.bf16 %v606, %v606
    %v2626 = vpack.c.bf16 %v608, %v608
    %2627 = vmatprep.subr.bf16.mxu0 %v2447
    %2628 = vmatpush1.bf16.xpose.msra.mxu0 %v2446
    %2629 = vmatprep.subr.bf16.mxu0 0
    %2630 = vmatpush1.bf16.xpose.msra.mxu0 0
    %2631 = vmatprep.subr.bf16.mxu0 0
    %2632 = vmatpush1.bf16.xpose.msra.mxu0 0
    %2633 = vmatprep.subr.bf16.mxu0 0
    %2634 = vmatpush1.bf16.xpose.msra.mxu0 0
    %2635 = vmatprep.subr.bf16.mxu0 0
    %2636 = vmatpush1.bf16.xpose.msra.mxu0 0
    %2637 = vmatprep.subr.bf16.mxu0 0
    %2638 = vmatpush1.bf16.xpose.msra.mxu0 0
    %2639 = vmatprep.subr.bf16.mxu0 0
    %2640 = vmatpush1.bf16.xpose.msra.mxu0 0
    %2641 = vmatprep.subr.bf16.mxu0 0
    %2642 = vmatpush1.bf16.xpose.msra.mxu0 0
    %2643 = vmatprep.subr.bf16.mxu0 0
    %2644 = vmatpush1.bf16.xpose.msra.mxu0 0
    %2645 = vmatprep.subr.bf16.mxu0 0
    %2646 = vmatpush1.bf16.xpose.msra.mxu0 0
    %2647 = vmatprep.subr.bf16.mxu0 0
    %2648 = vmatpush1.bf16.xpose.msra.mxu0 0
    %2649 = vmatprep.subr.bf16.mxu0 0
    %2650 = vmatpush1.bf16.xpose.msra.mxu0 0
    %2651 = vmatprep.subr.bf16.mxu0 0
    %2652 = vmatpush1.bf16.xpose.msra.mxu0 0
    %2653 = vmatprep.subr.bf16.mxu0 0
    %2654 = vmatpush1.bf16.xpose.msra.mxu0 0
    %2655 = vmatprep.subr.bf16.mxu0 0
    %2656 = vmatpush1.bf16.xpose.msra.mxu0 0
    %2657 = vmatprep.subr.bf16.mxu0 0
    %2658 = vmatpush1.bf16.xpose.msra.mxu0 0
    %2659 = vmatprep.mubr.bf16.mxu0 %v2621
    %2660 = vmatmul.mubr.bf16.gmra.mrb[0].mxu0 %v2620
    %v2661 = vpop.f32.mrb[0].mxu0
    %v2662 = vadd.f32 0.0, %v2661
    %v2663 = vpop.f32.mrb[0].mxu0
    %v2664 = vpop.f32.mrb[0].mxu0
    %v2665 = vpop.f32.mrb[0].mxu0
    %2666 = vdwg.mxu0
    %2667 = vmatprep.subr.bf16.mxu0 %v2449
    %2668 = vmatpush1.bf16.xpose.msra.mxu0 %v2448
    %2669 = vmatprep.subr.bf16.mxu0 0
    %2670 = vmatpush1.bf16.xpose.msra.mxu0 0
    %2671 = vmatprep.subr.bf16.mxu0 0
    %2672 = vmatpush1.bf16.xpose.msra.mxu0 0
    %2673 = vmatprep.subr.bf16.mxu0 0
    %2674 = vmatpush1.bf16.xpose.msra.mxu0 0
    %2675 = vmatprep.subr.bf16.mxu0 0
    %2676 = vmatpush1.bf16.xpose.msra.mxu0 0
    %2677 = vmatprep.subr.bf16.mxu0 0
    %2678 = vmatpush1.bf16.xpose.msra.mxu0 0
    %2679 = vmatprep.subr.bf16.mxu0 0
    %2680 = vmatpush1.bf16.xpose.msra.mxu0 0
    %2681 = vmatprep.subr.bf16.mxu0 0
    %2682 = vmatpush1.bf16.xpose.msra.mxu0 0
    %2683 = vmatprep.subr.bf16.mxu0 0
    %2684 = vmatpush1.bf16.xpose.msra.mxu0 0
    %2685 = vmatprep.subr.bf16.mxu0 0
    %2686 = vmatpush1.bf16.xpose.msra.mxu0 0
    %2687 = vmatprep.subr.bf16.mxu0 0
    %2688 = vmatpush1.bf16.xpose.msra.mxu0 0
    %2689 = vmatprep.subr.bf16.mxu0 0
    %2690 = vmatpush1.bf16.xpose.msra.mxu0 0
    %2691 = vmatprep.subr.bf16.mxu0 0
    %2692 = vmatpush1.bf16.xpose.msra.mxu0 0
    %2693 = vmatprep.subr.bf16.mxu0 0
    %2694 = vmatpush1.bf16.xpose.msra.mxu0 0
    %2695 = vmatprep.subr.bf16.mxu0 0
    %2696 = vmatpush1.bf16.xpose.msra.mxu0 0
    %2697 = vmatprep.subr.bf16.mxu0 0
    %2698 = vmatpush1.bf16.xpose.msra.mxu0 0
    %2699 = vmatprep.mubr.bf16.mxu0 %v2623
    %2700 = vmatmul.mubr.bf16.gmra.mrb[0].mxu0 %v2622
    %v2701 = vpop.f32.mrb[0].mxu0
    %v2702 = vadd.f32 %v2662, %v2701
    %v2703 = vpop.f32.mrb[0].mxu0
    %v2704 = vpop.f32.mrb[0].mxu0
    %v2705 = vpop.f32.mrb[0].mxu0
    %2706 = vdwg.mxu0
    %2707 = vmatprep.subr.bf16.mxu0 %v2451
    %2708 = vmatpush1.bf16.xpose.msra.mxu0 %v2450
    %2709 = vmatprep.subr.bf16.mxu0 0
    %2710 = vmatpush1.bf16.xpose.msra.mxu0 0
    %2711 = vmatprep.subr.bf16.mxu0 0
    %2712 = vmatpush1.bf16.xpose.msra.mxu0 0
    %2713 = vmatprep.subr.bf16.mxu0 0
    %2714 = vmatpush1.bf16.xpose.msra.mxu0 0
    %2715 = vmatprep.subr.bf16.mxu0 0
    %2716 = vmatpush1.bf16.xpose.msra.mxu0 0
    %2717 = vmatprep.subr.bf16.mxu0 0
    %2718 = vmatpush1.bf16.xpose.msra.mxu0 0
    %2719 = vmatprep.subr.bf16.mxu0 0
    %2720 = vmatpush1.bf16.xpose.msra.mxu0 0
    %2721 = vmatprep.subr.bf16.mxu0 0
    %2722 = vmatpush1.bf16.xpose.msra.mxu0 0
    %2723 = vmatprep.subr.bf16.mxu0 0
    %2724 = vmatpush1.bf16.xpose.msra.mxu0 0
    %2725 = vmatprep.subr.bf16.mxu0 0
    %2726 = vmatpush1.bf16.xpose.msra.mxu0 0
    %2727 = vmatprep.subr.bf16.mxu0 0
    %2728 = vmatpush1.bf16.xpose.msra.mxu0 0
    %2729 = vmatprep.subr.bf16.mxu0 0
    %2730 = vmatpush1.bf16.xpose.msra.mxu0 0
    %2731 = vmatprep.subr.bf16.mxu0 0
    %2732 = vmatpush1.bf16.xpose.msra.mxu0 0
    %2733 = vmatprep.subr.bf16.mxu0 0
    %2734 = vmatpush1.bf16.xpose.msra.mxu0 0
    %2735 = vmatprep.subr.bf16.mxu0 0
    %2736 = vmatpush1.bf16.xpose.msra.mxu0 0
    %2737 = vmatprep.subr.bf16.mxu0 0
    %2738 = vmatpush1.bf16.xpose.msra.mxu0 0
    %2739 = vmatprep.mubr.bf16.mxu0 %v2625
    %2740 = vmatmul.mubr.bf16.gmra.mrb[0].mxu0 %v2624
    %v2741 = vpop.f32.mrb[0].mxu0
    %v2742 = vadd.f32 %v2702, %v2741
    %v2743 = vpop.f32.mrb[0].mxu0
    %v2744 = vpop.f32.mrb[0].mxu0
    %v2745 = vpop.f32.mrb[0].mxu0
    %2746 = vdwg.mxu0
    %2747 = vmatprep.subr.bf16.mxu0 0
    %2748 = vmatpush1.bf16.xpose.msra.mxu0 %v2452
    %2749 = vmatprep.subr.bf16.mxu0 0
    %2750 = vmatpush1.bf16.xpose.msra.mxu0 0
    %2751 = vmatprep.subr.bf16.mxu0 0
    %2752 = vmatpush1.bf16.xpose.msra.mxu0 0
    %2753 = vmatprep.subr.bf16.mxu0 0
    %2754 = vmatpush1.bf16.xpose.msra.mxu0 0
    %2755 = vmatprep.subr.bf16.mxu0 0
    %2756 = vmatpush1.bf16.xpose.msra.mxu0 0
    %2757 = vmatprep.subr.bf16.mxu0 0
    %2758 = vmatpush1.bf16.xpose.msra.mxu0 0
    %2759 = vmatprep.subr.bf16.mxu0 0
    %2760 = vmatpush1.bf16.xpose.msra.mxu0 0
    %2761 = vmatprep.subr.bf16.mxu0 0
    %2762 = vmatpush1.bf16.xpose.msra.mxu0 0
    %2763 = vmatprep.subr.bf16.mxu0 0
    %2764 = vmatpush1.bf16.xpose.msra.mxu0 0
    %2765 = vmatprep.subr.bf16.mxu0 0
    %2766 = vmatpush1.bf16.xpose.msra.mxu0 0
    %2767 = vmatprep.subr.bf16.mxu0 0
    %2768 = vmatpush1.bf16.xpose.msra.mxu0 0
    %2769 = vmatprep.subr.bf16.mxu0 0
    %2770 = vmatpush1.bf16.xpose.msra.mxu0 0
    %2771 = vmatprep.subr.bf16.mxu0 0
    %2772 = vmatpush1.bf16.xpose.msra.mxu0 0
    %2773 = vmatprep.subr.bf16.mxu0 0
    %2774 = vmatpush1.bf16.xpose.msra.mxu0 0
    %2775 = vmatprep.subr.bf16.mxu0 0
    %2776 = vmatpush1.bf16.xpose.msra.mxu0 0
    %2777 = vmatprep.subr.bf16.mxu0 0
    %2778 = vmatpush1.bf16.xpose.msra.mxu0 0
    %2779 = vmatprep.mubr.bf16.mxu0 0
    %2780 = vmatmul.mubr.bf16.gmra.mrb[0].mxu0 %v2626
    %v2781 = vpop.f32.mrb[0].mxu0
    %v2782 = vadd.f32 %v2742, %v2781
    %v2783 = vpop.f32.mrb[0].mxu0
    %v2784 = vpop.f32.mrb[0].mxu0
    %v2785 = vpop.f32.mrb[0].mxu0
    %2786 = vdwg.mxu0
    %v2787 = vpack.c.bf16 %v647, %v647
    %v2788 = vpack.c.bf16 %v649, %v649
    %v2789 = vpack.c.bf16 %v688, %v688
    %v2790 = vpack.c.bf16 %v690, %v690
    %v2791 = vpack.c.bf16 %v729, %v729
    %v2792 = vpack.c.bf16 %v731, %v731
    %v2793 = vpack.c.bf16 %v770, %v770
    %2794 = vmatprep.subr.bf16.mxu0 %v2447
    %2795 = vmatpush1.bf16.xpose.msra.mxu0 %v2446
    %2796 = vmatprep.subr.bf16.mxu0 0
    %2797 = vmatpush1.bf16.xpose.msra.mxu0 0
    %2798 = vmatprep.subr.bf16.mxu0 0
    %2799 = vmatpush1.bf16.xpose.msra.mxu0 0
    %2800 = vmatprep.subr.bf16.mxu0 0
    %2801 = vmatpush1.bf16.xpose.msra.mxu0 0
    %2802 = vmatprep.subr.bf16.mxu0 0
    %2803 = vmatpush1.bf16.xpose.msra.mxu0 0
    %2804 = vmatprep.subr.bf16.mxu0 0
    %2805 = vmatpush1.bf16.xpose.msra.mxu0 0
    %2806 = vmatprep.subr.bf16.mxu0 0
    %2807 = vmatpush1.bf16.xpose.msra.mxu0 0
    %2808 = vmatprep.subr.bf16.mxu0 0
    %2809 = vmatpush1.bf16.xpose.msra.mxu0 0
    %2810 = vmatprep.subr.bf16.mxu0 0
    %2811 = vmatpush1.bf16.xpose.msra.mxu0 0
    %2812 = vmatprep.subr.bf16.mxu0 0
    %2813 = vmatpush1.bf16.xpose.msra.mxu0 0
    %2814 = vmatprep.subr.bf16.mxu0 0
    %2815 = vmatpush1.bf16.xpose.msra.mxu0 0
    %2816 = vmatprep.subr.bf16.mxu0 0
    %2817 = vmatpush1.bf16.xpose.msra.mxu0 0
    %2818 = vmatprep.subr.bf16.mxu0 0
    %2819 = vmatpush1.bf16.xpose.msra.mxu0 0
    %2820 = vmatprep.subr.bf16.mxu0 0
    %2821 = vmatpush1.bf16.xpose.msra.mxu0 0
    %2822 = vmatprep.subr.bf16.mxu0 0
    %2823 = vmatpush1.bf16.xpose.msra.mxu0 0
    %2824 = vmatprep.subr.bf16.mxu0 0
    %2825 = vmatpush1.bf16.xpose.msra.mxu0 0
    %2826 = vmatprep.mubr.bf16.mxu0 %v2788
    %2827 = vmatmul.mubr.bf16.gmra.mrb[0].mxu0 %v2787
    %v2828 = vpop.f32.mrb[0].mxu0
    %v2829 = vadd.f32 0.0, %v2828
    %v2830 = vpop.f32.mrb[0].mxu0
    %v2831 = vpop.f32.mrb[0].mxu0
    %v2832 = vpop.f32.mrb[0].mxu0
    %2833 = vdwg.mxu0
    %2834 = vmatprep.subr.bf16.mxu0 %v2449
    %2835 = vmatpush1.bf16.xpose.msra.mxu0 %v2448
    %2836 = vmatprep.subr.bf16.mxu0 0
    %2837 = vmatpush1.bf16.xpose.msra.mxu0 0
    %2838 = vmatprep.subr.bf16.mxu0 0
    %2839 = vmatpush1.bf16.xpose.msra.mxu0 0
    %2840 = vmatprep.subr.bf16.mxu0 0
    %2841 = vmatpush1.bf16.xpose.msra.mxu0 0
    %2842 = vmatprep.subr.bf16.mxu0 0
    %2843 = vmatpush1.bf16.xpose.msra.mxu0 0
    %2844 = vmatprep.subr.bf16.mxu0 0
    %2845 = vmatpush1.bf16.xpose.msra.mxu0 0
    %2846 = vmatprep.subr.bf16.mxu0 0
    %2847 = vmatpush1.bf16.xpose.msra.mxu0 0
    %2848 = vmatprep.subr.bf16.mxu0 0
    %2849 = vmatpush1.bf16.xpose.msra.mxu0 0
    %2850 = vmatprep.subr.bf16.mxu0 0
    %2851 = vmatpush1.bf16.xpose.msra.mxu0 0
    %2852 = vmatprep.subr.bf16.mxu0 0
    %2853 = vmatpush1.bf16.xpose.msra.mxu0 0
    %2854 = vmatprep.subr.bf16.mxu0 0
    %2855 = vmatpush1.bf16.xpose.msra.mxu0 0
    %2856 = vmatprep.subr.bf16.mxu0 0
    %2857 = vmatpush1.bf16.xpose.msra.mxu0 0
    %2858 = vmatprep.subr.bf16.mxu0 0
    %2859 = vmatpush1.bf16.xpose.msra.mxu0 0
    %2860 = vmatprep.subr.bf16.mxu0 0
    %2861 = vmatpush1.bf16.xpose.msra.mxu0 0
    %2862 = vmatprep.subr.bf16.mxu0 0
    %2863 = vmatpush1.bf16.xpose.msra.mxu0 0
    %2864 = vmatprep.subr.bf16.mxu0 0
    %2865 = vmatpush1.bf16.xpose.msra.mxu0 0
    %2866 = vmatprep.mubr.bf16.mxu0 %v2790
    %2867 = vmatmul.mubr.bf16.gmra.mrb[0].mxu0 %v2789
    %v2868 = vpop.f32.mrb[0].mxu0
    %v2869 = vadd.f32 %v2829, %v2868
    %v2870 = vpop.f32.mrb[0].mxu0
    %v2871 = vpop.f32.mrb[0].mxu0
    %v2872 = vpop.f32.mrb[0].mxu0
    %2873 = vdwg.mxu0
    %2874 = vmatprep.subr.bf16.mxu0 %v2451
    %2875 = vmatpush1.bf16.xpose.msra.mxu0 %v2450
    %2876 = vmatprep.subr.bf16.mxu0 0
    %2877 = vmatpush1.bf16.xpose.msra.mxu0 0
    %2878 = vmatprep.subr.bf16.mxu0 0
    %2879 = vmatpush1.bf16.xpose.msra.mxu0 0
    %2880 = vmatprep.subr.bf16.mxu0 0
    %2881 = vmatpush1.bf16.xpose.msra.mxu0 0
    %2882 = vmatprep.subr.bf16.mxu0 0
    %2883 = vmatpush1.bf16.xpose.msra.mxu0 0
    %2884 = vmatprep.subr.bf16.mxu0 0
    %2885 = vmatpush1.bf16.xpose.msra.mxu0 0
    %2886 = vmatprep.subr.bf16.mxu0 0
    %2887 = vmatpush1.bf16.xpose.msra.mxu0 0
    %2888 = vmatprep.subr.bf16.mxu0 0
    %2889 = vmatpush1.bf16.xpose.msra.mxu0 0
    %2890 = vmatprep.subr.bf16.mxu0 0
    %2891 = vmatpush1.bf16.xpose.msra.mxu0 0
    %2892 = vmatprep.subr.bf16.mxu0 0
    %2893 = vmatpush1.bf16.xpose.msra.mxu0 0
    %2894 = vmatprep.subr.bf16.mxu0 0
    %2895 = vmatpush1.bf16.xpose.msra.mxu0 0
    %2896 = vmatprep.subr.bf16.mxu0 0
    %2897 = vmatpush1.bf16.xpose.msra.mxu0 0
    %2898 = vmatprep.subr.bf16.mxu0 0
    %2899 = vmatpush1.bf16.xpose.msra.mxu0 0
    %2900 = vmatprep.subr.bf16.mxu0 0
    %2901 = vmatpush1.bf16.xpose.msra.mxu0 0
    %2902 = vmatprep.subr.bf16.mxu0 0
    %2903 = vmatpush1.bf16.xpose.msra.mxu0 0
    %2904 = vmatprep.subr.bf16.mxu0 0
    %2905 = vmatpush1.bf16.xpose.msra.mxu0 0
    %2906 = vmatprep.mubr.bf16.mxu0 %v2792
    %2907 = vmatmul.mubr.bf16.gmra.mrb[0].mxu0 %v2791
    %v2908 = vpop.f32.mrb[0].mxu0
    %v2909 = vadd.f32 %v2869, %v2908
    %v2910 = vpop.f32.mrb[0].mxu0
    %v2911 = vpop.f32.mrb[0].mxu0
    %v2912 = vpop.f32.mrb[0].mxu0
    %2913 = vdwg.mxu0
    %2914 = vmatprep.subr.bf16.mxu0 0
    %2915 = vmatpush1.bf16.xpose.msra.mxu0 %v2452
    %2916 = vmatprep.subr.bf16.mxu0 0
    %2917 = vmatpush1.bf16.xpose.msra.mxu0 0
    %2918 = vmatprep.subr.bf16.mxu0 0
    %2919 = vmatpush1.bf16.xpose.msra.mxu0 0
    %2920 = vmatprep.subr.bf16.mxu0 0
    %2921 = vmatpush1.bf16.xpose.msra.mxu0 0
    %2922 = vmatprep.subr.bf16.mxu0 0
    %2923 = vmatpush1.bf16.xpose.msra.mxu0 0
    %2924 = vmatprep.subr.bf16.mxu0 0
    %2925 = vmatpush1.bf16.xpose.msra.mxu0 0
    %2926 = vmatprep.subr.bf16.mxu0 0
    %2927 = vmatpush1.bf16.xpose.msra.mxu0 0
    %2928 = vmatprep.subr.bf16.mxu0 0
    %2929 = vmatpush1.bf16.xpose.msra.mxu0 0
    %2930 = vmatprep.subr.bf16.mxu0 0
    %2931 = vmatpush1.bf16.xpose.msra.mxu0 0
    %2932 = vmatprep.subr.bf16.mxu0 0
    %2933 = vmatpush1.bf16.xpose.msra.mxu0 0
    %2934 = vmatprep.subr.bf16.mxu0 0
    %2935 = vmatpush1.bf16.xpose.msra.mxu0 0
    %2936 = vmatprep.subr.bf16.mxu0 0
    %2937 = vmatpush1.bf16.xpose.msra.mxu0 0
    %2938 = vmatprep.subr.bf16.mxu0 0
    %2939 = vmatpush1.bf16.xpose.msra.mxu0 0
    %2940 = vmatprep.subr.bf16.mxu0 0
    %2941 = vmatpush1.bf16.xpose.msra.mxu0 0
    %2942 = vmatprep.subr.bf16.mxu0 0
    %2943 = vmatpush1.bf16.xpose.msra.mxu0 0
    %2944 = vmatprep.subr.bf16.mxu0 0
    %2945 = vmatpush1.bf16.xpose.msra.mxu0 0
    %2946 = vmatprep.mubr.bf16.mxu0 0
    %2947 = vmatmul.mubr.bf16.gmra.mrb[0].mxu0 %v2793
    %v2948 = vpop.f32.mrb[0].mxu0
    %v2949 = vadd.f32 %v2909, %v2948
    %v2950 = vpop.f32.mrb[0].mxu0
    %v2951 = vpop.f32.mrb[0].mxu0
    %v2952 = vpop.f32.mrb[0].mxu0
    %2953 = vdwg.mxu0
    %v2954 = vld [vmem:[%s2] sm:$0xff]
    %v2955 = vld [vmem:[%s2 + $0x8] sm:$0xff]
    %v2956 = vlaneseq
    %v2957 = vand.u32 %v2956, 127
    %v2958 = vmul.f32 %v2954, %v2615
    %2960 = vrot.lane.b32.xlu0 %v2782, 1
    %v2961 = vpop.permute.xlu0 %2960
    %v2963 = vmul.f32 %v2954, %v2961
    %2965 = vrot.lane.b32.xlu0 %v2963, 127
    %v2966 = vpop.permute.xlu0 %2965
    %v2968 = vadd.f32 %v2958, %v2966
    %2970 = vrot.lane.b32.xlu0 %v2949, 2
    %v2971 = vpop.permute.xlu0 %2970
    %v2973 = vmul.f32 %v2954, %v2971
    %2975 = vrot.lane.b32.xlu0 %v2973, 126
    %v2976 = vpop.permute.xlu0 %2975
    %v2978 = vadd.f32 %v2968, %v2976
    %2980 = vrot.lane.b32.xlu0 %v2615, 3
    %v2981 = vpop.permute.xlu0 %2980
    %v2983 = vmul.f32 %v2954, %v2981
    %2984 = vrot.lane.b32.xlu0 %v2782, 4
    %v2985 = vpop.permute.xlu0 %2984
    %v2987 = vmul.f32 %v2954, %v2985
    %2989 = vrot.lane.b32.xlu0 %v2987, 127
    %v2990 = vpop.permute.xlu0 %2989
    %v2992 = vadd.f32 %v2983, %v2990
    %2993 = vrot.lane.b32.xlu0 %v2949, 5
    %v2994 = vpop.permute.xlu0 %2993
    %v2996 = vmul.f32 %v2954, %v2994
    %2998 = vrot.lane.b32.xlu0 %v2996, 126
    %v2999 = vpop.permute.xlu0 %2998
    %v3001 = vadd.f32 %v2992, %v2999
    %3002 = vrot.lane.b32.xlu0 %v2615, 6
    %v3003 = vpop.permute.xlu0 %3002
    %v3005 = vmul.f32 %v2954, %v3003
    %3006 = vrot.lane.b32.xlu0 %v2782, 7
    %v3007 = vpop.permute.xlu0 %3006
    %v3009 = vmul.f32 %v2954, %v3007
    %3011 = vrot.lane.b32.xlu0 %v3009, 127
    %v3012 = vpop.permute.xlu0 %3011
    %v3014 = vadd.f32 %v3005, %v3012
    %3015 = vrot.lane.b32.xlu0 %v2949, 8
    %v3016 = vpop.permute.xlu0 %3015
    %v3018 = vmul.f32 %v2954, %v3016
    %3020 = vrot.lane.b32.xlu0 %v3018, 126
    %v3021 = vpop.permute.xlu0 %3020
    %v3023 = vadd.f32 %v3014, %v3021
    %v3024 = vsub.f32 %v2615, %v2978
    %3026 = vrot.lane.b32.xlu0 %v3001, 125
    %v3027 = vpop.permute.xlu0 %3026
    %v3029 = vsub.f32 %v2782, %v3027
    %3031 = vrot.lane.b32.xlu0 %v3023, 122
    %v3032 = vpop.permute.xlu0 %3031
    %v3034 = vsub.f32 %v2949, %v3032
    %vm3035 = vcmp.eq.s32.totalorder %v2957, 0
    %v3036 = vsel %vm3035, 1, 0
    %v3037 = vcvt.s32.f32 %v3036
    %3039 = vset.pattern.permute.xlu0 0
    %3040 = vperm.xlu0 %3039, %v2954
    %v3041 = vpop.permute.xlu0 %3040
    %v3043 = vmul.f32 %v3041, %v3037
    %3044 = vset.pattern.permute.xlu0 3
    %3045 = vperm.xlu0 %3044, %v2954
    %v3046 = vpop.permute.xlu0 %3045
    %v3048 = vmul.f32 %v3046, %v3037
    %3049 = vset.pattern.permute.xlu0 6
    %3050 = vperm.xlu0 %3049, %v2954
    %v3051 = vpop.permute.xlu0 %3050
    %v3053 = vmul.f32 %v3051, %v3037
    %3054 = vset.pattern.permute.xlu0 1
    %3055 = vperm.xlu0 %3054, %v2954
    %v3056 = vpop.permute.xlu0 %3055
    %v3058 = vmul.f32 %v3056, %v3037
    %3059 = vset.pattern.permute.xlu0 4
    %3060 = vperm.xlu0 %3059, %v2954
    %v3061 = vpop.permute.xlu0 %3060
    %v3063 = vmul.f32 %v3061, %v3037
    %3064 = vset.pattern.permute.xlu0 7
    %3065 = vperm.xlu0 %3064, %v2954
    %v3066 = vpop.permute.xlu0 %3065
    %v3068 = vmul.f32 %v3066, %v3037
    %3069 = vset.pattern.permute.xlu0 2
    %3070 = vperm.xlu0 %3069, %v2954
    %v3071 = vpop.permute.xlu0 %3070
    %v3073 = vmul.f32 %v3071, %v3037
    %3074 = vset.pattern.permute.xlu0 5
    %3075 = vperm.xlu0 %3074, %v2954
    %v3076 = vpop.permute.xlu0 %3075
    %v3078 = vmul.f32 %v3076, %v3037
    %3079 = vset.pattern.permute.xlu0 8
    %3080 = vperm.xlu0 %3079, %v2954
    %v3081 = vpop.permute.xlu0 %3080
    %v3083 = vmul.f32 %v3081, %v3037
    %3085 = vset.pattern.permute.xlu0 0
    %3086 = vperm.xlu0 %3085, %v3024
    %v3087 = vpop.permute.xlu0 %3086
    %v3089 = vmul.f32 %v3087, %v3037
    %3091 = vset.pattern.permute.xlu0 0
    %3092 = vperm.xlu0 %3091, %v3029
    %v3093 = vpop.permute.xlu0 %3092
    %v3095 = vmul.f32 %v3093, %v3037
    %3097 = vset.pattern.permute.xlu0 0
    %3098 = vperm.xlu0 %3097, %v3034
    %v3099 = vpop.permute.xlu0 %3098
    %v3101 = vmul.f32 %v3099, %v3037
    %3102 = vrot.lane.b32.xlu0 %v2954, 119
    %v3103 = vpop.permute.xlu0 %3102
    %v3105 = vmul.f32 %v2954, %v3103
    %3106 = vrot.lane.b32.xlu0 %v2954, 117
    %v3107 = vpop.permute.xlu0 %3106
    %v3109 = vmul.f32 %v2954, %v3107
    %3111 = vrot.lane.b32.xlu0 %v3109, 127
    %v3112 = vpop.permute.xlu0 %3111
    %v3114 = vadd.f32 %v3105, %v3112
    %3115 = vrot.lane.b32.xlu0 %v2954, 115
    %v3116 = vpop.permute.xlu0 %3115
    %v3118 = vmul.f32 %v2954, %v3116
    %3120 = vrot.lane.b32.xlu0 %v3118, 126
    %v3121 = vpop.permute.xlu0 %3120
    %v3123 = vadd.f32 %v3114, %v3121
    %3124 = vrot.lane.b32.xlu0 %v2954, 118
    %v3125 = vpop.permute.xlu0 %3124
    %v3127 = vmul.f32 %v2954, %v3125
    %3128 = vrot.lane.b32.xlu0 %v2954, 116
    %v3129 = vpop.permute.xlu0 %3128
    %v3131 = vmul.f32 %v2954, %v3129
    %3133 = vrot.lane.b32.xlu0 %v3131, 127
    %v3134 = vpop.permute.xlu0 %3133
    %v3136 = vadd.f32 %v3127, %v3134
    %3137 = vrot.lane.b32.xlu0 %v2954, 114
    %v3138 = vpop.permute.xlu0 %3137
    %v3140 = vmul.f32 %v2954, %v3138
    %3142 = vrot.lane.b32.xlu0 %v3140, 126
    %v3143 = vpop.permute.xlu0 %3142
    %v3145 = vadd.f32 %v3136, %v3143
    %3146 = vrot.lane.b32.xlu0 %v3118, 127
    %v3147 = vpop.permute.xlu0 %3146
    %v3149 = vadd.f32 %v3109, %v3147
    %3150 = vrot.lane.b32.xlu0 %v2954, 113
    %v3151 = vpop.permute.xlu0 %3150
    %v3153 = vmul.f32 %v2954, %v3151
    %3155 = vrot.lane.b32.xlu0 %v3153, 126
    %v3156 = vpop.permute.xlu0 %3155
    %v3158 = vadd.f32 %v3149, %v3156
    %3159 = vrot.lane.b32.xlu0 %v2954, 122
    %v3160 = vpop.permute.xlu0 %3159
    %v3162 = vmul.f32 %v2954, %v3160
    %3163 = vrot.lane.b32.xlu0 %v2954, 120
    %v3164 = vpop.permute.xlu0 %3163
    %v3166 = vmul.f32 %v2954, %v3164
    %3168 = vrot.lane.b32.xlu0 %v3166, 127
    %v3169 = vpop.permute.xlu0 %3168
    %v3171 = vadd.f32 %v3162, %v3169
    %3173 = vrot.lane.b32.xlu0 %v3127, 126
    %v3174 = vpop.permute.xlu0 %3173
    %v3176 = vadd.f32 %v3171, %v3174
    %3177 = vrot.lane.b32.xlu0 %v2954, 121
    %v3178 = vpop.permute.xlu0 %3177
    %v3180 = vmul.f32 %v2954, %v3178
    %3182 = vrot.lane.b32.xlu0 %v3105, 127
    %v3183 = vpop.permute.xlu0 %3182
    %v3185 = vadd.f32 %v3180, %v3183
    %3186 = vrot.lane.b32.xlu0 %v3109, 126
    %v3187 = vpop.permute.xlu0 %3186
    %v3189 = vadd.f32 %v3185, %v3187
    %3190 = vrot.lane.b32.xlu0 %v3127, 127
    %v3191 = vpop.permute.xlu0 %3190
    %v3193 = vadd.f32 %v3166, %v3191
    %3194 = vrot.lane.b32.xlu0 %v3131, 126
    %v3195 = vpop.permute.xlu0 %3194
    %v3197 = vadd.f32 %v3193, %v3195
    %3198 = vrot.lane.b32.xlu0 %v2954, 125
    %v3199 = vpop.permute.xlu0 %3198
    %v3201 = vmul.f32 %v2954, %v3199
    %3202 = vrot.lane.b32.xlu0 %v2954, 123
    %v3203 = vpop.permute.xlu0 %3202
    %v3205 = vmul.f32 %v2954, %v3203
    %3207 = vrot.lane.b32.xlu0 %v3205, 127
    %v3208 = vpop.permute.xlu0 %3207
    %v3210 = vadd.f32 %v3201, %v3208
    %3212 = vrot.lane.b32.xlu0 %v3180, 126
    %v3213 = vpop.permute.xlu0 %3212
    %v3215 = vadd.f32 %v3210, %v3213
    %3216 = vrot.lane.b32.xlu0 %v2954, 124
    %v3217 = vpop.permute.xlu0 %3216
    %v3219 = vmul.f32 %v2954, %v3217
    %3221 = vrot.lane.b32.xlu0 %v3162, 127
    %v3222 = vpop.permute.xlu0 %3221
    %v3224 = vadd.f32 %v3219, %v3222
    %3225 = vrot.lane.b32.xlu0 %v3166, 126
    %v3226 = vpop.permute.xlu0 %3225
    %v3228 = vadd.f32 %v3224, %v3226
    %3229 = vrot.lane.b32.xlu0 %v3180, 127
    %v3230 = vpop.permute.xlu0 %3229
    %v3232 = vadd.f32 %v3205, %v3230
    %3233 = vrot.lane.b32.xlu0 %v3105, 126
    %v3234 = vpop.permute.xlu0 %3233
    %v3236 = vadd.f32 %v3232, %v3234
    %3237 = vrot.lane.b32.xlu0 %v2615, 1
    %v3238 = vpop.permute.xlu0 %3237
    %v3240 = vsub.f32 %v2615, %v3238
    %v3241 = vsub.f32 %v2782, %v2961
    %3242 = vrot.lane.b32.xlu0 %v2949, 1
    %v3243 = vpop.permute.xlu0 %3242
    %v3245 = vsub.f32 %v2949, %v3243
    %3247 = vrot.lane.b32.xlu0 %v3240, 127
    %v3248 = vpop.permute.xlu0 %3247
    %v3250 = vmul.f32 %v2954, %v3248
    %v3251 = vmul.f32 %v2954, %v3241
    %3253 = vrot.lane.b32.xlu0 %v3251, 127
    %v3254 = vpop.permute.xlu0 %3253
    %v3256 = vadd.f32 %v3250, %v3254
    %3258 = vrot.lane.b32.xlu0 %v3245, 1
    %v3259 = vpop.permute.xlu0 %3258
    %v3261 = vmul.f32 %v2954, %v3259
    %3263 = vrot.lane.b32.xlu0 %v3261, 126
    %v3264 = vpop.permute.xlu0 %3263
    %v3266 = vadd.f32 %v3256, %v3264
    %3267 = vrot.lane.b32.xlu0 %v3240, 2
    %v3268 = vpop.permute.xlu0 %3267
    %v3270 = vmul.f32 %v2954, %v3268
    %3272 = vrot.lane.b32.xlu0 %v3241, 3
    %v3273 = vpop.permute.xlu0 %3272
    %v3275 = vmul.f32 %v2954, %v3273
    %3277 = vrot.lane.b32.xlu0 %v3275, 127
    %v3278 = vpop.permute.xlu0 %3277
    %v3280 = vadd.f32 %v3270, %v3278
    %3281 = vrot.lane.b32.xlu0 %v3245, 4
    %v3282 = vpop.permute.xlu0 %3281
    %v3284 = vmul.f32 %v2954, %v3282
    %3286 = vrot.lane.b32.xlu0 %v3284, 126
    %v3287 = vpop.permute.xlu0 %3286
    %v3289 = vadd.f32 %v3280, %v3287
    %3290 = vrot.lane.b32.xlu0 %v3240, 5
    %v3291 = vpop.permute.xlu0 %3290
    %v3293 = vmul.f32 %v2954, %v3291
    %3294 = vrot.lane.b32.xlu0 %v3241, 6
    %v3295 = vpop.permute.xlu0 %3294
    %v3297 = vmul.f32 %v2954, %v3295
    %3299 = vrot.lane.b32.xlu0 %v3297, 127
    %v3300 = vpop.permute.xlu0 %3299
    %v3302 = vadd.f32 %v3293, %v3300
    %3303 = vrot.lane.b32.xlu0 %v3245, 7
    %v3304 = vpop.permute.xlu0 %3303
    %v3306 = vmul.f32 %v2954, %v3304
    %3308 = vrot.lane.b32.xlu0 %v3306, 126
    %v3309 = vpop.permute.xlu0 %3308
    %v3311 = vadd.f32 %v3302, %v3309
    %v3312 = vadd.f32 %v3266, %v2615
    %3313 = vrot.lane.b32.xlu0 %v2782, 3
    %v3314 = vpop.permute.xlu0 %3313
    %v3316 = vadd.f32 %v3289, %v3314
    %3317 = vrot.lane.b32.xlu0 %v2949, 6
    %v3318 = vpop.permute.xlu0 %3317
    %v3320 = vadd.f32 %v3311, %v3318
    %3321 = vrot.lane.b32.xlu0 %v2615, 127
    %v3322 = vpop.permute.xlu0 %3321
    %v3324 = vmul.f32 %v3123, %v3322
    %3325 = vrot.lane.b32.xlu0 %v2782, 127
    %v3326 = vpop.permute.xlu0 %3325
    %v3328 = vmul.f32 %v3145, %v3326
    %v3329 = vadd.f32 %v3324, %v3328
    %3330 = vrot.lane.b32.xlu0 %v2949, 127
    %v3331 = vpop.permute.xlu0 %3330
    %v3333 = vmul.f32 %v3158, %v3331
    %v3334 = vadd.f32 %v3329, %v3333
    %3335 = vrot.lane.b32.xlu0 %v2615, 2
    %v3336 = vpop.permute.xlu0 %3335
    %v3338 = vmul.f32 %v3176, %v3336
    %3339 = vrot.lane.b32.xlu0 %v2782, 2
    %v3340 = vpop.permute.xlu0 %3339
    %v3342 = vmul.f32 %v3189, %v3340
    %v3343 = vadd.f32 %v3338, %v3342
    %v3344 = vmul.f32 %v3197, %v2971
    %v3345 = vadd.f32 %v3343, %v3344
    %3346 = vrot.lane.b32.xlu0 %v2615, 5
    %v3347 = vpop.permute.xlu0 %3346
    %v3349 = vmul.f32 %v3215, %v3347
    %3350 = vrot.lane.b32.xlu0 %v2782, 5
    %v3351 = vpop.permute.xlu0 %3350
    %v3353 = vmul.f32 %v3228, %v3351
    %v3354 = vadd.f32 %v3349, %v3353
    %v3355 = vmul.f32 %v3236, %v2994
    %v3356 = vadd.f32 %v3354, %v3355
    %v3357 = vsub.f32 %v3312, %v3334
    %v3358 = vsub.f32 %v3316, %v3345
    %v3359 = vsub.f32 %v3320, %v3356
    %vm3360 = vcmp.eq.s32.totalorder %v2957, 1
    %v3361 = vsel %vm3360, 1, 0
    %v3362 = vcvt.s32.f32 %v3361
    %3364 = vset.pattern.permute.xlu0 0
    %3365 = vperm.xlu0 %3364, %v3123
    %v3366 = vpop.permute.xlu0 %3365
    %v3368 = vmul.f32 %v3366, %v3362
    %v3369 = vadd.f32 %v3043, %v3368
    %3371 = vset.pattern.permute.xlu0 3
    %3372 = vperm.xlu0 %3371, %v3176
    %v3373 = vpop.permute.xlu0 %3372
    %v3375 = vmul.f32 %v3373, %v3362
    %v3376 = vadd.f32 %v3048, %v3375
    %3378 = vset.pattern.permute.xlu0 6
    %3379 = vperm.xlu0 %3378, %v3215
    %v3380 = vpop.permute.xlu0 %3379
    %v3382 = vmul.f32 %v3380, %v3362
    %v3383 = vadd.f32 %v3053, %v3382
    %3385 = vset.pattern.permute.xlu0 0
    %3386 = vperm.xlu0 %3385, %v3145
    %v3387 = vpop.permute.xlu0 %3386
    %v3389 = vmul.f32 %v3387, %v3362
    %v3390 = vadd.f32 %v3058, %v3389
    %3392 = vset.pattern.permute.xlu0 3
    %3393 = vperm.xlu0 %3392, %v3189
    %v3394 = vpop.permute.xlu0 %3393
    %v3396 = vmul.f32 %v3394, %v3362
    %v3397 = vadd.f32 %v3063, %v3396
    %3399 = vset.pattern.permute.xlu0 6
    %3400 = vperm.xlu0 %3399, %v3228
    %v3401 = vpop.permute.xlu0 %3400
    %v3403 = vmul.f32 %v3401, %v3362
    %v3404 = vadd.f32 %v3068, %v3403
    %3406 = vset.pattern.permute.xlu0 0
    %3407 = vperm.xlu0 %3406, %v3158
    %v3408 = vpop.permute.xlu0 %3407
    %v3410 = vmul.f32 %v3408, %v3362
    %v3411 = vadd.f32 %v3073, %v3410
    %3413 = vset.pattern.permute.xlu0 3
    %3414 = vperm.xlu0 %3413, %v3197
    %v3415 = vpop.permute.xlu0 %3414
    %v3417 = vmul.f32 %v3415, %v3362
    %v3418 = vadd.f32 %v3078, %v3417
    %3420 = vset.pattern.permute.xlu0 6
    %3421 = vperm.xlu0 %3420, %v3236
    %v3422 = vpop.permute.xlu0 %3421
    %v3424 = vmul.f32 %v3422, %v3362
    %v3425 = vadd.f32 %v3083, %v3424
    %3427 = vset.pattern.permute.xlu0 0
    %3428 = vperm.xlu0 %3427, %v3357
    %v3429 = vpop.permute.xlu0 %3428
    %v3431 = vmul.f32 %v3429, %v3362
    %v3432 = vadd.f32 %v3089, %v3431
    %3434 = vset.pattern.permute.xlu0 3
    %3435 = vperm.xlu0 %3434, %v3358
    %v3436 = vpop.permute.xlu0 %3435
    %v3438 = vmul.f32 %v3436, %v3362
    %v3439 = vadd.f32 %v3095, %v3438
    %3441 = vset.pattern.permute.xlu0 6
    %3442 = vperm.xlu0 %3441, %v3359
    %v3443 = vpop.permute.xlu0 %3442
    %v3445 = vmul.f32 %v3443, %v3362
    %v3446 = vadd.f32 %v3101, %v3445
    %3447 = vrot.lane.b32.xlu0 %v2954, 110
    %v3448 = vpop.permute.xlu0 %3447
    %v3450 = vmul.f32 %v3123, %v3448
    %3451 = vrot.lane.b32.xlu0 %v2954, 107
    %v3452 = vpop.permute.xlu0 %3451
    %v3454 = vmul.f32 %v3145, %v3452
    %v3455 = vadd.f32 %v3450, %v3454
    %3456 = vrot.lane.b32.xlu0 %v2954, 104
    %v3457 = vpop.permute.xlu0 %3456
    %v3459 = vmul.f32 %v3158, %v3457
    %v3460 = vadd.f32 %v3455, %v3459
    %3461 = vrot.lane.b32.xlu0 %v2954, 109
    %v3462 = vpop.permute.xlu0 %3461
    %v3464 = vmul.f32 %v3123, %v3462
    %3465 = vrot.lane.b32.xlu0 %v2954, 106
    %v3466 = vpop.permute.xlu0 %3465
    %v3468 = vmul.f32 %v3145, %v3466
    %v3469 = vadd.f32 %v3464, %v3468
    %3470 = vrot.lane.b32.xlu0 %v2954, 103
    %v3471 = vpop.permute.xlu0 %3470
    %v3473 = vmul.f32 %v3158, %v3471
    %v3474 = vadd.f32 %v3469, %v3473
    %3475 = vrot.lane.b32.xlu0 %v2954, 108
    %v3476 = vpop.permute.xlu0 %3475
    %v3478 = vmul.f32 %v3123, %v3476
    %3479 = vrot.lane.b32.xlu0 %v2954, 105
    %v3480 = vpop.permute.xlu0 %3479
    %v3482 = vmul.f32 %v3145, %v3480
    %v3483 = vadd.f32 %v3478, %v3482
    %3484 = vrot.lane.b32.xlu0 %v2954, 102
    %v3485 = vpop.permute.xlu0 %3484
    %v3487 = vmul.f32 %v3158, %v3485
    %v3488 = vadd.f32 %v3483, %v3487
    %v3489 = vmul.f32 %v3176, %v3151
    %v3490 = vmul.f32 %v3189, %v3448
    %v3491 = vadd.f32 %v3489, %v3490
    %v3492 = vmul.f32 %v3197, %v3452
    %v3493 = vadd.f32 %v3491, %v3492
    %3494 = vrot.lane.b32.xlu0 %v2954, 112
    %v3495 = vpop.permute.xlu0 %3494
    %v3497 = vmul.f32 %v3176, %v3495
    %v3498 = vmul.f32 %v3189, %v3462
    %v3499 = vadd.f32 %v3497, %v3498
    %v3500 = vmul.f32 %v3197, %v3466
    %v3501 = vadd.f32 %v3499, %v3500
    %3502 = vrot.lane.b32.xlu0 %v2954, 111
    %v3503 = vpop.permute.xlu0 %3502
    %v3505 = vmul.f32 %v3176, %v3503
    %v3506 = vmul.f32 %v3189, %v3476
    %v3507 = vadd.f32 %v3505, %v3506
    %v3508 = vmul.f32 %v3197, %v3480
    %v3509 = vadd.f32 %v3507, %v3508
    %v3510 = vmul.f32 %v3215, %v3129
    %v3511 = vmul.f32 %v3228, %v3151
    %v3512 = vadd.f32 %v3510, %v3511
    %v3513 = vmul.f32 %v3236, %v3448
    %v3514 = vadd.f32 %v3512, %v3513
    %v3515 = vmul.f32 %v3215, %v3116
    %v3516 = vmul.f32 %v3228, %v3495
    %v3517 = vadd.f32 %v3515, %v3516
    %v3518 = vmul.f32 %v3236, %v3462
    %v3519 = vadd.f32 %v3517, %v3518
    %v3520 = vmul.f32 %v3215, %v3138
    %v3521 = vmul.f32 %v3228, %v3503
    %v3522 = vadd.f32 %v3520, %v3521
    %v3523 = vmul.f32 %v3236, %v3476
    %v3524 = vadd.f32 %v3522, %v3523
    %3525 = vrot.lane.b32.xlu0 %v3240, 126
    %v3526 = vpop.permute.xlu0 %3525
    %v3528 = vmul.f32 %v3123, %v3526
    %3529 = vrot.lane.b32.xlu0 %v3241, 126
    %v3530 = vpop.permute.xlu0 %3529
    %v3532 = vmul.f32 %v3145, %v3530
    %v3533 = vadd.f32 %v3528, %v3532
    %3534 = vrot.lane.b32.xlu0 %v3245, 126
    %v3535 = vpop.permute.xlu0 %3534
    %v3537 = vmul.f32 %v3158, %v3535
    %v3538 = vadd.f32 %v3533, %v3537
    %3539 = vrot.lane.b32.xlu0 %v3240, 1
    %v3540 = vpop.permute.xlu0 %3539
    %v3542 = vmul.f32 %v3176, %v3540
    %3543 = vrot.lane.b32.xlu0 %v3241, 1
    %v3544 = vpop.permute.xlu0 %3543
    %v3546 = vmul.f32 %v3189, %v3544
    %v3547 = vadd.f32 %v3542, %v3546
    %v3548 = vmul.f32 %v3197, %v3259
    %v3549 = vadd.f32 %v3547, %v3548
    %3550 = vrot.lane.b32.xlu0 %v3240, 4
    %v3551 = vpop.permute.xlu0 %3550
    %v3553 = vmul.f32 %v3215, %v3551
    %3554 = vrot.lane.b32.xlu0 %v3241, 4
    %v3555 = vpop.permute.xlu0 %3554
    %v3557 = vmul.f32 %v3228, %v3555
    %v3558 = vadd.f32 %v3553, %v3557
    %v3559 = vmul.f32 %v3236, %v3282
    %v3560 = vadd.f32 %v3558, %v3559
    %v3561 = vadd.f32 %v3538, %v3312
    %v3562 = vadd.f32 %v3549, %v3316
    %v3563 = vadd.f32 %v3560, %v3320
    %3564 = vrot.lane.b32.xlu0 %v2615, 126
    %v3565 = vpop.permute.xlu0 %3564
    %v3567 = vmul.f32 %v3460, %v3565
    %3568 = vrot.lane.b32.xlu0 %v2782, 126
    %v3569 = vpop.permute.xlu0 %3568
    %v3571 = vmul.f32 %v3474, %v3569
    %v3572 = vadd.f32 %v3567, %v3571
    %3573 = vrot.lane.b32.xlu0 %v2949, 126
    %v3574 = vpop.permute.xlu0 %3573
    %v3576 = vmul.f32 %v3488, %v3574
    %v3577 = vadd.f32 %v3572, %v3576
    %v3578 = vmul.f32 %v3493, %v3238
    %v3579 = vmul.f32 %v3501, %v2961
    %v3580 = vadd.f32 %v3578, %v3579
    %v3581 = vmul.f32 %v3509, %v3243
    %v3582 = vadd.f32 %v3580, %v3581
    %3583 = vrot.lane.b32.xlu0 %v2615, 4
    %v3584 = vpop.permute.xlu0 %3583
    %v3586 = vmul.f32 %v3514, %v3584
    %v3587 = vmul.f32 %v3519, %v2985
    %v3588 = vadd.f32 %v3586, %v3587
    %3589 = vrot.lane.b32.xlu0 %v2949, 4
    %v3590 = vpop.permute.xlu0 %3589
    %v3592 = vmul.f32 %v3524, %v3590
    %v3593 = vadd.f32 %v3588, %v3592
    %v3594 = vsub.f32 %v3561, %v3577
    %v3595 = vsub.f32 %v3562, %v3582
    %v3596 = vsub.f32 %v3563, %v3593
    %vm3597 = vcmp.eq.s32.totalorder %v2957, 2
    %v3598 = vsel %vm3597, 1, 0
    %v3599 = vcvt.s32.f32 %v3598
    %3601 = vset.pattern.permute.xlu0 0
    %3602 = vperm.xlu0 %3601, %v3460
    %v3603 = vpop.permute.xlu0 %3602
    %v3605 = vmul.f32 %v3603, %v3599
    %v3606 = vadd.f32 %v3369, %v3605
    %3608 = vset.pattern.permute.xlu0 3
    %3609 = vperm.xlu0 %3608, %v3493
    %v3610 = vpop.permute.xlu0 %3609
    %v3612 = vmul.f32 %v3610, %v3599
    %v3613 = vadd.f32 %v3376, %v3612
    %3615 = vset.pattern.permute.xlu0 6
    %3616 = vperm.xlu0 %3615, %v3514
    %v3617 = vpop.permute.xlu0 %3616
    %v3619 = vmul.f32 %v3617, %v3599
    %v3620 = vadd.f32 %v3383, %v3619
    %3622 = vset.pattern.permute.xlu0 0
    %3623 = vperm.xlu0 %3622, %v3474
    %v3624 = vpop.permute.xlu0 %3623
    %v3626 = vmul.f32 %v3624, %v3599
    %v3627 = vadd.f32 %v3390, %v3626
    %3629 = vset.pattern.permute.xlu0 3
    %3630 = vperm.xlu0 %3629, %v3501
    %v3631 = vpop.permute.xlu0 %3630
    %v3633 = vmul.f32 %v3631, %v3599
    %v3634 = vadd.f32 %v3397, %v3633
    %3636 = vset.pattern.permute.xlu0 6
    %3637 = vperm.xlu0 %3636, %v3519
    %v3638 = vpop.permute.xlu0 %3637
    %v3640 = vmul.f32 %v3638, %v3599
    %v3641 = vadd.f32 %v3404, %v3640
    %3643 = vset.pattern.permute.xlu0 0
    %3644 = vperm.xlu0 %3643, %v3488
    %v3645 = vpop.permute.xlu0 %3644
    %v3647 = vmul.f32 %v3645, %v3599
    %v3648 = vadd.f32 %v3411, %v3647
    %3650 = vset.pattern.permute.xlu0 3
    %3651 = vperm.xlu0 %3650, %v3509
    %v3652 = vpop.permute.xlu0 %3651
    %v3654 = vmul.f32 %v3652, %v3599
    %v3655 = vadd.f32 %v3418, %v3654
    %3657 = vset.pattern.permute.xlu0 6
    %3658 = vperm.xlu0 %3657, %v3524
    %v3659 = vpop.permute.xlu0 %3658
    %v3661 = vmul.f32 %v3659, %v3599
    %v3662 = vadd.f32 %v3425, %v3661
    %3664 = vset.pattern.permute.xlu0 0
    %3665 = vperm.xlu0 %3664, %v3594
    %v3666 = vpop.permute.xlu0 %3665
    %v3668 = vmul.f32 %v3666, %v3599
    %v3669 = vadd.f32 %v3432, %v3668
    %3671 = vset.pattern.permute.xlu0 3
    %3672 = vperm.xlu0 %3671, %v3595
    %v3673 = vpop.permute.xlu0 %3672
    %v3675 = vmul.f32 %v3673, %v3599
    %v3676 = vadd.f32 %v3439, %v3675
    %3678 = vset.pattern.permute.xlu0 6
    %3679 = vperm.xlu0 %3678, %v3596
    %v3680 = vpop.permute.xlu0 %3679
    %v3682 = vmul.f32 %v3680, %v3599
    %v3683 = vadd.f32 %v3446, %v3682
    %3684 = vrot.lane.b32.xlu0 %v2954, 101
    %v3685 = vpop.permute.xlu0 %3684
    %v3687 = vmul.f32 %v3460, %v3685
    %3688 = vrot.lane.b32.xlu0 %v2954, 98
    %v3689 = vpop.permute.xlu0 %3688
    %v3691 = vmul.f32 %v3474, %v3689
    %v3692 = vadd.f32 %v3687, %v3691
    %3693 = vrot.lane.b32.xlu0 %v2954, 95
    %v3694 = vpop.permute.xlu0 %3693
    %v3696 = vmul.f32 %v3488, %v3694
    %v3697 = vadd.f32 %v3692, %v3696
    %3698 = vrot.lane.b32.xlu0 %v2954, 100
    %v3699 = vpop.permute.xlu0 %3698
    %v3701 = vmul.f32 %v3460, %v3699
    %3702 = vrot.lane.b32.xlu0 %v2954, 97
    %v3703 = vpop.permute.xlu0 %3702
    %v3705 = vmul.f32 %v3474, %v3703
    %v3706 = vadd.f32 %v3701, %v3705
    %3707 = vrot.lane.b32.xlu0 %v2954, 94
    %v3708 = vpop.permute.xlu0 %3707
    %v3710 = vmul.f32 %v3488, %v3708
    %v3711 = vadd.f32 %v3706, %v3710
    %3712 = vrot.lane.b32.xlu0 %v2954, 99
    %v3713 = vpop.permute.xlu0 %3712
    %v3715 = vmul.f32 %v3460, %v3713
    %3716 = vrot.lane.b32.xlu0 %v2954, 96
    %v3717 = vpop.permute.xlu0 %3716
    %v3719 = vmul.f32 %v3474, %v3717
    %v3720 = vadd.f32 %v3715, %v3719
    %3721 = vrot.lane.b32.xlu0 %v2954, 93
    %v3722 = vpop.permute.xlu0 %3721
    %v3724 = vmul.f32 %v3488, %v3722
    %v3725 = vadd.f32 %v3720, %v3724
    %v3726 = vmul.f32 %v3493, %v3457
    %v3727 = vmul.f32 %v3501, %v3685
    %v3728 = vadd.f32 %v3726, %v3727
    %v3729 = vmul.f32 %v3509, %v3689
    %v3730 = vadd.f32 %v3728, %v3729
    %v3731 = vmul.f32 %v3493, %v3471
    %v3732 = vmul.f32 %v3501, %v3699
    %v3733 = vadd.f32 %v3731, %v3732
    %v3734 = vmul.f32 %v3509, %v3703
    %v3735 = vadd.f32 %v3733, %v3734
    %v3736 = vmul.f32 %v3493, %v3485
    %v3737 = vmul.f32 %v3501, %v3713
    %v3738 = vadd.f32 %v3736, %v3737
    %v3739 = vmul.f32 %v3509, %v3717
    %v3740 = vadd.f32 %v3738, %v3739
    %v3741 = vmul.f32 %v3514, %v3452
    %v3742 = vmul.f32 %v3519, %v3457
    %v3743 = vadd.f32 %v3741, %v3742
    %v3744 = vmul.f32 %v3524, %v3685
    %v3745 = vadd.f32 %v3743, %v3744
    %v3746 = vmul.f32 %v3514, %v3466
    %v3747 = vmul.f32 %v3519, %v3471
    %v3748 = vadd.f32 %v3746, %v3747
    %v3749 = vmul.f32 %v3524, %v3699
    %v3750 = vadd.f32 %v3748, %v3749
    %v3751 = vmul.f32 %v3514, %v3480
    %v3752 = vmul.f32 %v3519, %v3485
    %v3753 = vadd.f32 %v3751, %v3752
    %v3754 = vmul.f32 %v3524, %v3713
    %v3755 = vadd.f32 %v3753, %v3754
    %3756 = vrot.lane.b32.xlu0 %v3240, 125
    %v3757 = vpop.permute.xlu0 %3756
    %v3759 = vmul.f32 %v3460, %v3757
    %3760 = vrot.lane.b32.xlu0 %v3241, 125
    %v3761 = vpop.permute.xlu0 %3760
    %v3763 = vmul.f32 %v3474, %v3761
    %v3764 = vadd.f32 %v3759, %v3763
    %3765 = vrot.lane.b32.xlu0 %v3245, 125
    %v3766 = vpop.permute.xlu0 %3765
    %v3768 = vmul.f32 %v3488, %v3766
    %v3769 = vadd.f32 %v3764, %v3768
    %v3770 = vmul.f32 %v3493, %v3240
    %v3771 = vmul.f32 %v3501, %v3241
    %v3772 = vadd.f32 %v3770, %v3771
    %v3773 = vmul.f32 %v3509, %v3245
    %v3774 = vadd.f32 %v3772, %v3773
    %3775 = vrot.lane.b32.xlu0 %v3240, 3
    %v3776 = vpop.permute.xlu0 %3775
    %v3778 = vmul.f32 %v3514, %v3776
    %v3779 = vmul.f32 %v3519, %v3273
    %v3780 = vadd.f32 %v3778, %v3779
    %3781 = vrot.lane.b32.xlu0 %v3245, 3
    %v3782 = vpop.permute.xlu0 %3781
    %v3784 = vmul.f32 %v3524, %v3782
    %v3785 = vadd.f32 %v3780, %v3784
    %v3786 = vadd.f32 %v3769, %v3561
    %v3787 = vadd.f32 %v3774, %v3562
    %v3788 = vadd.f32 %v3785, %v3563
    %3789 = vrot.lane.b32.xlu0 %v2615, 125
    %v3790 = vpop.permute.xlu0 %3789
    %v3792 = vmul.f32 %v3697, %v3790
    %3793 = vrot.lane.b32.xlu0 %v2782, 125
    %v3794 = vpop.permute.xlu0 %3793
    %v3796 = vmul.f32 %v3711, %v3794
    %v3797 = vadd.f32 %v3792, %v3796
    %3798 = vrot.lane.b32.xlu0 %v2949, 125
    %v3799 = vpop.permute.xlu0 %3798
    %v3801 = vmul.f32 %v3725, %v3799
    %v3802 = vadd.f32 %v3797, %v3801
    %v3803 = vmul.f32 %v3730, %v2615
    %v3804 = vmul.f32 %v3735, %v2782
    %v3805 = vadd.f32 %v3803, %v3804
    %v3806 = vmul.f32 %v3740, %v2949
    %v3807 = vadd.f32 %v3805, %v3806
    %v3808 = vmul.f32 %v3745, %v2981
    %v3809 = vmul.f32 %v3750, %v3314
    %v3810 = vadd.f32 %v3808, %v3809
    %3811 = vrot.lane.b32.xlu0 %v2949, 3
    %v3812 = vpop.permute.xlu0 %3811
    %v3814 = vmul.f32 %v3755, %v3812
    %v3815 = vadd.f32 %v3810, %v3814
    %v3816 = vsub.f32 %v3786, %v3802
    %v3817 = vsub.f32 %v3787, %v3807
    %v3818 = vsub.f32 %v3788, %v3815
    %vm3819 = vcmp.eq.s32.totalorder %v2957, 3
    %v3820 = vsel %vm3819, 1, 0
    %v3821 = vcvt.s32.f32 %v3820
    %3823 = vset.pattern.permute.xlu0 0
    %3824 = vperm.xlu0 %3823, %v3697
    %v3825 = vpop.permute.xlu0 %3824
    %v3827 = vmul.f32 %v3825, %v3821
    %v3828 = vadd.f32 %v3606, %v3827
    %3830 = vset.pattern.permute.xlu0 3
    %3831 = vperm.xlu0 %3830, %v3730
    %v3832 = vpop.permute.xlu0 %3831
    %v3834 = vmul.f32 %v3832, %v3821
    %v3835 = vadd.f32 %v3613, %v3834
    %3837 = vset.pattern.permute.xlu0 6
    %3838 = vperm.xlu0 %3837, %v3745
    %v3839 = vpop.permute.xlu0 %3838
    %v3841 = vmul.f32 %v3839, %v3821
    %v3842 = vadd.f32 %v3620, %v3841
    %3844 = vset.pattern.permute.xlu0 0
    %3845 = vperm.xlu0 %3844, %v3711
    %v3846 = vpop.permute.xlu0 %3845
    %v3848 = vmul.f32 %v3846, %v3821
    %v3849 = vadd.f32 %v3627, %v3848
    %3851 = vset.pattern.permute.xlu0 3
    %3852 = vperm.xlu0 %3851, %v3735
    %v3853 = vpop.permute.xlu0 %3852
    %v3855 = vmul.f32 %v3853, %v3821
    %v3856 = vadd.f32 %v3634, %v3855
    %3858 = vset.pattern.permute.xlu0 6
    %3859 = vperm.xlu0 %3858, %v3750
    %v3860 = vpop.permute.xlu0 %3859
    %v3862 = vmul.f32 %v3860, %v3821
    %v3863 = vadd.f32 %v3641, %v3862
    %3865 = vset.pattern.permute.xlu0 0
    %3866 = vperm.xlu0 %3865, %v3725
    %v3867 = vpop.permute.xlu0 %3866
    %v3869 = vmul.f32 %v3867, %v3821
    %v3870 = vadd.f32 %v3648, %v3869
    %3872 = vset.pattern.permute.xlu0 3
    %3873 = vperm.xlu0 %3872, %v3740
    %v3874 = vpop.permute.xlu0 %3873
    %v3876 = vmul.f32 %v3874, %v3821
    %v3877 = vadd.f32 %v3655, %v3876
    %3879 = vset.pattern.permute.xlu0 6
    %3880 = vperm.xlu0 %3879, %v3755
    %v3881 = vpop.permute.xlu0 %3880
    %v3883 = vmul.f32 %v3881, %v3821
    %v3884 = vadd.f32 %v3662, %v3883
    %3886 = vset.pattern.permute.xlu0 0
    %3887 = vperm.xlu0 %3886, %v3816
    %v3888 = vpop.permute.xlu0 %3887
    %v3890 = vmul.f32 %v3888, %v3821
    %v3891 = vadd.f32 %v3669, %v3890
    %3893 = vset.pattern.permute.xlu0 3
    %3894 = vperm.xlu0 %3893, %v3817
    %v3895 = vpop.permute.xlu0 %3894
    %v3897 = vmul.f32 %v3895, %v3821
    %v3898 = vadd.f32 %v3676, %v3897
    %3900 = vset.pattern.permute.xlu0 6
    %3901 = vperm.xlu0 %3900, %v3818
    %v3902 = vpop.permute.xlu0 %3901
    %v3904 = vmul.f32 %v3902, %v3821
    %v3905 = vadd.f32 %v3683, %v3904
    %3906 = vrot.lane.b32.xlu0 %v2954, 92
    %v3907 = vpop.permute.xlu0 %3906
    %v3909 = vmul.f32 %v2954, %v3907
    %3910 = vrot.lane.b32.xlu0 %v2954, 90
    %v3911 = vpop.permute.xlu0 %3910
    %v3913 = vmul.f32 %v2954, %v3911
    %3915 = vrot.lane.b32.xlu0 %v3913, 127
    %v3916 = vpop.permute.xlu0 %3915
    %v3918 = vadd.f32 %v3909, %v3916
    %3919 = vrot.lane.b32.xlu0 %v2954, 88
    %v3920 = vpop.permute.xlu0 %3919
    %v3922 = vmul.f32 %v2954, %v3920
    %3924 = vrot.lane.b32.xlu0 %v3922, 126
    %v3925 = vpop.permute.xlu0 %3924
    %v3927 = vadd.f32 %v3918, %v3925
    %3928 = vrot.lane.b32.xlu0 %v2954, 91
    %v3929 = vpop.permute.xlu0 %3928
    %v3931 = vmul.f32 %v2954, %v3929
    %3932 = vrot.lane.b32.xlu0 %v2954, 89
    %v3933 = vpop.permute.xlu0 %3932
    %v3935 = vmul.f32 %v2954, %v3933
    %3937 = vrot.lane.b32.xlu0 %v3935, 127
    %v3938 = vpop.permute.xlu0 %3937
    %v3940 = vadd.f32 %v3931, %v3938
    %3941 = vrot.lane.b32.xlu0 %v2954, 87
    %v3942 = vpop.permute.xlu0 %3941
    %v3944 = vmul.f32 %v2954, %v3942
    %3946 = vrot.lane.b32.xlu0 %v3944, 126
    %v3947 = vpop.permute.xlu0 %3946
    %v3949 = vadd.f32 %v3940, %v3947
    %3950 = vrot.lane.b32.xlu0 %v3922, 127
    %v3951 = vpop.permute.xlu0 %3950
    %v3953 = vadd.f32 %v3913, %v3951
    %3954 = vrot.lane.b32.xlu0 %v2954, 86
    %v3955 = vpop.permute.xlu0 %3954
    %v3957 = vmul.f32 %v2954, %v3955
    %3959 = vrot.lane.b32.xlu0 %v3957, 126
    %v3960 = vpop.permute.xlu0 %3959
    %v3962 = vadd.f32 %v3953, %v3960
    %v3963 = vmul.f32 %v2954, %v3694
    %v3964 = vmul.f32 %v2954, %v3722
    %3966 = vrot.lane.b32.xlu0 %v3964, 127
    %v3967 = vpop.permute.xlu0 %3966
    %v3969 = vadd.f32 %v3963, %v3967
    %3971 = vrot.lane.b32.xlu0 %v3931, 126
    %v3972 = vpop.permute.xlu0 %3971
    %v3974 = vadd.f32 %v3969, %v3972
    %v3975 = vmul.f32 %v2954, %v3708
    %3977 = vrot.lane.b32.xlu0 %v3909, 127
    %v3978 = vpop.permute.xlu0 %3977
    %v3980 = vadd.f32 %v3975, %v3978
    %3981 = vrot.lane.b32.xlu0 %v3913, 126
    %v3982 = vpop.permute.xlu0 %3981
    %v3984 = vadd.f32 %v3980, %v3982
    %3985 = vrot.lane.b32.xlu0 %v3931, 127
    %v3986 = vpop.permute.xlu0 %3985
    %v3988 = vadd.f32 %v3964, %v3986
    %3989 = vrot.lane.b32.xlu0 %v3935, 126
    %v3990 = vpop.permute.xlu0 %3989
    %v3992 = vadd.f32 %v3988, %v3990
    %v3993 = vmul.f32 %v2954, %v3689
    %v3994 = vmul.f32 %v2954, %v3717
    %3996 = vrot.lane.b32.xlu0 %v3994, 127
    %v3997 = vpop.permute.xlu0 %3996
    %v3999 = vadd.f32 %v3993, %v3997
    %4001 = vrot.lane.b32.xlu0 %v3975, 126
    %v4002 = vpop.permute.xlu0 %4001
    %v4004 = vadd.f32 %v3999, %v4002
    %v4005 = vmul.f32 %v2954, %v3703
    %4007 = vrot.lane.b32.xlu0 %v3963, 127
    %v4008 = vpop.permute.xlu0 %4007
    %v4010 = vadd.f32 %v4005, %v4008
    %4011 = vrot.lane.b32.xlu0 %v3964, 126
    %v4012 = vpop.permute.xlu0 %4011
    %v4014 = vadd.f32 %v4010, %v4012
    %4015 = vrot.lane.b32.xlu0 %v3975, 127
    %v4016 = vpop.permute.xlu0 %4015
    %v4018 = vadd.f32 %v3994, %v4016
    %4019 = vrot.lane.b32.xlu0 %v3909, 126
    %v4020 = vpop.permute.xlu0 %4019
    %v4022 = vadd.f32 %v4018, %v4020
    %v4023 = vsub.f32 %v2615, %v3584
    %v4024 = vsub.f32 %v2782, %v2985
    %v4025 = vsub.f32 %v2949, %v3590
    %4027 = vrot.lane.b32.xlu0 %v4023, 124
    %v4028 = vpop.permute.xlu0 %4027
    %v4030 = vmul.f32 %v2954, %v4028
    %4032 = vrot.lane.b32.xlu0 %v4024, 125
    %v4033 = vpop.permute.xlu0 %4032
    %v4035 = vmul.f32 %v2954, %v4033
    %4037 = vrot.lane.b32.xlu0 %v4035, 127
    %v4038 = vpop.permute.xlu0 %4037
    %v4040 = vadd.f32 %v4030, %v4038
    %4042 = vrot.lane.b32.xlu0 %v4025, 126
    %v4043 = vpop.permute.xlu0 %4042
    %v4045 = vmul.f32 %v2954, %v4043
    %4047 = vrot.lane.b32.xlu0 %v4045, 126
    %v4048 = vpop.permute.xlu0 %4047
    %v4050 = vadd.f32 %v4040, %v4048
    %4051 = vrot.lane.b32.xlu0 %v4023, 127
    %v4052 = vpop.permute.xlu0 %4051
    %v4054 = vmul.f32 %v2954, %v4052
    %v4055 = vmul.f32 %v2954, %v4024
    %4057 = vrot.lane.b32.xlu0 %v4055, 127
    %v4058 = vpop.permute.xlu0 %4057
    %v4060 = vadd.f32 %v4054, %v4058
    %4061 = vrot.lane.b32.xlu0 %v4025, 1
    %v4062 = vpop.permute.xlu0 %4061
    %v4064 = vmul.f32 %v2954, %v4062
    %4066 = vrot.lane.b32.xlu0 %v4064, 126
    %v4067 = vpop.permute.xlu0 %4066
    %v4069 = vadd.f32 %v4060, %v4067
    %4070 = vrot.lane.b32.xlu0 %v4023, 2
    %v4071 = vpop.permute.xlu0 %4070
    %v4073 = vmul.f32 %v2954, %v4071
    %4074 = vrot.lane.b32.xlu0 %v4024, 3
    %v4075 = vpop.permute.xlu0 %4074
    %v4077 = vmul.f32 %v2954, %v4075
    %4079 = vrot.lane.b32.xlu0 %v4077, 127
    %v4080 = vpop.permute.xlu0 %4079
    %v4082 = vadd.f32 %v4073, %v4080
    %4083 = vrot.lane.b32.xlu0 %v4025, 4
    %v4084 = vpop.permute.xlu0 %4083
    %v4086 = vmul.f32 %v2954, %v4084
    %4088 = vrot.lane.b32.xlu0 %v4086, 126
    %v4089 = vpop.permute.xlu0 %4088
    %v4091 = vadd.f32 %v4082, %v4089
    %v4092 = vadd.f32 %v4050, %v2615
    %v4093 = vadd.f32 %v4069, %v3314
    %v4094 = vadd.f32 %v4091, %v3318
    %4095 = vrot.lane.b32.xlu0 %v2615, 124
    %v4096 = vpop.permute.xlu0 %4095
    %v4098 = vmul.f32 %v3927, %v4096
    %4099 = vrot.lane.b32.xlu0 %v2782, 124
    %v4100 = vpop.permute.xlu0 %4099
    %v4102 = vmul.f32 %v3949, %v4100
    %v4103 = vadd.f32 %v4098, %v4102
    %4104 = vrot.lane.b32.xlu0 %v2949, 124
    %v4105 = vpop.permute.xlu0 %4104
    %v4107 = vmul.f32 %v3962, %v4105
    %v4108 = vadd.f32 %v4103, %v4107
    %v4109 = vmul.f32 %v3974, %v3322
    %v4110 = vmul.f32 %v3984, %v3326
    %v4111 = vadd.f32 %v4109, %v4110
    %v4112 = vmul.f32 %v3992, %v3331
    %v4113 = vadd.f32 %v4111, %v4112
    %v4114 = vmul.f32 %v4004, %v3336
    %v4115 = vmul.f32 %v4014, %v3340
    %v4116 = vadd.f32 %v4114, %v4115
    %v4117 = vmul.f32 %v4022, %v2971
    %v4118 = vadd.f32 %v4116, %v4117
    %v4119 = vsub.f32 %v4092, %v4108
    %v4120 = vsub.f32 %v4093, %v4113
    %v4121 = vsub.f32 %v4094, %v4118
    %vm4122 = vcmp.eq.s32.totalorder %v2957, 4
    %v4123 = vsel %vm4122, 1, 0
    %v4124 = vcvt.s32.f32 %v4123
    %4126 = vset.pattern.permute.xlu0 0
    %4127 = vperm.xlu0 %4126, %v3927
    %v4128 = vpop.permute.xlu0 %4127
    %v4130 = vmul.f32 %v4128, %v4124
    %v4131 = vadd.f32 %v3828, %v4130
    %4133 = vset.pattern.permute.xlu0 3
    %4134 = vperm.xlu0 %4133, %v3974
    %v4135 = vpop.permute.xlu0 %4134
    %v4137 = vmul.f32 %v4135, %v4124
    %v4138 = vadd.f32 %v3835, %v4137
    %4140 = vset.pattern.permute.xlu0 6
    %4141 = vperm.xlu0 %4140, %v4004
    %v4142 = vpop.permute.xlu0 %4141
    %v4144 = vmul.f32 %v4142, %v4124
    %v4145 = vadd.f32 %v3842, %v4144
    %4147 = vset.pattern.permute.xlu0 0
    %4148 = vperm.xlu0 %4147, %v3949
    %v4149 = vpop.permute.xlu0 %4148
    %v4151 = vmul.f32 %v4149, %v4124
    %v4152 = vadd.f32 %v3849, %v4151
    %4154 = vset.pattern.permute.xlu0 3
    %4155 = vperm.xlu0 %4154, %v3984
    %v4156 = vpop.permute.xlu0 %4155
    %v4158 = vmul.f32 %v4156, %v4124
    %v4159 = vadd.f32 %v3856, %v4158
    %4161 = vset.pattern.permute.xlu0 6
    %4162 = vperm.xlu0 %4161, %v4014
    %v4163 = vpop.permute.xlu0 %4162
    %v4165 = vmul.f32 %v4163, %v4124
    %v4166 = vadd.f32 %v3863, %v4165
    %4168 = vset.pattern.permute.xlu0 0
    %4169 = vperm.xlu0 %4168, %v3962
    %v4170 = vpop.permute.xlu0 %4169
    %v4172 = vmul.f32 %v4170, %v4124
    %v4173 = vadd.f32 %v3870, %v4172
    %4175 = vset.pattern.permute.xlu0 3
    %4176 = vperm.xlu0 %4175, %v3992
    %v4177 = vpop.permute.xlu0 %4176
    %v4179 = vmul.f32 %v4177, %v4124
    %v4180 = vadd.f32 %v3877, %v4179
    %4182 = vset.pattern.permute.xlu0 6
    %4183 = vperm.xlu0 %4182, %v4022
    %v4184 = vpop.permute.xlu0 %4183
    %v4186 = vmul.f32 %v4184, %v4124
    %v4187 = vadd.f32 %v3884, %v4186
    %4189 = vset.pattern.permute.xlu0 0
    %4190 = vperm.xlu0 %4189, %v4119
    %v4191 = vpop.permute.xlu0 %4190
    %v4193 = vmul.f32 %v4191, %v4124
    %v4194 = vadd.f32 %v3891, %v4193
    %4196 = vset.pattern.permute.xlu0 3
    %4197 = vperm.xlu0 %4196, %v4120
    %v4198 = vpop.permute.xlu0 %4197
    %v4200 = vmul.f32 %v4198, %v4124
    %v4201 = vadd.f32 %v3898, %v4200
    %4203 = vset.pattern.permute.xlu0 6
    %4204 = vperm.xlu0 %4203, %v4121
    %v4205 = vpop.permute.xlu0 %4204
    %v4207 = vmul.f32 %v4205, %v4124
    %v4208 = vadd.f32 %v3905, %v4207
    %4209 = vrot.lane.b32.xlu0 %v2954, 83
    %v4210 = vpop.permute.xlu0 %4209
    %v4212 = vmul.f32 %v3927, %v4210
    %4213 = vrot.lane.b32.xlu0 %v2954, 80
    %v4214 = vpop.permute.xlu0 %4213
    %v4216 = vmul.f32 %v3949, %v4214
    %v4217 = vadd.f32 %v4212, %v4216
    %4218 = vrot.lane.b32.xlu0 %v2954, 77
    %v4219 = vpop.permute.xlu0 %4218
    %v4221 = vmul.f32 %v3962, %v4219
    %v4222 = vadd.f32 %v4217, %v4221
    %4223 = vrot.lane.b32.xlu0 %v2954, 82
    %v4224 = vpop.permute.xlu0 %4223
    %v4226 = vmul.f32 %v3927, %v4224
    %4227 = vrot.lane.b32.xlu0 %v2954, 79
    %v4228 = vpop.permute.xlu0 %4227
    %v4230 = vmul.f32 %v3949, %v4228
    %v4231 = vadd.f32 %v4226, %v4230
    %4232 = vrot.lane.b32.xlu0 %v2954, 76
    %v4233 = vpop.permute.xlu0 %4232
    %v4235 = vmul.f32 %v3962, %v4233
    %v4236 = vadd.f32 %v4231, %v4235
    %4237 = vrot.lane.b32.xlu0 %v2954, 81
    %v4238 = vpop.permute.xlu0 %4237
    %v4240 = vmul.f32 %v3927, %v4238
    %4241 = vrot.lane.b32.xlu0 %v2954, 78
    %v4242 = vpop.permute.xlu0 %4241
    %v4244 = vmul.f32 %v3949, %v4242
    %v4245 = vadd.f32 %v4240, %v4244
    %4246 = vrot.lane.b32.xlu0 %v2954, 75
    %v4247 = vpop.permute.xlu0 %4246
    %v4249 = vmul.f32 %v3962, %v4247
    %v4250 = vadd.f32 %v4245, %v4249
    %v4251 = vmul.f32 %v3974, %v3955
    %v4252 = vmul.f32 %v3984, %v4210
    %v4253 = vadd.f32 %v4251, %v4252
    %v4254 = vmul.f32 %v3992, %v4214
    %v4255 = vadd.f32 %v4253, %v4254
    %4256 = vrot.lane.b32.xlu0 %v2954, 85
    %v4257 = vpop.permute.xlu0 %4256
    %v4259 = vmul.f32 %v3974, %v4257
    %v4260 = vmul.f32 %v3984, %v4224
    %v4261 = vadd.f32 %v4259, %v4260
    %v4262 = vmul.f32 %v3992, %v4228
    %v4263 = vadd.f32 %v4261, %v4262
    %4264 = vrot.lane.b32.xlu0 %v2954, 84
    %v4265 = vpop.permute.xlu0 %4264
    %v4267 = vmul.f32 %v3974, %v4265
    %v4268 = vmul.f32 %v3984, %v4238
    %v4269 = vadd.f32 %v4267, %v4268
    %v4270 = vmul.f32 %v3992, %v4242
    %v4271 = vadd.f32 %v4269, %v4270
    %v4272 = vmul.f32 %v4004, %v3933
    %v4273 = vmul.f32 %v4014, %v3955
    %v4274 = vadd.f32 %v4272, %v4273
    %v4275 = vmul.f32 %v4022, %v4210
    %v4276 = vadd.f32 %v4274, %v4275
    %v4277 = vmul.f32 %v4004, %v3920
    %v4278 = vmul.f32 %v4014, %v4257
    %v4279 = vadd.f32 %v4277, %v4278
    %v4280 = vmul.f32 %v4022, %v4224
    %v4281 = vadd.f32 %v4279, %v4280
    %v4282 = vmul.f32 %v4004, %v3942
    %v4283 = vmul.f32 %v4014, %v4265
    %v4284 = vadd.f32 %v4282, %v4283
    %v4285 = vmul.f32 %v4022, %v4238
    %v4286 = vadd.f32 %v4284, %v4285
    %4287 = vrot.lane.b32.xlu0 %v3240, 123
    %v4288 = vpop.permute.xlu0 %4287
    %v4290 = vmul.f32 %v3927, %v4288
    %4291 = vrot.lane.b32.xlu0 %v3241, 123
    %v4292 = vpop.permute.xlu0 %4291
    %v4294 = vmul.f32 %v3949, %v4292
    %v4295 = vadd.f32 %v4290, %v4294
    %4296 = vrot.lane.b32.xlu0 %v3245, 123
    %v4297 = vpop.permute.xlu0 %4296
    %v4299 = vmul.f32 %v3962, %v4297
    %v4300 = vadd.f32 %v4295, %v4299
    %v4301 = vmul.f32 %v3974, %v3526
    %v4302 = vmul.f32 %v3984, %v3530
    %v4303 = vadd.f32 %v4301, %v4302
    %v4304 = vmul.f32 %v3992, %v3535
    %v4305 = vadd.f32 %v4303, %v4304
    %v4306 = vmul.f32 %v4004, %v3540
    %v4307 = vmul.f32 %v4014, %v3544
    %v4308 = vadd.f32 %v4306, %v4307
    %v4309 = vmul.f32 %v4022, %v3259
    %v4310 = vadd.f32 %v4308, %v4309
    %v4311 = vadd.f32 %v4300, %v4092
    %v4312 = vadd.f32 %v4305, %v4093
    %v4313 = vadd.f32 %v4310, %v4094
    %4314 = vrot.lane.b32.xlu0 %v2615, 123
    %v4315 = vpop.permute.xlu0 %4314
    %v4317 = vmul.f32 %v4222, %v4315
    %4318 = vrot.lane.b32.xlu0 %v2782, 123
    %v4319 = vpop.permute.xlu0 %4318
    %v4321 = vmul.f32 %v4236, %v4319
    %v4322 = vadd.f32 %v4317, %v4321
    %4323 = vrot.lane.b32.xlu0 %v2949, 123
    %v4324 = vpop.permute.xlu0 %4323
    %v4326 = vmul.f32 %v4250, %v4324
    %v4327 = vadd.f32 %v4322, %v4326
    %v4328 = vmul.f32 %v4255, %v3565
    %v4329 = vmul.f32 %v4263, %v3569
    %v4330 = vadd.f32 %v4328, %v4329
    %v4331 = vmul.f32 %v4271, %v3574
    %v4332 = vadd.f32 %v4330, %v4331
    %v4333 = vmul.f32 %v4276, %v3238
    %v4334 = vmul.f32 %v4281, %v2961
    %v4335 = vadd.f32 %v4333, %v4334
    %v4336 = vmul.f32 %v4286, %v3243
    %v4337 = vadd.f32 %v4335, %v4336
    %v4338 = vsub.f32 %v4311, %v4327
    %v4339 = vsub.f32 %v4312, %v4332
    %v4340 = vsub.f32 %v4313, %v4337
    %vm4341 = vcmp.eq.s32.totalorder %v2957, 5
    %v4342 = vsel %vm4341, 1, 0
    %v4343 = vcvt.s32.f32 %v4342
    %4345 = vset.pattern.permute.xlu0 0
    %4346 = vperm.xlu0 %4345, %v4222
    %v4347 = vpop.permute.xlu0 %4346
    %v4349 = vmul.f32 %v4347, %v4343
    %v4350 = vadd.f32 %v4131, %v4349
    %4352 = vset.pattern.permute.xlu0 3
    %4353 = vperm.xlu0 %4352, %v4255
    %v4354 = vpop.permute.xlu0 %4353
    %v4356 = vmul.f32 %v4354, %v4343
    %v4357 = vadd.f32 %v4138, %v4356
    %4359 = vset.pattern.permute.xlu0 6
    %4360 = vperm.xlu0 %4359, %v4276
    %v4361 = vpop.permute.xlu0 %4360
    %v4363 = vmul.f32 %v4361, %v4343
    %v4364 = vadd.f32 %v4145, %v4363
    %4366 = vset.pattern.permute.xlu0 0
    %4367 = vperm.xlu0 %4366, %v4236
    %v4368 = vpop.permute.xlu0 %4367
    %v4370 = vmul.f32 %v4368, %v4343
    %v4371 = vadd.f32 %v4152, %v4370
    %4373 = vset.pattern.permute.xlu0 3
    %4374 = vperm.xlu0 %4373, %v4263
    %v4375 = vpop.permute.xlu0 %4374
    %v4377 = vmul.f32 %v4375, %v4343
    %v4378 = vadd.f32 %v4159, %v4377
    %4380 = vset.pattern.permute.xlu0 6
    %4381 = vperm.xlu0 %4380, %v4281
    %v4382 = vpop.permute.xlu0 %4381
    %v4384 = vmul.f32 %v4382, %v4343
    %v4385 = vadd.f32 %v4166, %v4384
    %4387 = vset.pattern.permute.xlu0 0
    %4388 = vperm.xlu0 %4387, %v4250
    %v4389 = vpop.permute.xlu0 %4388
    %v4391 = vmul.f32 %v4389, %v4343
    %v4392 = vadd.f32 %v4173, %v4391
    %4394 = vset.pattern.permute.xlu0 3
    %4395 = vperm.xlu0 %4394, %v4271
    %v4396 = vpop.permute.xlu0 %4395
    %v4398 = vmul.f32 %v4396, %v4343
    %v4399 = vadd.f32 %v4180, %v4398
    %4401 = vset.pattern.permute.xlu0 6
    %4402 = vperm.xlu0 %4401, %v4286
    %v4403 = vpop.permute.xlu0 %4402
    %v4405 = vmul.f32 %v4403, %v4343
    %v4406 = vadd.f32 %v4187, %v4405
    %4408 = vset.pattern.permute.xlu0 0
    %4409 = vperm.xlu0 %4408, %v4338
    %v4410 = vpop.permute.xlu0 %4409
    %v4412 = vmul.f32 %v4410, %v4343
    %v4413 = vadd.f32 %v4194, %v4412
    %4415 = vset.pattern.permute.xlu0 3
    %4416 = vperm.xlu0 %4415, %v4339
    %v4417 = vpop.permute.xlu0 %4416
    %v4419 = vmul.f32 %v4417, %v4343
    %v4420 = vadd.f32 %v4201, %v4419
    %4422 = vset.pattern.permute.xlu0 6
    %4423 = vperm.xlu0 %4422, %v4340
    %v4424 = vpop.permute.xlu0 %4423
    %v4426 = vmul.f32 %v4424, %v4343
    %v4427 = vadd.f32 %v4208, %v4426
    %4428 = vrot.lane.b32.xlu0 %v2954, 74
    %v4429 = vpop.permute.xlu0 %4428
    %v4431 = vmul.f32 %v4222, %v4429
    %4432 = vrot.lane.b32.xlu0 %v2954, 71
    %v4433 = vpop.permute.xlu0 %4432
    %v4435 = vmul.f32 %v4236, %v4433
    %v4436 = vadd.f32 %v4431, %v4435
    %4437 = vrot.lane.b32.xlu0 %v2954, 68
    %v4438 = vpop.permute.xlu0 %4437
    %v4440 = vmul.f32 %v4250, %v4438
    %v4441 = vadd.f32 %v4436, %v4440
    %4442 = vrot.lane.b32.xlu0 %v2954, 73
    %v4443 = vpop.permute.xlu0 %4442
    %v4445 = vmul.f32 %v4222, %v4443
    %4446 = vrot.lane.b32.xlu0 %v2954, 70
    %v4447 = vpop.permute.xlu0 %4446
    %v4449 = vmul.f32 %v4236, %v4447
    %v4450 = vadd.f32 %v4445, %v4449
    %4451 = vrot.lane.b32.xlu0 %v2954, 67
    %v4452 = vpop.permute.xlu0 %4451
    %v4454 = vmul.f32 %v4250, %v4452
    %v4455 = vadd.f32 %v4450, %v4454
    %4456 = vrot.lane.b32.xlu0 %v2954, 72
    %v4457 = vpop.permute.xlu0 %4456
    %v4459 = vmul.f32 %v4222, %v4457
    %4460 = vrot.lane.b32.xlu0 %v2954, 69
    %v4461 = vpop.permute.xlu0 %4460
    %v4463 = vmul.f32 %v4236, %v4461
    %v4464 = vadd.f32 %v4459, %v4463
    %4465 = vrot.lane.b32.xlu0 %v2954, 66
    %v4466 = vpop.permute.xlu0 %4465
    %v4468 = vmul.f32 %v4250, %v4466
    %v4469 = vadd.f32 %v4464, %v4468
    %v4470 = vmul.f32 %v4255, %v4219
    %v4471 = vmul.f32 %v4263, %v4429
    %v4472 = vadd.f32 %v4470, %v4471
    %v4473 = vmul.f32 %v4271, %v4433
    %v4474 = vadd.f32 %v4472, %v4473
    %v4475 = vmul.f32 %v4255, %v4233
    %v4476 = vmul.f32 %v4263, %v4443
    %v4477 = vadd.f32 %v4475, %v4476
    %v4478 = vmul.f32 %v4271, %v4447
    %v4479 = vadd.f32 %v4477, %v4478
    %v4480 = vmul.f32 %v4255, %v4247
    %v4481 = vmul.f32 %v4263, %v4457
    %v4482 = vadd.f32 %v4480, %v4481
    %v4483 = vmul.f32 %v4271, %v4461
    %v4484 = vadd.f32 %v4482, %v4483
    %v4485 = vmul.f32 %v4276, %v4214
    %v4486 = vmul.f32 %v4281, %v4219
    %v4487 = vadd.f32 %v4485, %v4486
    %v4488 = vmul.f32 %v4286, %v4429
    %v4489 = vadd.f32 %v4487, %v4488
    %v4490 = vmul.f32 %v4276, %v4228
    %v4491 = vmul.f32 %v4281, %v4233
    %v4492 = vadd.f32 %v4490, %v4491
    %v4493 = vmul.f32 %v4286, %v4443
    %v4494 = vadd.f32 %v4492, %v4493
    %v4495 = vmul.f32 %v4276, %v4242
    %v4496 = vmul.f32 %v4281, %v4247
    %v4497 = vadd.f32 %v4495, %v4496
    %v4498 = vmul.f32 %v4286, %v4457
    %v4499 = vadd.f32 %v4497, %v4498
    %4500 = vrot.lane.b32.xlu0 %v3240, 122
    %v4501 = vpop.permute.xlu0 %4500
    %v4503 = vmul.f32 %v4222, %v4501
    %4504 = vrot.lane.b32.xlu0 %v3241, 122
    %v4505 = vpop.permute.xlu0 %4504
    %v4507 = vmul.f32 %v4236, %v4505
    %v4508 = vadd.f32 %v4503, %v4507
    %4509 = vrot.lane.b32.xlu0 %v3245, 122
    %v4510 = vpop.permute.xlu0 %4509
    %v4512 = vmul.f32 %v4250, %v4510
    %v4513 = vadd.f32 %v4508, %v4512
    %v4514 = vmul.f32 %v4255, %v3757
    %v4515 = vmul.f32 %v4263, %v3761
    %v4516 = vadd.f32 %v4514, %v4515
    %v4517 = vmul.f32 %v4271, %v3766
    %v4518 = vadd.f32 %v4516, %v4517
    %v4519 = vmul.f32 %v4276, %v3240
    %v4520 = vmul.f32 %v4281, %v3241
    %v4521 = vadd.f32 %v4519, %v4520
    %v4522 = vmul.f32 %v4286, %v3245
    %v4523 = vadd.f32 %v4521, %v4522
    %v4524 = vadd.f32 %v4513, %v4311
    %v4525 = vadd.f32 %v4518, %v4312
    %v4526 = vadd.f32 %v4523, %v4313
    %4527 = vrot.lane.b32.xlu0 %v2615, 122
    %v4528 = vpop.permute.xlu0 %4527
    %v4530 = vmul.f32 %v4441, %v4528
    %4531 = vrot.lane.b32.xlu0 %v2782, 122
    %v4532 = vpop.permute.xlu0 %4531
    %v4534 = vmul.f32 %v4455, %v4532
    %v4535 = vadd.f32 %v4530, %v4534
    %4536 = vrot.lane.b32.xlu0 %v2949, 122
    %v4537 = vpop.permute.xlu0 %4536
    %v4539 = vmul.f32 %v4469, %v4537
    %v4540 = vadd.f32 %v4535, %v4539
    %v4541 = vmul.f32 %v4474, %v3790
    %v4542 = vmul.f32 %v4479, %v3794
    %v4543 = vadd.f32 %v4541, %v4542
    %v4544 = vmul.f32 %v4484, %v3799
    %v4545 = vadd.f32 %v4543, %v4544
    %v4546 = vmul.f32 %v4489, %v2615
    %v4547 = vmul.f32 %v4494, %v2782
    %v4548 = vadd.f32 %v4546, %v4547
    %v4549 = vmul.f32 %v4499, %v2949
    %v4550 = vadd.f32 %v4548, %v4549
    %v4551 = vsub.f32 %v4524, %v4540
    %v4552 = vsub.f32 %v4525, %v4545
    %v4553 = vsub.f32 %v4526, %v4550
    %vm4554 = vcmp.eq.s32.totalorder %v2957, 6
    %v4555 = vsel %vm4554, 1, 0
    %v4556 = vcvt.s32.f32 %v4555
    %4558 = vset.pattern.permute.xlu0 0
    %4559 = vperm.xlu0 %4558, %v4441
    %v4560 = vpop.permute.xlu0 %4559
    %v4562 = vmul.f32 %v4560, %v4556
    %v4563 = vadd.f32 %v4350, %v4562
    %4565 = vset.pattern.permute.xlu0 3
    %4566 = vperm.xlu0 %4565, %v4474
    %v4567 = vpop.permute.xlu0 %4566
    %v4569 = vmul.f32 %v4567, %v4556
    %v4570 = vadd.f32 %v4357, %v4569
    %4572 = vset.pattern.permute.xlu0 6
    %4573 = vperm.xlu0 %4572, %v4489
    %v4574 = vpop.permute.xlu0 %4573
    %v4576 = vmul.f32 %v4574, %v4556
    %v4577 = vadd.f32 %v4364, %v4576
    %4579 = vset.pattern.permute.xlu0 0
    %4580 = vperm.xlu0 %4579, %v4455
    %v4581 = vpop.permute.xlu0 %4580
    %v4583 = vmul.f32 %v4581, %v4556
    %v4584 = vadd.f32 %v4371, %v4583
    %4586 = vset.pattern.permute.xlu0 3
    %4587 = vperm.xlu0 %4586, %v4479
    %v4588 = vpop.permute.xlu0 %4587
    %v4590 = vmul.f32 %v4588, %v4556
    %v4591 = vadd.f32 %v4378, %v4590
    %4593 = vset.pattern.permute.xlu0 6
    %4594 = vperm.xlu0 %4593, %v4494
    %v4595 = vpop.permute.xlu0 %4594
    %v4597 = vmul.f32 %v4595, %v4556
    %v4598 = vadd.f32 %v4385, %v4597
    %4600 = vset.pattern.permute.xlu0 0
    %4601 = vperm.xlu0 %4600, %v4469
    %v4602 = vpop.permute.xlu0 %4601
    %v4604 = vmul.f32 %v4602, %v4556
    %v4605 = vadd.f32 %v4392, %v4604
    %4607 = vset.pattern.permute.xlu0 3
    %4608 = vperm.xlu0 %4607, %v4484
    %v4609 = vpop.permute.xlu0 %4608
    %v4611 = vmul.f32 %v4609, %v4556
    %v4612 = vadd.f32 %v4399, %v4611
    %4614 = vset.pattern.permute.xlu0 6
    %4615 = vperm.xlu0 %4614, %v4499
    %v4616 = vpop.permute.xlu0 %4615
    %v4618 = vmul.f32 %v4616, %v4556
    %v4619 = vadd.f32 %v4406, %v4618
    %4621 = vset.pattern.permute.xlu0 0
    %4622 = vperm.xlu0 %4621, %v4551
    %v4623 = vpop.permute.xlu0 %4622
    %v4625 = vmul.f32 %v4623, %v4556
    %v4626 = vadd.f32 %v4413, %v4625
    %4628 = vset.pattern.permute.xlu0 3
    %4629 = vperm.xlu0 %4628, %v4552
    %v4630 = vpop.permute.xlu0 %4629
    %v4632 = vmul.f32 %v4630, %v4556
    %v4633 = vadd.f32 %v4420, %v4632
    %4635 = vset.pattern.permute.xlu0 6
    %4636 = vperm.xlu0 %4635, %v4553
    %v4637 = vpop.permute.xlu0 %4636
    %v4639 = vmul.f32 %v4637, %v4556
    %v4640 = vadd.f32 %v4427, %v4639
    %4641 = vrot.lane.b32.xlu0 %v2954, 65
    %v4642 = vpop.permute.xlu0 %4641
    %v4644 = vmul.f32 %v2954, %v4642
    %4645 = vrot.lane.b32.xlu0 %v2954, 63
    %v4646 = vpop.permute.xlu0 %4645
    %v4648 = vmul.f32 %v2954, %v4646
    %4650 = vrot.lane.b32.xlu0 %v4648, 127
    %v4651 = vpop.permute.xlu0 %4650
    %v4653 = vadd.f32 %v4644, %v4651
    %4654 = vrot.lane.b32.xlu0 %v2954, 61
    %v4655 = vpop.permute.xlu0 %4654
    %v4657 = vmul.f32 %v2954, %v4655
    %4659 = vrot.lane.b32.xlu0 %v4657, 126
    %v4660 = vpop.permute.xlu0 %4659
    %v4662 = vadd.f32 %v4653, %v4660
    %4663 = vrot.lane.b32.xlu0 %v2954, 64
    %v4664 = vpop.permute.xlu0 %4663
    %v4666 = vmul.f32 %v2954, %v4664
    %4667 = vrot.lane.b32.xlu0 %v2954, 62
    %v4668 = vpop.permute.xlu0 %4667
    %v4670 = vmul.f32 %v2954, %v4668
    %4672 = vrot.lane.b32.xlu0 %v4670, 127
    %v4673 = vpop.permute.xlu0 %4672
    %v4675 = vadd.f32 %v4666, %v4673
    %4676 = vrot.lane.b32.xlu0 %v2954, 60
    %v4677 = vpop.permute.xlu0 %4676
    %v4679 = vmul.f32 %v2954, %v4677
    %4681 = vrot.lane.b32.xlu0 %v4679, 126
    %v4682 = vpop.permute.xlu0 %4681
    %v4684 = vadd.f32 %v4675, %v4682
    %4685 = vrot.lane.b32.xlu0 %v4657, 127
    %v4686 = vpop.permute.xlu0 %4685
    %v4688 = vadd.f32 %v4648, %v4686
    %4689 = vrot.lane.b32.xlu0 %v2954, 59
    %v4690 = vpop.permute.xlu0 %4689
    %v4692 = vmul.f32 %v2954, %v4690
    %4694 = vrot.lane.b32.xlu0 %v4692, 126
    %v4695 = vpop.permute.xlu0 %4694
    %v4697 = vadd.f32 %v4688, %v4695
    %v4698 = vmul.f32 %v2954, %v4438
    %v4699 = vmul.f32 %v2954, %v4466
    %4701 = vrot.lane.b32.xlu0 %v4699, 127
    %v4702 = vpop.permute.xlu0 %4701
    %v4704 = vadd.f32 %v4698, %v4702
    %4706 = vrot.lane.b32.xlu0 %v4666, 126
    %v4707 = vpop.permute.xlu0 %4706
    %v4709 = vadd.f32 %v4704, %v4707
    %v4710 = vmul.f32 %v2954, %v4452
    %4712 = vrot.lane.b32.xlu0 %v4644, 127
    %v4713 = vpop.permute.xlu0 %4712
    %v4715 = vadd.f32 %v4710, %v4713
    %4716 = vrot.lane.b32.xlu0 %v4648, 126
    %v4717 = vpop.permute.xlu0 %4716
    %v4719 = vadd.f32 %v4715, %v4717
    %4720 = vrot.lane.b32.xlu0 %v4666, 127
    %v4721 = vpop.permute.xlu0 %4720
    %v4723 = vadd.f32 %v4699, %v4721
    %4724 = vrot.lane.b32.xlu0 %v4670, 126
    %v4725 = vpop.permute.xlu0 %4724
    %v4727 = vadd.f32 %v4723, %v4725
    %v4728 = vmul.f32 %v2954, %v4433
    %v4729 = vmul.f32 %v2954, %v4461
    %4731 = vrot.lane.b32.xlu0 %v4729, 127
    %v4732 = vpop.permute.xlu0 %4731
    %v4734 = vadd.f32 %v4728, %v4732
    %4736 = vrot.lane.b32.xlu0 %v4710, 126
    %v4737 = vpop.permute.xlu0 %4736
    %v4739 = vadd.f32 %v4734, %v4737
    %v4740 = vmul.f32 %v2954, %v4447
    %4742 = vrot.lane.b32.xlu0 %v4698, 127
    %v4743 = vpop.permute.xlu0 %4742
    %v4745 = vadd.f32 %v4740, %v4743
    %4746 = vrot.lane.b32.xlu0 %v4699, 126
    %v4747 = vpop.permute.xlu0 %4746
    %v4749 = vadd.f32 %v4745, %v4747
    %4750 = vrot.lane.b32.xlu0 %v4710, 127
    %v4751 = vpop.permute.xlu0 %4750
    %v4753 = vadd.f32 %v4729, %v4751
    %4754 = vrot.lane.b32.xlu0 %v4644, 126
    %v4755 = vpop.permute.xlu0 %4754
    %v4757 = vadd.f32 %v4753, %v4755
    %4758 = vrot.lane.b32.xlu0 %v2615, 7
    %v4759 = vpop.permute.xlu0 %4758
    %v4761 = vsub.f32 %v2615, %v4759
    %v4762 = vsub.f32 %v2782, %v3007
    %4763 = vrot.lane.b32.xlu0 %v2949, 7
    %v4764 = vpop.permute.xlu0 %4763
    %v4766 = vsub.f32 %v2949, %v4764
    %4768 = vrot.lane.b32.xlu0 %v4761, 121
    %v4769 = vpop.permute.xlu0 %4768
    %v4771 = vmul.f32 %v2954, %v4769
    %4773 = vrot.lane.b32.xlu0 %v4762, 122
    %v4774 = vpop.permute.xlu0 %4773
    %v4776 = vmul.f32 %v2954, %v4774
    %4778 = vrot.lane.b32.xlu0 %v4776, 127
    %v4779 = vpop.permute.xlu0 %4778
    %v4781 = vadd.f32 %v4771, %v4779
    %4783 = vrot.lane.b32.xlu0 %v4766, 123
    %v4784 = vpop.permute.xlu0 %4783
    %v4786 = vmul.f32 %v2954, %v4784
    %4788 = vrot.lane.b32.xlu0 %v4786, 126
    %v4789 = vpop.permute.xlu0 %4788
    %v4791 = vadd.f32 %v4781, %v4789
    %4792 = vrot.lane.b32.xlu0 %v4761, 124
    %v4793 = vpop.permute.xlu0 %4792
    %v4795 = vmul.f32 %v2954, %v4793
    %4796 = vrot.lane.b32.xlu0 %v4762, 125
    %v4797 = vpop.permute.xlu0 %4796
    %v4799 = vmul.f32 %v2954, %v4797
    %4801 = vrot.lane.b32.xlu0 %v4799, 127
    %v4802 = vpop.permute.xlu0 %4801
    %v4804 = vadd.f32 %v4795, %v4802
    %4805 = vrot.lane.b32.xlu0 %v4766, 126
    %v4806 = vpop.permute.xlu0 %4805
    %v4808 = vmul.f32 %v2954, %v4806
    %4810 = vrot.lane.b32.xlu0 %v4808, 126
    %v4811 = vpop.permute.xlu0 %4810
    %v4813 = vadd.f32 %v4804, %v4811
    %4814 = vrot.lane.b32.xlu0 %v4761, 127
    %v4815 = vpop.permute.xlu0 %4814
    %v4817 = vmul.f32 %v2954, %v4815
    %v4818 = vmul.f32 %v2954, %v4762
    %4820 = vrot.lane.b32.xlu0 %v4818, 127
    %v4821 = vpop.permute.xlu0 %4820
    %v4823 = vadd.f32 %v4817, %v4821
    %4824 = vrot.lane.b32.xlu0 %v4766, 1
    %v4825 = vpop.permute.xlu0 %4824
    %v4827 = vmul.f32 %v2954, %v4825
    %4829 = vrot.lane.b32.xlu0 %v4827, 126
    %v4830 = vpop.permute.xlu0 %4829
    %v4832 = vadd.f32 %v4823, %v4830
    %v4833 = vadd.f32 %v4791, %v2615
    %v4834 = vadd.f32 %v4813, %v3314
    %v4835 = vadd.f32 %v4832, %v3318
    %4836 = vrot.lane.b32.xlu0 %v2615, 121
    %v4837 = vpop.permute.xlu0 %4836
    %v4839 = vmul.f32 %v4662, %v4837
    %4840 = vrot.lane.b32.xlu0 %v2782, 121
    %v4841 = vpop.permute.xlu0 %4840
    %v4843 = vmul.f32 %v4684, %v4841
    %v4844 = vadd.f32 %v4839, %v4843
    %4845 = vrot.lane.b32.xlu0 %v2949, 121
    %v4846 = vpop.permute.xlu0 %4845
    %v4848 = vmul.f32 %v4697, %v4846
    %v4849 = vadd.f32 %v4844, %v4848
    %v4850 = vmul.f32 %v4709, %v4096
    %v4851 = vmul.f32 %v4719, %v4100
    %v4852 = vadd.f32 %v4850, %v4851
    %v4853 = vmul.f32 %v4727, %v4105
    %v4854 = vadd.f32 %v4852, %v4853
    %v4855 = vmul.f32 %v4739, %v3322
    %v4856 = vmul.f32 %v4749, %v3326
    %v4857 = vadd.f32 %v4855, %v4856
    %v4858 = vmul.f32 %v4757, %v3331
    %v4859 = vadd.f32 %v4857, %v4858
    %v4860 = vsub.f32 %v4833, %v4849
    %v4861 = vsub.f32 %v4834, %v4854
    %v4862 = vsub.f32 %v4835, %v4859
    %vm4863 = vcmp.eq.s32.totalorder %v2957, 7
    %v4864 = vsel %vm4863, 1, 0
    %v4865 = vcvt.s32.f32 %v4864
    %4867 = vset.pattern.permute.xlu0 0
    %4868 = vperm.xlu0 %4867, %v4662
    %v4869 = vpop.permute.xlu0 %4868
    %v4871 = vmul.f32 %v4869, %v4865
    %v4872 = vadd.f32 %v4563, %v4871
    %4874 = vset.pattern.permute.xlu0 3
    %4875 = vperm.xlu0 %4874, %v4709
    %v4876 = vpop.permute.xlu0 %4875
    %v4878 = vmul.f32 %v4876, %v4865
    %v4879 = vadd.f32 %v4570, %v4878
    %4881 = vset.pattern.permute.xlu0 6
    %4882 = vperm.xlu0 %4881, %v4739
    %v4883 = vpop.permute.xlu0 %4882
    %v4885 = vmul.f32 %v4883, %v4865
    %v4886 = vadd.f32 %v4577, %v4885
    %4888 = vset.pattern.permute.xlu0 0
    %4889 = vperm.xlu0 %4888, %v4684
    %v4890 = vpop.permute.xlu0 %4889
    %v4892 = vmul.f32 %v4890, %v4865
    %v4893 = vadd.f32 %v4584, %v4892
    %4895 = vset.pattern.permute.xlu0 3
    %4896 = vperm.xlu0 %4895, %v4719
    %v4897 = vpop.permute.xlu0 %4896
    %v4899 = vmul.f32 %v4897, %v4865
    %v4900 = vadd.f32 %v4591, %v4899
    %4902 = vset.pattern.permute.xlu0 6
    %4903 = vperm.xlu0 %4902, %v4749
    %v4904 = vpop.permute.xlu0 %4903
    %v4906 = vmul.f32 %v4904, %v4865
    %v4907 = vadd.f32 %v4598, %v4906
    %4909 = vset.pattern.permute.xlu0 0
    %4910 = vperm.xlu0 %4909, %v4697
    %v4911 = vpop.permute.xlu0 %4910
    %v4913 = vmul.f32 %v4911, %v4865
    %v4914 = vadd.f32 %v4605, %v4913
    %4916 = vset.pattern.permute.xlu0 3
    %4917 = vperm.xlu0 %4916, %v4727
    %v4918 = vpop.permute.xlu0 %4917
    %v4920 = vmul.f32 %v4918, %v4865
    %v4921 = vadd.f32 %v4612, %v4920
    %4923 = vset.pattern.permute.xlu0 6
    %4924 = vperm.xlu0 %4923, %v4757
    %v4925 = vpop.permute.xlu0 %4924
    %v4927 = vmul.f32 %v4925, %v4865
    %v4928 = vadd.f32 %v4619, %v4927
    %4930 = vset.pattern.permute.xlu0 0
    %4931 = vperm.xlu0 %4930, %v4860
    %v4932 = vpop.permute.xlu0 %4931
    %v4934 = vmul.f32 %v4932, %v4865
    %v4935 = vadd.f32 %v4626, %v4934
    %4937 = vset.pattern.permute.xlu0 3
    %4938 = vperm.xlu0 %4937, %v4861
    %v4939 = vpop.permute.xlu0 %4938
    %v4941 = vmul.f32 %v4939, %v4865
    %v4942 = vadd.f32 %v4633, %v4941
    %4944 = vset.pattern.permute.xlu0 6
    %4945 = vperm.xlu0 %4944, %v4862
    %v4946 = vpop.permute.xlu0 %4945
    %v4948 = vmul.f32 %v4946, %v4865
    %v4949 = vadd.f32 %v4640, %v4948
    %4950 = vrot.lane.b32.xlu0 %v2954, 56
    %v4951 = vpop.permute.xlu0 %4950
    %v4953 = vmul.f32 %v4662, %v4951
    %4954 = vrot.lane.b32.xlu0 %v2954, 53
    %v4955 = vpop.permute.xlu0 %4954
    %v4957 = vmul.f32 %v4684, %v4955
    %v4958 = vadd.f32 %v4953, %v4957
    %4959 = vrot.lane.b32.xlu0 %v2954, 50
    %v4960 = vpop.permute.xlu0 %4959
    %v4962 = vmul.f32 %v4697, %v4960
    %v4963 = vadd.f32 %v4958, %v4962
    %4964 = vrot.lane.b32.xlu0 %v2954, 55
    %v4965 = vpop.permute.xlu0 %4964
    %v4967 = vmul.f32 %v4662, %v4965
    %4968 = vrot.lane.b32.xlu0 %v2954, 52
    %v4969 = vpop.permute.xlu0 %4968
    %v4971 = vmul.f32 %v4684, %v4969
    %v4972 = vadd.f32 %v4967, %v4971
    %4973 = vrot.lane.b32.xlu0 %v2954, 49
    %v4974 = vpop.permute.xlu0 %4973
    %v4976 = vmul.f32 %v4697, %v4974
    %v4977 = vadd.f32 %v4972, %v4976
    %4978 = vrot.lane.b32.xlu0 %v2954, 54
    %v4979 = vpop.permute.xlu0 %4978
    %v4981 = vmul.f32 %v4662, %v4979
    %4982 = vrot.lane.b32.xlu0 %v2954, 51
    %v4983 = vpop.permute.xlu0 %4982
    %v4985 = vmul.f32 %v4684, %v4983
    %v4986 = vadd.f32 %v4981, %v4985
    %4987 = vrot.lane.b32.xlu0 %v2954, 48
    %v4988 = vpop.permute.xlu0 %4987
    %v4990 = vmul.f32 %v4697, %v4988
    %v4991 = vadd.f32 %v4986, %v4990
    %v4992 = vmul.f32 %v4709, %v4690
    %v4993 = vmul.f32 %v4719, %v4951
    %v4994 = vadd.f32 %v4992, %v4993
    %v4995 = vmul.f32 %v4727, %v4955
    %v4996 = vadd.f32 %v4994, %v4995
    %4997 = vrot.lane.b32.xlu0 %v2954, 58
    %v4998 = vpop.permute.xlu0 %4997
    %v5000 = vmul.f32 %v4709, %v4998
    %v5001 = vmul.f32 %v4719, %v4965
    %v5002 = vadd.f32 %v5000, %v5001
    %v5003 = vmul.f32 %v4727, %v4969
    %v5004 = vadd.f32 %v5002, %v5003
    %5005 = vrot.lane.b32.xlu0 %v2954, 57
    %v5006 = vpop.permute.xlu0 %5005
    %v5008 = vmul.f32 %v4709, %v5006
    %v5009 = vmul.f32 %v4719, %v4979
    %v5010 = vadd.f32 %v5008, %v5009
    %v5011 = vmul.f32 %v4727, %v4983
    %v5012 = vadd.f32 %v5010, %v5011
    %v5013 = vmul.f32 %v4739, %v4668
    %v5014 = vmul.f32 %v4749, %v4690
    %v5015 = vadd.f32 %v5013, %v5014
    %v5016 = vmul.f32 %v4757, %v4951
    %v5017 = vadd.f32 %v5015, %v5016
    %v5018 = vmul.f32 %v4739, %v4655
    %v5019 = vmul.f32 %v4749, %v4998
    %v5020 = vadd.f32 %v5018, %v5019
    %v5021 = vmul.f32 %v4757, %v4965
    %v5022 = vadd.f32 %v5020, %v5021
    %v5023 = vmul.f32 %v4739, %v4677
    %v5024 = vmul.f32 %v4749, %v5006
    %v5025 = vadd.f32 %v5023, %v5024
    %v5026 = vmul.f32 %v4757, %v4979
    %v5027 = vadd.f32 %v5025, %v5026
    %5028 = vrot.lane.b32.xlu0 %v3240, 120
    %v5029 = vpop.permute.xlu0 %5028
    %v5031 = vmul.f32 %v4662, %v5029
    %5032 = vrot.lane.b32.xlu0 %v3241, 120
    %v5033 = vpop.permute.xlu0 %5032
    %v5035 = vmul.f32 %v4684, %v5033
    %v5036 = vadd.f32 %v5031, %v5035
    %5037 = vrot.lane.b32.xlu0 %v3245, 120
    %v5038 = vpop.permute.xlu0 %5037
    %v5040 = vmul.f32 %v4697, %v5038
    %v5041 = vadd.f32 %v5036, %v5040
    %v5042 = vmul.f32 %v4709, %v4288
    %v5043 = vmul.f32 %v4719, %v4292
    %v5044 = vadd.f32 %v5042, %v5043
    %v5045 = vmul.f32 %v4727, %v4297
    %v5046 = vadd.f32 %v5044, %v5045
    %v5047 = vmul.f32 %v4739, %v3526
    %v5048 = vmul.f32 %v4749, %v3530
    %v5049 = vadd.f32 %v5047, %v5048
    %v5050 = vmul.f32 %v4757, %v3535
    %v5051 = vadd.f32 %v5049, %v5050
    %v5052 = vadd.f32 %v5041, %v4833
    %v5053 = vadd.f32 %v5046, %v4834
    %v5054 = vadd.f32 %v5051, %v4835
    %5055 = vrot.lane.b32.xlu0 %v2615, 120
    %v5056 = vpop.permute.xlu0 %5055
    %v5058 = vmul.f32 %v4963, %v5056
    %5059 = vrot.lane.b32.xlu0 %v2782, 120
    %v5060 = vpop.permute.xlu0 %5059
    %v5062 = vmul.f32 %v4977, %v5060
    %v5063 = vadd.f32 %v5058, %v5062
    %5064 = vrot.lane.b32.xlu0 %v2949, 120
    %v5065 = vpop.permute.xlu0 %5064
    %v5067 = vmul.f32 %v4991, %v5065
    %v5068 = vadd.f32 %v5063, %v5067
    %v5069 = vmul.f32 %v4996, %v4315
    %v5070 = vmul.f32 %v5004, %v4319
    %v5071 = vadd.f32 %v5069, %v5070
    %v5072 = vmul.f32 %v5012, %v4324
    %v5073 = vadd.f32 %v5071, %v5072
    %v5074 = vmul.f32 %v5017, %v3565
    %v5075 = vmul.f32 %v5022, %v3569
    %v5076 = vadd.f32 %v5074, %v5075
    %v5077 = vmul.f32 %v5027, %v3574
    %v5078 = vadd.f32 %v5076, %v5077
    %v5079 = vsub.f32 %v5052, %v5068
    %v5080 = vsub.f32 %v5053, %v5073
    %v5081 = vsub.f32 %v5054, %v5078
    %vm5082 = vcmp.eq.s32.totalorder %v2957, 8
    %v5083 = vsel %vm5082, 1, 0
    %v5084 = vcvt.s32.f32 %v5083
    %5086 = vset.pattern.permute.xlu0 0
    %5087 = vperm.xlu0 %5086, %v4963
    %v5088 = vpop.permute.xlu0 %5087
    %v5090 = vmul.f32 %v5088, %v5084
    %v5091 = vadd.f32 %v4872, %v5090
    %5093 = vset.pattern.permute.xlu0 3
    %5094 = vperm.xlu0 %5093, %v4996
    %v5095 = vpop.permute.xlu0 %5094
    %v5097 = vmul.f32 %v5095, %v5084
    %v5098 = vadd.f32 %v4879, %v5097
    %5100 = vset.pattern.permute.xlu0 6
    %5101 = vperm.xlu0 %5100, %v5017
    %v5102 = vpop.permute.xlu0 %5101
    %v5104 = vmul.f32 %v5102, %v5084
    %v5105 = vadd.f32 %v4886, %v5104
    %5107 = vset.pattern.permute.xlu0 0
    %5108 = vperm.xlu0 %5107, %v4977
    %v5109 = vpop.permute.xlu0 %5108
    %v5111 = vmul.f32 %v5109, %v5084
    %v5112 = vadd.f32 %v4893, %v5111
    %5114 = vset.pattern.permute.xlu0 3
    %5115 = vperm.xlu0 %5114, %v5004
    %v5116 = vpop.permute.xlu0 %5115
    %v5118 = vmul.f32 %v5116, %v5084
    %v5119 = vadd.f32 %v4900, %v5118
    %5121 = vset.pattern.permute.xlu0 6
    %5122 = vperm.xlu0 %5121, %v5022
    %v5123 = vpop.permute.xlu0 %5122
    %v5125 = vmul.f32 %v5123, %v5084
    %v5126 = vadd.f32 %v4907, %v5125
    %5128 = vset.pattern.permute.xlu0 0
    %5129 = vperm.xlu0 %5128, %v4991
    %v5130 = vpop.permute.xlu0 %5129
    %v5132 = vmul.f32 %v5130, %v5084
    %v5133 = vadd.f32 %v4914, %v5132
    %5135 = vset.pattern.permute.xlu0 3
    %5136 = vperm.xlu0 %5135, %v5012
    %v5137 = vpop.permute.xlu0 %5136
    %v5139 = vmul.f32 %v5137, %v5084
    %v5140 = vadd.f32 %v4921, %v5139
    %5142 = vset.pattern.permute.xlu0 6
    %5143 = vperm.xlu0 %5142, %v5027
    %v5144 = vpop.permute.xlu0 %5143
    %v5146 = vmul.f32 %v5144, %v5084
    %v5147 = vadd.f32 %v4928, %v5146
    %5149 = vset.pattern.permute.xlu0 0
    %5150 = vperm.xlu0 %5149, %v5079
    %v5151 = vpop.permute.xlu0 %5150
    %v5153 = vmul.f32 %v5151, %v5084
    %v5154 = vadd.f32 %v4935, %v5153
    %5156 = vset.pattern.permute.xlu0 3
    %5157 = vperm.xlu0 %5156, %v5080
    %v5158 = vpop.permute.xlu0 %5157
    %v5160 = vmul.f32 %v5158, %v5084
    %v5161 = vadd.f32 %v4942, %v5160
    %5163 = vset.pattern.permute.xlu0 6
    %5164 = vperm.xlu0 %5163, %v5081
    %v5165 = vpop.permute.xlu0 %5164
    %v5167 = vmul.f32 %v5165, %v5084
    %v5168 = vadd.f32 %v4949, %v5167
    %5169 = vrot.lane.b32.xlu0 %v2954, 47
    %v5170 = vpop.permute.xlu0 %5169
    %v5172 = vmul.f32 %v4963, %v5170
    %5173 = vrot.lane.b32.xlu0 %v2954, 44
    %v5174 = vpop.permute.xlu0 %5173
    %v5176 = vmul.f32 %v4977, %v5174
    %v5177 = vadd.f32 %v5172, %v5176
    %5178 = vrot.lane.b32.xlu0 %v2954, 41
    %v5179 = vpop.permute.xlu0 %5178
    %v5181 = vmul.f32 %v4991, %v5179
    %v5182 = vadd.f32 %v5177, %v5181
    %5183 = vrot.lane.b32.xlu0 %v2954, 46
    %v5184 = vpop.permute.xlu0 %5183
    %v5186 = vmul.f32 %v4963, %v5184
    %5187 = vrot.lane.b32.xlu0 %v2954, 43
    %v5188 = vpop.permute.xlu0 %5187
    %v5190 = vmul.f32 %v4977, %v5188
    %v5191 = vadd.f32 %v5186, %v5190
    %5192 = vrot.lane.b32.xlu0 %v2954, 40
    %v5193 = vpop.permute.xlu0 %5192
    %v5195 = vmul.f32 %v4991, %v5193
    %v5196 = vadd.f32 %v5191, %v5195
    %5197 = vrot.lane.b32.xlu0 %v2954, 45
    %v5198 = vpop.permute.xlu0 %5197
    %v5200 = vmul.f32 %v4963, %v5198
    %5201 = vrot.lane.b32.xlu0 %v2954, 42
    %v5202 = vpop.permute.xlu0 %5201
    %v5204 = vmul.f32 %v4977, %v5202
    %v5205 = vadd.f32 %v5200, %v5204
    %5206 = vrot.lane.b32.xlu0 %v2954, 39
    %v5207 = vpop.permute.xlu0 %5206
    %v5209 = vmul.f32 %v4991, %v5207
    %v5210 = vadd.f32 %v5205, %v5209
    %v5211 = vmul.f32 %v4996, %v4960
    %v5212 = vmul.f32 %v5004, %v5170
    %v5213 = vadd.f32 %v5211, %v5212
    %v5214 = vmul.f32 %v5012, %v5174
    %v5215 = vadd.f32 %v5213, %v5214
    %v5216 = vmul.f32 %v4996, %v4974
    %v5217 = vmul.f32 %v5004, %v5184
    %v5218 = vadd.f32 %v5216, %v5217
    %v5219 = vmul.f32 %v5012, %v5188
    %v5220 = vadd.f32 %v5218, %v5219
    %v5221 = vmul.f32 %v4996, %v4988
    %v5222 = vmul.f32 %v5004, %v5198
    %v5223 = vadd.f32 %v5221, %v5222
    %v5224 = vmul.f32 %v5012, %v5202
    %v5225 = vadd.f32 %v5223, %v5224
    %v5226 = vmul.f32 %v5017, %v4955
    %v5227 = vmul.f32 %v5022, %v4960
    %v5228 = vadd.f32 %v5226, %v5227
    %v5229 = vmul.f32 %v5027, %v5170
    %v5230 = vadd.f32 %v5228, %v5229
    %v5231 = vmul.f32 %v5017, %v4969
    %v5232 = vmul.f32 %v5022, %v4974
    %v5233 = vadd.f32 %v5231, %v5232
    %v5234 = vmul.f32 %v5027, %v5184
    %v5235 = vadd.f32 %v5233, %v5234
    %v5236 = vmul.f32 %v5017, %v4983
    %v5237 = vmul.f32 %v5022, %v4988
    %v5238 = vadd.f32 %v5236, %v5237
    %v5239 = vmul.f32 %v5027, %v5198
    %v5240 = vadd.f32 %v5238, %v5239
    %5241 = vrot.lane.b32.xlu0 %v3240, 119
    %v5242 = vpop.permute.xlu0 %5241
    %v5244 = vmul.f32 %v4963, %v5242
    %5245 = vrot.lane.b32.xlu0 %v3241, 119
    %v5246 = vpop.permute.xlu0 %5245
    %v5248 = vmul.f32 %v4977, %v5246
    %v5249 = vadd.f32 %v5244, %v5248
    %5250 = vrot.lane.b32.xlu0 %v3245, 119
    %v5251 = vpop.permute.xlu0 %5250
    %v5253 = vmul.f32 %v4991, %v5251
    %v5254 = vadd.f32 %v5249, %v5253
    %v5255 = vmul.f32 %v4996, %v4501
    %v5256 = vmul.f32 %v5004, %v4505
    %v5257 = vadd.f32 %v5255, %v5256
    %v5258 = vmul.f32 %v5012, %v4510
    %v5259 = vadd.f32 %v5257, %v5258
    %v5260 = vmul.f32 %v5017, %v3757
    %v5261 = vmul.f32 %v5022, %v3761
    %v5262 = vadd.f32 %v5260, %v5261
    %v5263 = vmul.f32 %v5027, %v3766
    %v5264 = vadd.f32 %v5262, %v5263
    %v5265 = vadd.f32 %v5254, %v5052
    %v5266 = vadd.f32 %v5259, %v5053
    %v5267 = vadd.f32 %v5264, %v5054
    %5268 = vrot.lane.b32.xlu0 %v2615, 119
    %v5269 = vpop.permute.xlu0 %5268
    %v5271 = vmul.f32 %v5182, %v5269
    %5272 = vrot.lane.b32.xlu0 %v2782, 119
    %v5273 = vpop.permute.xlu0 %5272
    %v5275 = vmul.f32 %v5196, %v5273
    %v5276 = vadd.f32 %v5271, %v5275
    %5277 = vrot.lane.b32.xlu0 %v2949, 119
    %v5278 = vpop.permute.xlu0 %5277
    %v5280 = vmul.f32 %v5210, %v5278
    %v5281 = vadd.f32 %v5276, %v5280
    %v5282 = vmul.f32 %v5215, %v4528
    %v5283 = vmul.f32 %v5220, %v4532
    %v5284 = vadd.f32 %v5282, %v5283
    %v5285 = vmul.f32 %v5225, %v4537
    %v5286 = vadd.f32 %v5284, %v5285
    %v5287 = vmul.f32 %v5230, %v3790
    %v5288 = vmul.f32 %v5235, %v3794
    %v5289 = vadd.f32 %v5287, %v5288
    %v5290 = vmul.f32 %v5240, %v3799
    %v5291 = vadd.f32 %v5289, %v5290
    %v5292 = vsub.f32 %v5265, %v5281
    %v5293 = vsub.f32 %v5266, %v5286
    %v5294 = vsub.f32 %v5267, %v5291
    %vm5295 = vcmp.eq.s32.totalorder %v2957, 9
    %v5296 = vsel %vm5295, 1, 0
    %v5297 = vcvt.s32.f32 %v5296
    %5299 = vset.pattern.permute.xlu0 0
    %5300 = vperm.xlu0 %5299, %v5182
    %v5301 = vpop.permute.xlu0 %5300
    %v5303 = vmul.f32 %v5301, %v5297
    %v5304 = vadd.f32 %v5091, %v5303
    %5306 = vset.pattern.permute.xlu0 3
    %5307 = vperm.xlu0 %5306, %v5215
    %v5308 = vpop.permute.xlu0 %5307
    %v5310 = vmul.f32 %v5308, %v5297
    %v5311 = vadd.f32 %v5098, %v5310
    %5313 = vset.pattern.permute.xlu0 6
    %5314 = vperm.xlu0 %5313, %v5230
    %v5315 = vpop.permute.xlu0 %5314
    %v5317 = vmul.f32 %v5315, %v5297
    %v5318 = vadd.f32 %v5105, %v5317
    %5320 = vset.pattern.permute.xlu0 0
    %5321 = vperm.xlu0 %5320, %v5196
    %v5322 = vpop.permute.xlu0 %5321
    %v5324 = vmul.f32 %v5322, %v5297
    %v5325 = vadd.f32 %v5112, %v5324
    %5327 = vset.pattern.permute.xlu0 3
    %5328 = vperm.xlu0 %5327, %v5220
    %v5329 = vpop.permute.xlu0 %5328
    %v5331 = vmul.f32 %v5329, %v5297
    %v5332 = vadd.f32 %v5119, %v5331
    %5334 = vset.pattern.permute.xlu0 6
    %5335 = vperm.xlu0 %5334, %v5235
    %v5336 = vpop.permute.xlu0 %5335
    %v5338 = vmul.f32 %v5336, %v5297
    %v5339 = vadd.f32 %v5126, %v5338
    %5341 = vset.pattern.permute.xlu0 0
    %5342 = vperm.xlu0 %5341, %v5210
    %v5343 = vpop.permute.xlu0 %5342
    %v5345 = vmul.f32 %v5343, %v5297
    %v5346 = vadd.f32 %v5133, %v5345
    %5348 = vset.pattern.permute.xlu0 3
    %5349 = vperm.xlu0 %5348, %v5225
    %v5350 = vpop.permute.xlu0 %5349
    %v5352 = vmul.f32 %v5350, %v5297
    %v5353 = vadd.f32 %v5140, %v5352
    %5355 = vset.pattern.permute.xlu0 6
    %5356 = vperm.xlu0 %5355, %v5240
    %v5357 = vpop.permute.xlu0 %5356
    %v5359 = vmul.f32 %v5357, %v5297
    %v5360 = vadd.f32 %v5147, %v5359
    %5362 = vset.pattern.permute.xlu0 0
    %5363 = vperm.xlu0 %5362, %v5292
    %v5364 = vpop.permute.xlu0 %5363
    %v5366 = vmul.f32 %v5364, %v5297
    %v5367 = vadd.f32 %v5154, %v5366
    %5369 = vset.pattern.permute.xlu0 3
    %5370 = vperm.xlu0 %5369, %v5293
    %v5371 = vpop.permute.xlu0 %5370
    %v5373 = vmul.f32 %v5371, %v5297
    %v5374 = vadd.f32 %v5161, %v5373
    %5376 = vset.pattern.permute.xlu0 6
    %5377 = vperm.xlu0 %5376, %v5294
    %v5378 = vpop.permute.xlu0 %5377
    %v5380 = vmul.f32 %v5378, %v5297
    %v5381 = vadd.f32 %v5168, %v5380
    %5382 = vrot.lane.b32.xlu0 %v2954, 38
    %v5383 = vpop.permute.xlu0 %5382
    %v5385 = vmul.f32 %v2954, %v5383
    %5386 = vrot.lane.b32.xlu0 %v2954, 36
    %v5387 = vpop.permute.xlu0 %5386
    %v5389 = vmul.f32 %v2954, %v5387
    %5391 = vrot.lane.b32.xlu0 %v5389, 127
    %v5392 = vpop.permute.xlu0 %5391
    %v5394 = vadd.f32 %v5385, %v5392
    %5395 = vrot.lane.b32.xlu0 %v2954, 34
    %v5396 = vpop.permute.xlu0 %5395
    %v5398 = vmul.f32 %v2954, %v5396
    %5400 = vrot.lane.b32.xlu0 %v5398, 126
    %v5401 = vpop.permute.xlu0 %5400
    %v5403 = vadd.f32 %v5394, %v5401
    %5404 = vrot.lane.b32.xlu0 %v2954, 37
    %v5405 = vpop.permute.xlu0 %5404
    %v5407 = vmul.f32 %v2954, %v5405
    %5408 = vrot.lane.b32.xlu0 %v2954, 35
    %v5409 = vpop.permute.xlu0 %5408
    %v5411 = vmul.f32 %v2954, %v5409
    %5413 = vrot.lane.b32.xlu0 %v5411, 127
    %v5414 = vpop.permute.xlu0 %5413
    %v5416 = vadd.f32 %v5407, %v5414
    %5417 = vrot.lane.b32.xlu0 %v2954, 33
    %v5418 = vpop.permute.xlu0 %5417
    %v5420 = vmul.f32 %v2954, %v5418
    %5422 = vrot.lane.b32.xlu0 %v5420, 126
    %v5423 = vpop.permute.xlu0 %5422
    %v5425 = vadd.f32 %v5416, %v5423
    %5426 = vrot.lane.b32.xlu0 %v5398, 127
    %v5427 = vpop.permute.xlu0 %5426
    %v5429 = vadd.f32 %v5389, %v5427
    %5430 = vrot.lane.b32.xlu0 %v2954, 32
    %v5431 = vpop.permute.xlu0 %5430
    %v5433 = vmul.f32 %v2954, %v5431
    %5435 = vrot.lane.b32.xlu0 %v5433, 126
    %v5436 = vpop.permute.xlu0 %5435
    %v5438 = vadd.f32 %v5429, %v5436
    %v5439 = vmul.f32 %v2954, %v5179
    %v5440 = vmul.f32 %v2954, %v5207
    %5442 = vrot.lane.b32.xlu0 %v5440, 127
    %v5443 = vpop.permute.xlu0 %5442
    %v5445 = vadd.f32 %v5439, %v5443
    %5447 = vrot.lane.b32.xlu0 %v5407, 126
    %v5448 = vpop.permute.xlu0 %5447
    %v5450 = vadd.f32 %v5445, %v5448
    %v5451 = vmul.f32 %v2954, %v5193
    %5453 = vrot.lane.b32.xlu0 %v5385, 127
    %v5454 = vpop.permute.xlu0 %5453
    %v5456 = vadd.f32 %v5451, %v5454
    %5457 = vrot.lane.b32.xlu0 %v5389, 126
    %v5458 = vpop.permute.xlu0 %5457
    %v5460 = vadd.f32 %v5456, %v5458
    %5461 = vrot.lane.b32.xlu0 %v5407, 127
    %v5462 = vpop.permute.xlu0 %5461
    %v5464 = vadd.f32 %v5440, %v5462
    %5465 = vrot.lane.b32.xlu0 %v5411, 126
    %v5466 = vpop.permute.xlu0 %5465
    %v5468 = vadd.f32 %v5464, %v5466
    %v5469 = vmul.f32 %v2954, %v5174
    %v5470 = vmul.f32 %v2954, %v5202
    %5472 = vrot.lane.b32.xlu0 %v5470, 127
    %v5473 = vpop.permute.xlu0 %5472
    %v5475 = vadd.f32 %v5469, %v5473
    %5477 = vrot.lane.b32.xlu0 %v5451, 126
    %v5478 = vpop.permute.xlu0 %5477
    %v5480 = vadd.f32 %v5475, %v5478
    %v5481 = vmul.f32 %v2954, %v5188
    %5483 = vrot.lane.b32.xlu0 %v5439, 127
    %v5484 = vpop.permute.xlu0 %5483
    %v5486 = vadd.f32 %v5481, %v5484
    %5487 = vrot.lane.b32.xlu0 %v5440, 126
    %v5488 = vpop.permute.xlu0 %5487
    %v5490 = vadd.f32 %v5486, %v5488
    %5491 = vrot.lane.b32.xlu0 %v5451, 127
    %v5492 = vpop.permute.xlu0 %5491
    %v5494 = vadd.f32 %v5470, %v5492
    %5495 = vrot.lane.b32.xlu0 %v5385, 126
    %v5496 = vpop.permute.xlu0 %5495
    %v5498 = vadd.f32 %v5494, %v5496
    %5499 = vrot.lane.b32.xlu0 %v2615, 10
    %v5500 = vpop.permute.xlu0 %5499
    %v5502 = vsub.f32 %v2615, %v5500
    %5503 = vrot.lane.b32.xlu0 %v2782, 10
    %v5504 = vpop.permute.xlu0 %5503
    %v5506 = vsub.f32 %v2782, %v5504
    %5507 = vrot.lane.b32.xlu0 %v2949, 10
    %v5508 = vpop.permute.xlu0 %5507
    %v5510 = vsub.f32 %v2949, %v5508
    %5512 = vrot.lane.b32.xlu0 %v5502, 118
    %v5513 = vpop.permute.xlu0 %5512
    %v5515 = vmul.f32 %v2954, %v5513
    %5517 = vrot.lane.b32.xlu0 %v5506, 119
    %v5518 = vpop.permute.xlu0 %5517
    %v5520 = vmul.f32 %v2954, %v5518
    %5522 = vrot.lane.b32.xlu0 %v5520, 127
    %v5523 = vpop.permute.xlu0 %5522
    %v5525 = vadd.f32 %v5515, %v5523
    %5527 = vrot.lane.b32.xlu0 %v5510, 120
    %v5528 = vpop.permute.xlu0 %5527
    %v5530 = vmul.f32 %v2954, %v5528
    %5532 = vrot.lane.b32.xlu0 %v5530, 126
    %v5533 = vpop.permute.xlu0 %5532
    %v5535 = vadd.f32 %v5525, %v5533
    %5536 = vrot.lane.b32.xlu0 %v5502, 121
    %v5537 = vpop.permute.xlu0 %5536
    %v5539 = vmul.f32 %v2954, %v5537
    %5540 = vrot.lane.b32.xlu0 %v5506, 122
    %v5541 = vpop.permute.xlu0 %5540
    %v5543 = vmul.f32 %v2954, %v5541
    %5545 = vrot.lane.b32.xlu0 %v5543, 127
    %v5546 = vpop.permute.xlu0 %5545
    %v5548 = vadd.f32 %v5539, %v5546
    %5549 = vrot.lane.b32.xlu0 %v5510, 123
    %v5550 = vpop.permute.xlu0 %5549
    %v5552 = vmul.f32 %v2954, %v5550
    %5554 = vrot.lane.b32.xlu0 %v5552, 126
    %v5555 = vpop.permute.xlu0 %5554
    %v5557 = vadd.f32 %v5548, %v5555
    %5558 = vrot.lane.b32.xlu0 %v5502, 124
    %v5559 = vpop.permute.xlu0 %5558
    %v5561 = vmul.f32 %v2954, %v5559
    %5562 = vrot.lane.b32.xlu0 %v5506, 125
    %v5563 = vpop.permute.xlu0 %5562
    %v5565 = vmul.f32 %v2954, %v5563
    %5567 = vrot.lane.b32.xlu0 %v5565, 127
    %v5568 = vpop.permute.xlu0 %5567
    %v5570 = vadd.f32 %v5561, %v5568
    %5571 = vrot.lane.b32.xlu0 %v5510, 126
    %v5572 = vpop.permute.xlu0 %5571
    %v5574 = vmul.f32 %v2954, %v5572
    %5576 = vrot.lane.b32.xlu0 %v5574, 126
    %v5577 = vpop.permute.xlu0 %5576
    %v5579 = vadd.f32 %v5570, %v5577
    %v5580 = vadd.f32 %v5535, %v2615
    %v5581 = vadd.f32 %v5557, %v3314
    %v5582 = vadd.f32 %v5579, %v3318
    %5583 = vrot.lane.b32.xlu0 %v2615, 118
    %v5584 = vpop.permute.xlu0 %5583
    %v5586 = vmul.f32 %v5403, %v5584
    %5587 = vrot.lane.b32.xlu0 %v2782, 118
    %v5588 = vpop.permute.xlu0 %5587
    %v5590 = vmul.f32 %v5425, %v5588
    %v5591 = vadd.f32 %v5586, %v5590
    %5592 = vrot.lane.b32.xlu0 %v2949, 118
    %v5593 = vpop.permute.xlu0 %5592
    %v5595 = vmul.f32 %v5438, %v5593
    %v5596 = vadd.f32 %v5591, %v5595
    %v5597 = vmul.f32 %v5450, %v4837
    %v5598 = vmul.f32 %v5460, %v4841
    %v5599 = vadd.f32 %v5597, %v5598
    %v5600 = vmul.f32 %v5468, %v4846
    %v5601 = vadd.f32 %v5599, %v5600
    %v5602 = vmul.f32 %v5480, %v4096
    %v5603 = vmul.f32 %v5490, %v4100
    %v5604 = vadd.f32 %v5602, %v5603
    %v5605 = vmul.f32 %v5498, %v4105
    %v5606 = vadd.f32 %v5604, %v5605
    %v5607 = vsub.f32 %v5580, %v5596
    %v5608 = vsub.f32 %v5581, %v5601
    %v5609 = vsub.f32 %v5582, %v5606
    %vm5610 = vcmp.eq.s32.totalorder %v2957, 10
    %v5611 = vsel %vm5610, 1, 0
    %v5612 = vcvt.s32.f32 %v5611
    %5614 = vset.pattern.permute.xlu0 0
    %5615 = vperm.xlu0 %5614, %v5403
    %v5616 = vpop.permute.xlu0 %5615
    %v5618 = vmul.f32 %v5616, %v5612
    %v5619 = vadd.f32 %v5304, %v5618
    %5621 = vset.pattern.permute.xlu0 3
    %5622 = vperm.xlu0 %5621, %v5450
    %v5623 = vpop.permute.xlu0 %5622
    %v5625 = vmul.f32 %v5623, %v5612
    %v5626 = vadd.f32 %v5311, %v5625
    %5628 = vset.pattern.permute.xlu0 6
    %5629 = vperm.xlu0 %5628, %v5480
    %v5630 = vpop.permute.xlu0 %5629
    %v5632 = vmul.f32 %v5630, %v5612
    %v5633 = vadd.f32 %v5318, %v5632
    %5635 = vset.pattern.permute.xlu0 0
    %5636 = vperm.xlu0 %5635, %v5425
    %v5637 = vpop.permute.xlu0 %5636
    %v5639 = vmul.f32 %v5637, %v5612
    %v5640 = vadd.f32 %v5325, %v5639
    %5642 = vset.pattern.permute.xlu0 3
    %5643 = vperm.xlu0 %5642, %v5460
    %v5644 = vpop.permute.xlu0 %5643
    %v5646 = vmul.f32 %v5644, %v5612
    %v5647 = vadd.f32 %v5332, %v5646
    %5649 = vset.pattern.permute.xlu0 6
    %5650 = vperm.xlu0 %5649, %v5490
    %v5651 = vpop.permute.xlu0 %5650
    %v5653 = vmul.f32 %v5651, %v5612
    %v5654 = vadd.f32 %v5339, %v5653
    %5656 = vset.pattern.permute.xlu0 0
    %5657 = vperm.xlu0 %5656, %v5438
    %v5658 = vpop.permute.xlu0 %5657
    %v5660 = vmul.f32 %v5658, %v5612
    %v5661 = vadd.f32 %v5346, %v5660
    %5663 = vset.pattern.permute.xlu0 3
    %5664 = vperm.xlu0 %5663, %v5468
    %v5665 = vpop.permute.xlu0 %5664
    %v5667 = vmul.f32 %v5665, %v5612
    %v5668 = vadd.f32 %v5353, %v5667
    %5670 = vset.pattern.permute.xlu0 6
    %5671 = vperm.xlu0 %5670, %v5498
    %v5672 = vpop.permute.xlu0 %5671
    %v5674 = vmul.f32 %v5672, %v5612
    %v5675 = vadd.f32 %v5360, %v5674
    %5677 = vset.pattern.permute.xlu0 0
    %5678 = vperm.xlu0 %5677, %v5607
    %v5679 = vpop.permute.xlu0 %5678
    %v5681 = vmul.f32 %v5679, %v5612
    %v5682 = vadd.f32 %v5367, %v5681
    %5684 = vset.pattern.permute.xlu0 3
    %5685 = vperm.xlu0 %5684, %v5608
    %v5686 = vpop.permute.xlu0 %5685
    %v5688 = vmul.f32 %v5686, %v5612
    %v5689 = vadd.f32 %v5374, %v5688
    %5691 = vset.pattern.permute.xlu0 6
    %5692 = vperm.xlu0 %5691, %v5609
    %v5693 = vpop.permute.xlu0 %5692
    %v5695 = vmul.f32 %v5693, %v5612
    %v5696 = vadd.f32 %v5381, %v5695
    %5697 = vrot.lane.b32.xlu0 %v2954, 29
    %v5698 = vpop.permute.xlu0 %5697
    %v5700 = vmul.f32 %v5403, %v5698
    %5701 = vrot.lane.b32.xlu0 %v2954, 26
    %v5702 = vpop.permute.xlu0 %5701
    %v5704 = vmul.f32 %v5425, %v5702
    %v5705 = vadd.f32 %v5700, %v5704
    %5706 = vrot.lane.b32.xlu0 %v2954, 23
    %v5707 = vpop.permute.xlu0 %5706
    %v5709 = vmul.f32 %v5438, %v5707
    %v5710 = vadd.f32 %v5705, %v5709
    %5711 = vrot.lane.b32.xlu0 %v2954, 28
    %v5712 = vpop.permute.xlu0 %5711
    %v5714 = vmul.f32 %v5403, %v5712
    %5715 = vrot.lane.b32.xlu0 %v2954, 25
    %v5716 = vpop.permute.xlu0 %5715
    %v5718 = vmul.f32 %v5425, %v5716
    %v5719 = vadd.f32 %v5714, %v5718
    %5720 = vrot.lane.b32.xlu0 %v2954, 22
    %v5721 = vpop.permute.xlu0 %5720
    %v5723 = vmul.f32 %v5438, %v5721
    %v5724 = vadd.f32 %v5719, %v5723
    %5725 = vrot.lane.b32.xlu0 %v2954, 27
    %v5726 = vpop.permute.xlu0 %5725
    %v5728 = vmul.f32 %v5403, %v5726
    %5729 = vrot.lane.b32.xlu0 %v2954, 24
    %v5730 = vpop.permute.xlu0 %5729
    %v5732 = vmul.f32 %v5425, %v5730
    %v5733 = vadd.f32 %v5728, %v5732
    %5734 = vrot.lane.b32.xlu0 %v2954, 21
    %v5735 = vpop.permute.xlu0 %5734
    %v5737 = vmul.f32 %v5438, %v5735
    %v5738 = vadd.f32 %v5733, %v5737
    %v5739 = vmul.f32 %v5450, %v5431
    %v5740 = vmul.f32 %v5460, %v5698
    %v5741 = vadd.f32 %v5739, %v5740
    %v5742 = vmul.f32 %v5468, %v5702
    %v5743 = vadd.f32 %v5741, %v5742
    %5744 = vrot.lane.b32.xlu0 %v2954, 31
    %v5745 = vpop.permute.xlu0 %5744
    %v5747 = vmul.f32 %v5450, %v5745
    %v5748 = vmul.f32 %v5460, %v5712
    %v5749 = vadd.f32 %v5747, %v5748
    %v5750 = vmul.f32 %v5468, %v5716
    %v5751 = vadd.f32 %v5749, %v5750
    %5752 = vrot.lane.b32.xlu0 %v2954, 30
    %v5753 = vpop.permute.xlu0 %5752
    %v5755 = vmul.f32 %v5450, %v5753
    %v5756 = vmul.f32 %v5460, %v5726
    %v5757 = vadd.f32 %v5755, %v5756
    %v5758 = vmul.f32 %v5468, %v5730
    %v5759 = vadd.f32 %v5757, %v5758
    %v5760 = vmul.f32 %v5480, %v5409
    %v5761 = vmul.f32 %v5490, %v5431
    %v5762 = vadd.f32 %v5760, %v5761
    %v5763 = vmul.f32 %v5498, %v5698
    %v5764 = vadd.f32 %v5762, %v5763
    %v5765 = vmul.f32 %v5480, %v5396
    %v5766 = vmul.f32 %v5490, %v5745
    %v5767 = vadd.f32 %v5765, %v5766
    %v5768 = vmul.f32 %v5498, %v5712
    %v5769 = vadd.f32 %v5767, %v5768
    %v5770 = vmul.f32 %v5480, %v5418
    %v5771 = vmul.f32 %v5490, %v5753
    %v5772 = vadd.f32 %v5770, %v5771
    %v5773 = vmul.f32 %v5498, %v5726
    %v5774 = vadd.f32 %v5772, %v5773
    %5775 = vrot.lane.b32.xlu0 %v3240, 117
    %v5776 = vpop.permute.xlu0 %5775
    %v5778 = vmul.f32 %v5403, %v5776
    %5779 = vrot.lane.b32.xlu0 %v3241, 117
    %v5780 = vpop.permute.xlu0 %5779
    %v5782 = vmul.f32 %v5425, %v5780
    %v5783 = vadd.f32 %v5778, %v5782
    %5784 = vrot.lane.b32.xlu0 %v3245, 117
    %v5785 = vpop.permute.xlu0 %5784
    %v5787 = vmul.f32 %v5438, %v5785
    %v5788 = vadd.f32 %v5783, %v5787
    %v5789 = vmul.f32 %v5450, %v5029
    %v5790 = vmul.f32 %v5460, %v5033
    %v5791 = vadd.f32 %v5789, %v5790
    %v5792 = vmul.f32 %v5468, %v5038
    %v5793 = vadd.f32 %v5791, %v5792
    %v5794 = vmul.f32 %v5480, %v4288
    %v5795 = vmul.f32 %v5490, %v4292
    %v5796 = vadd.f32 %v5794, %v5795
    %v5797 = vmul.f32 %v5498, %v4297
    %v5798 = vadd.f32 %v5796, %v5797
    %v5799 = vadd.f32 %v5788, %v5580
    %v5800 = vadd.f32 %v5793, %v5581
    %v5801 = vadd.f32 %v5798, %v5582
    %5802 = vrot.lane.b32.xlu0 %v2615, 117
    %v5803 = vpop.permute.xlu0 %5802
    %v5805 = vmul.f32 %v5710, %v5803
    %5806 = vrot.lane.b32.xlu0 %v2782, 117
    %v5807 = vpop.permute.xlu0 %5806
    %v5809 = vmul.f32 %v5724, %v5807
    %v5810 = vadd.f32 %v5805, %v5809
    %5811 = vrot.lane.b32.xlu0 %v2949, 117
    %v5812 = vpop.permute.xlu0 %5811
    %v5814 = vmul.f32 %v5738, %v5812
    %v5815 = vadd.f32 %v5810, %v5814
    %v5816 = vmul.f32 %v5743, %v5056
    %v5817 = vmul.f32 %v5751, %v5060
    %v5818 = vadd.f32 %v5816, %v5817
    %v5819 = vmul.f32 %v5759, %v5065
    %v5820 = vadd.f32 %v5818, %v5819
    %v5821 = vmul.f32 %v5764, %v4315
    %v5822 = vmul.f32 %v5769, %v4319
    %v5823 = vadd.f32 %v5821, %v5822
    %v5824 = vmul.f32 %v5774, %v4324
    %v5825 = vadd.f32 %v5823, %v5824
    %v5826 = vsub.f32 %v5799, %v5815
    %v5827 = vsub.f32 %v5800, %v5820
    %v5828 = vsub.f32 %v5801, %v5825
    %vm5829 = vcmp.eq.s32.totalorder %v2957, 11
    %v5830 = vsel %vm5829, 1, 0
    %v5831 = vcvt.s32.f32 %v5830
    %5833 = vset.pattern.permute.xlu0 0
    %5834 = vperm.xlu0 %5833, %v5710
    %v5835 = vpop.permute.xlu0 %5834
    %v5837 = vmul.f32 %v5835, %v5831
    %v5838 = vadd.f32 %v5619, %v5837
    %5840 = vset.pattern.permute.xlu0 3
    %5841 = vperm.xlu0 %5840, %v5743
    %v5842 = vpop.permute.xlu0 %5841
    %v5844 = vmul.f32 %v5842, %v5831
    %v5845 = vadd.f32 %v5626, %v5844
    %5847 = vset.pattern.permute.xlu0 6
    %5848 = vperm.xlu0 %5847, %v5764
    %v5849 = vpop.permute.xlu0 %5848
    %v5851 = vmul.f32 %v5849, %v5831
    %v5852 = vadd.f32 %v5633, %v5851
    %5854 = vset.pattern.permute.xlu0 0
    %5855 = vperm.xlu0 %5854, %v5724
    %v5856 = vpop.permute.xlu0 %5855
    %v5858 = vmul.f32 %v5856, %v5831
    %v5859 = vadd.f32 %v5640, %v5858
    %5861 = vset.pattern.permute.xlu0 3
    %5862 = vperm.xlu0 %5861, %v5751
    %v5863 = vpop.permute.xlu0 %5862
    %v5865 = vmul.f32 %v5863, %v5831
    %v5866 = vadd.f32 %v5647, %v5865
    %5868 = vset.pattern.permute.xlu0 6
    %5869 = vperm.xlu0 %5868, %v5769
    %v5870 = vpop.permute.xlu0 %5869
    %v5872 = vmul.f32 %v5870, %v5831
    %v5873 = vadd.f32 %v5654, %v5872
    %5875 = vset.pattern.permute.xlu0 0
    %5876 = vperm.xlu0 %5875, %v5738
    %v5877 = vpop.permute.xlu0 %5876
    %v5879 = vmul.f32 %v5877, %v5831
    %v5880 = vadd.f32 %v5661, %v5879
    %5882 = vset.pattern.permute.xlu0 3
    %5883 = vperm.xlu0 %5882, %v5759
    %v5884 = vpop.permute.xlu0 %5883
    %v5886 = vmul.f32 %v5884, %v5831
    %v5887 = vadd.f32 %v5668, %v5886
    %5889 = vset.pattern.permute.xlu0 6
    %5890 = vperm.xlu0 %5889, %v5774
    %v5891 = vpop.permute.xlu0 %5890
    %v5893 = vmul.f32 %v5891, %v5831
    %v5894 = vadd.f32 %v5675, %v5893
    %5896 = vset.pattern.permute.xlu0 0
    %5897 = vperm.xlu0 %5896, %v5826
    %v5898 = vpop.permute.xlu0 %5897
    %v5900 = vmul.f32 %v5898, %v5831
    %v5901 = vadd.f32 %v5682, %v5900
    %5903 = vset.pattern.permute.xlu0 3
    %5904 = vperm.xlu0 %5903, %v5827
    %v5905 = vpop.permute.xlu0 %5904
    %v5907 = vmul.f32 %v5905, %v5831
    %v5908 = vadd.f32 %v5689, %v5907
    %5910 = vset.pattern.permute.xlu0 6
    %5911 = vperm.xlu0 %5910, %v5828
    %v5912 = vpop.permute.xlu0 %5911
    %v5914 = vmul.f32 %v5912, %v5831
    %v5915 = vadd.f32 %v5696, %v5914
    %5916 = vrot.lane.b32.xlu0 %v2954, 20
    %v5917 = vpop.permute.xlu0 %5916
    %v5919 = vmul.f32 %v5710, %v5917
    %5920 = vrot.lane.b32.xlu0 %v2954, 17
    %v5921 = vpop.permute.xlu0 %5920
    %v5923 = vmul.f32 %v5724, %v5921
    %v5924 = vadd.f32 %v5919, %v5923
    %5925 = vrot.lane.b32.xlu0 %v2954, 14
    %v5926 = vpop.permute.xlu0 %5925
    %v5928 = vmul.f32 %v5738, %v5926
    %v5929 = vadd.f32 %v5924, %v5928
    %5930 = vrot.lane.b32.xlu0 %v2954, 19
    %v5931 = vpop.permute.xlu0 %5930
    %v5933 = vmul.f32 %v5710, %v5931
    %5934 = vrot.lane.b32.xlu0 %v2954, 16
    %v5935 = vpop.permute.xlu0 %5934
    %v5937 = vmul.f32 %v5724, %v5935
    %v5938 = vadd.f32 %v5933, %v5937
    %5939 = vrot.lane.b32.xlu0 %v2954, 13
    %v5940 = vpop.permute.xlu0 %5939
    %v5942 = vmul.f32 %v5738, %v5940
    %v5943 = vadd.f32 %v5938, %v5942
    %5944 = vrot.lane.b32.xlu0 %v2954, 18
    %v5945 = vpop.permute.xlu0 %5944
    %v5947 = vmul.f32 %v5710, %v5945
    %5948 = vrot.lane.b32.xlu0 %v2954, 15
    %v5949 = vpop.permute.xlu0 %5948
    %v5951 = vmul.f32 %v5724, %v5949
    %v5952 = vadd.f32 %v5947, %v5951
    %5953 = vrot.lane.b32.xlu0 %v2954, 12
    %v5954 = vpop.permute.xlu0 %5953
    %v5956 = vmul.f32 %v5738, %v5954
    %v5957 = vadd.f32 %v5952, %v5956
    %v5958 = vmul.f32 %v5743, %v5707
    %v5959 = vmul.f32 %v5751, %v5917
    %v5960 = vadd.f32 %v5958, %v5959
    %v5961 = vmul.f32 %v5759, %v5921
    %v5962 = vadd.f32 %v5960, %v5961
    %v5963 = vmul.f32 %v5743, %v5721
    %v5964 = vmul.f32 %v5751, %v5931
    %v5965 = vadd.f32 %v5963, %v5964
    %v5966 = vmul.f32 %v5759, %v5935
    %v5967 = vadd.f32 %v5965, %v5966
    %v5968 = vmul.f32 %v5743, %v5735
    %v5969 = vmul.f32 %v5751, %v5945
    %v5970 = vadd.f32 %v5968, %v5969
    %v5971 = vmul.f32 %v5759, %v5949
    %v5972 = vadd.f32 %v5970, %v5971
    %v5973 = vmul.f32 %v5764, %v5702
    %v5974 = vmul.f32 %v5769, %v5707
    %v5975 = vadd.f32 %v5973, %v5974
    %v5976 = vmul.f32 %v5774, %v5917
    %v5977 = vadd.f32 %v5975, %v5976
    %v5978 = vmul.f32 %v5764, %v5716
    %v5979 = vmul.f32 %v5769, %v5721
    %v5980 = vadd.f32 %v5978, %v5979
    %v5981 = vmul.f32 %v5774, %v5931
    %v5982 = vadd.f32 %v5980, %v5981
    %v5983 = vmul.f32 %v5764, %v5730
    %v5984 = vmul.f32 %v5769, %v5735
    %v5985 = vadd.f32 %v5983, %v5984
    %v5986 = vmul.f32 %v5774, %v5945
    %v5987 = vadd.f32 %v5985, %v5986
    %5988 = vrot.lane.b32.xlu0 %v3240, 116
    %v5989 = vpop.permute.xlu0 %5988
    %v5991 = vmul.f32 %v5710, %v5989
    %5992 = vrot.lane.b32.xlu0 %v3241, 116
    %v5993 = vpop.permute.xlu0 %5992
    %v5995 = vmul.f32 %v5724, %v5993
    %v5996 = vadd.f32 %v5991, %v5995
    %5997 = vrot.lane.b32.xlu0 %v3245, 116
    %v5998 = vpop.permute.xlu0 %5997
    %v6000 = vmul.f32 %v5738, %v5998
    %v6001 = vadd.f32 %v5996, %v6000
    %v6002 = vmul.f32 %v5743, %v5242
    %v6003 = vmul.f32 %v5751, %v5246
    %v6004 = vadd.f32 %v6002, %v6003
    %v6005 = vmul.f32 %v5759, %v5251
    %v6006 = vadd.f32 %v6004, %v6005
    %v6007 = vmul.f32 %v5764, %v4501
    %v6008 = vmul.f32 %v5769, %v4505
    %v6009 = vadd.f32 %v6007, %v6008
    %v6010 = vmul.f32 %v5774, %v4510
    %v6011 = vadd.f32 %v6009, %v6010
    %v6012 = vadd.f32 %v6001, %v5799
    %v6013 = vadd.f32 %v6006, %v5800
    %v6014 = vadd.f32 %v6011, %v5801
    %6015 = vrot.lane.b32.xlu0 %v2615, 116
    %v6016 = vpop.permute.xlu0 %6015
    %v6018 = vmul.f32 %v5929, %v6016
    %6019 = vrot.lane.b32.xlu0 %v2782, 116
    %v6020 = vpop.permute.xlu0 %6019
    %v6022 = vmul.f32 %v5943, %v6020
    %v6023 = vadd.f32 %v6018, %v6022
    %6024 = vrot.lane.b32.xlu0 %v2949, 116
    %v6025 = vpop.permute.xlu0 %6024
    %v6027 = vmul.f32 %v5957, %v6025
    %v6028 = vadd.f32 %v6023, %v6027
    %v6029 = vmul.f32 %v5962, %v5269
    %v6030 = vmul.f32 %v5967, %v5273
    %v6031 = vadd.f32 %v6029, %v6030
    %v6032 = vmul.f32 %v5972, %v5278
    %v6033 = vadd.f32 %v6031, %v6032
    %v6034 = vmul.f32 %v5977, %v4528
    %v6035 = vmul.f32 %v5982, %v4532
    %v6036 = vadd.f32 %v6034, %v6035
    %v6037 = vmul.f32 %v5987, %v4537
    %v6038 = vadd.f32 %v6036, %v6037
    %v6039 = vsub.f32 %v6012, %v6028
    %v6040 = vsub.f32 %v6013, %v6033
    %v6041 = vsub.f32 %v6014, %v6038
    %vm6042 = vcmp.eq.s32.totalorder %v2957, 12
    %v6043 = vsel %vm6042, 1, 0
    %v6044 = vcvt.s32.f32 %v6043
    %6046 = vset.pattern.permute.xlu0 0
    %6047 = vperm.xlu0 %6046, %v5929
    %v6048 = vpop.permute.xlu0 %6047
    %v6050 = vmul.f32 %v6048, %v6044
    %v6051 = vadd.f32 %v5838, %v6050
    %6053 = vset.pattern.permute.xlu0 3
    %6054 = vperm.xlu0 %6053, %v5962
    %v6055 = vpop.permute.xlu0 %6054
    %v6057 = vmul.f32 %v6055, %v6044
    %v6058 = vadd.f32 %v5845, %v6057
    %6060 = vset.pattern.permute.xlu0 6
    %6061 = vperm.xlu0 %6060, %v5977
    %v6062 = vpop.permute.xlu0 %6061
    %v6064 = vmul.f32 %v6062, %v6044
    %v6065 = vadd.f32 %v5852, %v6064
    %6067 = vset.pattern.permute.xlu0 0
    %6068 = vperm.xlu0 %6067, %v5943
    %v6069 = vpop.permute.xlu0 %6068
    %v6071 = vmul.f32 %v6069, %v6044
    %v6072 = vadd.f32 %v5859, %v6071
    %6074 = vset.pattern.permute.xlu0 3
    %6075 = vperm.xlu0 %6074, %v5967
    %v6076 = vpop.permute.xlu0 %6075
    %v6078 = vmul.f32 %v6076, %v6044
    %v6079 = vadd.f32 %v5866, %v6078
    %6081 = vset.pattern.permute.xlu0 6
    %6082 = vperm.xlu0 %6081, %v5982
    %v6083 = vpop.permute.xlu0 %6082
    %v6085 = vmul.f32 %v6083, %v6044
    %v6086 = vadd.f32 %v5873, %v6085
    %6088 = vset.pattern.permute.xlu0 0
    %6089 = vperm.xlu0 %6088, %v5957
    %v6090 = vpop.permute.xlu0 %6089
    %v6092 = vmul.f32 %v6090, %v6044
    %v6093 = vadd.f32 %v5880, %v6092
    %6095 = vset.pattern.permute.xlu0 3
    %6096 = vperm.xlu0 %6095, %v5972
    %v6097 = vpop.permute.xlu0 %6096
    %v6099 = vmul.f32 %v6097, %v6044
    %v6100 = vadd.f32 %v5887, %v6099
    %6102 = vset.pattern.permute.xlu0 6
    %6103 = vperm.xlu0 %6102, %v5987
    %v6104 = vpop.permute.xlu0 %6103
    %v6106 = vmul.f32 %v6104, %v6044
    %v6107 = vadd.f32 %v5894, %v6106
    %6109 = vset.pattern.permute.xlu0 0
    %6110 = vperm.xlu0 %6109, %v6039
    %v6111 = vpop.permute.xlu0 %6110
    %v6113 = vmul.f32 %v6111, %v6044
    %v6114 = vadd.f32 %v5901, %v6113
    %6116 = vset.pattern.permute.xlu0 3
    %6117 = vperm.xlu0 %6116, %v6040
    %v6118 = vpop.permute.xlu0 %6117
    %v6120 = vmul.f32 %v6118, %v6044
    %v6121 = vadd.f32 %v5908, %v6120
    %6123 = vset.pattern.permute.xlu0 6
    %6124 = vperm.xlu0 %6123, %v6041
    %v6125 = vpop.permute.xlu0 %6124
    %v6127 = vmul.f32 %v6125, %v6044
    %v6128 = vadd.f32 %v5915, %v6127
    %6129 = vrot.lane.b32.xlu0 %v2954, 11
    %v6130 = vpop.permute.xlu0 %6129
    %v6132 = vmul.f32 %v2954, %v6130
    %6133 = vrot.lane.b32.xlu0 %v2954, 9
    %v6134 = vpop.permute.xlu0 %6133
    %v6136 = vmul.f32 %v2954, %v6134
    %6138 = vrot.lane.b32.xlu0 %v6136, 127
    %v6139 = vpop.permute.xlu0 %6138
    %v6141 = vadd.f32 %v6132, %v6139
    %6142 = vrot.lane.b32.xlu0 %v2954, 7
    %v6143 = vpop.permute.xlu0 %6142
    %v6145 = vmul.f32 %v2954, %v6143
    %6147 = vrot.lane.b32.xlu0 %v6145, 126
    %v6148 = vpop.permute.xlu0 %6147
    %v6150 = vadd.f32 %v6141, %v6148
    %6151 = vrot.lane.b32.xlu0 %v2954, 10
    %v6152 = vpop.permute.xlu0 %6151
    %v6154 = vmul.f32 %v2954, %v6152
    %6155 = vrot.lane.b32.xlu0 %v2954, 8
    %v6156 = vpop.permute.xlu0 %6155
    %v6158 = vmul.f32 %v2954, %v6156
    %6160 = vrot.lane.b32.xlu0 %v6158, 127
    %v6161 = vpop.permute.xlu0 %6160
    %v6163 = vadd.f32 %v6154, %v6161
    %6164 = vrot.lane.b32.xlu0 %v2954, 6
    %v6165 = vpop.permute.xlu0 %6164
    %v6167 = vmul.f32 %v2954, %v6165
    %6169 = vrot.lane.b32.xlu0 %v6167, 126
    %v6170 = vpop.permute.xlu0 %6169
    %v6172 = vadd.f32 %v6163, %v6170
    %6173 = vrot.lane.b32.xlu0 %v6145, 127
    %v6174 = vpop.permute.xlu0 %6173
    %v6176 = vadd.f32 %v6136, %v6174
    %6177 = vrot.lane.b32.xlu0 %v2954, 5
    %v6178 = vpop.permute.xlu0 %6177
    %v6180 = vmul.f32 %v2954, %v6178
    %6182 = vrot.lane.b32.xlu0 %v6180, 126
    %v6183 = vpop.permute.xlu0 %6182
    %v6185 = vadd.f32 %v6176, %v6183
    %v6186 = vmul.f32 %v2954, %v5926
    %v6187 = vmul.f32 %v2954, %v5954
    %6189 = vrot.lane.b32.xlu0 %v6187, 127
    %v6190 = vpop.permute.xlu0 %6189
    %v6192 = vadd.f32 %v6186, %v6190
    %6194 = vrot.lane.b32.xlu0 %v6154, 126
    %v6195 = vpop.permute.xlu0 %6194
    %v6197 = vadd.f32 %v6192, %v6195
    %v6198 = vmul.f32 %v2954, %v5940
    %6200 = vrot.lane.b32.xlu0 %v6132, 127
    %v6201 = vpop.permute.xlu0 %6200
    %v6203 = vadd.f32 %v6198, %v6201
    %6204 = vrot.lane.b32.xlu0 %v6136, 126
    %v6205 = vpop.permute.xlu0 %6204
    %v6207 = vadd.f32 %v6203, %v6205
    %6208 = vrot.lane.b32.xlu0 %v6154, 127
    %v6209 = vpop.permute.xlu0 %6208
    %v6211 = vadd.f32 %v6187, %v6209
    %6212 = vrot.lane.b32.xlu0 %v6158, 126
    %v6213 = vpop.permute.xlu0 %6212
    %v6215 = vadd.f32 %v6211, %v6213
    %v6216 = vmul.f32 %v2954, %v5921
    %v6217 = vmul.f32 %v2954, %v5949
    %6219 = vrot.lane.b32.xlu0 %v6217, 127
    %v6220 = vpop.permute.xlu0 %6219
    %v6222 = vadd.f32 %v6216, %v6220
    %6224 = vrot.lane.b32.xlu0 %v6198, 126
    %v6225 = vpop.permute.xlu0 %6224
    %v6227 = vadd.f32 %v6222, %v6225
    %v6228 = vmul.f32 %v2954, %v5935
    %6230 = vrot.lane.b32.xlu0 %v6186, 127
    %v6231 = vpop.permute.xlu0 %6230
    %v6233 = vadd.f32 %v6228, %v6231
    %6234 = vrot.lane.b32.xlu0 %v6187, 126
    %v6235 = vpop.permute.xlu0 %6234
    %v6237 = vadd.f32 %v6233, %v6235
    %6238 = vrot.lane.b32.xlu0 %v6198, 127
    %v6239 = vpop.permute.xlu0 %6238
    %v6241 = vadd.f32 %v6217, %v6239
    %6242 = vrot.lane.b32.xlu0 %v6132, 126
    %v6243 = vpop.permute.xlu0 %6242
    %v6245 = vadd.f32 %v6241, %v6243
    %6246 = vrot.lane.b32.xlu0 %v2615, 13
    %v6247 = vpop.permute.xlu0 %6246
    %v6249 = vsub.f32 %v2615, %v6247
    %6250 = vrot.lane.b32.xlu0 %v2782, 13
    %v6251 = vpop.permute.xlu0 %6250
    %v6253 = vsub.f32 %v2782, %v6251
    %6254 = vrot.lane.b32.xlu0 %v2949, 13
    %v6255 = vpop.permute.xlu0 %6254
    %v6257 = vsub.f32 %v2949, %v6255
    %6259 = vrot.lane.b32.xlu0 %v6249, 115
    %v6260 = vpop.permute.xlu0 %6259
    %v6262 = vmul.f32 %v2954, %v6260
    %6264 = vrot.lane.b32.xlu0 %v6253, 116
    %v6265 = vpop.permute.xlu0 %6264
    %v6267 = vmul.f32 %v2954, %v6265
    %6269 = vrot.lane.b32.xlu0 %v6267, 127
    %v6270 = vpop.permute.xlu0 %6269
    %v6272 = vadd.f32 %v6262, %v6270
    %6274 = vrot.lane.b32.xlu0 %v6257, 117
    %v6275 = vpop.permute.xlu0 %6274
    %v6277 = vmul.f32 %v2954, %v6275
    %6279 = vrot.lane.b32.xlu0 %v6277, 126
    %v6280 = vpop.permute.xlu0 %6279
    %v6282 = vadd.f32 %v6272, %v6280
    %6283 = vrot.lane.b32.xlu0 %v6249, 118
    %v6284 = vpop.permute.xlu0 %6283
    %v6286 = vmul.f32 %v2954, %v6284
    %6287 = vrot.lane.b32.xlu0 %v6253, 119
    %v6288 = vpop.permute.xlu0 %6287
    %v6290 = vmul.f32 %v2954, %v6288
    %6292 = vrot.lane.b32.xlu0 %v6290, 127
    %v6293 = vpop.permute.xlu0 %6292
    %v6295 = vadd.f32 %v6286, %v6293
    %6296 = vrot.lane.b32.xlu0 %v6257, 120
    %v6297 = vpop.permute.xlu0 %6296
    %v6299 = vmul.f32 %v2954, %v6297
    %6301 = vrot.lane.b32.xlu0 %v6299, 126
    %v6302 = vpop.permute.xlu0 %6301
    %v6304 = vadd.f32 %v6295, %v6302
    %6305 = vrot.lane.b32.xlu0 %v6249, 121
    %v6306 = vpop.permute.xlu0 %6305
    %v6308 = vmul.f32 %v2954, %v6306
    %6309 = vrot.lane.b32.xlu0 %v6253, 122
    %v6310 = vpop.permute.xlu0 %6309
    %v6312 = vmul.f32 %v2954, %v6310
    %6314 = vrot.lane.b32.xlu0 %v6312, 127
    %v6315 = vpop.permute.xlu0 %6314
    %v6317 = vadd.f32 %v6308, %v6315
    %6318 = vrot.lane.b32.xlu0 %v6257, 123
    %v6319 = vpop.permute.xlu0 %6318
    %v6321 = vmul.f32 %v2954, %v6319
    %6323 = vrot.lane.b32.xlu0 %v6321, 126
    %v6324 = vpop.permute.xlu0 %6323
    %v6326 = vadd.f32 %v6317, %v6324
    %v6327 = vadd.f32 %v6282, %v2615
    %v6328 = vadd.f32 %v6304, %v3314
    %v6329 = vadd.f32 %v6326, %v3318
    %6330 = vrot.lane.b32.xlu0 %v2615, 115
    %v6331 = vpop.permute.xlu0 %6330
    %v6333 = vmul.f32 %v6150, %v6331
    %6334 = vrot.lane.b32.xlu0 %v2782, 115
    %v6335 = vpop.permute.xlu0 %6334
    %v6337 = vmul.f32 %v6172, %v6335
    %v6338 = vadd.f32 %v6333, %v6337
    %6339 = vrot.lane.b32.xlu0 %v2949, 115
    %v6340 = vpop.permute.xlu0 %6339
    %v6342 = vmul.f32 %v6185, %v6340
    %v6343 = vadd.f32 %v6338, %v6342
    %v6344 = vmul.f32 %v6197, %v5584
    %v6345 = vmul.f32 %v6207, %v5588
    %v6346 = vadd.f32 %v6344, %v6345
    %v6347 = vmul.f32 %v6215, %v5593
    %v6348 = vadd.f32 %v6346, %v6347
    %v6349 = vmul.f32 %v6227, %v4837
    %v6350 = vmul.f32 %v6237, %v4841
    %v6351 = vadd.f32 %v6349, %v6350
    %v6352 = vmul.f32 %v6245, %v4846
    %v6353 = vadd.f32 %v6351, %v6352
    %v6354 = vsub.f32 %v6327, %v6343
    %v6355 = vsub.f32 %v6328, %v6348
    %v6356 = vsub.f32 %v6329, %v6353
    %vm6357 = vcmp.eq.s32.totalorder %v2957, 13
    %v6358 = vsel %vm6357, 1, 0
    %v6359 = vcvt.s32.f32 %v6358
    %6361 = vset.pattern.permute.xlu0 0
    %6362 = vperm.xlu0 %6361, %v6150
    %v6363 = vpop.permute.xlu0 %6362
    %v6365 = vmul.f32 %v6363, %v6359
    %v6366 = vadd.f32 %v6051, %v6365
    %6368 = vset.pattern.permute.xlu0 3
    %6369 = vperm.xlu0 %6368, %v6197
    %v6370 = vpop.permute.xlu0 %6369
    %v6372 = vmul.f32 %v6370, %v6359
    %v6373 = vadd.f32 %v6058, %v6372
    %6375 = vset.pattern.permute.xlu0 6
    %6376 = vperm.xlu0 %6375, %v6227
    %v6377 = vpop.permute.xlu0 %6376
    %v6379 = vmul.f32 %v6377, %v6359
    %v6380 = vadd.f32 %v6065, %v6379
    %6382 = vset.pattern.permute.xlu0 0
    %6383 = vperm.xlu0 %6382, %v6172
    %v6384 = vpop.permute.xlu0 %6383
    %v6386 = vmul.f32 %v6384, %v6359
    %v6387 = vadd.f32 %v6072, %v6386
    %6389 = vset.pattern.permute.xlu0 3
    %6390 = vperm.xlu0 %6389, %v6207
    %v6391 = vpop.permute.xlu0 %6390
    %v6393 = vmul.f32 %v6391, %v6359
    %v6394 = vadd.f32 %v6079, %v6393
    %6396 = vset.pattern.permute.xlu0 6
    %6397 = vperm.xlu0 %6396, %v6237
    %v6398 = vpop.permute.xlu0 %6397
    %v6400 = vmul.f32 %v6398, %v6359
    %v6401 = vadd.f32 %v6086, %v6400
    %6403 = vset.pattern.permute.xlu0 0
    %6404 = vperm.xlu0 %6403, %v6185
    %v6405 = vpop.permute.xlu0 %6404
    %v6407 = vmul.f32 %v6405, %v6359
    %v6408 = vadd.f32 %v6093, %v6407
    %6410 = vset.pattern.permute.xlu0 3
    %6411 = vperm.xlu0 %6410, %v6215
    %v6412 = vpop.permute.xlu0 %6411
    %v6414 = vmul.f32 %v6412, %v6359
    %v6415 = vadd.f32 %v6100, %v6414
    %6417 = vset.pattern.permute.xlu0 6
    %6418 = vperm.xlu0 %6417, %v6245
    %v6419 = vpop.permute.xlu0 %6418
    %v6421 = vmul.f32 %v6419, %v6359
    %v6422 = vadd.f32 %v6107, %v6421
    %6424 = vset.pattern.permute.xlu0 0
    %6425 = vperm.xlu0 %6424, %v6354
    %v6426 = vpop.permute.xlu0 %6425
    %v6428 = vmul.f32 %v6426, %v6359
    %v6429 = vadd.f32 %v6114, %v6428
    %6431 = vset.pattern.permute.xlu0 3
    %6432 = vperm.xlu0 %6431, %v6355
    %v6433 = vpop.permute.xlu0 %6432
    %v6435 = vmul.f32 %v6433, %v6359
    %v6436 = vadd.f32 %v6121, %v6435
    %6438 = vset.pattern.permute.xlu0 6
    %6439 = vperm.xlu0 %6438, %v6356
    %v6440 = vpop.permute.xlu0 %6439
    %v6442 = vmul.f32 %v6440, %v6359
    %v6443 = vadd.f32 %v6128, %v6442
    %6444 = vrot.lane.b32.xlu0 %v2954, 2
    %v6445 = vpop.permute.xlu0 %6444
    %v6447 = vmul.f32 %v6150, %v6445
    %6449 = vrot.lane.b32.xlu0 %v2955, 127
    %v6450 = vpop.permute.xlu0 %6449
    %v6452 = vmul.f32 %v6172, %v6450
    %v6453 = vadd.f32 %v6447, %v6452
    %6454 = vrot.lane.b32.xlu0 %v2955, 124
    %v6455 = vpop.permute.xlu0 %6454
    %v6457 = vmul.f32 %v6185, %v6455
    %v6458 = vadd.f32 %v6453, %v6457
    %6459 = vrot.lane.b32.xlu0 %v2954, 1
    %v6460 = vpop.permute.xlu0 %6459
    %v6462 = vmul.f32 %v6150, %v6460
    %6463 = vrot.lane.b32.xlu0 %v2955, 126
    %v6464 = vpop.permute.xlu0 %6463
    %v6466 = vmul.f32 %v6172, %v6464
    %v6467 = vadd.f32 %v6462, %v6466
    %6468 = vrot.lane.b32.xlu0 %v2955, 123
    %v6469 = vpop.permute.xlu0 %6468
    %v6471 = vmul.f32 %v6185, %v6469
    %v6472 = vadd.f32 %v6467, %v6471
    %v6473 = vmul.f32 %v6150, %v2955
    %6474 = vrot.lane.b32.xlu0 %v2955, 125
    %v6475 = vpop.permute.xlu0 %6474
    %v6477 = vmul.f32 %v6172, %v6475
    %v6478 = vadd.f32 %v6473, %v6477
    %6479 = vrot.lane.b32.xlu0 %v2955, 122
    %v6480 = vpop.permute.xlu0 %6479
    %v6482 = vmul.f32 %v6185, %v6480
    %v6483 = vadd.f32 %v6478, %v6482
    %v6484 = vmul.f32 %v6197, %v6178
    %6485 = vrot.lane.b32.xlu0 %v2955, 2
    %v6486 = vpop.permute.xlu0 %6485
    %v6488 = vmul.f32 %v6207, %v6486
    %v6489 = vadd.f32 %v6484, %v6488
    %v6490 = vmul.f32 %v6215, %v6450
    %v6491 = vadd.f32 %v6489, %v6490
    %6492 = vrot.lane.b32.xlu0 %v2954, 4
    %v6493 = vpop.permute.xlu0 %6492
    %v6495 = vmul.f32 %v6197, %v6493
    %6496 = vrot.lane.b32.xlu0 %v2955, 1
    %v6497 = vpop.permute.xlu0 %6496
    %v6499 = vmul.f32 %v6207, %v6497
    %v6500 = vadd.f32 %v6495, %v6499
    %v6501 = vmul.f32 %v6215, %v6464
    %v6502 = vadd.f32 %v6500, %v6501
    %6503 = vrot.lane.b32.xlu0 %v2955, 3
    %v6504 = vpop.permute.xlu0 %6503
    %v6506 = vmul.f32 %v6197, %v6504
    %v6507 = vmul.f32 %v6207, %v2955
    %v6508 = vadd.f32 %v6506, %v6507
    %v6509 = vmul.f32 %v6215, %v6475
    %v6510 = vadd.f32 %v6508, %v6509
    %v6511 = vmul.f32 %v6227, %v6156
    %6512 = vrot.lane.b32.xlu0 %v2955, 5
    %v6513 = vpop.permute.xlu0 %6512
    %v6515 = vmul.f32 %v6237, %v6513
    %v6516 = vadd.f32 %v6511, %v6515
    %v6517 = vmul.f32 %v6245, %v6486
    %v6518 = vadd.f32 %v6516, %v6517
    %v6519 = vmul.f32 %v6227, %v6143
    %6520 = vrot.lane.b32.xlu0 %v2955, 4
    %v6521 = vpop.permute.xlu0 %6520
    %v6523 = vmul.f32 %v6237, %v6521
    %v6524 = vadd.f32 %v6519, %v6523
    %v6525 = vmul.f32 %v6245, %v6497
    %v6526 = vadd.f32 %v6524, %v6525
    %6527 = vrot.lane.b32.xlu0 %v2955, 6
    %v6528 = vpop.permute.xlu0 %6527
    %v6530 = vmul.f32 %v6227, %v6528
    %v6531 = vmul.f32 %v6237, %v6504
    %v6532 = vadd.f32 %v6530, %v6531
    %v6533 = vmul.f32 %v6245, %v2955
    %v6534 = vadd.f32 %v6532, %v6533
    %6535 = vrot.lane.b32.xlu0 %v3240, 114
    %v6536 = vpop.permute.xlu0 %6535
    %v6538 = vmul.f32 %v6150, %v6536
    %6539 = vrot.lane.b32.xlu0 %v3241, 114
    %v6540 = vpop.permute.xlu0 %6539
    %v6542 = vmul.f32 %v6172, %v6540
    %v6543 = vadd.f32 %v6538, %v6542
    %6544 = vrot.lane.b32.xlu0 %v3245, 114
    %v6545 = vpop.permute.xlu0 %6544
    %v6547 = vmul.f32 %v6185, %v6545
    %v6548 = vadd.f32 %v6543, %v6547
    %v6549 = vmul.f32 %v6197, %v5776
    %v6550 = vmul.f32 %v6207, %v5780
    %v6551 = vadd.f32 %v6549, %v6550
    %v6552 = vmul.f32 %v6215, %v5785
    %v6553 = vadd.f32 %v6551, %v6552
    %v6554 = vmul.f32 %v6227, %v5029
    %v6555 = vmul.f32 %v6237, %v5033
    %v6556 = vadd.f32 %v6554, %v6555
    %v6557 = vmul.f32 %v6245, %v5038
    %v6558 = vadd.f32 %v6556, %v6557
    %v6559 = vadd.f32 %v6548, %v6327
    %v6560 = vadd.f32 %v6553, %v6328
    %v6561 = vadd.f32 %v6558, %v6329
    %6562 = vrot.lane.b32.xlu0 %v2615, 114
    %v6563 = vpop.permute.xlu0 %6562
    %v6565 = vmul.f32 %v6458, %v6563
    %6566 = vrot.lane.b32.xlu0 %v2782, 114
    %v6567 = vpop.permute.xlu0 %6566
    %v6569 = vmul.f32 %v6472, %v6567
    %v6570 = vadd.f32 %v6565, %v6569
    %6571 = vrot.lane.b32.xlu0 %v2949, 114
    %v6572 = vpop.permute.xlu0 %6571
    %v6574 = vmul.f32 %v6483, %v6572
    %v6575 = vadd.f32 %v6570, %v6574
    %v6576 = vmul.f32 %v6491, %v5803
    %v6577 = vmul.f32 %v6502, %v5807
    %v6578 = vadd.f32 %v6576, %v6577
    %v6579 = vmul.f32 %v6510, %v5812
    %v6580 = vadd.f32 %v6578, %v6579
    %v6581 = vmul.f32 %v6518, %v5056
    %v6582 = vmul.f32 %v6526, %v5060
    %v6583 = vadd.f32 %v6581, %v6582
    %v6584 = vmul.f32 %v6534, %v5065
    %v6585 = vadd.f32 %v6583, %v6584
    %v6586 = vsub.f32 %v6559, %v6575
    %v6587 = vsub.f32 %v6560, %v6580
    %v6588 = vsub.f32 %v6561, %v6585
    %vm6589 = vcmp.eq.s32.totalorder %v2957, 14
    %v6590 = vsel %vm6589, 1, 0
    %v6591 = vcvt.s32.f32 %v6590
    %6593 = vset.pattern.permute.xlu0 0
    %6594 = vperm.xlu0 %6593, %v6458
    %v6595 = vpop.permute.xlu0 %6594
    %v6597 = vmul.f32 %v6595, %v6591
    %v6598 = vadd.f32 %v6366, %v6597
    %6600 = vset.pattern.permute.xlu0 3
    %6601 = vperm.xlu0 %6600, %v6491
    %v6602 = vpop.permute.xlu0 %6601
    %v6604 = vmul.f32 %v6602, %v6591
    %v6605 = vadd.f32 %v6373, %v6604
    %6607 = vset.pattern.permute.xlu0 6
    %6608 = vperm.xlu0 %6607, %v6518
    %v6609 = vpop.permute.xlu0 %6608
    %v6611 = vmul.f32 %v6609, %v6591
    %v6612 = vadd.f32 %v6380, %v6611
    %6614 = vset.pattern.permute.xlu0 0
    %6615 = vperm.xlu0 %6614, %v6472
    %v6616 = vpop.permute.xlu0 %6615
    %v6618 = vmul.f32 %v6616, %v6591
    %v6619 = vadd.f32 %v6387, %v6618
    %6621 = vset.pattern.permute.xlu0 3
    %6622 = vperm.xlu0 %6621, %v6502
    %v6623 = vpop.permute.xlu0 %6622
    %v6625 = vmul.f32 %v6623, %v6591
    %v6626 = vadd.f32 %v6394, %v6625
    %6628 = vset.pattern.permute.xlu0 6
    %6629 = vperm.xlu0 %6628, %v6526
    %v6630 = vpop.permute.xlu0 %6629
    %v6632 = vmul.f32 %v6630, %v6591
    %v6633 = vadd.f32 %v6401, %v6632
    %6635 = vset.pattern.permute.xlu0 0
    %6636 = vperm.xlu0 %6635, %v6483
    %v6637 = vpop.permute.xlu0 %6636
    %v6639 = vmul.f32 %v6637, %v6591
    %v6640 = vadd.f32 %v6408, %v6639
    %6642 = vset.pattern.permute.xlu0 3
    %6643 = vperm.xlu0 %6642, %v6510
    %v6644 = vpop.permute.xlu0 %6643
    %v6646 = vmul.f32 %v6644, %v6591
    %v6647 = vadd.f32 %v6415, %v6646
    %6649 = vset.pattern.permute.xlu0 6
    %6650 = vperm.xlu0 %6649, %v6534
    %v6651 = vpop.permute.xlu0 %6650
    %v6653 = vmul.f32 %v6651, %v6591
    %v6654 = vadd.f32 %v6422, %v6653
    %6656 = vset.pattern.permute.xlu0 0
    %6657 = vperm.xlu0 %6656, %v6586
    %v6658 = vpop.permute.xlu0 %6657
    %v6660 = vmul.f32 %v6658, %v6591
    %v6661 = vadd.f32 %v6429, %v6660
    %6663 = vset.pattern.permute.xlu0 3
    %6664 = vperm.xlu0 %6663, %v6587
    %v6665 = vpop.permute.xlu0 %6664
    %v6667 = vmul.f32 %v6665, %v6591
    %v6668 = vadd.f32 %v6436, %v6667
    %6670 = vset.pattern.permute.xlu0 6
    %6671 = vperm.xlu0 %6670, %v6588
    %v6672 = vpop.permute.xlu0 %6671
    %v6674 = vmul.f32 %v6672, %v6591
    %v6675 = vadd.f32 %v6443, %v6674
    %6676 = vrot.lane.b32.xlu0 %v2955, 121
    %v6677 = vpop.permute.xlu0 %6676
    %v6679 = vmul.f32 %v6458, %v6677
    %6680 = vrot.lane.b32.xlu0 %v2955, 118
    %v6681 = vpop.permute.xlu0 %6680
    %v6683 = vmul.f32 %v6472, %v6681
    %v6684 = vadd.f32 %v6679, %v6683
    %6685 = vrot.lane.b32.xlu0 %v2955, 115
    %v6686 = vpop.permute.xlu0 %6685
    %v6688 = vmul.f32 %v6483, %v6686
    %v6689 = vadd.f32 %v6684, %v6688
    %6690 = vrot.lane.b32.xlu0 %v2955, 120
    %v6691 = vpop.permute.xlu0 %6690
    %v6693 = vmul.f32 %v6458, %v6691
    %6694 = vrot.lane.b32.xlu0 %v2955, 117
    %v6695 = vpop.permute.xlu0 %6694
    %v6697 = vmul.f32 %v6472, %v6695
    %v6698 = vadd.f32 %v6693, %v6697
    %6699 = vrot.lane.b32.xlu0 %v2955, 114
    %v6700 = vpop.permute.xlu0 %6699
    %v6702 = vmul.f32 %v6483, %v6700
    %v6703 = vadd.f32 %v6698, %v6702
    %6704 = vrot.lane.b32.xlu0 %v2955, 119
    %v6705 = vpop.permute.xlu0 %6704
    %v6707 = vmul.f32 %v6458, %v6705
    %6708 = vrot.lane.b32.xlu0 %v2955, 116
    %v6709 = vpop.permute.xlu0 %6708
    %v6711 = vmul.f32 %v6472, %v6709
    %v6712 = vadd.f32 %v6707, %v6711
    %6713 = vrot.lane.b32.xlu0 %v2955, 113
    %v6714 = vpop.permute.xlu0 %6713
    %v6716 = vmul.f32 %v6483, %v6714
    %v6717 = vadd.f32 %v6712, %v6716
    %v6718 = vmul.f32 %v6491, %v6455
    %v6719 = vmul.f32 %v6502, %v6677
    %v6720 = vadd.f32 %v6718, %v6719
    %v6721 = vmul.f32 %v6510, %v6681
    %v6722 = vadd.f32 %v6720, %v6721
    %v6723 = vmul.f32 %v6491, %v6469
    %v6724 = vmul.f32 %v6502, %v6691
    %v6725 = vadd.f32 %v6723, %v6724
    %v6726 = vmul.f32 %v6510, %v6695
    %v6727 = vadd.f32 %v6725, %v6726
    %v6728 = vmul.f32 %v6491, %v6480
    %v6729 = vmul.f32 %v6502, %v6705
    %v6730 = vadd.f32 %v6728, %v6729
    %v6731 = vmul.f32 %v6510, %v6709
    %v6732 = vadd.f32 %v6730, %v6731
    %v6733 = vmul.f32 %v6518, %v6450
    %v6734 = vmul.f32 %v6526, %v6455
    %v6735 = vadd.f32 %v6733, %v6734
    %v6736 = vmul.f32 %v6534, %v6677
    %v6737 = vadd.f32 %v6735, %v6736
    %v6738 = vmul.f32 %v6518, %v6464
    %v6739 = vmul.f32 %v6526, %v6469
    %v6740 = vadd.f32 %v6738, %v6739
    %v6741 = vmul.f32 %v6534, %v6691
    %v6742 = vadd.f32 %v6740, %v6741
    %v6743 = vmul.f32 %v6518, %v6475
    %v6744 = vmul.f32 %v6526, %v6480
    %v6745 = vadd.f32 %v6743, %v6744
    %v6746 = vmul.f32 %v6534, %v6705
    %v6747 = vadd.f32 %v6745, %v6746
    %6748 = vrot.lane.b32.xlu0 %v3240, 113
    %v6749 = vpop.permute.xlu0 %6748
    %v6751 = vmul.f32 %v6458, %v6749
    %6752 = vrot.lane.b32.xlu0 %v3241, 113
    %v6753 = vpop.permute.xlu0 %6752
    %v6755 = vmul.f32 %v6472, %v6753
    %v6756 = vadd.f32 %v6751, %v6755
    %6757 = vrot.lane.b32.xlu0 %v3245, 113
    %v6758 = vpop.permute.xlu0 %6757
    %v6760 = vmul.f32 %v6483, %v6758
    %v6761 = vadd.f32 %v6756, %v6760
    %v6762 = vmul.f32 %v6491, %v5989
    %v6763 = vmul.f32 %v6502, %v5993
    %v6764 = vadd.f32 %v6762, %v6763
    %v6765 = vmul.f32 %v6510, %v5998
    %v6766 = vadd.f32 %v6764, %v6765
    %v6767 = vmul.f32 %v6518, %v5242
    %v6768 = vmul.f32 %v6526, %v5246
    %v6769 = vadd.f32 %v6767, %v6768
    %v6770 = vmul.f32 %v6534, %v5251
    %v6771 = vadd.f32 %v6769, %v6770
    %v6772 = vadd.f32 %v6761, %v6559
    %v6773 = vadd.f32 %v6766, %v6560
    %v6774 = vadd.f32 %v6771, %v6561
    %6775 = vrot.lane.b32.xlu0 %v2615, 113
    %v6776 = vpop.permute.xlu0 %6775
    %v6778 = vmul.f32 %v6689, %v6776
    %6779 = vrot.lane.b32.xlu0 %v2782, 113
    %v6780 = vpop.permute.xlu0 %6779
    %v6782 = vmul.f32 %v6703, %v6780
    %v6783 = vadd.f32 %v6778, %v6782
    %6784 = vrot.lane.b32.xlu0 %v2949, 113
    %v6785 = vpop.permute.xlu0 %6784
    %v6787 = vmul.f32 %v6717, %v6785
    %v6788 = vadd.f32 %v6783, %v6787
    %v6789 = vmul.f32 %v6722, %v6016
    %v6790 = vmul.f32 %v6727, %v6020
    %v6791 = vadd.f32 %v6789, %v6790
    %v6792 = vmul.f32 %v6732, %v6025
    %v6793 = vadd.f32 %v6791, %v6792
    %v6794 = vmul.f32 %v6737, %v5269
    %v6795 = vmul.f32 %v6742, %v5273
    %v6796 = vadd.f32 %v6794, %v6795
    %v6797 = vmul.f32 %v6747, %v5278
    %v6798 = vadd.f32 %v6796, %v6797
    %v6799 = vsub.f32 %v6772, %v6788
    %v6800 = vsub.f32 %v6773, %v6793
    %v6801 = vsub.f32 %v6774, %v6798
    %vm6802 = vcmp.eq.s32.totalorder %v2957, 15
    %v6803 = vsel %vm6802, 1, 0
    %v6804 = vcvt.s32.f32 %v6803
    %6806 = vset.pattern.permute.xlu0 0
    %6807 = vperm.xlu0 %6806, %v6689
    %v6808 = vpop.permute.xlu0 %6807
    %v6810 = vmul.f32 %v6808, %v6804
    %v6811 = vadd.f32 %v6598, %v6810
    %6813 = vset.pattern.permute.xlu0 3
    %6814 = vperm.xlu0 %6813, %v6722
    %v6815 = vpop.permute.xlu0 %6814
    %v6817 = vmul.f32 %v6815, %v6804
    %v6818 = vadd.f32 %v6605, %v6817
    %6820 = vset.pattern.permute.xlu0 6
    %6821 = vperm.xlu0 %6820, %v6737
    %v6822 = vpop.permute.xlu0 %6821
    %v6824 = vmul.f32 %v6822, %v6804
    %v6825 = vadd.f32 %v6612, %v6824
    %6827 = vset.pattern.permute.xlu0 0
    %6828 = vperm.xlu0 %6827, %v6703
    %v6829 = vpop.permute.xlu0 %6828
    %v6831 = vmul.f32 %v6829, %v6804
    %v6832 = vadd.f32 %v6619, %v6831
    %6834 = vset.pattern.permute.xlu0 3
    %6835 = vperm.xlu0 %6834, %v6727
    %v6836 = vpop.permute.xlu0 %6835
    %v6838 = vmul.f32 %v6836, %v6804
    %v6839 = vadd.f32 %v6626, %v6838
    %6841 = vset.pattern.permute.xlu0 6
    %6842 = vperm.xlu0 %6841, %v6742
    %v6843 = vpop.permute.xlu0 %6842
    %v6845 = vmul.f32 %v6843, %v6804
    %v6846 = vadd.f32 %v6633, %v6845
    %6848 = vset.pattern.permute.xlu0 0
    %6849 = vperm.xlu0 %6848, %v6717
    %v6850 = vpop.permute.xlu0 %6849
    %v6852 = vmul.f32 %v6850, %v6804
    %v6853 = vadd.f32 %v6640, %v6852
    %6855 = vset.pattern.permute.xlu0 3
    %6856 = vperm.xlu0 %6855, %v6732
    %v6857 = vpop.permute.xlu0 %6856
    %v6859 = vmul.f32 %v6857, %v6804
    %v6860 = vadd.f32 %v6647, %v6859
    %6862 = vset.pattern.permute.xlu0 6
    %6863 = vperm.xlu0 %6862, %v6747
    %v6864 = vpop.permute.xlu0 %6863
    %v6866 = vmul.f32 %v6864, %v6804
    %v6867 = vadd.f32 %v6654, %v6866
    %6869 = vset.pattern.permute.xlu0 0
    %6870 = vperm.xlu0 %6869, %v6799
    %v6871 = vpop.permute.xlu0 %6870
    %v6873 = vmul.f32 %v6871, %v6804
    %v6874 = vadd.f32 %v6661, %v6873
    %6876 = vset.pattern.permute.xlu0 3
    %6877 = vperm.xlu0 %6876, %v6800
    %v6878 = vpop.permute.xlu0 %6877
    %v6880 = vmul.f32 %v6878, %v6804
    %v6881 = vadd.f32 %v6668, %v6880
    %6883 = vset.pattern.permute.xlu0 6
    %6884 = vperm.xlu0 %6883, %v6801
    %v6885 = vpop.permute.xlu0 %6884
    %v6887 = vmul.f32 %v6885, %v6804
    %v6888 = vadd.f32 %v6675, %v6887
    %v6889 = vpack.c.bf16 %v6818, %v6811
    %v6890 = vpack.c.bf16 %v6832, %v6825
    %v6891 = vpack.c.bf16 %v6846, %v6839
    %v6892 = vpack.c.bf16 %v6860, %v6853
    %v6893 = vpack.c.bf16 %v6874, %v6867
    %v6894 = vpack.c.bf16 %v6888, %v6881
    %v6895 = vld [vmem:[%s8] sm:$0xff]
    %v6896 = vld [vmem:[%s8 + $0x8] sm:$0xff]
    %v6897 = vld [vmem:[%s8 + $0x10] sm:$0xff]
    %v6898 = vld [vmem:[%s8 + $0x18] sm:$0xf]
    %v6899 = vld [vmem:[%s8 + $0x1c] sm:$0xff]
    %v6900 = vld [vmem:[%s8 + $0x24] sm:$0xff]
    %v6901 = vld [vmem:[%s8 + $0x2c] sm:$0xff]
    %v6902 = vld [vmem:[%s8 + $0x34] sm:$0xf]
    %v6911 = vunpack.c.l.b16 %v6895
    %v6912 = vunpack.c.h.b16 %v6895
    %v6913 = vunpack.c.l.b16 %v6896
    %v6914 = vunpack.c.h.b16 %v6896
    %v6915 = vunpack.c.l.b16 %v6897
    %v6916 = vunpack.c.h.b16 %v6897
    %v6917 = vunpack.c.l.b16 %v6898
    %v6918 = vunpack.c.l.b16 %v6899
    %v6919 = vunpack.c.h.b16 %v6899
    %v6920 = vunpack.c.l.b16 %v6900
    %v6921 = vunpack.c.h.b16 %v6900
    %v6922 = vunpack.c.l.b16 %v6901
    %v6923 = vunpack.c.h.b16 %v6901
    %v6924 = vunpack.c.l.b16 %v6902
    %v6925 = vpack.c.b16 %v6918, %v6911
    %v6926 = vpack.c.b16 %v6919, %v6912
    %v6927 = vpack.c.b16 %v6920, %v6913
    %v6928 = vpack.c.b16 %v6921, %v6914
    %v6929 = vpack.c.b16 %v6922, %v6915
    %v6930 = vpack.c.b16 %v6923, %v6916
    %v6931 = vpack.c.b16 %v6924, %v6917
    %vm6939 = vcmask 130048
    %v6941 = vsel %vm6939, %v6889, 0
    %v6944 = vsel %vm6939, %v6890, 0
    %v6947 = vsel %vm6939, %v6891, 0
    %v6950 = vsel %vm6939, %v6892, 0
    %v6953 = vsel %vm6939, %v6893, 0
    %v6956 = vsel %vm6939, %v6894, 0
    %6958 = vmatprep.subr.bf16.mxu0 %v6926
    %6959 = vmatpush1.bf16.msra.mxu0 %v6925
    %6960 = vmatprep.subr.bf16.mxu0 0
    %6961 = vmatpush1.bf16.msra.mxu0 0
    %6962 = vmatprep.subr.bf16.mxu0 0
    %6963 = vmatpush1.bf16.msra.mxu0 0
    %6964 = vmatprep.subr.bf16.mxu0 0
    %6965 = vmatpush1.bf16.msra.mxu0 0
    %6966 = vmatprep.subr.bf16.mxu0 0
    %6967 = vmatpush1.bf16.msra.mxu0 0
    %6968 = vmatprep.subr.bf16.mxu0 0
    %6969 = vmatpush1.bf16.msra.mxu0 0
    %6970 = vmatprep.subr.bf16.mxu0 0
    %6971 = vmatpush1.bf16.msra.mxu0 0
    %6972 = vmatprep.subr.bf16.mxu0 0
    %6973 = vmatpush1.bf16.msra.mxu0 0
    %6974 = vmatprep.subr.bf16.mxu0 0
    %6975 = vmatpush1.bf16.msra.mxu0 0
    %6976 = vmatprep.subr.bf16.mxu0 0
    %6977 = vmatpush1.bf16.msra.mxu0 0
    %6978 = vmatprep.subr.bf16.mxu0 0
    %6979 = vmatpush1.bf16.msra.mxu0 0
    %6980 = vmatprep.subr.bf16.mxu0 0
    %6981 = vmatpush1.bf16.msra.mxu0 0
    %6982 = vmatprep.subr.bf16.mxu0 0
    %6983 = vmatpush1.bf16.msra.mxu0 0
    %6984 = vmatprep.subr.bf16.mxu0 0
    %6985 = vmatpush1.bf16.msra.mxu0 0
    %6986 = vmatprep.subr.bf16.mxu0 0
    %6987 = vmatpush1.bf16.msra.mxu0 0
    %6988 = vmatprep.subr.bf16.mxu0 0
    %6989 = vmatpush1.bf16.msra.mxu0 0
    %6990 = vmatprep.mubr.bf16.mxu0 0
    %6991 = vmatmul.mubr.bf16.gmra.mrb[0].mxu0 %v6941
    %v6992 = vpop.f32.mrb[0].mxu0
    %v6993 = vadd.f32 0.0, %v6992
    %v6994 = vpop.f32.mrb[0].mxu0
    %v6995 = vadd.f32 0.0, %v6994
    %v6996 = vpop.f32.mrb[0].mxu0
    %v6997 = vadd.f32 0.0, %v6996
    %v6998 = vpop.f32.mrb[0].mxu0
    %v6999 = vadd.f32 0.0, %v6998
    %7000 = vmatprep.mubr.bf16.mxu0 0
    %7001 = vmatmul.mubr.bf16.gmra.mrb[0].mxu0 %v6944
    %v7002 = vpop.f32.mrb[0].mxu0
    %v7003 = vadd.f32 0.0, %v7002
    %v7004 = vpop.f32.mrb[0].mxu0
    %v7005 = vadd.f32 0.0, %v7004
    %v7006 = vpop.f32.mrb[0].mxu0
    %v7007 = vadd.f32 0.0, %v7006
    %v7008 = vpop.f32.mrb[0].mxu0
    %v7009 = vadd.f32 0.0, %v7008
    %7010 = vmatprep.mubr.bf16.mxu0 0
    %7011 = vmatmul.mubr.bf16.gmra.mrb[0].mxu0 %v6947
    %v7012 = vpop.f32.mrb[0].mxu0
    %v7013 = vadd.f32 0.0, %v7012
    %v7014 = vpop.f32.mrb[0].mxu0
    %v7015 = vadd.f32 0.0, %v7014
    %v7016 = vpop.f32.mrb[0].mxu0
    %v7017 = vadd.f32 0.0, %v7016
    %v7018 = vpop.f32.mrb[0].mxu0
    %v7019 = vadd.f32 0.0, %v7018
    %7020 = vmatprep.mubr.bf16.mxu0 0
    %7021 = vmatmul.mubr.bf16.gmra.mrb[0].mxu0 %v6950
    %v7022 = vpop.f32.mrb[0].mxu0
    %v7023 = vadd.f32 0.0, %v7022
    %v7024 = vpop.f32.mrb[0].mxu0
    %v7025 = vadd.f32 0.0, %v7024
    %v7026 = vpop.f32.mrb[0].mxu0
    %v7027 = vadd.f32 0.0, %v7026
    %v7028 = vpop.f32.mrb[0].mxu0
    %v7029 = vadd.f32 0.0, %v7028
    %7030 = vmatprep.mubr.bf16.mxu0 0
    %7031 = vmatmul.mubr.bf16.gmra.mrb[0].mxu0 %v6953
    %v7032 = vpop.f32.mrb[0].mxu0
    %v7033 = vadd.f32 0.0, %v7032
    %v7034 = vpop.f32.mrb[0].mxu0
    %v7035 = vadd.f32 0.0, %v7034
    %v7036 = vpop.f32.mrb[0].mxu0
    %v7037 = vadd.f32 0.0, %v7036
    %v7038 = vpop.f32.mrb[0].mxu0
    %v7039 = vadd.f32 0.0, %v7038
    %7040 = vmatprep.mubr.bf16.mxu0 0
    %7041 = vmatmul.mubr.bf16.gmra.mrb[0].mxu0 %v6956
    %v7042 = vpop.f32.mrb[0].mxu0
    %v7043 = vadd.f32 0.0, %v7042
    %v7044 = vpop.f32.mrb[0].mxu0
    %v7045 = vadd.f32 0.0, %v7044
    %v7046 = vpop.f32.mrb[0].mxu0
    %v7047 = vadd.f32 0.0, %v7046
    %v7048 = vpop.f32.mrb[0].mxu0
    %v7049 = vadd.f32 0.0, %v7048
    %7050 = vdwg.mxu0
    %7051 = vmatprep.subr.bf16.mxu0 %v6928
    %7052 = vmatpush1.bf16.msra.mxu0 %v6927
    %7053 = vmatprep.subr.bf16.mxu0 0
    %7054 = vmatpush1.bf16.msra.mxu0 0
    %7055 = vmatprep.subr.bf16.mxu0 0
    %7056 = vmatpush1.bf16.msra.mxu0 0
    %7057 = vmatprep.subr.bf16.mxu0 0
    %7058 = vmatpush1.bf16.msra.mxu0 0
    %7059 = vmatprep.subr.bf16.mxu0 0
    %7060 = vmatpush1.bf16.msra.mxu0 0
    %7061 = vmatprep.subr.bf16.mxu0 0
    %7062 = vmatpush1.bf16.msra.mxu0 0
    %7063 = vmatprep.subr.bf16.mxu0 0
    %7064 = vmatpush1.bf16.msra.mxu0 0
    %7065 = vmatprep.subr.bf16.mxu0 0
    %7066 = vmatpush1.bf16.msra.mxu0 0
    %7067 = vmatprep.subr.bf16.mxu0 0
    %7068 = vmatpush1.bf16.msra.mxu0 0
    %7069 = vmatprep.subr.bf16.mxu0 0
    %7070 = vmatpush1.bf16.msra.mxu0 0
    %7071 = vmatprep.subr.bf16.mxu0 0
    %7072 = vmatpush1.bf16.msra.mxu0 0
    %7073 = vmatprep.subr.bf16.mxu0 0
    %7074 = vmatpush1.bf16.msra.mxu0 0
    %7075 = vmatprep.subr.bf16.mxu0 0
    %7076 = vmatpush1.bf16.msra.mxu0 0
    %7077 = vmatprep.subr.bf16.mxu0 0
    %7078 = vmatpush1.bf16.msra.mxu0 0
    %7079 = vmatprep.subr.bf16.mxu0 0
    %7080 = vmatpush1.bf16.msra.mxu0 0
    %7081 = vmatprep.subr.bf16.mxu0 0
    %7082 = vmatpush1.bf16.msra.mxu0 0
    %7083 = vmatprep.mubr.bf16.mxu0 0
    %7084 = vmatmul.mubr.bf16.gmra.mrb[0].mxu0 %v6941
    %v7085 = vpop.f32.mrb[0].mxu0
    %v7086 = vadd.f32 0.0, %v7085
    %v7087 = vpop.f32.mrb[0].mxu0
    %v7088 = vadd.f32 0.0, %v7087
    %v7089 = vpop.f32.mrb[0].mxu0
    %v7090 = vadd.f32 0.0, %v7089
    %v7091 = vpop.f32.mrb[0].mxu0
    %v7092 = vadd.f32 0.0, %v7091
    %7093 = vmatprep.mubr.bf16.mxu0 0
    %7094 = vmatmul.mubr.bf16.gmra.mrb[0].mxu0 %v6944
    %v7095 = vpop.f32.mrb[0].mxu0
    %v7096 = vadd.f32 0.0, %v7095
    %v7097 = vpop.f32.mrb[0].mxu0
    %v7098 = vadd.f32 0.0, %v7097
    %v7099 = vpop.f32.mrb[0].mxu0
    %v7100 = vadd.f32 0.0, %v7099
    %v7101 = vpop.f32.mrb[0].mxu0
    %v7102 = vadd.f32 0.0, %v7101
    %7103 = vmatprep.mubr.bf16.mxu0 0
    %7104 = vmatmul.mubr.bf16.gmra.mrb[0].mxu0 %v6947
    %v7105 = vpop.f32.mrb[0].mxu0
    %v7106 = vadd.f32 0.0, %v7105
    %v7107 = vpop.f32.mrb[0].mxu0
    %v7108 = vadd.f32 0.0, %v7107
    %v7109 = vpop.f32.mrb[0].mxu0
    %v7110 = vadd.f32 0.0, %v7109
    %v7111 = vpop.f32.mrb[0].mxu0
    %v7112 = vadd.f32 0.0, %v7111
    %7113 = vmatprep.mubr.bf16.mxu0 0
    %7114 = vmatmul.mubr.bf16.gmra.mrb[0].mxu0 %v6950
    %v7115 = vpop.f32.mrb[0].mxu0
    %v7116 = vadd.f32 0.0, %v7115
    %v7117 = vpop.f32.mrb[0].mxu0
    %v7118 = vadd.f32 0.0, %v7117
    %v7119 = vpop.f32.mrb[0].mxu0
    %v7120 = vadd.f32 0.0, %v7119
    %v7121 = vpop.f32.mrb[0].mxu0
    %v7122 = vadd.f32 0.0, %v7121
    %7123 = vmatprep.mubr.bf16.mxu0 0
    %7124 = vmatmul.mubr.bf16.gmra.mrb[0].mxu0 %v6953
    %v7125 = vpop.f32.mrb[0].mxu0
    %v7126 = vadd.f32 0.0, %v7125
    %v7127 = vpop.f32.mrb[0].mxu0
    %v7128 = vadd.f32 0.0, %v7127
    %v7129 = vpop.f32.mrb[0].mxu0
    %v7130 = vadd.f32 0.0, %v7129
    %v7131 = vpop.f32.mrb[0].mxu0
    %v7132 = vadd.f32 0.0, %v7131
    %7133 = vmatprep.mubr.bf16.mxu0 0
    %7134 = vmatmul.mubr.bf16.gmra.mrb[0].mxu0 %v6956
    %v7135 = vpop.f32.mrb[0].mxu0
    %v7136 = vadd.f32 0.0, %v7135
    %v7137 = vpop.f32.mrb[0].mxu0
    %v7138 = vadd.f32 0.0, %v7137
    %v7139 = vpop.f32.mrb[0].mxu0
    %v7140 = vadd.f32 0.0, %v7139
    %v7141 = vpop.f32.mrb[0].mxu0
    %v7142 = vadd.f32 0.0, %v7141
    %7143 = vdwg.mxu0
    %7144 = vmatprep.subr.bf16.mxu0 %v6930
    %7145 = vmatpush1.bf16.msra.mxu0 %v6929
    %7146 = vmatprep.subr.bf16.mxu0 0
    %7147 = vmatpush1.bf16.msra.mxu0 0
    %7148 = vmatprep.subr.bf16.mxu0 0
    %7149 = vmatpush1.bf16.msra.mxu0 0
    %7150 = vmatprep.subr.bf16.mxu0 0
    %7151 = vmatpush1.bf16.msra.mxu0 0
    %7152 = vmatprep.subr.bf16.mxu0 0
    %7153 = vmatpush1.bf16.msra.mxu0 0
    %7154 = vmatprep.subr.bf16.mxu0 0
    %7155 = vmatpush1.bf16.msra.mxu0 0
    %7156 = vmatprep.subr.bf16.mxu0 0
    %7157 = vmatpush1.bf16.msra.mxu0 0
    %7158 = vmatprep.subr.bf16.mxu0 0
    %7159 = vmatpush1.bf16.msra.mxu0 0
    %7160 = vmatprep.subr.bf16.mxu0 0
    %7161 = vmatpush1.bf16.msra.mxu0 0
    %7162 = vmatprep.subr.bf16.mxu0 0
    %7163 = vmatpush1.bf16.msra.mxu0 0
    %7164 = vmatprep.subr.bf16.mxu0 0
    %7165 = vmatpush1.bf16.msra.mxu0 0
    %7166 = vmatprep.subr.bf16.mxu0 0
    %7167 = vmatpush1.bf16.msra.mxu0 0
    %7168 = vmatprep.subr.bf16.mxu0 0
    %7169 = vmatpush1.bf16.msra.mxu0 0
    %7170 = vmatprep.subr.bf16.mxu0 0
    %7171 = vmatpush1.bf16.msra.mxu0 0
    %7172 = vmatprep.subr.bf16.mxu0 0
    %7173 = vmatpush1.bf16.msra.mxu0 0
    %7174 = vmatprep.subr.bf16.mxu0 0
    %7175 = vmatpush1.bf16.msra.mxu0 0
    %7176 = vmatprep.mubr.bf16.mxu0 0
    %7177 = vmatmul.mubr.bf16.gmra.mrb[0].mxu0 %v6941
    %v7178 = vpop.f32.mrb[0].mxu0
    %v7179 = vadd.f32 0.0, %v7178
    %v7180 = vpop.f32.mrb[0].mxu0
    %v7181 = vadd.f32 0.0, %v7180
    %v7182 = vpop.f32.mrb[0].mxu0
    %v7183 = vadd.f32 0.0, %v7182
    %v7184 = vpop.f32.mrb[0].mxu0
    %v7185 = vadd.f32 0.0, %v7184
    %7186 = vmatprep.mubr.bf16.mxu0 0
    %7187 = vmatmul.mubr.bf16.gmra.mrb[0].mxu0 %v6944
    %v7188 = vpop.f32.mrb[0].mxu0
    %v7189 = vadd.f32 0.0, %v7188
    %v7190 = vpop.f32.mrb[0].mxu0
    %v7191 = vadd.f32 0.0, %v7190
    %v7192 = vpop.f32.mrb[0].mxu0
    %v7193 = vadd.f32 0.0, %v7192
    %v7194 = vpop.f32.mrb[0].mxu0
    %v7195 = vadd.f32 0.0, %v7194
    %7196 = vmatprep.mubr.bf16.mxu0 0
    %7197 = vmatmul.mubr.bf16.gmra.mrb[0].mxu0 %v6947
    %v7198 = vpop.f32.mrb[0].mxu0
    %v7199 = vadd.f32 0.0, %v7198
    %v7200 = vpop.f32.mrb[0].mxu0
    %v7201 = vadd.f32 0.0, %v7200
    %v7202 = vpop.f32.mrb[0].mxu0
    %v7203 = vadd.f32 0.0, %v7202
    %v7204 = vpop.f32.mrb[0].mxu0
    %v7205 = vadd.f32 0.0, %v7204
    %7206 = vmatprep.mubr.bf16.mxu0 0
    %7207 = vmatmul.mubr.bf16.gmra.mrb[0].mxu0 %v6950
    %v7208 = vpop.f32.mrb[0].mxu0
    %v7209 = vadd.f32 0.0, %v7208
    %v7210 = vpop.f32.mrb[0].mxu0
    %v7211 = vadd.f32 0.0, %v7210
    %v7212 = vpop.f32.mrb[0].mxu0
    %v7213 = vadd.f32 0.0, %v7212
    %v7214 = vpop.f32.mrb[0].mxu0
    %v7215 = vadd.f32 0.0, %v7214
    %7216 = vmatprep.mubr.bf16.mxu0 0
    %7217 = vmatmul.mubr.bf16.gmra.mrb[0].mxu0 %v6953
    %v7218 = vpop.f32.mrb[0].mxu0
    %v7219 = vadd.f32 0.0, %v7218
    %v7220 = vpop.f32.mrb[0].mxu0
    %v7221 = vadd.f32 0.0, %v7220
    %v7222 = vpop.f32.mrb[0].mxu0
    %v7223 = vadd.f32 0.0, %v7222
    %v7224 = vpop.f32.mrb[0].mxu0
    %v7225 = vadd.f32 0.0, %v7224
    %7226 = vmatprep.mubr.bf16.mxu0 0
    %7227 = vmatmul.mubr.bf16.gmra.mrb[0].mxu0 %v6956
    %v7228 = vpop.f32.mrb[0].mxu0
    %v7229 = vadd.f32 0.0, %v7228
    %v7230 = vpop.f32.mrb[0].mxu0
    %v7231 = vadd.f32 0.0, %v7230
    %v7232 = vpop.f32.mrb[0].mxu0
    %v7233 = vadd.f32 0.0, %v7232
    %v7234 = vpop.f32.mrb[0].mxu0
    %v7235 = vadd.f32 0.0, %v7234
    %7236 = vdwg.mxu0
    %7237 = vmatprep.subr.bf16.mxu0 0
    %7238 = vmatpush1.bf16.msra.mxu0 %v6931
    %7239 = vmatprep.subr.bf16.mxu0 0
    %7240 = vmatpush1.bf16.msra.mxu0 0
    %7241 = vmatprep.subr.bf16.mxu0 0
    %7242 = vmatpush1.bf16.msra.mxu0 0
    %7243 = vmatprep.subr.bf16.mxu0 0
    %7244 = vmatpush1.bf16.msra.mxu0 0
    %7245 = vmatprep.subr.bf16.mxu0 0
    %7246 = vmatpush1.bf16.msra.mxu0 0
    %7247 = vmatprep.subr.bf16.mxu0 0
    %7248 = vmatpush1.bf16.msra.mxu0 0
    %7249 = vmatprep.subr.bf16.mxu0 0
    %7250 = vmatpush1.bf16.msra.mxu0 0
    %7251 = vmatprep.subr.bf16.mxu0 0
    %7252 = vmatpush1.bf16.msra.mxu0 0
    %7253 = vmatprep.subr.bf16.mxu0 0
    %7254 = vmatpush1.bf16.msra.mxu0 0
    %7255 = vmatprep.subr.bf16.mxu0 0
    %7256 = vmatpush1.bf16.msra.mxu0 0
    %7257 = vmatprep.subr.bf16.mxu0 0
    %7258 = vmatpush1.bf16.msra.mxu0 0
    %7259 = vmatprep.subr.bf16.mxu0 0
    %7260 = vmatpush1.bf16.msra.mxu0 0
    %7261 = vmatprep.subr.bf16.mxu0 0
    %7262 = vmatpush1.bf16.msra.mxu0 0
    %7263 = vmatprep.subr.bf16.mxu0 0
    %7264 = vmatpush1.bf16.msra.mxu0 0
    %7265 = vmatprep.subr.bf16.mxu0 0
    %7266 = vmatpush1.bf16.msra.mxu0 0
    %7267 = vmatprep.subr.bf16.mxu0 0
    %7268 = vmatpush1.bf16.msra.mxu0 0
    %7269 = vmatprep.mubr.bf16.mxu0 0
    %7270 = vmatmul.mubr.bf16.gmra.mrb[0].mxu0 %v6941
    %v7271 = vpop.f32.mrb[0].mxu0
    %v7272 = vadd.f32 0.0, %v7271
    %v7273 = vpop.f32.mrb[0].mxu0
    %v7274 = vpop.f32.mrb[0].mxu0
    %v7275 = vadd.f32 0.0, %v7274
    %v7276 = vpop.f32.mrb[0].mxu0
    %7277 = vmatprep.mubr.bf16.mxu0 0
    %7278 = vmatmul.mubr.bf16.gmra.mrb[0].mxu0 %v6944
    %v7279 = vpop.f32.mrb[0].mxu0
    %v7280 = vadd.f32 0.0, %v7279
    %v7281 = vpop.f32.mrb[0].mxu0
    %v7282 = vpop.f32.mrb[0].mxu0
    %v7283 = vadd.f32 0.0, %v7282
    %v7284 = vpop.f32.mrb[0].mxu0
    %7285 = vmatprep.mubr.bf16.mxu0 0
    %7286 = vmatmul.mubr.bf16.gmra.mrb[0].mxu0 %v6947
    %v7287 = vpop.f32.mrb[0].mxu0
    %v7288 = vadd.f32 0.0, %v7287
    %v7289 = vpop.f32.mrb[0].mxu0
    %v7290 = vpop.f32.mrb[0].mxu0
    %v7291 = vadd.f32 0.0, %v7290
    %v7292 = vpop.f32.mrb[0].mxu0
    %7293 = vmatprep.mubr.bf16.mxu0 0
    %7294 = vmatmul.mubr.bf16.gmra.mrb[0].mxu0 %v6950
    %v7295 = vpop.f32.mrb[0].mxu0
    %v7296 = vadd.f32 0.0, %v7295
    %v7297 = vpop.f32.mrb[0].mxu0
    %v7298 = vpop.f32.mrb[0].mxu0
    %v7299 = vadd.f32 0.0, %v7298
    %v7300 = vpop.f32.mrb[0].mxu0
    %7301 = vmatprep.mubr.bf16.mxu0 0
    %7302 = vmatmul.mubr.bf16.gmra.mrb[0].mxu0 %v6953
    %v7303 = vpop.f32.mrb[0].mxu0
    %v7304 = vadd.f32 0.0, %v7303
    %v7305 = vpop.f32.mrb[0].mxu0
    %v7306 = vpop.f32.mrb[0].mxu0
    %v7307 = vadd.f32 0.0, %v7306
    %v7308 = vpop.f32.mrb[0].mxu0
    %7309 = vmatprep.mubr.bf16.mxu0 0
    %7310 = vmatmul.mubr.bf16.gmra.mrb[0].mxu0 %v6956
    %v7311 = vpop.f32.mrb[0].mxu0
    %v7312 = vadd.f32 0.0, %v7311
    %v7313 = vpop.f32.mrb[0].mxu0
    %v7314 = vpop.f32.mrb[0].mxu0
    %v7315 = vadd.f32 0.0, %v7314
    %v7316 = vpop.f32.mrb[0].mxu0
    %7317 = vdwg.mxu0
    %v7318 = vld [vmem:[%s7] sm:$0xff]
    %v7319 = vld [vmem:[%s7 + $0x8] sm:$0xff]
    %v7320 = vld [vmem:[%s7 + $0x10] sm:$0xff]
    %v7321 = vld [vmem:[%s7 + $0x18] sm:$0xf]
    %v7322 = vld [vmem:[%s7 + $0x1c] sm:$0xff]
    %v7323 = vld [vmem:[%s7 + $0x24] sm:$0xff]
    %v7324 = vld [vmem:[%s7 + $0x2c] sm:$0xff]
    %v7325 = vld [vmem:[%s7 + $0x34] sm:$0xf]
    %v7326 = vld [vmem:[%s7 + $0x38] sm:$0x77]
    %v7327 = vld [vmem:[%s7 + $0x40] sm:$0x77]
    %v7328 = vld [vmem:[%s7 + $0x48] sm:$0x77]
    %v7329 = vld [vmem:[%s7 + $0x50] sm:$0x7]
    %v7330 = vmul.f32 %v6993, %v2388
    %v7331 = vmul.f32 %v6995, %v2389
    %v7332 = vmul.f32 %v7086, %v2390
    %v7333 = vmul.f32 %v7088, %v2391
    %v7334 = vmul.f32 %v7179, %v2392
    %v7335 = vmul.f32 %v7181, %v2393
    %v7336 = vmul.f32 %v7272, %v2394
    %v7337 = vmul.f32 %v7007, %v2395
    %v7338 = vmul.f32 %v7009, %v2396
    %v7339 = vmul.f32 %v7100, %v2397
    %v7340 = vmul.f32 %v7102, %v2398
    %v7341 = vmul.f32 %v7193, %v2399
    %v7342 = vmul.f32 %v7195, %v2400
    %v7343 = vmul.f32 %v7283, %v2401
    %v7344 = vadd.f32 %v7330, %v7337
    %v7345 = vadd.f32 %v7331, %v7338
    %v7346 = vadd.f32 %v7332, %v7339
    %v7347 = vadd.f32 %v7333, %v7340
    %v7348 = vadd.f32 %v7334, %v7341
    %v7349 = vadd.f32 %v7335, %v7342
    %v7350 = vadd.f32 %v7336, %v7343
    %v7351 = vmul.f32 %v7023, %v2402
    %v7352 = vmul.f32 %v7025, %v2403
    %v7353 = vmul.f32 %v7116, %v2404
    %v7354 = vmul.f32 %v7118, %v2405
    %v7355 = vmul.f32 %v7209, %v2406
    %v7356 = vmul.f32 %v7211, %v2407
    %v7357 = vmul.f32 %v7296, %v2408
    %v7358 = vadd.f32 %v7344, %v7351
    %v7359 = vadd.f32 %v7345, %v7352
    %v7360 = vadd.f32 %v7346, %v7353
    %v7361 = vadd.f32 %v7347, %v7354
    %v7362 = vadd.f32 %v7348, %v7355
    %v7363 = vadd.f32 %v7349, %v7356
    %v7364 = vadd.f32 %v7350, %v7357
    %v7365 = vadd.f32 %v7358, %v7037
    %v7366 = vadd.f32 %v7359, %v7039
    %v7367 = vadd.f32 %v7360, %v7130
    %v7368 = vadd.f32 %v7361, %v7132
    %v7369 = vadd.f32 %v7362, %v7223
    %v7370 = vadd.f32 %v7363, %v7225
    %v7371 = vadd.f32 %v7364, %v7307
    %7372 = vst [vmem:[#allocation2] sm:$0xff] %v7365
    %7373 = vst [vmem:[#allocation2 + $0x8] sm:$0xff] %v7366
    %7374 = vst [vmem:[#allocation2 + $0x10] sm:$0xff] %v7367
    %7375 = vst [vmem:[#allocation2 + $0x18] sm:$0xff] %v7368
    %7376 = vst [vmem:[#allocation2 + $0x20] sm:$0xff] %v7369
    %7377 = vst [vmem:[#allocation2 + $0x28] sm:$0xff] %v7370
    %7378 = vst [vmem:[#allocation2 + $0x30] sm:$0xff] %v7371
    %v7379 = vpack.c.bf16 %v7365, %v7365
    %v7380 = vpack.c.bf16 %v7366, %v7366
    %v7381 = vpack.c.bf16 %v7367, %v7367
    %v7382 = vpack.c.bf16 %v7368, %v7368
    %v7383 = vpack.c.bf16 %v7369, %v7369
    %v7384 = vpack.c.bf16 %v7370, %v7370
    %v7385 = vpack.c.bf16 %v7371, %v7371
    %v7398 = vunpack.c.l.b16 %v7318
    %v7399 = vunpack.c.h.b16 %v7318
    %v7400 = vunpack.c.l.b16 %v7319
    %v7401 = vunpack.c.h.b16 %v7319
    %v7402 = vunpack.c.l.b16 %v7320
    %v7403 = vunpack.c.h.b16 %v7320
    %v7404 = vunpack.c.l.b16 %v7321
    %v7405 = vunpack.c.l.b16 %v7322
    %v7406 = vunpack.c.h.b16 %v7322
    %v7407 = vunpack.c.l.b16 %v7323
    %v7408 = vunpack.c.h.b16 %v7323
    %v7409 = vunpack.c.l.b16 %v7324
    %v7410 = vunpack.c.h.b16 %v7324
    %v7411 = vunpack.c.l.b16 %v7325
    %v7412 = vunpack.c.l.b16 %v7326
    %v7413 = vunpack.c.h.b16 %v7326
    %v7414 = vunpack.c.l.b16 %v7327
    %v7415 = vunpack.c.h.b16 %v7327
    %v7416 = vunpack.c.l.b16 %v7328
    %v7417 = vunpack.c.h.b16 %v7328
    %v7418 = vunpack.c.l.b16 %v7329
    %v7419 = vpack.c.b16 %v7405, %v7398
    %v7420 = vpack.c.b16 %v7406, %v7399
    %v7421 = vpack.c.b16 %v7407, %v7400
    %v7422 = vpack.c.b16 %v7408, %v7401
    %v7423 = vpack.c.b16 %v7409, %v7402
    %v7424 = vpack.c.b16 %v7410, %v7403
    %v7425 = vpack.c.b16 %v7411, %v7404
    %v7426 = vpack.c.b16 %v7412, %v7412
    %v7427 = vpack.c.b16 %v7413, %v7413
    %v7428 = vpack.c.b16 %v7414, %v7414
    %v7429 = vpack.c.b16 %v7415, %v7415
    %v7430 = vpack.c.b16 %v7416, %v7416
    %v7431 = vpack.c.b16 %v7417, %v7417
    %v7432 = vpack.c.b16 %v7418, %v7418
    %7447 = vmatprep.subr.bf16.mxu0 %v7420
    %7448 = vmatpush1.bf16.xpose.msra.mxu0 %v7419
    %7449 = vmatprep.subr.bf16.mxu0 %v7427
    %7450 = vmatpush1.bf16.xpose.msra.mxu0 %v7426
    %7451 = vmatprep.subr.bf16.mxu0 0
    %7452 = vmatpush1.bf16.xpose.msra.mxu0 0
    %7453 = vmatprep.subr.bf16.mxu0 0
    %7454 = vmatpush1.bf16.xpose.msra.mxu0 0
    %7455 = vmatprep.subr.bf16.mxu0 0
    %7456 = vmatpush1.bf16.xpose.msra.mxu0 0
    %7457 = vmatprep.subr.bf16.mxu0 0
    %7458 = vmatpush1.bf16.xpose.msra.mxu0 0
    %7459 = vmatprep.subr.bf16.mxu0 0
    %7460 = vmatpush1.bf16.xpose.msra.mxu0 0
    %7461 = vmatprep.subr.bf16.mxu0 0
    %7462 = vmatpush1.bf16.xpose.msra.mxu0 0
    %7463 = vmatprep.subr.bf16.mxu0 0
    %7464 = vmatpush1.bf16.xpose.msra.mxu0 0
    %7465 = vmatprep.subr.bf16.mxu0 0
    %7466 = vmatpush1.bf16.xpose.msra.mxu0 0
    %7467 = vmatprep.subr.bf16.mxu0 0
    %7468 = vmatpush1.bf16.xpose.msra.mxu0 0
    %7469 = vmatprep.subr.bf16.mxu0 0
    %7470 = vmatpush1.bf16.xpose.msra.mxu0 0
    %7471 = vmatprep.subr.bf16.mxu0 0
    %7472 = vmatpush1.bf16.xpose.msra.mxu0 0
    %7473 = vmatprep.subr.bf16.mxu0 0
    %7474 = vmatpush1.bf16.xpose.msra.mxu0 0
    %7475 = vmatprep.subr.bf16.mxu0 0
    %7476 = vmatpush1.bf16.xpose.msra.mxu0 0
    %7477 = vmatprep.subr.bf16.mxu0 0
    %7478 = vmatpush1.bf16.xpose.msra.mxu0 0
    %7479 = vmatprep.mubr.bf16.mxu0 %v7380
    %7480 = vmatmul.mubr.bf16.gmra.mrb[0].mxu0 %v7379
    %v7481 = vpop.f32.mrb[0].mxu0
    %v7482 = vadd.f32 0.0, %v7481
    %v7483 = vpop.f32.mrb[0].mxu0
    %v7484 = vpop.f32.mrb[0].mxu0
    %v7485 = vpop.f32.mrb[0].mxu0
    %7486 = vdwg.mxu0
    %7487 = vmatprep.subr.bf16.mxu0 %v7422
    %7488 = vmatpush1.bf16.xpose.msra.mxu0 %v7421
    %7489 = vmatprep.subr.bf16.mxu0 %v7429
    %7490 = vmatpush1.bf16.xpose.msra.mxu0 %v7428
    %7491 = vmatprep.subr.bf16.mxu0 0
    %7492 = vmatpush1.bf16.xpose.msra.mxu0 0
    %7493 = vmatprep.subr.bf16.mxu0 0
    %7494 = vmatpush1.bf16.xpose.msra.mxu0 0
    %7495 = vmatprep.subr.bf16.mxu0 0
    %7496 = vmatpush1.bf16.xpose.msra.mxu0 0
    %7497 = vmatprep.subr.bf16.mxu0 0
    %7498 = vmatpush1.bf16.xpose.msra.mxu0 0
    %7499 = vmatprep.subr.bf16.mxu0 0
    %7500 = vmatpush1.bf16.xpose.msra.mxu0 0
    %7501 = vmatprep.subr.bf16.mxu0 0
    %7502 = vmatpush1.bf16.xpose.msra.mxu0 0
    %7503 = vmatprep.subr.bf16.mxu0 0
    %7504 = vmatpush1.bf16.xpose.msra.mxu0 0
    %7505 = vmatprep.subr.bf16.mxu0 0
    %7506 = vmatpush1.bf16.xpose.msra.mxu0 0
    %7507 = vmatprep.subr.bf16.mxu0 0
    %7508 = vmatpush1.bf16.xpose.msra.mxu0 0
    %7509 = vmatprep.subr.bf16.mxu0 0
    %7510 = vmatpush1.bf16.xpose.msra.mxu0 0
    %7511 = vmatprep.subr.bf16.mxu0 0
    %7512 = vmatpush1.bf16.xpose.msra.mxu0 0
    %7513 = vmatprep.subr.bf16.mxu0 0
    %7514 = vmatpush1.bf16.xpose.msra.mxu0 0
    %7515 = vmatprep.subr.bf16.mxu0 0
    %7516 = vmatpush1.bf16.xpose.msra.mxu0 0
    %7517 = vmatprep.subr.bf16.mxu0 0
    %7518 = vmatpush1.bf16.xpose.msra.mxu0 0
    %7519 = vmatprep.mubr.bf16.mxu0 %v7382
    %7520 = vmatmul.mubr.bf16.gmra.mrb[0].mxu0 %v7381
    %v7521 = vpop.f32.mrb[0].mxu0
    %v7522 = vadd.f32 %v7482, %v7521
    %v7523 = vpop.f32.mrb[0].mxu0
    %v7524 = vpop.f32.mrb[0].mxu0
    %v7525 = vpop.f32.mrb[0].mxu0
    %7526 = vdwg.mxu0
    %7527 = vmatprep.subr.bf16.mxu0 %v7424
    %7528 = vmatpush1.bf16.xpose.msra.mxu0 %v7423
    %7529 = vmatprep.subr.bf16.mxu0 %v7431
    %7530 = vmatpush1.bf16.xpose.msra.mxu0 %v7430
    %7531 = vmatprep.subr.bf16.mxu0 0
    %7532 = vmatpush1.bf16.xpose.msra.mxu0 0
    %7533 = vmatprep.subr.bf16.mxu0 0
    %7534 = vmatpush1.bf16.xpose.msra.mxu0 0
    %7535 = vmatprep.subr.bf16.mxu0 0
    %7536 = vmatpush1.bf16.xpose.msra.mxu0 0
    %7537 = vmatprep.subr.bf16.mxu0 0
    %7538 = vmatpush1.bf16.xpose.msra.mxu0 0
    %7539 = vmatprep.subr.bf16.mxu0 0
    %7540 = vmatpush1.bf16.xpose.msra.mxu0 0
    %7541 = vmatprep.subr.bf16.mxu0 0
    %7542 = vmatpush1.bf16.xpose.msra.mxu0 0
    %7543 = vmatprep.subr.bf16.mxu0 0
    %7544 = vmatpush1.bf16.xpose.msra.mxu0 0
    %7545 = vmatprep.subr.bf16.mxu0 0
    %7546 = vmatpush1.bf16.xpose.msra.mxu0 0
    %7547 = vmatprep.subr.bf16.mxu0 0
    %7548 = vmatpush1.bf16.xpose.msra.mxu0 0
    %7549 = vmatprep.subr.bf16.mxu0 0
    %7550 = vmatpush1.bf16.xpose.msra.mxu0 0
    %7551 = vmatprep.subr.bf16.mxu0 0
    %7552 = vmatpush1.bf16.xpose.msra.mxu0 0
    %7553 = vmatprep.subr.bf16.mxu0 0
    %7554 = vmatpush1.bf16.xpose.msra.mxu0 0
    %7555 = vmatprep.subr.bf16.mxu0 0
    %7556 = vmatpush1.bf16.xpose.msra.mxu0 0
    %7557 = vmatprep.subr.bf16.mxu0 0
    %7558 = vmatpush1.bf16.xpose.msra.mxu0 0
    %7559 = vmatprep.mubr.bf16.mxu0 %v7384
    %7560 = vmatmul.mubr.bf16.gmra.mrb[0].mxu0 %v7383
    %v7561 = vpop.f32.mrb[0].mxu0
    %v7562 = vadd.f32 %v7522, %v7561
    %v7563 = vpop.f32.mrb[0].mxu0
    %v7564 = vpop.f32.mrb[0].mxu0
    %v7565 = vpop.f32.mrb[0].mxu0
    %7566 = vdwg.mxu0
    %7567 = vmatprep.subr.bf16.mxu0 0
    %7568 = vmatpush1.bf16.xpose.msra.mxu0 %v7425
    %7569 = vmatprep.subr.bf16.mxu0 0
    %7570 = vmatpush1.bf16.xpose.msra.mxu0 %v7432
    %7571 = vmatprep.subr.bf16.mxu0 0
    %7572 = vmatpush1.bf16.xpose.msra.mxu0 0
    %7573 = vmatprep.subr.bf16.mxu0 0
    %7574 = vmatpush1.bf16.xpose.msra.mxu0 0
    %7575 = vmatprep.subr.bf16.mxu0 0
    %7576 = vmatpush1.bf16.xpose.msra.mxu0 0
    %7577 = vmatprep.subr.bf16.mxu0 0
    %7578 = vmatpush1.bf16.xpose.msra.mxu0 0
    %7579 = vmatprep.subr.bf16.mxu0 0
    %7580 = vmatpush1.bf16.xpose.msra.mxu0 0
    %7581 = vmatprep.subr.bf16.mxu0 0
    %7582 = vmatpush1.bf16.xpose.msra.mxu0 0
    %7583 = vmatprep.subr.bf16.mxu0 0
    %7584 = vmatpush1.bf16.xpose.msra.mxu0 0
    %7585 = vmatprep.subr.bf16.mxu0 0
    %7586 = vmatpush1.bf16.xpose.msra.mxu0 0
    %7587 = vmatprep.subr.bf16.mxu0 0
    %7588 = vmatpush1.bf16.xpose.msra.mxu0 0
    %7589 = vmatprep.subr.bf16.mxu0 0
    %7590 = vmatpush1.bf16.xpose.msra.mxu0 0
    %7591 = vmatprep.subr.bf16.mxu0 0
    %7592 = vmatpush1.bf16.xpose.msra.mxu0 0
    %7593 = vmatprep.subr.bf16.mxu0 0
    %7594 = vmatpush1.bf16.xpose.msra.mxu0 0
    %7595 = vmatprep.subr.bf16.mxu0 0
    %7596 = vmatpush1.bf16.xpose.msra.mxu0 0
    %7597 = vmatprep.subr.bf16.mxu0 0
    %7598 = vmatpush1.bf16.xpose.msra.mxu0 0
    %7599 = vmatprep.mubr.bf16.mxu0 0
    %7600 = vmatmul.mubr.bf16.gmra.mrb[0].mxu0 %v7385
    %v7601 = vpop.f32.mrb[0].mxu0
    %v7602 = vadd.f32 %v7562, %v7601
    %v7603 = vpop.f32.mrb[0].mxu0
    %v7604 = vpop.f32.mrb[0].mxu0
    %v7605 = vpop.f32.mrb[0].mxu0
    %7606 = vdwg.mxu0
    %vm7607 = vcmask 171008
    %7608 = vst.msk [vmem:[#allocation4] sm:$0xff] %vm7607, %v7602
    %v7609 = vmul.f32 %v6997, %v2388
    %v7610 = vmul.f32 %v6999, %v2389
    %v7611 = vmul.f32 %v7090, %v2390
    %v7612 = vmul.f32 %v7092, %v2391
    %v7613 = vmul.f32 %v7183, %v2392
    %v7614 = vmul.f32 %v7185, %v2393
    %v7615 = vmul.f32 %v7275, %v2394
    %v7616 = vmul.f32 %v7013, %v2395
    %v7617 = vmul.f32 %v7015, %v2396
    %v7618 = vmul.f32 %v7106, %v2397
    %v7619 = vmul.f32 %v7108, %v2398
    %v7620 = vmul.f32 %v7199, %v2399
    %v7621 = vmul.f32 %v7201, %v2400
    %v7622 = vmul.f32 %v7288, %v2401
    %v7623 = vadd.f32 %v7609, %v7616
    %v7624 = vadd.f32 %v7610, %v7617
    %v7625 = vadd.f32 %v7611, %v7618
    %v7626 = vadd.f32 %v7612, %v7619
    %v7627 = vadd.f32 %v7613, %v7620
    %v7628 = vadd.f32 %v7614, %v7621
    %v7629 = vadd.f32 %v7615, %v7622
    %v7630 = vmul.f32 %v7027, %v2402
    %v7631 = vmul.f32 %v7029, %v2403
    %v7632 = vmul.f32 %v7120, %v2404
    %v7633 = vmul.f32 %v7122, %v2405
    %v7634 = vmul.f32 %v7213, %v2406
    %v7635 = vmul.f32 %v7215, %v2407
    %v7636 = vmul.f32 %v7299, %v2408
    %v7637 = vadd.f32 %v7623, %v7630
    %v7638 = vadd.f32 %v7624, %v7631
    %v7639 = vadd.f32 %v7625, %v7632
    %v7640 = vadd.f32 %v7626, %v7633
    %v7641 = vadd.f32 %v7627, %v7634
    %v7642 = vadd.f32 %v7628, %v7635
    %v7643 = vadd.f32 %v7629, %v7636
    %v7644 = vadd.f32 %v7637, %v7043
    %v7645 = vadd.f32 %v7638, %v7045
    %v7646 = vadd.f32 %v7639, %v7136
    %v7647 = vadd.f32 %v7640, %v7138
    %v7648 = vadd.f32 %v7641, %v7229
    %v7649 = vadd.f32 %v7642, %v7231
    %v7650 = vadd.f32 %v7643, %v7312
    %s7651 = scalar_lea.vmem [#allocation2], 56
    %7652 = vst [vmem:[%s7651] sm:$0xff] %v7644
    %7653 = vst [vmem:[%s7651 + $0x8] sm:$0xff] %v7645
    %7654 = vst [vmem:[%s7651 + $0x10] sm:$0xff] %v7646
    %7655 = vst [vmem:[%s7651 + $0x18] sm:$0xff] %v7647
    %7656 = vst [vmem:[%s7651 + $0x20] sm:$0xff] %v7648
    %7657 = vst [vmem:[%s7651 + $0x28] sm:$0xff] %v7649
    %7658 = vst [vmem:[%s7651 + $0x30] sm:$0xff] %v7650
    %v7659 = vpack.c.bf16 %v7644, %v7644
    %v7660 = vpack.c.bf16 %v7645, %v7645
    %v7661 = vpack.c.bf16 %v7646, %v7646
    %v7662 = vpack.c.bf16 %v7647, %v7647
    %v7663 = vpack.c.bf16 %v7648, %v7648
    %v7664 = vpack.c.bf16 %v7649, %v7649
    %v7665 = vpack.c.bf16 %v7650, %v7650
    %7666 = vmatprep.subr.bf16.mxu0 %v7420
    %7667 = vmatpush1.bf16.xpose.msra.mxu0 %v7419
    %7668 = vmatprep.subr.bf16.mxu0 %v7427
    %7669 = vmatpush1.bf16.xpose.msra.mxu0 %v7426
    %7670 = vmatprep.subr.bf16.mxu0 0
    %7671 = vmatpush1.bf16.xpose.msra.mxu0 0
    %7672 = vmatprep.subr.bf16.mxu0 0
    %7673 = vmatpush1.bf16.xpose.msra.mxu0 0
    %7674 = vmatprep.subr.bf16.mxu0 0
    %7675 = vmatpush1.bf16.xpose.msra.mxu0 0
    %7676 = vmatprep.subr.bf16.mxu0 0
    %7677 = vmatpush1.bf16.xpose.msra.mxu0 0
    %7678 = vmatprep.subr.bf16.mxu0 0
    %7679 = vmatpush1.bf16.xpose.msra.mxu0 0
    %7680 = vmatprep.subr.bf16.mxu0 0
    %7681 = vmatpush1.bf16.xpose.msra.mxu0 0
    %7682 = vmatprep.subr.bf16.mxu0 0
    %7683 = vmatpush1.bf16.xpose.msra.mxu0 0
    %7684 = vmatprep.subr.bf16.mxu0 0
    %7685 = vmatpush1.bf16.xpose.msra.mxu0 0
    %7686 = vmatprep.subr.bf16.mxu0 0
    %7687 = vmatpush1.bf16.xpose.msra.mxu0 0
    %7688 = vmatprep.subr.bf16.mxu0 0
    %7689 = vmatpush1.bf16.xpose.msra.mxu0 0
    %7690 = vmatprep.subr.bf16.mxu0 0
    %7691 = vmatpush1.bf16.xpose.msra.mxu0 0
    %7692 = vmatprep.subr.bf16.mxu0 0
    %7693 = vmatpush1.bf16.xpose.msra.mxu0 0
    %7694 = vmatprep.subr.bf16.mxu0 0
    %7695 = vmatpush1.bf16.xpose.msra.mxu0 0
    %7696 = vmatprep.subr.bf16.mxu0 0
    %7697 = vmatpush1.bf16.xpose.msra.mxu0 0
    %7698 = vmatprep.mubr.bf16.mxu0 %v7660
    %7699 = vmatmul.mubr.bf16.gmra.mrb[0].mxu0 %v7659
    %v7700 = vpop.f32.mrb[0].mxu0
    %v7701 = vadd.f32 0.0, %v7700
    %v7702 = vpop.f32.mrb[0].mxu0
    %v7703 = vpop.f32.mrb[0].mxu0
    %v7704 = vpop.f32.mrb[0].mxu0
    %7705 = vdwg.mxu0
    %7706 = vmatprep.subr.bf16.mxu0 %v7422
    %7707 = vmatpush1.bf16.xpose.msra.mxu0 %v7421
    %7708 = vmatprep.subr.bf16.mxu0 %v7429
    %7709 = vmatpush1.bf16.xpose.msra.mxu0 %v7428
    %7710 = vmatprep.subr.bf16.mxu0 0
    %7711 = vmatpush1.bf16.xpose.msra.mxu0 0
    %7712 = vmatprep.subr.bf16.mxu0 0
    %7713 = vmatpush1.bf16.xpose.msra.mxu0 0
    %7714 = vmatprep.subr.bf16.mxu0 0
    %7715 = vmatpush1.bf16.xpose.msra.mxu0 0
    %7716 = vmatprep.subr.bf16.mxu0 0
    %7717 = vmatpush1.bf16.xpose.msra.mxu0 0
    %7718 = vmatprep.subr.bf16.mxu0 0
    %7719 = vmatpush1.bf16.xpose.msra.mxu0 0
    %7720 = vmatprep.subr.bf16.mxu0 0
    %7721 = vmatpush1.bf16.xpose.msra.mxu0 0
    %7722 = vmatprep.subr.bf16.mxu0 0
    %7723 = vmatpush1.bf16.xpose.msra.mxu0 0
    %7724 = vmatprep.subr.bf16.mxu0 0
    %7725 = vmatpush1.bf16.xpose.msra.mxu0 0
    %7726 = vmatprep.subr.bf16.mxu0 0
    %7727 = vmatpush1.bf16.xpose.msra.mxu0 0
    %7728 = vmatprep.subr.bf16.mxu0 0
    %7729 = vmatpush1.bf16.xpose.msra.mxu0 0
    %7730 = vmatprep.subr.bf16.mxu0 0
    %7731 = vmatpush1.bf16.xpose.msra.mxu0 0
    %7732 = vmatprep.subr.bf16.mxu0 0
    %7733 = vmatpush1.bf16.xpose.msra.mxu0 0
    %7734 = vmatprep.subr.bf16.mxu0 0
    %7735 = vmatpush1.bf16.xpose.msra.mxu0 0
    %7736 = vmatprep.subr.bf16.mxu0 0
    %7737 = vmatpush1.bf16.xpose.msra.mxu0 0
    %7738 = vmatprep.mubr.bf16.mxu0 %v7662
    %7739 = vmatmul.mubr.bf16.gmra.mrb[0].mxu0 %v7661
    %v7740 = vpop.f32.mrb[0].mxu0
    %v7741 = vadd.f32 %v7701, %v7740
    %v7742 = vpop.f32.mrb[0].mxu0
    %v7743 = vpop.f32.mrb[0].mxu0
    %v7744 = vpop.f32.mrb[0].mxu0
    %7745 = vdwg.mxu0
    %7746 = vmatprep.subr.bf16.mxu0 %v7424
    %7747 = vmatpush1.bf16.xpose.msra.mxu0 %v7423
    %7748 = vmatprep.subr.bf16.mxu0 %v7431
    %7749 = vmatpush1.bf16.xpose.msra.mxu0 %v7430
    %7750 = vmatprep.subr.bf16.mxu0 0
    %7751 = vmatpush1.bf16.xpose.msra.mxu0 0
    %7752 = vmatprep.subr.bf16.mxu0 0
    %7753 = vmatpush1.bf16.xpose.msra.mxu0 0
    %7754 = vmatprep.subr.bf16.mxu0 0
    %7755 = vmatpush1.bf16.xpose.msra.mxu0 0
    %7756 = vmatprep.subr.bf16.mxu0 0
    %7757 = vmatpush1.bf16.xpose.msra.mxu0 0
    %7758 = vmatprep.subr.bf16.mxu0 0
    %7759 = vmatpush1.bf16.xpose.msra.mxu0 0
    %7760 = vmatprep.subr.bf16.mxu0 0
    %7761 = vmatpush1.bf16.xpose.msra.mxu0 0
    %7762 = vmatprep.subr.bf16.mxu0 0
    %7763 = vmatpush1.bf16.xpose.msra.mxu0 0
    %7764 = vmatprep.subr.bf16.mxu0 0
    %7765 = vmatpush1.bf16.xpose.msra.mxu0 0
    %7766 = vmatprep.subr.bf16.mxu0 0
    %7767 = vmatpush1.bf16.xpose.msra.mxu0 0
    %7768 = vmatprep.subr.bf16.mxu0 0
    %7769 = vmatpush1.bf16.xpose.msra.mxu0 0
    %7770 = vmatprep.subr.bf16.mxu0 0
    %7771 = vmatpush1.bf16.xpose.msra.mxu0 0
    %7772 = vmatprep.subr.bf16.mxu0 0
    %7773 = vmatpush1.bf16.xpose.msra.mxu0 0
    %7774 = vmatprep.subr.bf16.mxu0 0
    %7775 = vmatpush1.bf16.xpose.msra.mxu0 0
    %7776 = vmatprep.subr.bf16.mxu0 0
    %7777 = vmatpush1.bf16.xpose.msra.mxu0 0
    %7778 = vmatprep.mubr.bf16.mxu0 %v7664
    %7779 = vmatmul.mubr.bf16.gmra.mrb[0].mxu0 %v7663
    %v7780 = vpop.f32.mrb[0].mxu0
    %v7781 = vadd.f32 %v7741, %v7780
    %v7782 = vpop.f32.mrb[0].mxu0
    %v7783 = vpop.f32.mrb[0].mxu0
    %v7784 = vpop.f32.mrb[0].mxu0
    %7785 = vdwg.mxu0
    %7786 = vmatprep.subr.bf16.mxu0 0
    %7787 = vmatpush1.bf16.xpose.msra.mxu0 %v7425
    %7788 = vmatprep.subr.bf16.mxu0 0
    %7789 = vmatpush1.bf16.xpose.msra.mxu0 %v7432
    %7790 = vmatprep.subr.bf16.mxu0 0
    %7791 = vmatpush1.bf16.xpose.msra.mxu0 0
    %7792 = vmatprep.subr.bf16.mxu0 0
    %7793 = vmatpush1.bf16.xpose.msra.mxu0 0
    %7794 = vmatprep.subr.bf16.mxu0 0
    %7795 = vmatpush1.bf16.xpose.msra.mxu0 0
    %7796 = vmatprep.subr.bf16.mxu0 0
    %7797 = vmatpush1.bf16.xpose.msra.mxu0 0
    %7798 = vmatprep.subr.bf16.mxu0 0
    %7799 = vmatpush1.bf16.xpose.msra.mxu0 0
    %7800 = vmatprep.subr.bf16.mxu0 0
    %7801 = vmatpush1.bf16.xpose.msra.mxu0 0
    %7802 = vmatprep.subr.bf16.mxu0 0
    %7803 = vmatpush1.bf16.xpose.msra.mxu0 0
    %7804 = vmatprep.subr.bf16.mxu0 0
    %7805 = vmatpush1.bf16.xpose.msra.mxu0 0
    %7806 = vmatprep.subr.bf16.mxu0 0
    %7807 = vmatpush1.bf16.xpose.msra.mxu0 0
    %7808 = vmatprep.subr.bf16.mxu0 0
    %7809 = vmatpush1.bf16.xpose.msra.mxu0 0
    %7810 = vmatprep.subr.bf16.mxu0 0
    %7811 = vmatpush1.bf16.xpose.msra.mxu0 0
    %7812 = vmatprep.subr.bf16.mxu0 0
    %7813 = vmatpush1.bf16.xpose.msra.mxu0 0
    %7814 = vmatprep.subr.bf16.mxu0 0
    %7815 = vmatpush1.bf16.xpose.msra.mxu0 0
    %7816 = vmatprep.subr.bf16.mxu0 0
    %7817 = vmatpush1.bf16.xpose.msra.mxu0 0
    %7818 = vmatprep.mubr.bf16.mxu0 0
    %7819 = vmatmul.mubr.bf16.gmra.mrb[0].mxu0 %v7665
    %v7820 = vpop.f32.mrb[0].mxu0
    %v7821 = vadd.f32 %v7781, %v7820
    %v7822 = vpop.f32.mrb[0].mxu0
    %v7823 = vpop.f32.mrb[0].mxu0
    %v7824 = vpop.f32.mrb[0].mxu0
    %7825 = vdwg.mxu0
    %s7826 = scalar_lea.vmem [#allocation4], 8
    %7827 = vst.msk [vmem:[%s7826] sm:$0xff] %vm7607, %v7821
    %v7828 = vmul.f32 %v7003, %v2388
    %v7829 = vmul.f32 %v7005, %v2389
    %v7830 = vmul.f32 %v7096, %v2390
    %v7831 = vmul.f32 %v7098, %v2391
    %v7832 = vmul.f32 %v7189, %v2392
    %v7833 = vmul.f32 %v7191, %v2393
    %v7834 = vmul.f32 %v7280, %v2394
    %v7835 = vmul.f32 %v7017, %v2395
    %v7836 = vmul.f32 %v7019, %v2396
    %v7837 = vmul.f32 %v7110, %v2397
    %v7838 = vmul.f32 %v7112, %v2398
    %v7839 = vmul.f32 %v7203, %v2399
    %v7840 = vmul.f32 %v7205, %v2400
    %v7841 = vmul.f32 %v7291, %v2401
    %v7842 = vadd.f32 %v7828, %v7835
    %v7843 = vadd.f32 %v7829, %v7836
    %v7844 = vadd.f32 %v7830, %v7837
    %v7845 = vadd.f32 %v7831, %v7838
    %v7846 = vadd.f32 %v7832, %v7839
    %v7847 = vadd.f32 %v7833, %v7840
    %v7848 = vadd.f32 %v7834, %v7841
    %v7849 = vmul.f32 %v7033, %v2402
    %v7850 = vmul.f32 %v7035, %v2403
    %v7851 = vmul.f32 %v7126, %v2404
    %v7852 = vmul.f32 %v7128, %v2405
    %v7853 = vmul.f32 %v7219, %v2406
    %v7854 = vmul.f32 %v7221, %v2407
    %v7855 = vmul.f32 %v7304, %v2408
    %v7856 = vadd.f32 %v7842, %v7849
    %v7857 = vadd.f32 %v7843, %v7850
    %v7858 = vadd.f32 %v7844, %v7851
    %v7859 = vadd.f32 %v7845, %v7852
    %v7860 = vadd.f32 %v7846, %v7853
    %v7861 = vadd.f32 %v7847, %v7854
    %v7862 = vadd.f32 %v7848, %v7855
    %v7863 = vadd.f32 %v7856, %v7047
    %v7864 = vadd.f32 %v7857, %v7049
    %v7865 = vadd.f32 %v7858, %v7140
    %v7866 = vadd.f32 %v7859, %v7142
    %v7867 = vadd.f32 %v7860, %v7233
    %v7868 = vadd.f32 %v7861, %v7235
    %v7869 = vadd.f32 %v7862, %v7315
    %s7870 = scalar_lea.vmem [#allocation2], 112
    %7871 = vst [vmem:[%s7870] sm:$0xff] %v7863
    %7872 = vst [vmem:[%s7870 + $0x8] sm:$0xff] %v7864
    %7873 = vst [vmem:[%s7870 + $0x10] sm:$0xff] %v7865
    %7874 = vst [vmem:[%s7870 + $0x18] sm:$0xff] %v7866
    %7875 = vst [vmem:[%s7870 + $0x20] sm:$0xff] %v7867
    %7876 = vst [vmem:[%s7870 + $0x28] sm:$0xff] %v7868
    %7877 = vst [vmem:[%s7870 + $0x30] sm:$0xff] %v7869
    %v7878 = vpack.c.bf16 %v7863, %v7863
    %v7879 = vpack.c.bf16 %v7864, %v7864
    %v7880 = vpack.c.bf16 %v7865, %v7865
    %v7881 = vpack.c.bf16 %v7866, %v7866
    %v7882 = vpack.c.bf16 %v7867, %v7867
    %v7883 = vpack.c.bf16 %v7868, %v7868
    %v7884 = vpack.c.bf16 %v7869, %v7869
    %7885 = vmatprep.subr.bf16.mxu0 %v7420
    %7886 = vmatpush1.bf16.xpose.msra.mxu0 %v7419
    %7887 = vmatprep.subr.bf16.mxu0 %v7427
    %7888 = vmatpush1.bf16.xpose.msra.mxu0 %v7426
    %7889 = vmatprep.subr.bf16.mxu0 0
    %7890 = vmatpush1.bf16.xpose.msra.mxu0 0
    %7891 = vmatprep.subr.bf16.mxu0 0
    %7892 = vmatpush1.bf16.xpose.msra.mxu0 0
    %7893 = vmatprep.subr.bf16.mxu0 0
    %7894 = vmatpush1.bf16.xpose.msra.mxu0 0
    %7895 = vmatprep.subr.bf16.mxu0 0
    %7896 = vmatpush1.bf16.xpose.msra.mxu0 0
    %7897 = vmatprep.subr.bf16.mxu0 0
    %7898 = vmatpush1.bf16.xpose.msra.mxu0 0
    %7899 = vmatprep.subr.bf16.mxu0 0
    %7900 = vmatpush1.bf16.xpose.msra.mxu0 0
    %7901 = vmatprep.subr.bf16.mxu0 0
    %7902 = vmatpush1.bf16.xpose.msra.mxu0 0
    %7903 = vmatprep.subr.bf16.mxu0 0
    %7904 = vmatpush1.bf16.xpose.msra.mxu0 0
    %7905 = vmatprep.subr.bf16.mxu0 0
    %7906 = vmatpush1.bf16.xpose.msra.mxu0 0
    %7907 = vmatprep.subr.bf16.mxu0 0
    %7908 = vmatpush1.bf16.xpose.msra.mxu0 0
    %7909 = vmatprep.subr.bf16.mxu0 0
    %7910 = vmatpush1.bf16.xpose.msra.mxu0 0
    %7911 = vmatprep.subr.bf16.mxu0 0
    %7912 = vmatpush1.bf16.xpose.msra.mxu0 0
    %7913 = vmatprep.subr.bf16.mxu0 0
    %7914 = vmatpush1.bf16.xpose.msra.mxu0 0
    %7915 = vmatprep.subr.bf16.mxu0 0
    %7916 = vmatpush1.bf16.xpose.msra.mxu0 0
    %7917 = vmatprep.mubr.bf16.mxu0 %v7879
    %7918 = vmatmul.mubr.bf16.gmra.mrb[0].mxu0 %v7878
    %v7919 = vpop.f32.mrb[0].mxu0
    %v7920 = vadd.f32 0.0, %v7919
    %v7921 = vpop.f32.mrb[0].mxu0
    %v7922 = vpop.f32.mrb[0].mxu0
    %v7923 = vpop.f32.mrb[0].mxu0
    %7924 = vdwg.mxu0
    %7925 = vmatprep.subr.bf16.mxu0 %v7422
    %7926 = vmatpush1.bf16.xpose.msra.mxu0 %v7421
    %7927 = vmatprep.subr.bf16.mxu0 %v7429
    %7928 = vmatpush1.bf16.xpose.msra.mxu0 %v7428
    %7929 = vmatprep.subr.bf16.mxu0 0
    %7930 = vmatpush1.bf16.xpose.msra.mxu0 0
    %7931 = vmatprep.subr.bf16.mxu0 0
    %7932 = vmatpush1.bf16.xpose.msra.mxu0 0
    %7933 = vmatprep.subr.bf16.mxu0 0
    %7934 = vmatpush1.bf16.xpose.msra.mxu0 0
    %7935 = vmatprep.subr.bf16.mxu0 0
    %7936 = vmatpush1.bf16.xpose.msra.mxu0 0
    %7937 = vmatprep.subr.bf16.mxu0 0
    %7938 = vmatpush1.bf16.xpose.msra.mxu0 0
    %7939 = vmatprep.subr.bf16.mxu0 0
    %7940 = vmatpush1.bf16.xpose.msra.mxu0 0
    %7941 = vmatprep.subr.bf16.mxu0 0
    %7942 = vmatpush1.bf16.xpose.msra.mxu0 0
    %7943 = vmatprep.subr.bf16.mxu0 0
    %7944 = vmatpush1.bf16.xpose.msra.mxu0 0
    %7945 = vmatprep.subr.bf16.mxu0 0
    %7946 = vmatpush1.bf16.xpose.msra.mxu0 0
    %7947 = vmatprep.subr.bf16.mxu0 0
    %7948 = vmatpush1.bf16.xpose.msra.mxu0 0
    %7949 = vmatprep.subr.bf16.mxu0 0
    %7950 = vmatpush1.bf16.xpose.msra.mxu0 0
    %7951 = vmatprep.subr.bf16.mxu0 0
    %7952 = vmatpush1.bf16.xpose.msra.mxu0 0
    %7953 = vmatprep.subr.bf16.mxu0 0
    %7954 = vmatpush1.bf16.xpose.msra.mxu0 0
    %7955 = vmatprep.subr.bf16.mxu0 0
    %7956 = vmatpush1.bf16.xpose.msra.mxu0 0
    %7957 = vmatprep.mubr.bf16.mxu0 %v7881
    %7958 = vmatmul.mubr.bf16.gmra.mrb[0].mxu0 %v7880
    %v7959 = vpop.f32.mrb[0].mxu0
    %v7960 = vadd.f32 %v7920, %v7959
    %v7961 = vpop.f32.mrb[0].mxu0
    %v7962 = vpop.f32.mrb[0].mxu0
    %v7963 = vpop.f32.mrb[0].mxu0
    %7964 = vdwg.mxu0
    %7965 = vmatprep.subr.bf16.mxu0 %v7424
    %7966 = vmatpush1.bf16.xpose.msra.mxu0 %v7423
    %7967 = vmatprep.subr.bf16.mxu0 %v7431
    %7968 = vmatpush1.bf16.xpose.msra.mxu0 %v7430
    %7969 = vmatprep.subr.bf16.mxu0 0
    %7970 = vmatpush1.bf16.xpose.msra.mxu0 0
    %7971 = vmatprep.subr.bf16.mxu0 0
    %7972 = vmatpush1.bf16.xpose.msra.mxu0 0
    %7973 = vmatprep.subr.bf16.mxu0 0
    %7974 = vmatpush1.bf16.xpose.msra.mxu0 0
    %7975 = vmatprep.subr.bf16.mxu0 0
    %7976 = vmatpush1.bf16.xpose.msra.mxu0 0
    %7977 = vmatprep.subr.bf16.mxu0 0
    %7978 = vmatpush1.bf16.xpose.msra.mxu0 0
    %7979 = vmatprep.subr.bf16.mxu0 0
    %7980 = vmatpush1.bf16.xpose.msra.mxu0 0
    %7981 = vmatprep.subr.bf16.mxu0 0
    %7982 = vmatpush1.bf16.xpose.msra.mxu0 0
    %7983 = vmatprep.subr.bf16.mxu0 0
    %7984 = vmatpush1.bf16.xpose.msra.mxu0 0
    %7985 = vmatprep.subr.bf16.mxu0 0
    %7986 = vmatpush1.bf16.xpose.msra.mxu0 0
    %7987 = vmatprep.subr.bf16.mxu0 0
    %7988 = vmatpush1.bf16.xpose.msra.mxu0 0
    %7989 = vmatprep.subr.bf16.mxu0 0
    %7990 = vmatpush1.bf16.xpose.msra.mxu0 0
    %7991 = vmatprep.subr.bf16.mxu0 0
    %7992 = vmatpush1.bf16.xpose.msra.mxu0 0
    %7993 = vmatprep.subr.bf16.mxu0 0
    %7994 = vmatpush1.bf16.xpose.msra.mxu0 0
    %7995 = vmatprep.subr.bf16.mxu0 0
    %7996 = vmatpush1.bf16.xpose.msra.mxu0 0
    %7997 = vmatprep.mubr.bf16.mxu0 %v7883
    %7998 = vmatmul.mubr.bf16.gmra.mrb[0].mxu0 %v7882
    %v7999 = vpop.f32.mrb[0].mxu0
    %v8000 = vadd.f32 %v7960, %v7999
    %v8001 = vpop.f32.mrb[0].mxu0
    %v8002 = vpop.f32.mrb[0].mxu0
    %v8003 = vpop.f32.mrb[0].mxu0
    %8004 = vdwg.mxu0
    %8005 = vmatprep.subr.bf16.mxu0 0
    %8006 = vmatpush1.bf16.xpose.msra.mxu0 %v7425
    %8007 = vmatprep.subr.bf16.mxu0 0
    %8008 = vmatpush1.bf16.xpose.msra.mxu0 %v7432
    %8009 = vmatprep.subr.bf16.mxu0 0
    %8010 = vmatpush1.bf16.xpose.msra.mxu0 0
    %8011 = vmatprep.subr.bf16.mxu0 0
    %8012 = vmatpush1.bf16.xpose.msra.mxu0 0
    %8013 = vmatprep.subr.bf16.mxu0 0
    %8014 = vmatpush1.bf16.xpose.msra.mxu0 0
    %8015 = vmatprep.subr.bf16.mxu0 0
    %8016 = vmatpush1.bf16.xpose.msra.mxu0 0
    %8017 = vmatprep.subr.bf16.mxu0 0
    %8018 = vmatpush1.bf16.xpose.msra.mxu0 0
    %8019 = vmatprep.subr.bf16.mxu0 0
    %8020 = vmatpush1.bf16.xpose.msra.mxu0 0
    %8021 = vmatprep.subr.bf16.mxu0 0
    %8022 = vmatpush1.bf16.xpose.msra.mxu0 0
    %8023 = vmatprep.subr.bf16.mxu0 0
    %8024 = vmatpush1.bf16.xpose.msra.mxu0 0
    %8025 = vmatprep.subr.bf16.mxu0 0
    %8026 = vmatpush1.bf16.xpose.msra.mxu0 0
    %8027 = vmatprep.subr.bf16.mxu0 0
    %8028 = vmatpush1.bf16.xpose.msra.mxu0 0
    %8029 = vmatprep.subr.bf16.mxu0 0
    %8030 = vmatpush1.bf16.xpose.msra.mxu0 0
    %8031 = vmatprep.subr.bf16.mxu0 0
    %8032 = vmatpush1.bf16.xpose.msra.mxu0 0
    %8033 = vmatprep.subr.bf16.mxu0 0
    %8034 = vmatpush1.bf16.xpose.msra.mxu0 0
    %8035 = vmatprep.subr.bf16.mxu0 0
    %8036 = vmatpush1.bf16.xpose.msra.mxu0 0
    %8037 = vmatprep.mubr.bf16.mxu0 0
    %8038 = vmatmul.mubr.bf16.gmra.mrb[0].mxu0 %v7884
    %v8039 = vpop.f32.mrb[0].mxu0
    %v8040 = vadd.f32 %v8000, %v8039
    %v8041 = vpop.f32.mrb[0].mxu0
    %v8042 = vpop.f32.mrb[0].mxu0
    %v8043 = vpop.f32.mrb[0].mxu0
    %8044 = vdwg.mxu0
    %s8045 = scalar_lea.vmem [#allocation4], 16
    %8046 = vst.msk [vmem:[%s8045] sm:$0xff] %vm7607, %v8040
    // Predicated region
    $region38: #{mano_forward_pallas.1} parent=1 // pred_check
      _
    $region39: #{mano_forward_pallas.1} parent=1 // pred_check_branch
      %8048 = sbr.rel (0) target = $region41
    $region40: #{mano_forward_pallas.1} parent=1 // pred_region
      %s8050 = ssub.s32 2688, 2688
      %8051 = vsyncadd [#allocation3], %s8050
      %s8052 = sshll.u32 [#allocation2], 4
      %s8053 = int_to_ptr.vmem [resolvable:$true] %s8052
      %8058 = dma.vmem_to_hbm [thread:$0]  %s8053, 2688, %s9, [#allocation3], 896, 896, 56
    $region41: #{mano_forward_pallas.1} parent=1 // pred_fallthru
      _
    // Predicated region
    $region42: #{mano_forward_pallas.1} parent=1 // pred_check
      _
    $region43: #{mano_forward_pallas.1} parent=1 // pred_check_branch
      %8060 = sbr.rel (0) target = $region45
    $region44: #{mano_forward_pallas.1} parent=1 // pred_region
      %s8062 = ssub.s32 384, 384
      %8063 = vsyncadd [#allocation5], %s8062
      %s8064 = sshll.u32 [#allocation4], 4
      %s8065 = int_to_ptr.vmem [resolvable:$true] %s8064
      %8070 = dma.vmem_to_hbm [thread:$0]  %s8065, 384, %s10, [#allocation5], 128, 128, 8
    $region45: #{mano_forward_pallas.1} parent=1 // pred_fallthru
      _
    // Predicated region
    $region46: #{mano_forward_pallas.1} parent=1 // pred_check
      _
    $region47: #{mano_forward_pallas.1} parent=1 // pred_check_branch
      %8072 = sbr.rel (0) target = $region49
    $region48: #{mano_forward_pallas.1} parent=1 // pred_region
      %8073 = dma.done [#allocation3], 2688
    $region49: #{mano_forward_pallas.1} parent=1 // pred_fallthru
      _
    // Predicated region
    $region50: #{mano_forward_pallas.1} parent=1 // pred_check
      _
    $region51: #{mano_forward_pallas.1} parent=1 // pred_check_branch
      %8075 = sbr.rel (0) target = $region53
    $region52: #{mano_forward_pallas.1} parent=1 // pred_region
      %8076 = dma.done [#allocation5], 384
    $region53: #{mano_forward_pallas.1} parent=1 // pred_fallthru
      _
    %8077 = vsyncpa [#allocation3], 1
    %8078 = vsyncpa [#allocation5], 1

</llo_original>
